<compile_context>
chip_gen: v6e
topology: v6e:2x2x1
jax: 0.10.0
libtpu: 0.0.40
codegen_flags: <defaults>
</compile_context>

<pallas_src>
import functools

import jax
import jax.numpy as jnp
import numpy as np
from jax.experimental import pallas as pl
from jax.experimental.pallas import tpu as pltpu

# ---- model config (mirrors the PyTorch module) ----
N_EMBD = 60
BLOCK_SIZE = 20
N_HEAD = 3
N_LAYERS = 3
HEAD_SIZE = N_EMBD // N_HEAD          # 20
VOCAB_SIZE = 65                       # len(chars); synthetic deterministic choice
LN_EPS = 1e-5

# ---- padded (TPU lane-aligned) dims used inside the kernel ----
E_PAD = 128                           # n_embd   60 -> 128 (also per-head slab width)
F_PAD = 256                           # 4*n_embd 240 -> 256
V_PAD = 128                           # vocab    65 -> 128 (lane-dense output)
QKV_W = 3 * E_PAD                     # fused [q|k|v] width (384)
NEG_INF = -1e30

# bf16 matmul operands (f32 accumulate) ~3x MXU throughput on v6e/v7x.  Kept at
# f32 so the stacked error (bf16 + approx reciprocal) stays inside the 2e-3
# validation tolerance; flip to jnp.bfloat16 for serving after re-validating.
MATMUL_DTYPE = jnp.float32


def ngram_kernel(x_ref, bias_ref,
                 ln1g_ref, ln1b_ref, wqkv_ref, wproj_ref, bproj_ref,
                 ln2g_ref, ln2b_ref, w1_ref, b1_ref, w2_ref, b2_ref,
                 lnfg_ref, lnfb_ref, wlm_ref, blm_ref,
                 out_ref, *, batch_tile, seq_len):
    rows = batch_tile * seq_len
    x = x_ref[...]                      # (rows, E_PAD) f32, padded lanes are zero
    bias = bias_ref[...]                # (T, T) additive causal bias (0 / -1e30)

    # hoisted once (layer loop is statically unrolled; JAX does not CSE broadcasts)
    lane = jax.lax.broadcasted_iota(jnp.int32, (1, E_PAD), 1)
    lane_mask = lane < N_EMBD
    head_masks = [
        ((lane >= h * HEAD_SIZE) & (lane < (h + 1) * HEAD_SIZE)).astype(jnp.float32)
        for h in range(N_HEAD)
    ]                                   # each (1, E_PAD); selects one head's lanes
    inv_e = 1.0 / float(N_EMBD)
    scale = float(N_EMBD) ** -0.5       # PyTorch Head scales by C**-0.5, C = n_embd

    def layer_norm(v, g, b):
        # v's padded lanes are zero, so plain lane-sums / N_EMBD give true stats.
        mu = jnp.sum(v, axis=-1, keepdims=True) * inv_e
        d = jnp.where(lane_mask, v - mu, 0.0)
        var = jnp.sum(d * d, axis=-1, keepdims=True) * inv_e
        return d * jax.lax.rsqrt(var + LN_EPS) * g + b   # padded lanes stay zero

    def mm(a, w):                       # row-parallel MXU matmul, f32 accumulate
        return jnp.dot(a.astype(MATMUL_DTYPE), w.astype(MATMUL_DTYPE),
                       preferred_element_type=jnp.float32)

    for l in range(N_LAYERS):                            # static unroll, L = 3
        # ---- multi-head causal self-attention ----
        h_in = layer_norm(x, ln1g_ref[l], ln1b_ref[l])   # (rows, E_PAD)
        # one fused matmul produces [q | k | v] slabs, heads at natural lane offsets
        qkv = mm(h_in, wqkv_ref[l])                      # (rows, 384)
        qb = qkv[:, :E_PAD].reshape(batch_tile, seq_len, E_PAD)
        kb = qkv[:, E_PAD:2 * E_PAD].reshape(batch_tile, seq_len, E_PAD)
        vb = qkv[:, 2 * E_PAD:].reshape(batch_tile, seq_len, E_PAD)

        concat = None                                    # rebuilt head concat
        for h in range(N_HEAD):                          # static unroll, heads
            # masked q -> q_h . k_h exactly (other lanes of q are zeroed)
            qh = qb * head_masks[h][None]
            wei = jnp.einsum('btd,bsd->bts', qh, kb,
                             preferred_element_type=jnp.float32) * scale
            wei = wei + bias[None]
            wei = jnp.exp(wei - jnp.max(wei, axis=-1, keepdims=True))
            wei = wei * pl.reciprocal(jnp.sum(wei, axis=-1, keepdims=True),
                                      approx=True)
            attn = jnp.einsum('bts,bsd->btd', wei, vb,
                              preferred_element_type=jnp.float32)    # (bt,T,E_PAD)
            # keep only head h's lanes -> summing heads rebuilds the concat layout
            attn = attn * head_masks[h][None]
            concat = attn if concat is None else concat + attn
        sa = mm(concat.reshape(rows, E_PAD), wproj_ref[l]) + bproj_ref[l]
        x = x + sa

        # ---- feed-forward (Linear -> ReLU -> Linear) ----
        h2 = layer_norm(x, ln2g_ref[l], ln2b_ref[l])
        hidden = jnp.maximum(mm(h2, w1_ref[l]) + b1_ref[l], 0.0)
        x = x + mm(hidden, w2_ref[l]) + b2_ref[l]

    # ---- final layernorm + lm head (lane-dense, full-128-wide output store) ----
    xf = layer_norm(x, lnfg_ref[...], lnfb_ref[...])
    out_ref[...] = mm(xf, wlm_ref[...]) + blm_ref[...]


# ----------------------------------------------------------------------------
# parameter construction (unpadded, matches the PyTorch module / pure-JAX ref)
# ----------------------------------------------------------------------------
def init_params(key):
    ks = jax.random.split(key, 16)
    f32 = jnp.float32
    s = 0.02
    return dict(
        tok_table=jax.random.normal(ks[0], (VOCAB_SIZE, N_EMBD), f32) * s,
        pos_table=jax.random.normal(ks[1], (BLOCK_SIZE, N_EMBD), f32) * s,
        ln1g=jnp.ones((N_LAYERS, 1, N_EMBD), f32),
        ln1b=jnp.zeros((N_LAYERS, 1, N_EMBD), f32),
        wq=jax.random.normal(ks[2], (N_LAYERS, N_EMBD, N_EMBD), f32) * s,
        wk=jax.random.normal(ks[3], (N_LAYERS, N_EMBD, N_EMBD), f32) * s,
        wv=jax.random.normal(ks[4], (N_LAYERS, N_EMBD, N_EMBD), f32) * s,
        wproj=jax.random.normal(ks[5], (N_LAYERS, N_EMBD, N_EMBD), f32) * s,
        bproj=jax.random.normal(ks[6], (N_LAYERS, 1, N_EMBD), f32) * s,
        ln2g=jnp.ones((N_LAYERS, 1, N_EMBD), f32),
        ln2b=jnp.zeros((N_LAYERS, 1, N_EMBD), f32),
        w1=jax.random.normal(ks[7], (N_LAYERS, N_EMBD, 4 * N_EMBD), f32) * s,
        b1=jax.random.normal(ks[8], (N_LAYERS, 1, 4 * N_EMBD), f32) * s,
        w2=jax.random.normal(ks[9], (N_LAYERS, 4 * N_EMBD, N_EMBD), f32) * s,
        b2=jax.random.normal(ks[10], (N_LAYERS, 1, N_EMBD), f32) * s,
        lnfg=jnp.ones((1, N_EMBD), f32),
        lnfb=jnp.zeros((1, N_EMBD), f32),
        wlm=jax.random.normal(ks[11], (N_EMBD, VOCAB_SIZE), f32) * s,
        blm=jax.random.normal(ks[12], (1, VOCAB_SIZE), f32) * s,
    )


# ----------------------------------------------------------------------------
# one-time (hoisted) wrapper-side padding / weight re-layout
# ----------------------------------------------------------------------------
def _pad_last(a, n):
    widths = [(0, 0)] * (a.ndim - 1) + [(0, n - a.shape[-1])]
    return jnp.pad(a, widths)


def _pad_last2(a, r, c):
    widths = [(0, 0)] * (a.ndim - 2) + [(0, r - a.shape[-2]), (0, c - a.shape[-1])]
    return jnp.pad(a, widths)


def prepare_weights(p):
    """Pad / re-layout every parameter ONCE (hoisted out of the per-call path).

    The fused QKV weight is [q | k | v], each padded to a 128-lane slab with the
    3 heads at their natural 20-lane offsets inside the slab.  Padding is zero,
    so in-kernel masked-q per-head scores and masked-attn head concat are exact.
    """
    tok_pad = _pad_last(p['tok_table'].astype(jnp.float32), E_PAD)
    pos_pad = _pad_last(p['pos_table'].astype(jnp.float32), E_PAD)
    wqkv = jnp.concatenate(
        [_pad_last2(p['wq'], E_PAD, E_PAD),
         _pad_last2(p['wk'], E_PAD, E_PAD),
         _pad_last2(p['wv'], E_PAD, E_PAD)], axis=-1)       # (L, E_PAD, 384)
    weights = (
        _pad_last(p['ln1g'], E_PAD), _pad_last(p['ln1b'], E_PAD),
        wqkv,
        _pad_last2(p['wproj'], E_PAD, E_PAD), _pad_last(p['bproj'], E_PAD),
        _pad_last(p['ln2g'], E_PAD), _pad_last(p['ln2b'], E_PAD),
        _pad_last2(p['w1'], E_PAD, F_PAD), _pad_last(p['b1'], F_PAD),
        _pad_last2(p['w2'], F_PAD, E_PAD), _pad_last(p['b2'], E_PAD),
        _pad_last(p['lnfg'], E_PAD), _pad_last(p['lnfb'], E_PAD),
        _pad_last2(p['wlm'], E_PAD, V_PAD), _pad_last(p['blm'], V_PAD),
    )
    return tok_pad, pos_pad, weights


# ----------------------------------------------------------------------------
# generation-aware tuning
# ----------------------------------------------------------------------------
def _device_tuning():
    """(rows_per_step_cap, vmem_limit_bytes) based on the TPU generation."""
    try:
        kind = jax.devices()[0].device_kind.lower()
    except Exception:  # pragma: no cover
        kind = ""
    if "v7" in kind:                       # 64 MiB physical VMEM per TensorCore
        return 512, 48 * 1024 * 1024
    if any(t in kind for t in ("v5 lite", "v5e", "v6 lite", "v6e")):
        return 1024, 96 * 1024 * 1024      # 128 MiB physical VMEM
    return 1024, 32 * 1024 * 1024          # conservative default


def _plan_grid(B, T, rows_cap):
    """Return (batch_tile, padded_batch).

    Single grid step (block == full array) unless total rows exceed rows_cap;
    when splitting, the per-step row block (bb*T) is forced to a multiple of 8
    and the batch is padded up to a multiple of bb.
    """
    if B * T <= rows_cap:
        return B, B
    bb = max(1, rows_cap // T)
    while bb > 1 and (bb * T) % 8:
        bb -= 1
    if (bb * T) % 8:                       # cannot form an 8-aligned row block
        return B, B
    B_pad = -(-B // bb) * bb
    return bb, B_pad


# ----------------------------------------------------------------------------
# forward wrapper
# ----------------------------------------------------------------------------
@jax.jit
def ngram_forward(idx, tok_pad, pos_pad, weights):
    B, T = idx.shape
    rows_cap, vmem_limit = _device_tuning()
    bb, B_pad = _plan_grid(B, T, rows_cap)
    if B_pad != B:
        idx = jnp.pad(idx, ((0, B_pad - B), (0, 0)))       # dummy sequences

    # token/pos gather + causal bias are the only per-call XLA-side ops
    x = jnp.take(tok_pad, idx, axis=0) + pos_pad[:T][None]  # (B_pad, T, E_PAD)
    x = x.reshape(B_pad * T, E_PAD)
    causal = jnp.tril(jnp.ones((T, T), bool))
    bias = jnp.where(causal, 0.0, NEG_INF).astype(jnp.float32)

    rows = bb * T
    kernel = functools.partial(ngram_kernel, batch_tile=bb, seq_len=T)

    # TODO(synk): mark the 15 constant weight inputs single-buffered
    # (pipeline_mode=pl.Buffered(1)) once buffer_count=1 lowering is confirmed.
    def full_spec(a):
        nd = a.ndim
        return pl.BlockSpec(a.shape, lambda i, _n=nd: (0,) * _n)

    in_specs = ([pl.BlockSpec((rows, E_PAD), lambda i: (i, 0)), full_spec(bias)]
                + [full_spec(w) for w in weights])
    out_specs = pl.BlockSpec((rows, V_PAD), lambda i: (i, 0))

    logits = pl.pallas_call(
        kernel,
        out_shape=jax.ShapeDtypeStruct((B_pad * T, V_PAD), jnp.float32),
        grid=(B_pad // bb,),
        in_specs=in_specs,
        out_specs=out_specs,
        compiler_params=pltpu.CompilerParams(
            dimension_semantics=("parallel",),
            vmem_limit_bytes=vmem_limit),
    )(x, bias, *weights)

    # targets=None branch of the PyTorch forward -> loss is None; logits only.
    return logits.reshape(B_pad, T, V_PAD)[:B, :, :VOCAB_SIZE]


# ----------------------------------------------------------------------------
# pure-JAX reference for correctness checking
# ----------------------------------------------------------------------------
def ngram_forward_ref(idx, p):
    B, T = idx.shape
    x = jnp.take(p['tok_table'], idx, axis=0) + p['pos_table'][:T][None]
    scale = float(N_EMBD) ** -0.5
    causal = jnp.tril(jnp.ones((T, T), bool))

    def ln(x, g, b):
        mu = x.mean(-1, keepdims=True)
        var = ((x - mu) ** 2).mean(-1, keepdims=True)
        return (x - mu) / jnp.sqrt(var + LN_EPS) * g + b

    for l in range(N_LAYERS):
        h_in = ln(x, p['ln1g'][l], p['ln1b'][l])
        q = h_in @ p['wq'][l]
        k = h_in @ p['wk'][l]
        v = h_in @ p['wv'][l]
        outs = []
        for h in range(N_HEAD):
            sl = slice(h * HEAD_SIZE, (h + 1) * HEAD_SIZE)
            wei = jnp.einsum('btd,bsd->bts', q[..., sl], k[..., sl]) * scale
            wei = jnp.where(causal, wei, -jnp.inf)
            wei = jax.nn.softmax(wei, axis=-1)
            outs.append(jnp.einsum('bts,bsd->btd', wei, v[..., sl]))
        sa = jnp.concatenate(outs, -1) @ p['wproj'][l] + p['bproj'][l]
        x = x + sa
        h_in = ln(x, p['ln2g'][l], p['ln2b'][l])
        ff = jnp.maximum(h_in @ p['w1'][l] + p['b1'][l], 0.0) @ p['w2'][l] + p['b2'][l]
        x = x + ff
    x = ln(x, p['lnfg'], p['lnfb'])
    return x @ p['wlm'] + p['blm']


if __name__ == "__main__":
    key = jax.random.PRNGKey(0)
    pkey, ikey = jax.random.split(key)
    params = init_params(pkey)
    tok_pad, pos_pad, weights = prepare_weights(params)   # one-time weight re-layout

    B, T = 2, 8                    # small shapes; T <= block_size (20)
    idx = jax.random.randint(ikey, (B, T), 0, VOCAB_SIZE, dtype=jnp.int32)

    logits = ngram_forward(idx, tok_pad, pos_pad, weights)
    jax.block_until_ready(logits)

    ref = ngram_forward_ref(idx, params)
    np.testing.assert_allclose(np.asarray(logits), np.asarray(ref), rtol=2e-3, atol=2e-3)

    print("KERNEL_OK")
</pallas_src>

<mosaic_0001>
module attributes {stable_mosaic.version = 11 : i64} {
  func.func @ngram_kernel(%arg0: i32, %arg1: memref<16x128xf32, #tpu.memory_space<vmem>>, %arg2: memref<8x8xf32, #tpu.memory_space<vmem>>, %arg3: memref<3x1x128xf32, #tpu.memory_space<vmem>>, %arg4: memref<3x1x128xf32, #tpu.memory_space<vmem>>, %arg5: memref<3x128x384xf32, #tpu.memory_space<vmem>>, %arg6: memref<3x128x128xf32, #tpu.memory_space<vmem>>, %arg7: memref<3x1x128xf32, #tpu.memory_space<vmem>>, %arg8: memref<3x1x128xf32, #tpu.memory_space<vmem>>, %arg9: memref<3x1x128xf32, #tpu.memory_space<vmem>>, %arg10: memref<3x128x256xf32, #tpu.memory_space<vmem>>, %arg11: memref<3x1x256xf32, #tpu.memory_space<vmem>>, %arg12: memref<3x256x128xf32, #tpu.memory_space<vmem>>, %arg13: memref<3x1x128xf32, #tpu.memory_space<vmem>>, %arg14: memref<1x128xf32, #tpu.memory_space<vmem>>, %arg15: memref<1x128xf32, #tpu.memory_space<vmem>>, %arg16: memref<128x128xf32, #tpu.memory_space<vmem>>, %arg17: memref<1x128xf32, #tpu.memory_space<vmem>>, %arg18: memref<16x128xf32, #tpu.memory_space<vmem>>) attributes {dimension_semantics = [#tpu.dimension_semantics<parallel>], iteration_bounds = array<i64: 1>, scalar_prefetch = 0 : i64, scratch_operands = 0 : i64, tpu.core_type = #tpu.core_type<tc>, window_params = [{transform_indices = @transform_0, window_bounds = array<i64: 16, 128>}, {pipeline_mode = #tpu.pipeline_mode<synchronous>, transform_indices = @transform_1, window_bounds = array<i64: 8, 8>}, {pipeline_mode = #tpu.pipeline_mode<synchronous>, transform_indices = @transform_2, window_bounds = array<i64: 3, 1, 128>}, {pipeline_mode = #tpu.pipeline_mode<synchronous>, transform_indices = @transform_3, window_bounds = array<i64: 3, 1, 128>}, {pipeline_mode = #tpu.pipeline_mode<synchronous>, transform_indices = @transform_4, window_bounds = array<i64: 3, 128, 384>}, {pipeline_mode = #tpu.pipeline_mode<synchronous>, transform_indices = @transform_5, window_bounds = array<i64: 3, 128, 128>}, {pipeline_mode = #tpu.pipeline_mode<synchronous>, transform_indices = @transform_6, window_bounds = array<i64: 3, 1, 128>}, {pipeline_mode = #tpu.pipeline_mode<synchronous>, transform_indices = @transform_7, window_bounds = array<i64: 3, 1, 128>}, {pipeline_mode = #tpu.pipeline_mode<synchronous>, transform_indices = @transform_8, window_bounds = array<i64: 3, 1, 128>}, {pipeline_mode = #tpu.pipeline_mode<synchronous>, transform_indices = @transform_9, window_bounds = array<i64: 3, 128, 256>}, {pipeline_mode = #tpu.pipeline_mode<synchronous>, transform_indices = @transform_10, window_bounds = array<i64: 3, 1, 256>}, {pipeline_mode = #tpu.pipeline_mode<synchronous>, transform_indices = @transform_11, window_bounds = array<i64: 3, 256, 128>}, {pipeline_mode = #tpu.pipeline_mode<synchronous>, transform_indices = @transform_12, window_bounds = array<i64: 3, 1, 128>}, {pipeline_mode = #tpu.pipeline_mode<synchronous>, transform_indices = @transform_13, window_bounds = array<i64: 1, 128>}, {pipeline_mode = #tpu.pipeline_mode<synchronous>, transform_indices = @transform_14, window_bounds = array<i64: 1, 128>}, {pipeline_mode = #tpu.pipeline_mode<synchronous>, transform_indices = @transform_15, window_bounds = array<i64: 128, 128>}, {pipeline_mode = #tpu.pipeline_mode<synchronous>, transform_indices = @transform_16, window_bounds = array<i64: 1, 128>}, {transform_indices = @transform_17, window_bounds = array<i64: 16, 128>}]} {
    %c0 = arith.constant 0 : index
    %c0_0 = arith.constant 0 : index
    %0 = vector.load %arg1[%c0, %c0_0] : memref<16x128xf32, #tpu.memory_space<vmem>>, vector<16x128xf32>
    %c0_1 = arith.constant 0 : index
    %c0_2 = arith.constant 0 : index
    %1 = vector.load %arg2[%c0_1, %c0_2] : memref<8x8xf32, #tpu.memory_space<vmem>>, vector<8x8xf32>
    %2 = tpu.iota {dimensions = array<i32: 1>} : vector<1x128xi32>
    %c60_i32 = arith.constant 60 : i32
    %3 = vector.broadcast %c60_i32 : i32 to vector<1x128xi32>
    %4 = arith.cmpi slt, %2, %3 : vector<1x128xi32>
    %c0_i32 = arith.constant 0 : i32
    %5 = vector.broadcast %c0_i32 : i32 to vector<1x128xi32>
    %6 = arith.cmpi sge, %2, %5 : vector<1x128xi32>
    %c20_i32 = arith.constant 20 : i32
    %7 = vector.broadcast %c20_i32 : i32 to vector<1x128xi32>
    %8 = arith.cmpi slt, %2, %7 : vector<1x128xi32>
    %9 = arith.andi %6, %8 : vector<1x128xi1>
    %10 = arith.extui %9 : vector<1x128xi1> to vector<1x128xi32>
    %11 = arith.sitofp %10 : vector<1x128xi32> to vector<1x128xf32>
    %c20_i32_3 = arith.constant 20 : i32
    %12 = vector.broadcast %c20_i32_3 : i32 to vector<1x128xi32>
    %13 = arith.cmpi sge, %2, %12 : vector<1x128xi32>
    %c40_i32 = arith.constant 40 : i32
    %14 = vector.broadcast %c40_i32 : i32 to vector<1x128xi32>
    %15 = arith.cmpi slt, %2, %14 : vector<1x128xi32>
    %16 = arith.andi %13, %15 : vector<1x128xi1>
    %17 = arith.extui %16 : vector<1x128xi1> to vector<1x128xi32>
    %18 = arith.sitofp %17 : vector<1x128xi32> to vector<1x128xf32>
    %c40_i32_4 = arith.constant 40 : i32
    %19 = vector.broadcast %c40_i32_4 : i32 to vector<1x128xi32>
    %20 = arith.cmpi sge, %2, %19 : vector<1x128xi32>
    %c60_i32_5 = arith.constant 60 : i32
    %21 = vector.broadcast %c60_i32_5 : i32 to vector<1x128xi32>
    %22 = arith.cmpi slt, %2, %21 : vector<1x128xi32>
    %23 = arith.andi %20, %22 : vector<1x128xi1>
    %24 = arith.extui %23 : vector<1x128xi1> to vector<1x128xi32>
    %25 = arith.sitofp %24 : vector<1x128xi32> to vector<1x128xf32>
    %c0_6 = arith.constant 0 : index
    %c0_7 = arith.constant 0 : index
    %c0_8 = arith.constant 0 : index
    %26 = vector.load %arg3[%c0_6, %c0_7, %c0_8] : memref<3x1x128xf32, #tpu.memory_space<vmem>>, vector<1x1x128xf32>
    %27 = vector.shape_cast %26 : vector<1x1x128xf32> to vector<1x128xf32>
    %c0_9 = arith.constant 0 : index
    %c0_10 = arith.constant 0 : index
    %c0_11 = arith.constant 0 : index
    %28 = vector.load %arg4[%c0_9, %c0_10, %c0_11] : memref<3x1x128xf32, #tpu.memory_space<vmem>>, vector<1x1x128xf32>
    %29 = vector.shape_cast %28 : vector<1x1x128xf32> to vector<1x128xf32>
    %cst = arith.constant dense<0.000000e+00> : vector<16xf32>
    %30 = vector.multi_reduction <add>, %0, %cst [1] : vector<16x128xf32> to vector<16xf32>
    %31 = vector.shape_cast %30 : vector<16xf32> to vector<16x1xf32>
    %cst_12 = arith.constant 0.0166666675 : f32
    %32 = vector.broadcast %cst_12 : f32 to vector<16x1xf32>
    %33 = arith.mulf %31, %32 : vector<16x1xf32>
    %34 = vector.broadcast %33 : vector<16x1xf32> to vector<16x128xf32>
    %35 = arith.subf %0, %34 : vector<16x128xf32>
    %cst_13 = arith.constant 0.000000e+00 : f32
    %36 = vector.shape_cast %4 : vector<1x128xi1> to vector<1x128xi1>
    %37 = vector.broadcast %36 : vector<1x128xi1> to vector<16x128xi1>
    %38 = vector.broadcast %cst_13 : f32 to vector<16x128xf32>
    %39 = arith.select %37, %35, %38 : vector<16x128xi1>, vector<16x128xf32>
    %40 = arith.mulf %39, %39 : vector<16x128xf32>
    %cst_14 = arith.constant dense<0.000000e+00> : vector<16xf32>
    %41 = vector.multi_reduction <add>, %40, %cst_14 [1] : vector<16x128xf32> to vector<16xf32>
    %42 = vector.shape_cast %41 : vector<16xf32> to vector<16x1xf32>
    %cst_15 = arith.constant 0.0166666675 : f32
    %43 = vector.broadcast %cst_15 : f32 to vector<16x1xf32>
    %44 = arith.mulf %42, %43 : vector<16x1xf32>
    %cst_16 = arith.constant 9.99999974E-6 : f32
    %45 = vector.broadcast %cst_16 : f32 to vector<16x1xf32>
    %46 = arith.addf %44, %45 : vector<16x1xf32>
    %47 = math.rsqrt %46 : vector<16x1xf32>
    %48 = vector.broadcast %47 : vector<16x1xf32> to vector<16x128xf32>
    %49 = arith.mulf %39, %48 : vector<16x128xf32>
    %50 = vector.broadcast %27 : vector<1x128xf32> to vector<16x128xf32>
    %51 = arith.mulf %49, %50 : vector<16x128xf32>
    %52 = vector.broadcast %29 : vector<1x128xf32> to vector<16x128xf32>
    %53 = arith.addf %51, %52 : vector<16x128xf32>
    %c0_17 = arith.constant 0 : index
    %c0_18 = arith.constant 0 : index
    %c0_19 = arith.constant 0 : index
    %54 = vector.load %arg5[%c0_17, %c0_18, %c0_19] : memref<3x128x384xf32, #tpu.memory_space<vmem>>, vector<1x128x384xf32>
    %55 = vector.shape_cast %54 : vector<1x128x384xf32> to vector<128x384xf32>
    %cst_20 = arith.constant dense<0.000000e+00> : vector<16x384xf32>
    %56 = tpu.matmul %53, %55, %cst_20 {dimension_numbers = #tpu.dot_dimension_numbers<[1], [0], [0], [1], [0, 0, 1, 1], [], []>} : vector<16x128xf32>, vector<128x384xf32>, vector<16x384xf32> -> vector<16x384xf32>
    %57 = vector.extract_strided_slice %56 {offsets = [0, 0], sizes = [16, 128], strides = [1, 1]} : vector<16x384xf32> to vector<16x128xf32>
    %58 = vector.shape_cast %57 : vector<16x128xf32> to vector<2x8x128xf32>
    %59 = vector.extract_strided_slice %56 {offsets = [0, 128], sizes = [16, 128], strides = [1, 1]} : vector<16x384xf32> to vector<16x128xf32>
    %60 = vector.shape_cast %59 : vector<16x128xf32> to vector<2x8x128xf32>
    %61 = vector.extract_strided_slice %56 {offsets = [0, 256], sizes = [16, 128], strides = [1, 1]} : vector<16x384xf32> to vector<16x128xf32>
    %62 = vector.shape_cast %61 : vector<16x128xf32> to vector<2x8x128xf32>
    %63 = vector.shape_cast %11 : vector<1x128xf32> to vector<1x1x128xf32>
    %64 = vector.broadcast %63 : vector<1x1x128xf32> to vector<2x8x128xf32>
    %65 = arith.mulf %58, %64 : vector<2x8x128xf32>
    "tpu.trace_start"() <{level = 10 : i32, message = "btd,bsd->bts"}> : () -> ()
    %cst_21 = arith.constant dense<0.000000e+00> : vector<2x8x8xf32>
    %66 = tpu.matmul %65, %60, %cst_21 {dimension_numbers = #tpu.dot_dimension_numbers<[2], [2], [1], [1], [0, 0, 0, 1, 1, 1], [0], [0]>} : vector<2x8x128xf32>, vector<2x8x128xf32>, vector<2x8x8xf32> -> vector<2x8x8xf32>
    "tpu.trace_stop"() : () -> ()
    %cst_22 = arith.constant 0.129099444 : f32
    %67 = vector.broadcast %cst_22 : f32 to vector<2x8x8xf32>
    %68 = arith.mulf %66, %67 : vector<2x8x8xf32>
    %69 = vector.shape_cast %1 : vector<8x8xf32> to vector<1x8x8xf32>
    %70 = vector.broadcast %69 : vector<1x8x8xf32> to vector<2x8x8xf32>
    %71 = arith.addf %68, %70 : vector<2x8x8xf32>
    %cst_23 = arith.constant dense<0xFF800000> : vector<2x8xf32>
    %72 = vector.multi_reduction <maximumf>, %71, %cst_23 [2] : vector<2x8x8xf32> to vector<2x8xf32>
    %73 = vector.shape_cast %72 : vector<2x8xf32> to vector<2x8x1xf32>
    %74 = vector.broadcast %73 : vector<2x8x1xf32> to vector<2x8x8xf32>
    %75 = arith.subf %71, %74 : vector<2x8x8xf32>
    %76 = math.exp %75 : vector<2x8x8xf32>
    %cst_24 = arith.constant dense<0.000000e+00> : vector<2x8xf32>
    %77 = vector.multi_reduction <add>, %76, %cst_24 [2] : vector<2x8x8xf32> to vector<2x8xf32>
    %78 = vector.shape_cast %77 : vector<2x8xf32> to vector<2x8x1xf32>
    %79 = tpu.reciprocal %78 {approx = true} : vector<2x8x1xf32> -> vector<2x8x1xf32>
    %80 = vector.broadcast %79 : vector<2x8x1xf32> to vector<2x8x8xf32>
    %81 = arith.mulf %76, %80 : vector<2x8x8xf32>
    "tpu.trace_start"() <{level = 10 : i32, message = "bts,bsd->btd"}> : () -> ()
    %cst_25 = arith.constant dense<0.000000e+00> : vector<2x8x128xf32>
    %82 = tpu.matmul %81, %62, %cst_25 {dimension_numbers = #tpu.dot_dimension_numbers<[2], [1], [1], [2], [0, 0, 0, 1, 1, 2], [0], [0]>} : vector<2x8x8xf32>, vector<2x8x128xf32>, vector<2x8x128xf32> -> vector<2x8x128xf32>
    "tpu.trace_stop"() : () -> ()
    %83 = vector.shape_cast %11 : vector<1x128xf32> to vector<1x1x128xf32>
    %84 = vector.broadcast %83 : vector<1x1x128xf32> to vector<2x8x128xf32>
    %85 = arith.mulf %82, %84 : vector<2x8x128xf32>
    %86 = vector.shape_cast %18 : vector<1x128xf32> to vector<1x1x128xf32>
    %87 = vector.broadcast %86 : vector<1x1x128xf32> to vector<2x8x128xf32>
    %88 = arith.mulf %58, %87 : vector<2x8x128xf32>
    "tpu.trace_start"() <{level = 10 : i32, message = "btd,bsd->bts"}> : () -> ()
    %cst_26 = arith.constant dense<0.000000e+00> : vector<2x8x8xf32>
    %89 = tpu.matmul %88, %60, %cst_26 {dimension_numbers = #tpu.dot_dimension_numbers<[2], [2], [1], [1], [0, 0, 0, 1, 1, 1], [0], [0]>} : vector<2x8x128xf32>, vector<2x8x128xf32>, vector<2x8x8xf32> -> vector<2x8x8xf32>
    "tpu.trace_stop"() : () -> ()
    %cst_27 = arith.constant 0.129099444 : f32
    %90 = vector.broadcast %cst_27 : f32 to vector<2x8x8xf32>
    %91 = arith.mulf %89, %90 : vector<2x8x8xf32>
    %92 = vector.shape_cast %1 : vector<8x8xf32> to vector<1x8x8xf32>
    %93 = vector.broadcast %92 : vector<1x8x8xf32> to vector<2x8x8xf32>
    %94 = arith.addf %91, %93 : vector<2x8x8xf32>
    %cst_28 = arith.constant dense<0xFF800000> : vector<2x8xf32>
    %95 = vector.multi_reduction <maximumf>, %94, %cst_28 [2] : vector<2x8x8xf32> to vector<2x8xf32>
    %96 = vector.shape_cast %95 : vector<2x8xf32> to vector<2x8x1xf32>
    %97 = vector.broadcast %96 : vector<2x8x1xf32> to vector<2x8x8xf32>
    %98 = arith.subf %94, %97 : vector<2x8x8xf32>
    %99 = math.exp %98 : vector<2x8x8xf32>
    %cst_29 = arith.constant dense<0.000000e+00> : vector<2x8xf32>
    %100 = vector.multi_reduction <add>, %99, %cst_29 [2] : vector<2x8x8xf32> to vector<2x8xf32>
    %101 = vector.shape_cast %100 : vector<2x8xf32> to vector<2x8x1xf32>
    %102 = tpu.reciprocal %101 {approx = true} : vector<2x8x1xf32> -> vector<2x8x1xf32>
    %103 = vector.broadcast %102 : vector<2x8x1xf32> to vector<2x8x8xf32>
    %104 = arith.mulf %99, %103 : vector<2x8x8xf32>
    "tpu.trace_start"() <{level = 10 : i32, message = "bts,bsd->btd"}> : () -> ()
    %cst_30 = arith.constant dense<0.000000e+00> : vector<2x8x128xf32>
    %105 = tpu.matmul %104, %62, %cst_30 {dimension_numbers = #tpu.dot_dimension_numbers<[2], [1], [1], [2], [0, 0, 0, 1, 1, 2], [0], [0]>} : vector<2x8x8xf32>, vector<2x8x128xf32>, vector<2x8x128xf32> -> vector<2x8x128xf32>
    "tpu.trace_stop"() : () -> ()
    %106 = vector.shape_cast %18 : vector<1x128xf32> to vector<1x1x128xf32>
    %107 = vector.broadcast %106 : vector<1x1x128xf32> to vector<2x8x128xf32>
    %108 = arith.mulf %105, %107 : vector<2x8x128xf32>
    %109 = arith.addf %85, %108 : vector<2x8x128xf32>
    %110 = vector.shape_cast %25 : vector<1x128xf32> to vector<1x1x128xf32>
    %111 = vector.broadcast %110 : vector<1x1x128xf32> to vector<2x8x128xf32>
    %112 = arith.mulf %58, %111 : vector<2x8x128xf32>
    "tpu.trace_start"() <{level = 10 : i32, message = "btd,bsd->bts"}> : () -> ()
    %cst_31 = arith.constant dense<0.000000e+00> : vector<2x8x8xf32>
    %113 = tpu.matmul %112, %60, %cst_31 {dimension_numbers = #tpu.dot_dimension_numbers<[2], [2], [1], [1], [0, 0, 0, 1, 1, 1], [0], [0]>} : vector<2x8x128xf32>, vector<2x8x128xf32>, vector<2x8x8xf32> -> vector<2x8x8xf32>
    "tpu.trace_stop"() : () -> ()
    %cst_32 = arith.constant 0.129099444 : f32
    %114 = vector.broadcast %cst_32 : f32 to vector<2x8x8xf32>
    %115 = arith.mulf %113, %114 : vector<2x8x8xf32>
    %116 = vector.shape_cast %1 : vector<8x8xf32> to vector<1x8x8xf32>
    %117 = vector.broadcast %116 : vector<1x8x8xf32> to vector<2x8x8xf32>
    %118 = arith.addf %115, %117 : vector<2x8x8xf32>
    %cst_33 = arith.constant dense<0xFF800000> : vector<2x8xf32>
    %119 = vector.multi_reduction <maximumf>, %118, %cst_33 [2] : vector<2x8x8xf32> to vector<2x8xf32>
    %120 = vector.shape_cast %119 : vector<2x8xf32> to vector<2x8x1xf32>
    %121 = vector.broadcast %120 : vector<2x8x1xf32> to vector<2x8x8xf32>
    %122 = arith.subf %118, %121 : vector<2x8x8xf32>
    %123 = math.exp %122 : vector<2x8x8xf32>
    %cst_34 = arith.constant dense<0.000000e+00> : vector<2x8xf32>
    %124 = vector.multi_reduction <add>, %123, %cst_34 [2] : vector<2x8x8xf32> to vector<2x8xf32>
    %125 = vector.shape_cast %124 : vector<2x8xf32> to vector<2x8x1xf32>
    %126 = tpu.reciprocal %125 {approx = true} : vector<2x8x1xf32> -> vector<2x8x1xf32>
    %127 = vector.broadcast %126 : vector<2x8x1xf32> to vector<2x8x8xf32>
    %128 = arith.mulf %123, %127 : vector<2x8x8xf32>
    "tpu.trace_start"() <{level = 10 : i32, message = "bts,bsd->btd"}> : () -> ()
    %cst_35 = arith.constant dense<0.000000e+00> : vector<2x8x128xf32>
    %129 = tpu.matmul %128, %62, %cst_35 {dimension_numbers = #tpu.dot_dimension_numbers<[2], [1], [1], [2], [0, 0, 0, 1, 1, 2], [0], [0]>} : vector<2x8x8xf32>, vector<2x8x128xf32>, vector<2x8x128xf32> -> vector<2x8x128xf32>
    "tpu.trace_stop"() : () -> ()
    %130 = vector.shape_cast %25 : vector<1x128xf32> to vector<1x1x128xf32>
    %131 = vector.broadcast %130 : vector<1x1x128xf32> to vector<2x8x128xf32>
    %132 = arith.mulf %129, %131 : vector<2x8x128xf32>
    %133 = arith.addf %109, %132 : vector<2x8x128xf32>
    %134 = vector.shape_cast %133 : vector<2x8x128xf32> to vector<16x128xf32>
    %c0_36 = arith.constant 0 : index
    %c0_37 = arith.constant 0 : index
    %c0_38 = arith.constant 0 : index
    %135 = vector.load %arg6[%c0_36, %c0_37, %c0_38] : memref<3x128x128xf32, #tpu.memory_space<vmem>>, vector<1x128x128xf32>
    %136 = vector.shape_cast %135 : vector<1x128x128xf32> to vector<128x128xf32>
    %cst_39 = arith.constant dense<0.000000e+00> : vector<16x128xf32>
    %137 = tpu.matmul %134, %136, %cst_39 {dimension_numbers = #tpu.dot_dimension_numbers<[1], [0], [0], [1], [0, 0, 1, 1], [], []>} : vector<16x128xf32>, vector<128x128xf32>, vector<16x128xf32> -> vector<16x128xf32>
    %c0_40 = arith.constant 0 : index
    %c0_41 = arith.constant 0 : index
    %c0_42 = arith.constant 0 : index
    %138 = vector.load %arg7[%c0_40, %c0_41, %c0_42] : memref<3x1x128xf32, #tpu.memory_space<vmem>>, vector<1x1x128xf32>
    %139 = vector.shape_cast %138 : vector<1x1x128xf32> to vector<1x128xf32>
    %140 = vector.broadcast %139 : vector<1x128xf32> to vector<16x128xf32>
    %141 = arith.addf %137, %140 : vector<16x128xf32>
    %142 = arith.addf %0, %141 : vector<16x128xf32>
    %c0_43 = arith.constant 0 : index
    %c0_44 = arith.constant 0 : index
    %c0_45 = arith.constant 0 : index
    %143 = vector.load %arg8[%c0_43, %c0_44, %c0_45] : memref<3x1x128xf32, #tpu.memory_space<vmem>>, vector<1x1x128xf32>
    %144 = vector.shape_cast %143 : vector<1x1x128xf32> to vector<1x128xf32>
    %c0_46 = arith.constant 0 : index
    %c0_47 = arith.constant 0 : index
    %c0_48 = arith.constant 0 : index
    %145 = vector.load %arg9[%c0_46, %c0_47, %c0_48] : memref<3x1x128xf32, #tpu.memory_space<vmem>>, vector<1x1x128xf32>
    %146 = vector.shape_cast %145 : vector<1x1x128xf32> to vector<1x128xf32>
    %cst_49 = arith.constant dense<0.000000e+00> : vector<16xf32>
    %147 = vector.multi_reduction <add>, %142, %cst_49 [1] : vector<16x128xf32> to vector<16xf32>
    %148 = vector.shape_cast %147 : vector<16xf32> to vector<16x1xf32>
    %cst_50 = arith.constant 0.0166666675 : f32
    %149 = vector.broadcast %cst_50 : f32 to vector<16x1xf32>
    %150 = arith.mulf %148, %149 : vector<16x1xf32>
    %151 = vector.broadcast %150 : vector<16x1xf32> to vector<16x128xf32>
    %152 = arith.subf %142, %151 : vector<16x128xf32>
    %cst_51 = arith.constant 0.000000e+00 : f32
    %153 = vector.shape_cast %4 : vector<1x128xi1> to vector<1x128xi1>
    %154 = vector.broadcast %153 : vector<1x128xi1> to vector<16x128xi1>
    %155 = vector.broadcast %cst_51 : f32 to vector<16x128xf32>
    %156 = arith.select %154, %152, %155 : vector<16x128xi1>, vector<16x128xf32>
    %157 = arith.mulf %156, %156 : vector<16x128xf32>
    %cst_52 = arith.constant dense<0.000000e+00> : vector<16xf32>
    %158 = vector.multi_reduction <add>, %157, %cst_52 [1] : vector<16x128xf32> to vector<16xf32>
    %159 = vector.shape_cast %158 : vector<16xf32> to vector<16x1xf32>
    %cst_53 = arith.constant 0.0166666675 : f32
    %160 = vector.broadcast %cst_53 : f32 to vector<16x1xf32>
    %161 = arith.mulf %159, %160 : vector<16x1xf32>
    %cst_54 = arith.constant 9.99999974E-6 : f32
    %162 = vector.broadcast %cst_54 : f32 to vector<16x1xf32>
    %163 = arith.addf %161, %162 : vector<16x1xf32>
    %164 = math.rsqrt %163 : vector<16x1xf32>
    %165 = vector.broadcast %164 : vector<16x1xf32> to vector<16x128xf32>
    %166 = arith.mulf %156, %165 : vector<16x128xf32>
    %167 = vector.broadcast %144 : vector<1x128xf32> to vector<16x128xf32>
    %168 = arith.mulf %166, %167 : vector<16x128xf32>
    %169 = vector.broadcast %146 : vector<1x128xf32> to vector<16x128xf32>
    %170 = arith.addf %168, %169 : vector<16x128xf32>
    %c0_55 = arith.constant 0 : index
    %c0_56 = arith.constant 0 : index
    %c0_57 = arith.constant 0 : index
    %171 = vector.load %arg10[%c0_55, %c0_56, %c0_57] : memref<3x128x256xf32, #tpu.memory_space<vmem>>, vector<1x128x256xf32>
    %172 = vector.shape_cast %171 : vector<1x128x256xf32> to vector<128x256xf32>
    %cst_58 = arith.constant dense<0.000000e+00> : vector<16x256xf32>
    %173 = tpu.matmul %170, %172, %cst_58 {dimension_numbers = #tpu.dot_dimension_numbers<[1], [0], [0], [1], [0, 0, 1, 1], [], []>} : vector<16x128xf32>, vector<128x256xf32>, vector<16x256xf32> -> vector<16x256xf32>
    %c0_59 = arith.constant 0 : index
    %c0_60 = arith.constant 0 : index
    %c0_61 = arith.constant 0 : index
    %174 = vector.load %arg11[%c0_59, %c0_60, %c0_61] : memref<3x1x256xf32, #tpu.memory_space<vmem>>, vector<1x1x256xf32>
    %175 = vector.shape_cast %174 : vector<1x1x256xf32> to vector<1x256xf32>
    %176 = vector.broadcast %175 : vector<1x256xf32> to vector<16x256xf32>
    %177 = arith.addf %173, %176 : vector<16x256xf32>
    %cst_62 = arith.constant 0.000000e+00 : f32
    %178 = vector.broadcast %cst_62 : f32 to vector<16x256xf32>
    %179 = arith.maximumf %177, %178 : vector<16x256xf32>
    %c0_63 = arith.constant 0 : index
    %c0_64 = arith.constant 0 : index
    %c0_65 = arith.constant 0 : index
    %180 = vector.load %arg12[%c0_63, %c0_64, %c0_65] : memref<3x256x128xf32, #tpu.memory_space<vmem>>, vector<1x256x128xf32>
    %181 = vector.shape_cast %180 : vector<1x256x128xf32> to vector<256x128xf32>
    %cst_66 = arith.constant dense<0.000000e+00> : vector<16x128xf32>
    %182 = tpu.matmul %179, %181, %cst_66 {dimension_numbers = #tpu.dot_dimension_numbers<[1], [0], [0], [1], [0, 0, 1, 1], [], []>} : vector<16x256xf32>, vector<256x128xf32>, vector<16x128xf32> -> vector<16x128xf32>
    %183 = arith.addf %142, %182 : vector<16x128xf32>
    %c0_67 = arith.constant 0 : index
    %c0_68 = arith.constant 0 : index
    %c0_69 = arith.constant 0 : index
    %184 = vector.load %arg13[%c0_67, %c0_68, %c0_69] : memref<3x1x128xf32, #tpu.memory_space<vmem>>, vector<1x1x128xf32>
    %185 = vector.shape_cast %184 : vector<1x1x128xf32> to vector<1x128xf32>
    %186 = vector.broadcast %185 : vector<1x128xf32> to vector<16x128xf32>
    %187 = arith.addf %183, %186 : vector<16x128xf32>
    %c1 = arith.constant 1 : index
    %c0_70 = arith.constant 0 : index
    %c0_71 = arith.constant 0 : index
    %188 = vector.load %arg3[%c1, %c0_70, %c0_71] : memref<3x1x128xf32, #tpu.memory_space<vmem>>, vector<1x1x128xf32>
    %189 = vector.shape_cast %188 : vector<1x1x128xf32> to vector<1x128xf32>
    %c1_72 = arith.constant 1 : index
    %c0_73 = arith.constant 0 : index
    %c0_74 = arith.constant 0 : index
    %190 = vector.load %arg4[%c1_72, %c0_73, %c0_74] : memref<3x1x128xf32, #tpu.memory_space<vmem>>, vector<1x1x128xf32>
    %191 = vector.shape_cast %190 : vector<1x1x128xf32> to vector<1x128xf32>
    %cst_75 = arith.constant dense<0.000000e+00> : vector<16xf32>
    %192 = vector.multi_reduction <add>, %187, %cst_75 [1] : vector<16x128xf32> to vector<16xf32>
    %193 = vector.shape_cast %192 : vector<16xf32> to vector<16x1xf32>
    %cst_76 = arith.constant 0.0166666675 : f32
    %194 = vector.broadcast %cst_76 : f32 to vector<16x1xf32>
    %195 = arith.mulf %193, %194 : vector<16x1xf32>
    %196 = vector.broadcast %195 : vector<16x1xf32> to vector<16x128xf32>
    %197 = arith.subf %187, %196 : vector<16x128xf32>
    %cst_77 = arith.constant 0.000000e+00 : f32
    %198 = vector.shape_cast %4 : vector<1x128xi1> to vector<1x128xi1>
    %199 = vector.broadcast %198 : vector<1x128xi1> to vector<16x128xi1>
    %200 = vector.broadcast %cst_77 : f32 to vector<16x128xf32>
    %201 = arith.select %199, %197, %200 : vector<16x128xi1>, vector<16x128xf32>
    %202 = arith.mulf %201, %201 : vector<16x128xf32>
    %cst_78 = arith.constant dense<0.000000e+00> : vector<16xf32>
    %203 = vector.multi_reduction <add>, %202, %cst_78 [1] : vector<16x128xf32> to vector<16xf32>
    %204 = vector.shape_cast %203 : vector<16xf32> to vector<16x1xf32>
    %cst_79 = arith.constant 0.0166666675 : f32
    %205 = vector.broadcast %cst_79 : f32 to vector<16x1xf32>
    %206 = arith.mulf %204, %205 : vector<16x1xf32>
    %cst_80 = arith.constant 9.99999974E-6 : f32
    %207 = vector.broadcast %cst_80 : f32 to vector<16x1xf32>
    %208 = arith.addf %206, %207 : vector<16x1xf32>
    %209 = math.rsqrt %208 : vector<16x1xf32>
    %210 = vector.broadcast %209 : vector<16x1xf32> to vector<16x128xf32>
    %211 = arith.mulf %201, %210 : vector<16x128xf32>
    %212 = vector.broadcast %189 : vector<1x128xf32> to vector<16x128xf32>
    %213 = arith.mulf %211, %212 : vector<16x128xf32>
    %214 = vector.broadcast %191 : vector<1x128xf32> to vector<16x128xf32>
    %215 = arith.addf %213, %214 : vector<16x128xf32>
    %c1_81 = arith.constant 1 : index
    %c0_82 = arith.constant 0 : index
    %c0_83 = arith.constant 0 : index
    %216 = vector.load %arg5[%c1_81, %c0_82, %c0_83] : memref<3x128x384xf32, #tpu.memory_space<vmem>>, vector<1x128x384xf32>
    %217 = vector.shape_cast %216 : vector<1x128x384xf32> to vector<128x384xf32>
    %cst_84 = arith.constant dense<0.000000e+00> : vector<16x384xf32>
    %218 = tpu.matmul %215, %217, %cst_84 {dimension_numbers = #tpu.dot_dimension_numbers<[1], [0], [0], [1], [0, 0, 1, 1], [], []>} : vector<16x128xf32>, vector<128x384xf32>, vector<16x384xf32> -> vector<16x384xf32>
    %219 = vector.extract_strided_slice %218 {offsets = [0, 0], sizes = [16, 128], strides = [1, 1]} : vector<16x384xf32> to vector<16x128xf32>
    %220 = vector.shape_cast %219 : vector<16x128xf32> to vector<2x8x128xf32>
    %221 = vector.extract_strided_slice %218 {offsets = [0, 128], sizes = [16, 128], strides = [1, 1]} : vector<16x384xf32> to vector<16x128xf32>
    %222 = vector.shape_cast %221 : vector<16x128xf32> to vector<2x8x128xf32>
    %223 = vector.extract_strided_slice %218 {offsets = [0, 256], sizes = [16, 128], strides = [1, 1]} : vector<16x384xf32> to vector<16x128xf32>
    %224 = vector.shape_cast %223 : vector<16x128xf32> to vector<2x8x128xf32>
    %225 = vector.shape_cast %11 : vector<1x128xf32> to vector<1x1x128xf32>
    %226 = vector.broadcast %225 : vector<1x1x128xf32> to vector<2x8x128xf32>
    %227 = arith.mulf %220, %226 : vector<2x8x128xf32>
    "tpu.trace_start"() <{level = 10 : i32, message = "btd,bsd->bts"}> : () -> ()
    %cst_85 = arith.constant dense<0.000000e+00> : vector<2x8x8xf32>
    %228 = tpu.matmul %227, %222, %cst_85 {dimension_numbers = #tpu.dot_dimension_numbers<[2], [2], [1], [1], [0, 0, 0, 1, 1, 1], [0], [0]>} : vector<2x8x128xf32>, vector<2x8x128xf32>, vector<2x8x8xf32> -> vector<2x8x8xf32>
    "tpu.trace_stop"() : () -> ()
    %cst_86 = arith.constant 0.129099444 : f32
    %229 = vector.broadcast %cst_86 : f32 to vector<2x8x8xf32>
    %230 = arith.mulf %228, %229 : vector<2x8x8xf32>
    %231 = vector.shape_cast %1 : vector<8x8xf32> to vector<1x8x8xf32>
    %232 = vector.broadcast %231 : vector<1x8x8xf32> to vector<2x8x8xf32>
    %233 = arith.addf %230, %232 : vector<2x8x8xf32>
    %cst_87 = arith.constant dense<0xFF800000> : vector<2x8xf32>
    %234 = vector.multi_reduction <maximumf>, %233, %cst_87 [2] : vector<2x8x8xf32> to vector<2x8xf32>
    %235 = vector.shape_cast %234 : vector<2x8xf32> to vector<2x8x1xf32>
    %236 = vector.broadcast %235 : vector<2x8x1xf32> to vector<2x8x8xf32>
    %237 = arith.subf %233, %236 : vector<2x8x8xf32>
    %238 = math.exp %237 : vector<2x8x8xf32>
    %cst_88 = arith.constant dense<0.000000e+00> : vector<2x8xf32>
    %239 = vector.multi_reduction <add>, %238, %cst_88 [2] : vector<2x8x8xf32> to vector<2x8xf32>
    %240 = vector.shape_cast %239 : vector<2x8xf32> to vector<2x8x1xf32>
    %241 = tpu.reciprocal %240 {approx = true} : vector<2x8x1xf32> -> vector<2x8x1xf32>
    %242 = vector.broadcast %241 : vector<2x8x1xf32> to vector<2x8x8xf32>
    %243 = arith.mulf %238, %242 : vector<2x8x8xf32>
    "tpu.trace_start"() <{level = 10 : i32, message = "bts,bsd->btd"}> : () -> ()
    %cst_89 = arith.constant dense<0.000000e+00> : vector<2x8x128xf32>
    %244 = tpu.matmul %243, %224, %cst_89 {dimension_numbers = #tpu.dot_dimension_numbers<[2], [1], [1], [2], [0, 0, 0, 1, 1, 2], [0], [0]>} : vector<2x8x8xf32>, vector<2x8x128xf32>, vector<2x8x128xf32> -> vector<2x8x128xf32>
    "tpu.trace_stop"() : () -> ()
    %245 = vector.shape_cast %11 : vector<1x128xf32> to vector<1x1x128xf32>
    %246 = vector.broadcast %245 : vector<1x1x128xf32> to vector<2x8x128xf32>
    %247 = arith.mulf %244, %246 : vector<2x8x128xf32>
    %248 = vector.shape_cast %18 : vector<1x128xf32> to vector<1x1x128xf32>
    %249 = vector.broadcast %248 : vector<1x1x128xf32> to vector<2x8x128xf32>
    %250 = arith.mulf %220, %249 : vector<2x8x128xf32>
    "tpu.trace_start"() <{level = 10 : i32, message = "btd,bsd->bts"}> : () -> ()
    %cst_90 = arith.constant dense<0.000000e+00> : vector<2x8x8xf32>
    %251 = tpu.matmul %250, %222, %cst_90 {dimension_numbers = #tpu.dot_dimension_numbers<[2], [2], [1], [1], [0, 0, 0, 1, 1, 1], [0], [0]>} : vector<2x8x128xf32>, vector<2x8x128xf32>, vector<2x8x8xf32> -> vector<2x8x8xf32>
    "tpu.trace_stop"() : () -> ()
    %cst_91 = arith.constant 0.129099444 : f32
    %252 = vector.broadcast %cst_91 : f32 to vector<2x8x8xf32>
    %253 = arith.mulf %251, %252 : vector<2x8x8xf32>
    %254 = vector.shape_cast %1 : vector<8x8xf32> to vector<1x8x8xf32>
    %255 = vector.broadcast %254 : vector<1x8x8xf32> to vector<2x8x8xf32>
    %256 = arith.addf %253, %255 : vector<2x8x8xf32>
    %cst_92 = arith.constant dense<0xFF800000> : vector<2x8xf32>
    %257 = vector.multi_reduction <maximumf>, %256, %cst_92 [2] : vector<2x8x8xf32> to vector<2x8xf32>
    %258 = vector.shape_cast %257 : vector<2x8xf32> to vector<2x8x1xf32>
    %259 = vector.broadcast %258 : vector<2x8x1xf32> to vector<2x8x8xf32>
    %260 = arith.subf %256, %259 : vector<2x8x8xf32>
    %261 = math.exp %260 : vector<2x8x8xf32>
    %cst_93 = arith.constant dense<0.000000e+00> : vector<2x8xf32>
    %262 = vector.multi_reduction <add>, %261, %cst_93 [2] : vector<2x8x8xf32> to vector<2x8xf32>
    %263 = vector.shape_cast %262 : vector<2x8xf32> to vector<2x8x1xf32>
    %264 = tpu.reciprocal %263 {approx = true} : vector<2x8x1xf32> -> vector<2x8x1xf32>
    %265 = vector.broadcast %264 : vector<2x8x1xf32> to vector<2x8x8xf32>
    %266 = arith.mulf %261, %265 : vector<2x8x8xf32>
    "tpu.trace_start"() <{level = 10 : i32, message = "bts,bsd->btd"}> : () -> ()
    %cst_94 = arith.constant dense<0.000000e+00> : vector<2x8x128xf32>
    %267 = tpu.matmul %266, %224, %cst_94 {dimension_numbers = #tpu.dot_dimension_numbers<[2], [1], [1], [2], [0, 0, 0, 1, 1, 2], [0], [0]>} : vector<2x8x8xf32>, vector<2x8x128xf32>, vector<2x8x128xf32> -> vector<2x8x128xf32>
    "tpu.trace_stop"() : () -> ()
    %268 = vector.shape_cast %18 : vector<1x128xf32> to vector<1x1x128xf32>
    %269 = vector.broadcast %268 : vector<1x1x128xf32> to vector<2x8x128xf32>
    %270 = arith.mulf %267, %269 : vector<2x8x128xf32>
    %271 = arith.addf %247, %270 : vector<2x8x128xf32>
    %272 = vector.shape_cast %25 : vector<1x128xf32> to vector<1x1x128xf32>
    %273 = vector.broadcast %272 : vector<1x1x128xf32> to vector<2x8x128xf32>
    %274 = arith.mulf %220, %273 : vector<2x8x128xf32>
    "tpu.trace_start"() <{level = 10 : i32, message = "btd,bsd->bts"}> : () -> ()
    %cst_95 = arith.constant dense<0.000000e+00> : vector<2x8x8xf32>
    %275 = tpu.matmul %274, %222, %cst_95 {dimension_numbers = #tpu.dot_dimension_numbers<[2], [2], [1], [1], [0, 0, 0, 1, 1, 1], [0], [0]>} : vector<2x8x128xf32>, vector<2x8x128xf32>, vector<2x8x8xf32> -> vector<2x8x8xf32>
    "tpu.trace_stop"() : () -> ()
    %cst_96 = arith.constant 0.129099444 : f32
    %276 = vector.broadcast %cst_96 : f32 to vector<2x8x8xf32>
    %277 = arith.mulf %275, %276 : vector<2x8x8xf32>
    %278 = vector.shape_cast %1 : vector<8x8xf32> to vector<1x8x8xf32>
    %279 = vector.broadcast %278 : vector<1x8x8xf32> to vector<2x8x8xf32>
    %280 = arith.addf %277, %279 : vector<2x8x8xf32>
    %cst_97 = arith.constant dense<0xFF800000> : vector<2x8xf32>
    %281 = vector.multi_reduction <maximumf>, %280, %cst_97 [2] : vector<2x8x8xf32> to vector<2x8xf32>
    %282 = vector.shape_cast %281 : vector<2x8xf32> to vector<2x8x1xf32>
    %283 = vector.broadcast %282 : vector<2x8x1xf32> to vector<2x8x8xf32>
    %284 = arith.subf %280, %283 : vector<2x8x8xf32>
    %285 = math.exp %284 : vector<2x8x8xf32>
    %cst_98 = arith.constant dense<0.000000e+00> : vector<2x8xf32>
    %286 = vector.multi_reduction <add>, %285, %cst_98 [2] : vector<2x8x8xf32> to vector<2x8xf32>
    %287 = vector.shape_cast %286 : vector<2x8xf32> to vector<2x8x1xf32>
    %288 = tpu.reciprocal %287 {approx = true} : vector<2x8x1xf32> -> vector<2x8x1xf32>
    %289 = vector.broadcast %288 : vector<2x8x1xf32> to vector<2x8x8xf32>
    %290 = arith.mulf %285, %289 : vector<2x8x8xf32>
    "tpu.trace_start"() <{level = 10 : i32, message = "bts,bsd->btd"}> : () -> ()
    %cst_99 = arith.constant dense<0.000000e+00> : vector<2x8x128xf32>
    %291 = tpu.matmul %290, %224, %cst_99 {dimension_numbers = #tpu.dot_dimension_numbers<[2], [1], [1], [2], [0, 0, 0, 1, 1, 2], [0], [0]>} : vector<2x8x8xf32>, vector<2x8x128xf32>, vector<2x8x128xf32> -> vector<2x8x128xf32>
    "tpu.trace_stop"() : () -> ()
    %292 = vector.shape_cast %25 : vector<1x128xf32> to vector<1x1x128xf32>
    %293 = vector.broadcast %292 : vector<1x1x128xf32> to vector<2x8x128xf32>
    %294 = arith.mulf %291, %293 : vector<2x8x128xf32>
    %295 = arith.addf %271, %294 : vector<2x8x128xf32>
    %296 = vector.shape_cast %295 : vector<2x8x128xf32> to vector<16x128xf32>
    %c1_100 = arith.constant 1 : index
    %c0_101 = arith.constant 0 : index
    %c0_102 = arith.constant 0 : index
    %297 = vector.load %arg6[%c1_100, %c0_101, %c0_102] : memref<3x128x128xf32, #tpu.memory_space<vmem>>, vector<1x128x128xf32>
    %298 = vector.shape_cast %297 : vector<1x128x128xf32> to vector<128x128xf32>
    %cst_103 = arith.constant dense<0.000000e+00> : vector<16x128xf32>
    %299 = tpu.matmul %296, %298, %cst_103 {dimension_numbers = #tpu.dot_dimension_numbers<[1], [0], [0], [1], [0, 0, 1, 1], [], []>} : vector<16x128xf32>, vector<128x128xf32>, vector<16x128xf32> -> vector<16x128xf32>
    %c1_104 = arith.constant 1 : index
    %c0_105 = arith.constant 0 : index
    %c0_106 = arith.constant 0 : index
    %300 = vector.load %arg7[%c1_104, %c0_105, %c0_106] : memref<3x1x128xf32, #tpu.memory_space<vmem>>, vector<1x1x128xf32>
    %301 = vector.shape_cast %300 : vector<1x1x128xf32> to vector<1x128xf32>
    %302 = vector.broadcast %301 : vector<1x128xf32> to vector<16x128xf32>
    %303 = arith.addf %299, %302 : vector<16x128xf32>
    %304 = arith.addf %187, %303 : vector<16x128xf32>
    %c1_107 = arith.constant 1 : index
    %c0_108 = arith.constant 0 : index
    %c0_109 = arith.constant 0 : index
    %305 = vector.load %arg8[%c1_107, %c0_108, %c0_109] : memref<3x1x128xf32, #tpu.memory_space<vmem>>, vector<1x1x128xf32>
    %306 = vector.shape_cast %305 : vector<1x1x128xf32> to vector<1x128xf32>
    %c1_110 = arith.constant 1 : index
    %c0_111 = arith.constant 0 : index
    %c0_112 = arith.constant 0 : index
    %307 = vector.load %arg9[%c1_110, %c0_111, %c0_112] : memref<3x1x128xf32, #tpu.memory_space<vmem>>, vector<1x1x128xf32>
    %308 = vector.shape_cast %307 : vector<1x1x128xf32> to vector<1x128xf32>
    %cst_113 = arith.constant dense<0.000000e+00> : vector<16xf32>
    %309 = vector.multi_reduction <add>, %304, %cst_113 [1] : vector<16x128xf32> to vector<16xf32>
    %310 = vector.shape_cast %309 : vector<16xf32> to vector<16x1xf32>
    %cst_114 = arith.constant 0.0166666675 : f32
    %311 = vector.broadcast %cst_114 : f32 to vector<16x1xf32>
    %312 = arith.mulf %310, %311 : vector<16x1xf32>
    %313 = vector.broadcast %312 : vector<16x1xf32> to vector<16x128xf32>
    %314 = arith.subf %304, %313 : vector<16x128xf32>
    %cst_115 = arith.constant 0.000000e+00 : f32
    %315 = vector.shape_cast %4 : vector<1x128xi1> to vector<1x128xi1>
    %316 = vector.broadcast %315 : vector<1x128xi1> to vector<16x128xi1>
    %317 = vector.broadcast %cst_115 : f32 to vector<16x128xf32>
    %318 = arith.select %316, %314, %317 : vector<16x128xi1>, vector<16x128xf32>
    %319 = arith.mulf %318, %318 : vector<16x128xf32>
    %cst_116 = arith.constant dense<0.000000e+00> : vector<16xf32>
    %320 = vector.multi_reduction <add>, %319, %cst_116 [1] : vector<16x128xf32> to vector<16xf32>
    %321 = vector.shape_cast %320 : vector<16xf32> to vector<16x1xf32>
    %cst_117 = arith.constant 0.0166666675 : f32
    %322 = vector.broadcast %cst_117 : f32 to vector<16x1xf32>
    %323 = arith.mulf %321, %322 : vector<16x1xf32>
    %cst_118 = arith.constant 9.99999974E-6 : f32
    %324 = vector.broadcast %cst_118 : f32 to vector<16x1xf32>
    %325 = arith.addf %323, %324 : vector<16x1xf32>
    %326 = math.rsqrt %325 : vector<16x1xf32>
    %327 = vector.broadcast %326 : vector<16x1xf32> to vector<16x128xf32>
    %328 = arith.mulf %318, %327 : vector<16x128xf32>
    %329 = vector.broadcast %306 : vector<1x128xf32> to vector<16x128xf32>
    %330 = arith.mulf %328, %329 : vector<16x128xf32>
    %331 = vector.broadcast %308 : vector<1x128xf32> to vector<16x128xf32>
    %332 = arith.addf %330, %331 : vector<16x128xf32>
    %c1_119 = arith.constant 1 : index
    %c0_120 = arith.constant 0 : index
    %c0_121 = arith.constant 0 : index
    %333 = vector.load %arg10[%c1_119, %c0_120, %c0_121] : memref<3x128x256xf32, #tpu.memory_space<vmem>>, vector<1x128x256xf32>
    %334 = vector.shape_cast %333 : vector<1x128x256xf32> to vector<128x256xf32>
    %cst_122 = arith.constant dense<0.000000e+00> : vector<16x256xf32>
    %335 = tpu.matmul %332, %334, %cst_122 {dimension_numbers = #tpu.dot_dimension_numbers<[1], [0], [0], [1], [0, 0, 1, 1], [], []>} : vector<16x128xf32>, vector<128x256xf32>, vector<16x256xf32> -> vector<16x256xf32>
    %c1_123 = arith.constant 1 : index
    %c0_124 = arith.constant 0 : index
    %c0_125 = arith.constant 0 : index
    %336 = vector.load %arg11[%c1_123, %c0_124, %c0_125] : memref<3x1x256xf32, #tpu.memory_space<vmem>>, vector<1x1x256xf32>
    %337 = vector.shape_cast %336 : vector<1x1x256xf32> to vector<1x256xf32>
    %338 = vector.broadcast %337 : vector<1x256xf32> to vector<16x256xf32>
    %339 = arith.addf %335, %338 : vector<16x256xf32>
    %cst_126 = arith.constant 0.000000e+00 : f32
    %340 = vector.broadcast %cst_126 : f32 to vector<16x256xf32>
    %341 = arith.maximumf %339, %340 : vector<16x256xf32>
    %c1_127 = arith.constant 1 : index
    %c0_128 = arith.constant 0 : index
    %c0_129 = arith.constant 0 : index
    %342 = vector.load %arg12[%c1_127, %c0_128, %c0_129] : memref<3x256x128xf32, #tpu.memory_space<vmem>>, vector<1x256x128xf32>
    %343 = vector.shape_cast %342 : vector<1x256x128xf32> to vector<256x128xf32>
    %cst_130 = arith.constant dense<0.000000e+00> : vector<16x128xf32>
    %344 = tpu.matmul %341, %343, %cst_130 {dimension_numbers = #tpu.dot_dimension_numbers<[1], [0], [0], [1], [0, 0, 1, 1], [], []>} : vector<16x256xf32>, vector<256x128xf32>, vector<16x128xf32> -> vector<16x128xf32>
    %345 = arith.addf %304, %344 : vector<16x128xf32>
    %c1_131 = arith.constant 1 : index
    %c0_132 = arith.constant 0 : index
    %c0_133 = arith.constant 0 : index
    %346 = vector.load %arg13[%c1_131, %c0_132, %c0_133] : memref<3x1x128xf32, #tpu.memory_space<vmem>>, vector<1x1x128xf32>
    %347 = vector.shape_cast %346 : vector<1x1x128xf32> to vector<1x128xf32>
    %348 = vector.broadcast %347 : vector<1x128xf32> to vector<16x128xf32>
    %349 = arith.addf %345, %348 : vector<16x128xf32>
    %c2 = arith.constant 2 : index
    %c0_134 = arith.constant 0 : index
    %c0_135 = arith.constant 0 : index
    %350 = vector.load %arg3[%c2, %c0_134, %c0_135] : memref<3x1x128xf32, #tpu.memory_space<vmem>>, vector<1x1x128xf32>
    %351 = vector.shape_cast %350 : vector<1x1x128xf32> to vector<1x128xf32>
    %c2_136 = arith.constant 2 : index
    %c0_137 = arith.constant 0 : index
    %c0_138 = arith.constant 0 : index
    %352 = vector.load %arg4[%c2_136, %c0_137, %c0_138] : memref<3x1x128xf32, #tpu.memory_space<vmem>>, vector<1x1x128xf32>
    %353 = vector.shape_cast %352 : vector<1x1x128xf32> to vector<1x128xf32>
    %cst_139 = arith.constant dense<0.000000e+00> : vector<16xf32>
    %354 = vector.multi_reduction <add>, %349, %cst_139 [1] : vector<16x128xf32> to vector<16xf32>
    %355 = vector.shape_cast %354 : vector<16xf32> to vector<16x1xf32>
    %cst_140 = arith.constant 0.0166666675 : f32
    %356 = vector.broadcast %cst_140 : f32 to vector<16x1xf32>
    %357 = arith.mulf %355, %356 : vector<16x1xf32>
    %358 = vector.broadcast %357 : vector<16x1xf32> to vector<16x128xf32>
    %359 = arith.subf %349, %358 : vector<16x128xf32>
    %cst_141 = arith.constant 0.000000e+00 : f32
    %360 = vector.shape_cast %4 : vector<1x128xi1> to vector<1x128xi1>
    %361 = vector.broadcast %360 : vector<1x128xi1> to vector<16x128xi1>
    %362 = vector.broadcast %cst_141 : f32 to vector<16x128xf32>
    %363 = arith.select %361, %359, %362 : vector<16x128xi1>, vector<16x128xf32>
    %364 = arith.mulf %363, %363 : vector<16x128xf32>
    %cst_142 = arith.constant dense<0.000000e+00> : vector<16xf32>
    %365 = vector.multi_reduction <add>, %364, %cst_142 [1] : vector<16x128xf32> to vector<16xf32>
    %366 = vector.shape_cast %365 : vector<16xf32> to vector<16x1xf32>
    %cst_143 = arith.constant 0.0166666675 : f32
    %367 = vector.broadcast %cst_143 : f32 to vector<16x1xf32>
    %368 = arith.mulf %366, %367 : vector<16x1xf32>
    %cst_144 = arith.constant 9.99999974E-6 : f32
    %369 = vector.broadcast %cst_144 : f32 to vector<16x1xf32>
    %370 = arith.addf %368, %369 : vector<16x1xf32>
    %371 = math.rsqrt %370 : vector<16x1xf32>
    %372 = vector.broadcast %371 : vector<16x1xf32> to vector<16x128xf32>
    %373 = arith.mulf %363, %372 : vector<16x128xf32>
    %374 = vector.broadcast %351 : vector<1x128xf32> to vector<16x128xf32>
    %375 = arith.mulf %373, %374 : vector<16x128xf32>
    %376 = vector.broadcast %353 : vector<1x128xf32> to vector<16x128xf32>
    %377 = arith.addf %375, %376 : vector<16x128xf32>
    %c2_145 = arith.constant 2 : index
    %c0_146 = arith.constant 0 : index
    %c0_147 = arith.constant 0 : index
    %378 = vector.load %arg5[%c2_145, %c0_146, %c0_147] : memref<3x128x384xf32, #tpu.memory_space<vmem>>, vector<1x128x384xf32>
    %379 = vector.shape_cast %378 : vector<1x128x384xf32> to vector<128x384xf32>
    %cst_148 = arith.constant dense<0.000000e+00> : vector<16x384xf32>
    %380 = tpu.matmul %377, %379, %cst_148 {dimension_numbers = #tpu.dot_dimension_numbers<[1], [0], [0], [1], [0, 0, 1, 1], [], []>} : vector<16x128xf32>, vector<128x384xf32>, vector<16x384xf32> -> vector<16x384xf32>
    %381 = vector.extract_strided_slice %380 {offsets = [0, 0], sizes = [16, 128], strides = [1, 1]} : vector<16x384xf32> to vector<16x128xf32>
    %382 = vector.shape_cast %381 : vector<16x128xf32> to vector<2x8x128xf32>
    %383 = vector.extract_strided_slice %380 {offsets = [0, 128], sizes = [16, 128], strides = [1, 1]} : vector<16x384xf32> to vector<16x128xf32>
    %384 = vector.shape_cast %383 : vector<16x128xf32> to vector<2x8x128xf32>
    %385 = vector.extract_strided_slice %380 {offsets = [0, 256], sizes = [16, 128], strides = [1, 1]} : vector<16x384xf32> to vector<16x128xf32>
    %386 = vector.shape_cast %385 : vector<16x128xf32> to vector<2x8x128xf32>
    %387 = vector.shape_cast %11 : vector<1x128xf32> to vector<1x1x128xf32>
    %388 = vector.broadcast %387 : vector<1x1x128xf32> to vector<2x8x128xf32>
    %389 = arith.mulf %382, %388 : vector<2x8x128xf32>
    "tpu.trace_start"() <{level = 10 : i32, message = "btd,bsd->bts"}> : () -> ()
    %cst_149 = arith.constant dense<0.000000e+00> : vector<2x8x8xf32>
    %390 = tpu.matmul %389, %384, %cst_149 {dimension_numbers = #tpu.dot_dimension_numbers<[2], [2], [1], [1], [0, 0, 0, 1, 1, 1], [0], [0]>} : vector<2x8x128xf32>, vector<2x8x128xf32>, vector<2x8x8xf32> -> vector<2x8x8xf32>
    "tpu.trace_stop"() : () -> ()
    %cst_150 = arith.constant 0.129099444 : f32
    %391 = vector.broadcast %cst_150 : f32 to vector<2x8x8xf32>
    %392 = arith.mulf %390, %391 : vector<2x8x8xf32>
    %393 = vector.shape_cast %1 : vector<8x8xf32> to vector<1x8x8xf32>
    %394 = vector.broadcast %393 : vector<1x8x8xf32> to vector<2x8x8xf32>
    %395 = arith.addf %392, %394 : vector<2x8x8xf32>
    %cst_151 = arith.constant dense<0xFF800000> : vector<2x8xf32>
    %396 = vector.multi_reduction <maximumf>, %395, %cst_151 [2] : vector<2x8x8xf32> to vector<2x8xf32>
    %397 = vector.shape_cast %396 : vector<2x8xf32> to vector<2x8x1xf32>
    %398 = vector.broadcast %397 : vector<2x8x1xf32> to vector<2x8x8xf32>
    %399 = arith.subf %395, %398 : vector<2x8x8xf32>
    %400 = math.exp %399 : vector<2x8x8xf32>
    %cst_152 = arith.constant dense<0.000000e+00> : vector<2x8xf32>
    %401 = vector.multi_reduction <add>, %400, %cst_152 [2] : vector<2x8x8xf32> to vector<2x8xf32>
    %402 = vector.shape_cast %401 : vector<2x8xf32> to vector<2x8x1xf32>
    %403 = tpu.reciprocal %402 {approx = true} : vector<2x8x1xf32> -> vector<2x8x1xf32>
    %404 = vector.broadcast %403 : vector<2x8x1xf32> to vector<2x8x8xf32>
    %405 = arith.mulf %400, %404 : vector<2x8x8xf32>
    "tpu.trace_start"() <{level = 10 : i32, message = "bts,bsd->btd"}> : () -> ()
    %cst_153 = arith.constant dense<0.000000e+00> : vector<2x8x128xf32>
    %406 = tpu.matmul %405, %386, %cst_153 {dimension_numbers = #tpu.dot_dimension_numbers<[2], [1], [1], [2], [0, 0, 0, 1, 1, 2], [0], [0]>} : vector<2x8x8xf32>, vector<2x8x128xf32>, vector<2x8x128xf32> -> vector<2x8x128xf32>
    "tpu.trace_stop"() : () -> ()
    %407 = vector.shape_cast %11 : vector<1x128xf32> to vector<1x1x128xf32>
    %408 = vector.broadcast %407 : vector<1x1x128xf32> to vector<2x8x128xf32>
    %409 = arith.mulf %406, %408 : vector<2x8x128xf32>
    %410 = vector.shape_cast %18 : vector<1x128xf32> to vector<1x1x128xf32>
    %411 = vector.broadcast %410 : vector<1x1x128xf32> to vector<2x8x128xf32>
    %412 = arith.mulf %382, %411 : vector<2x8x128xf32>
    "tpu.trace_start"() <{level = 10 : i32, message = "btd,bsd->bts"}> : () -> ()
    %cst_154 = arith.constant dense<0.000000e+00> : vector<2x8x8xf32>
    %413 = tpu.matmul %412, %384, %cst_154 {dimension_numbers = #tpu.dot_dimension_numbers<[2], [2], [1], [1], [0, 0, 0, 1, 1, 1], [0], [0]>} : vector<2x8x128xf32>, vector<2x8x128xf32>, vector<2x8x8xf32> -> vector<2x8x8xf32>
    "tpu.trace_stop"() : () -> ()
    %cst_155 = arith.constant 0.129099444 : f32
    %414 = vector.broadcast %cst_155 : f32 to vector<2x8x8xf32>
    %415 = arith.mulf %413, %414 : vector<2x8x8xf32>
    %416 = vector.shape_cast %1 : vector<8x8xf32> to vector<1x8x8xf32>
    %417 = vector.broadcast %416 : vector<1x8x8xf32> to vector<2x8x8xf32>
    %418 = arith.addf %415, %417 : vector<2x8x8xf32>
    %cst_156 = arith.constant dense<0xFF800000> : vector<2x8xf32>
    %419 = vector.multi_reduction <maximumf>, %418, %cst_156 [2] : vector<2x8x8xf32> to vector<2x8xf32>
    %420 = vector.shape_cast %419 : vector<2x8xf32> to vector<2x8x1xf32>
    %421 = vector.broadcast %420 : vector<2x8x1xf32> to vector<2x8x8xf32>
    %422 = arith.subf %418, %421 : vector<2x8x8xf32>
    %423 = math.exp %422 : vector<2x8x8xf32>
    %cst_157 = arith.constant dense<0.000000e+00> : vector<2x8xf32>
    %424 = vector.multi_reduction <add>, %423, %cst_157 [2] : vector<2x8x8xf32> to vector<2x8xf32>
    %425 = vector.shape_cast %424 : vector<2x8xf32> to vector<2x8x1xf32>
    %426 = tpu.reciprocal %425 {approx = true} : vector<2x8x1xf32> -> vector<2x8x1xf32>
    %427 = vector.broadcast %426 : vector<2x8x1xf32> to vector<2x8x8xf32>
    %428 = arith.mulf %423, %427 : vector<2x8x8xf32>
    "tpu.trace_start"() <{level = 10 : i32, message = "bts,bsd->btd"}> : () -> ()
    %cst_158 = arith.constant dense<0.000000e+00> : vector<2x8x128xf32>
    %429 = tpu.matmul %428, %386, %cst_158 {dimension_numbers = #tpu.dot_dimension_numbers<[2], [1], [1], [2], [0, 0, 0, 1, 1, 2], [0], [0]>} : vector<2x8x8xf32>, vector<2x8x128xf32>, vector<2x8x128xf32> -> vector<2x8x128xf32>
    "tpu.trace_stop"() : () -> ()
    %430 = vector.shape_cast %18 : vector<1x128xf32> to vector<1x1x128xf32>
    %431 = vector.broadcast %430 : vector<1x1x128xf32> to vector<2x8x128xf32>
    %432 = arith.mulf %429, %431 : vector<2x8x128xf32>
    %433 = arith.addf %409, %432 : vector<2x8x128xf32>
    %434 = vector.shape_cast %25 : vector<1x128xf32> to vector<1x1x128xf32>
    %435 = vector.broadcast %434 : vector<1x1x128xf32> to vector<2x8x128xf32>
    %436 = arith.mulf %382, %435 : vector<2x8x128xf32>
    "tpu.trace_start"() <{level = 10 : i32, message = "btd,bsd->bts"}> : () -> ()
    %cst_159 = arith.constant dense<0.000000e+00> : vector<2x8x8xf32>
    %437 = tpu.matmul %436, %384, %cst_159 {dimension_numbers = #tpu.dot_dimension_numbers<[2], [2], [1], [1], [0, 0, 0, 1, 1, 1], [0], [0]>} : vector<2x8x128xf32>, vector<2x8x128xf32>, vector<2x8x8xf32> -> vector<2x8x8xf32>
    "tpu.trace_stop"() : () -> ()
    %cst_160 = arith.constant 0.129099444 : f32
    %438 = vector.broadcast %cst_160 : f32 to vector<2x8x8xf32>
    %439 = arith.mulf %437, %438 : vector<2x8x8xf32>
    %440 = vector.shape_cast %1 : vector<8x8xf32> to vector<1x8x8xf32>
    %441 = vector.broadcast %440 : vector<1x8x8xf32> to vector<2x8x8xf32>
    %442 = arith.addf %439, %441 : vector<2x8x8xf32>
    %cst_161 = arith.constant dense<0xFF800000> : vector<2x8xf32>
    %443 = vector.multi_reduction <maximumf>, %442, %cst_161 [2] : vector<2x8x8xf32> to vector<2x8xf32>
    %444 = vector.shape_cast %443 : vector<2x8xf32> to vector<2x8x1xf32>
    %445 = vector.broadcast %444 : vector<2x8x1xf32> to vector<2x8x8xf32>
    %446 = arith.subf %442, %445 : vector<2x8x8xf32>
    %447 = math.exp %446 : vector<2x8x8xf32>
    %cst_162 = arith.constant dense<0.000000e+00> : vector<2x8xf32>
    %448 = vector.multi_reduction <add>, %447, %cst_162 [2] : vector<2x8x8xf32> to vector<2x8xf32>
    %449 = vector.shape_cast %448 : vector<2x8xf32> to vector<2x8x1xf32>
    %450 = tpu.reciprocal %449 {approx = true} : vector<2x8x1xf32> -> vector<2x8x1xf32>
    %451 = vector.broadcast %450 : vector<2x8x1xf32> to vector<2x8x8xf32>
    %452 = arith.mulf %447, %451 : vector<2x8x8xf32>
    "tpu.trace_start"() <{level = 10 : i32, message = "bts,bsd->btd"}> : () -> ()
    %cst_163 = arith.constant dense<0.000000e+00> : vector<2x8x128xf32>
    %453 = tpu.matmul %452, %386, %cst_163 {dimension_numbers = #tpu.dot_dimension_numbers<[2], [1], [1], [2], [0, 0, 0, 1, 1, 2], [0], [0]>} : vector<2x8x8xf32>, vector<2x8x128xf32>, vector<2x8x128xf32> -> vector<2x8x128xf32>
    "tpu.trace_stop"() : () -> ()
    %454 = vector.shape_cast %25 : vector<1x128xf32> to vector<1x1x128xf32>
    %455 = vector.broadcast %454 : vector<1x1x128xf32> to vector<2x8x128xf32>
    %456 = arith.mulf %453, %455 : vector<2x8x128xf32>
    %457 = arith.addf %433, %456 : vector<2x8x128xf32>
    %458 = vector.shape_cast %457 : vector<2x8x128xf32> to vector<16x128xf32>
    %c2_164 = arith.constant 2 : index
    %c0_165 = arith.constant 0 : index
    %c0_166 = arith.constant 0 : index
    %459 = vector.load %arg6[%c2_164, %c0_165, %c0_166] : memref<3x128x128xf32, #tpu.memory_space<vmem>>, vector<1x128x128xf32>
    %460 = vector.shape_cast %459 : vector<1x128x128xf32> to vector<128x128xf32>
    %cst_167 = arith.constant dense<0.000000e+00> : vector<16x128xf32>
    %461 = tpu.matmul %458, %460, %cst_167 {dimension_numbers = #tpu.dot_dimension_numbers<[1], [0], [0], [1], [0, 0, 1, 1], [], []>} : vector<16x128xf32>, vector<128x128xf32>, vector<16x128xf32> -> vector<16x128xf32>
    %c2_168 = arith.constant 2 : index
    %c0_169 = arith.constant 0 : index
    %c0_170 = arith.constant 0 : index
    %462 = vector.load %arg7[%c2_168, %c0_169, %c0_170] : memref<3x1x128xf32, #tpu.memory_space<vmem>>, vector<1x1x128xf32>
    %463 = vector.shape_cast %462 : vector<1x1x128xf32> to vector<1x128xf32>
    %464 = vector.broadcast %463 : vector<1x128xf32> to vector<16x128xf32>
    %465 = arith.addf %461, %464 : vector<16x128xf32>
    %466 = arith.addf %349, %465 : vector<16x128xf32>
    %c2_171 = arith.constant 2 : index
    %c0_172 = arith.constant 0 : index
    %c0_173 = arith.constant 0 : index
    %467 = vector.load %arg8[%c2_171, %c0_172, %c0_173] : memref<3x1x128xf32, #tpu.memory_space<vmem>>, vector<1x1x128xf32>
    %468 = vector.shape_cast %467 : vector<1x1x128xf32> to vector<1x128xf32>
    %c2_174 = arith.constant 2 : index
    %c0_175 = arith.constant 0 : index
    %c0_176 = arith.constant 0 : index
    %469 = vector.load %arg9[%c2_174, %c0_175, %c0_176] : memref<3x1x128xf32, #tpu.memory_space<vmem>>, vector<1x1x128xf32>
    %470 = vector.shape_cast %469 : vector<1x1x128xf32> to vector<1x128xf32>
    %cst_177 = arith.constant dense<0.000000e+00> : vector<16xf32>
    %471 = vector.multi_reduction <add>, %466, %cst_177 [1] : vector<16x128xf32> to vector<16xf32>
    %472 = vector.shape_cast %471 : vector<16xf32> to vector<16x1xf32>
    %cst_178 = arith.constant 0.0166666675 : f32
    %473 = vector.broadcast %cst_178 : f32 to vector<16x1xf32>
    %474 = arith.mulf %472, %473 : vector<16x1xf32>
    %475 = vector.broadcast %474 : vector<16x1xf32> to vector<16x128xf32>
    %476 = arith.subf %466, %475 : vector<16x128xf32>
    %cst_179 = arith.constant 0.000000e+00 : f32
    %477 = vector.shape_cast %4 : vector<1x128xi1> to vector<1x128xi1>
    %478 = vector.broadcast %477 : vector<1x128xi1> to vector<16x128xi1>
    %479 = vector.broadcast %cst_179 : f32 to vector<16x128xf32>
    %480 = arith.select %478, %476, %479 : vector<16x128xi1>, vector<16x128xf32>
    %481 = arith.mulf %480, %480 : vector<16x128xf32>
    %cst_180 = arith.constant dense<0.000000e+00> : vector<16xf32>
    %482 = vector.multi_reduction <add>, %481, %cst_180 [1] : vector<16x128xf32> to vector<16xf32>
    %483 = vector.shape_cast %482 : vector<16xf32> to vector<16x1xf32>
    %cst_181 = arith.constant 0.0166666675 : f32
    %484 = vector.broadcast %cst_181 : f32 to vector<16x1xf32>
    %485 = arith.mulf %483, %484 : vector<16x1xf32>
    %cst_182 = arith.constant 9.99999974E-6 : f32
    %486 = vector.broadcast %cst_182 : f32 to vector<16x1xf32>
    %487 = arith.addf %485, %486 : vector<16x1xf32>
    %488 = math.rsqrt %487 : vector<16x1xf32>
    %489 = vector.broadcast %488 : vector<16x1xf32> to vector<16x128xf32>
    %490 = arith.mulf %480, %489 : vector<16x128xf32>
    %491 = vector.broadcast %468 : vector<1x128xf32> to vector<16x128xf32>
    %492 = arith.mulf %490, %491 : vector<16x128xf32>
    %493 = vector.broadcast %470 : vector<1x128xf32> to vector<16x128xf32>
    %494 = arith.addf %492, %493 : vector<16x128xf32>
    %c2_183 = arith.constant 2 : index
    %c0_184 = arith.constant 0 : index
    %c0_185 = arith.constant 0 : index
    %495 = vector.load %arg10[%c2_183, %c0_184, %c0_185] : memref<3x128x256xf32, #tpu.memory_space<vmem>>, vector<1x128x256xf32>
    %496 = vector.shape_cast %495 : vector<1x128x256xf32> to vector<128x256xf32>
    %cst_186 = arith.constant dense<0.000000e+00> : vector<16x256xf32>
    %497 = tpu.matmul %494, %496, %cst_186 {dimension_numbers = #tpu.dot_dimension_numbers<[1], [0], [0], [1], [0, 0, 1, 1], [], []>} : vector<16x128xf32>, vector<128x256xf32>, vector<16x256xf32> -> vector<16x256xf32>
    %c2_187 = arith.constant 2 : index
    %c0_188 = arith.constant 0 : index
    %c0_189 = arith.constant 0 : index
    %498 = vector.load %arg11[%c2_187, %c0_188, %c0_189] : memref<3x1x256xf32, #tpu.memory_space<vmem>>, vector<1x1x256xf32>
    %499 = vector.shape_cast %498 : vector<1x1x256xf32> to vector<1x256xf32>
    %500 = vector.broadcast %499 : vector<1x256xf32> to vector<16x256xf32>
    %501 = arith.addf %497, %500 : vector<16x256xf32>
    %cst_190 = arith.constant 0.000000e+00 : f32
    %502 = vector.broadcast %cst_190 : f32 to vector<16x256xf32>
    %503 = arith.maximumf %501, %502 : vector<16x256xf32>
    %c2_191 = arith.constant 2 : index
    %c0_192 = arith.constant 0 : index
    %c0_193 = arith.constant 0 : index
    %504 = vector.load %arg12[%c2_191, %c0_192, %c0_193] : memref<3x256x128xf32, #tpu.memory_space<vmem>>, vector<1x256x128xf32>
    %505 = vector.shape_cast %504 : vector<1x256x128xf32> to vector<256x128xf32>
    %cst_194 = arith.constant dense<0.000000e+00> : vector<16x128xf32>
    %506 = tpu.matmul %503, %505, %cst_194 {dimension_numbers = #tpu.dot_dimension_numbers<[1], [0], [0], [1], [0, 0, 1, 1], [], []>} : vector<16x256xf32>, vector<256x128xf32>, vector<16x128xf32> -> vector<16x128xf32>
    %507 = arith.addf %466, %506 : vector<16x128xf32>
    %c2_195 = arith.constant 2 : index
    %c0_196 = arith.constant 0 : index
    %c0_197 = arith.constant 0 : index
    %508 = vector.load %arg13[%c2_195, %c0_196, %c0_197] : memref<3x1x128xf32, #tpu.memory_space<vmem>>, vector<1x1x128xf32>
    %509 = vector.shape_cast %508 : vector<1x1x128xf32> to vector<1x128xf32>
    %510 = vector.broadcast %509 : vector<1x128xf32> to vector<16x128xf32>
    %511 = arith.addf %507, %510 : vector<16x128xf32>
    %c0_198 = arith.constant 0 : index
    %c0_199 = arith.constant 0 : index
    %512 = vector.load %arg14[%c0_198, %c0_199] : memref<1x128xf32, #tpu.memory_space<vmem>>, vector<1x128xf32>
    %c0_200 = arith.constant 0 : index
    %c0_201 = arith.constant 0 : index
    %513 = vector.load %arg15[%c0_200, %c0_201] : memref<1x128xf32, #tpu.memory_space<vmem>>, vector<1x128xf32>
    %cst_202 = arith.constant dense<0.000000e+00> : vector<16xf32>
    %514 = vector.multi_reduction <add>, %511, %cst_202 [1] : vector<16x128xf32> to vector<16xf32>
    %515 = vector.shape_cast %514 : vector<16xf32> to vector<16x1xf32>
    %cst_203 = arith.constant 0.0166666675 : f32
    %516 = vector.broadcast %cst_203 : f32 to vector<16x1xf32>
    %517 = arith.mulf %515, %516 : vector<16x1xf32>
    %518 = vector.broadcast %517 : vector<16x1xf32> to vector<16x128xf32>
    %519 = arith.subf %511, %518 : vector<16x128xf32>
    %cst_204 = arith.constant 0.000000e+00 : f32
    %520 = vector.shape_cast %4 : vector<1x128xi1> to vector<1x128xi1>
    %521 = vector.broadcast %520 : vector<1x128xi1> to vector<16x128xi1>
    %522 = vector.broadcast %cst_204 : f32 to vector<16x128xf32>
    %523 = arith.select %521, %519, %522 : vector<16x128xi1>, vector<16x128xf32>
    %524 = arith.mulf %523, %523 : vector<16x128xf32>
    %cst_205 = arith.constant dense<0.000000e+00> : vector<16xf32>
    %525 = vector.multi_reduction <add>, %524, %cst_205 [1] : vector<16x128xf32> to vector<16xf32>
    %526 = vector.shape_cast %525 : vector<16xf32> to vector<16x1xf32>
    %cst_206 = arith.constant 0.0166666675 : f32
    %527 = vector.broadcast %cst_206 : f32 to vector<16x1xf32>
    %528 = arith.mulf %526, %527 : vector<16x1xf32>
    %cst_207 = arith.constant 9.99999974E-6 : f32
    %529 = vector.broadcast %cst_207 : f32 to vector<16x1xf32>
    %530 = arith.addf %528, %529 : vector<16x1xf32>
    %531 = math.rsqrt %530 : vector<16x1xf32>
    %532 = vector.broadcast %531 : vector<16x1xf32> to vector<16x128xf32>
    %533 = arith.mulf %523, %532 : vector<16x128xf32>
    %534 = vector.broadcast %512 : vector<1x128xf32> to vector<16x128xf32>
    %535 = arith.mulf %533, %534 : vector<16x128xf32>
    %536 = vector.broadcast %513 : vector<1x128xf32> to vector<16x128xf32>
    %537 = arith.addf %535, %536 : vector<16x128xf32>
    %c0_208 = arith.constant 0 : index
    %c0_209 = arith.constant 0 : index
    %538 = vector.load %arg16[%c0_208, %c0_209] : memref<128x128xf32, #tpu.memory_space<vmem>>, vector<128x128xf32>
    %cst_210 = arith.constant dense<0.000000e+00> : vector<16x128xf32>
    %539 = tpu.matmul %537, %538, %cst_210 {dimension_numbers = #tpu.dot_dimension_numbers<[1], [0], [0], [1], [0, 0, 1, 1], [], []>} : vector<16x128xf32>, vector<128x128xf32>, vector<16x128xf32> -> vector<16x128xf32>
    %c0_211 = arith.constant 0 : index
    %c0_212 = arith.constant 0 : index
    %540 = vector.load %arg17[%c0_211, %c0_212] : memref<1x128xf32, #tpu.memory_space<vmem>>, vector<1x128xf32>
    %541 = vector.broadcast %540 : vector<1x128xf32> to vector<16x128xf32>
    %542 = arith.addf %539, %541 : vector<16x128xf32>
    %c0_213 = arith.constant 0 : index
    %c0_214 = arith.constant 0 : index
    %543 = vector.load %arg18[%c0_213, %c0_214] : memref<16x128xf32, #tpu.memory_space<vmem>>, vector<16x128xf32>
    tpu.vector_store %arg18[%c0_213, %c0_214], %542 {strides = array<i32>} : memref<16x128xf32, #tpu.memory_space<vmem>>, vector<16x128xf32>,
    return
  }
  func.func @transform_0(%arg0: i32) -> (i32, i32) {
    %c0_i32 = arith.constant 0 : i32
    %c0_i32_0 = arith.constant 0 : i32
    return %arg0, %c0_i32 : i32, i32
  }
  func.func @transform_1(%arg0: i32) -> (i32, i32) {
    %c0_i32 = arith.constant 0 : i32
    %c0_i32_0 = arith.constant 0 : i32
    %c0_i32_1 = arith.constant 0 : i32
    return %c0_i32, %c0_i32_0 : i32, i32
  }
  func.func @transform_2(%arg0: i32) -> (i32, i32, i32) {
    %c0_i32 = arith.constant 0 : i32
    %c0_i32_0 = arith.constant 0 : i32
    %c0_i32_1 = arith.constant 0 : i32
    %c0_i32_2 = arith.constant 0 : i32
    return %c0_i32, %c0_i32_0, %c0_i32_1 : i32, i32, i32
  }
  func.func @transform_3(%arg0: i32) -> (i32, i32, i32) {
    %c0_i32 = arith.constant 0 : i32
    %c0_i32_0 = arith.constant 0 : i32
    %c0_i32_1 = arith.constant 0 : i32
    %c0_i32_2 = arith.constant 0 : i32
    return %c0_i32, %c0_i32_0, %c0_i32_1 : i32, i32, i32
  }
  func.func @transform_4(%arg0: i32) -> (i32, i32, i32) {
    %c0_i32 = arith.constant 0 : i32
    %c0_i32_0 = arith.constant 0 : i32
    %c0_i32_1 = arith.constant 0 : i32
    %c0_i32_2 = arith.constant 0 : i32
    return %c0_i32, %c0_i32_0, %c0_i32_1 : i32, i32, i32
  }
  func.func @transform_5(%arg0: i32) -> (i32, i32, i32) {
    %c0_i32 = arith.constant 0 : i32
    %c0_i32_0 = arith.constant 0 : i32
    %c0_i32_1 = arith.constant 0 : i32
    %c0_i32_2 = arith.constant 0 : i32
    return %c0_i32, %c0_i32_0, %c0_i32_1 : i32, i32, i32
  }
  func.func @transform_6(%arg0: i32) -> (i32, i32, i32) {
    %c0_i32 = arith.constant 0 : i32
    %c0_i32_0 = arith.constant 0 : i32
    %c0_i32_1 = arith.constant 0 : i32
    %c0_i32_2 = arith.constant 0 : i32
    return %c0_i32, %c0_i32_0, %c0_i32_1 : i32, i32, i32
  }
  func.func @transform_7(%arg0: i32) -> (i32, i32, i32) {
    %c0_i32 = arith.constant 0 : i32
    %c0_i32_0 = arith.constant 0 : i32
    %c0_i32_1 = arith.constant 0 : i32
    %c0_i32_2 = arith.constant 0 : i32
    return %c0_i32, %c0_i32_0, %c0_i32_1 : i32, i32, i32
  }
  func.func @transform_8(%arg0: i32) -> (i32, i32, i32) {
    %c0_i32 = arith.constant 0 : i32
    %c0_i32_0 = arith.constant 0 : i32
    %c0_i32_1 = arith.constant 0 : i32
    %c0_i32_2 = arith.constant 0 : i32
    return %c0_i32, %c0_i32_0, %c0_i32_1 : i32, i32, i32
  }
  func.func @transform_9(%arg0: i32) -> (i32, i32, i32) {
    %c0_i32 = arith.constant 0 : i32
    %c0_i32_0 = arith.constant 0 : i32
    %c0_i32_1 = arith.constant 0 : i32
    %c0_i32_2 = arith.constant 0 : i32
    return %c0_i32, %c0_i32_0, %c0_i32_1 : i32, i32, i32
  }
  func.func @transform_10(%arg0: i32) -> (i32, i32, i32) {
    %c0_i32 = arith.constant 0 : i32
    %c0_i32_0 = arith.constant 0 : i32
    %c0_i32_1 = arith.constant 0 : i32
    %c0_i32_2 = arith.constant 0 : i32
    return %c0_i32, %c0_i32_0, %c0_i32_1 : i32, i32, i32
  }
  func.func @transform_11(%arg0: i32) -> (i32, i32, i32) {
    %c0_i32 = arith.constant 0 : i32
    %c0_i32_0 = arith.constant 0 : i32
    %c0_i32_1 = arith.constant 0 : i32
    %c0_i32_2 = arith.constant 0 : i32
    return %c0_i32, %c0_i32_0, %c0_i32_1 : i32, i32, i32
  }
  func.func @transform_12(%arg0: i32) -> (i32, i32, i32) {
    %c0_i32 = arith.constant 0 : i32
    %c0_i32_0 = arith.constant 0 : i32
    %c0_i32_1 = arith.constant 0 : i32
    %c0_i32_2 = arith.constant 0 : i32
    return %c0_i32, %c0_i32_0, %c0_i32_1 : i32, i32, i32
  }
  func.func @transform_13(%arg0: i32) -> (i32, i32) {
    %c0_i32 = arith.constant 0 : i32
    %c0_i32_0 = arith.constant 0 : i32
    %c0_i32_1 = arith.constant 0 : i32
    return %c0_i32, %c0_i32_0 : i32, i32
  }
  func.func @transform_14(%arg0: i32) -> (i32, i32) {
    %c0_i32 = arith.constant 0 : i32
    %c0_i32_0 = arith.constant 0 : i32
    %c0_i32_1 = arith.constant 0 : i32
    return %c0_i32, %c0_i32_0 : i32, i32
  }
  func.func @transform_15(%arg0: i32) -> (i32, i32) {
    %c0_i32 = arith.constant 0 : i32
    %c0_i32_0 = arith.constant 0 : i32
    %c0_i32_1 = arith.constant 0 : i32
    return %c0_i32, %c0_i32_0 : i32, i32
  }
  func.func @transform_16(%arg0: i32) -> (i32, i32) {
    %c0_i32 = arith.constant 0 : i32
    %c0_i32_0 = arith.constant 0 : i32
    %c0_i32_1 = arith.constant 0 : i32
    return %c0_i32, %c0_i32_0 : i32, i32
  }
  func.func @transform_17(%arg0: i32) -> (i32, i32) {
    %c0_i32 = arith.constant 0 : i32
    %c0_i32_0 = arith.constant 0 : i32
    return %arg0, %c0_i32 : i32, i32
  }
}

</mosaic_0001>

<llo_original>
// kernel: ngram_forward.1
$region0: #{ngram_forward.1}
  #allocation0 [shape = 'u32[]', space=smem, size = 0x4, offset = 0x4, fixed_abs, tag = 'smem constant byte address 0x4 - core index']
  #allocation1 [shape = 'u32[144,128]{1,0:T(1,128)}', space=vmem, size = 0x12000, scoped, tag = 'internal scratch']
  %s0 = inlined_call_operand.vmem [shape: f32[16,128], index: 0, kind: input, shape index: {}]
  %s1 = inlined_call_operand.vmem [shape: f32[8,8], index: 1, kind: input, shape index: {}]
  %s2 = inlined_call_operand.vmem [shape: f32[3,1,128], index: 2, kind: input, shape index: {}]
  %s3 = inlined_call_operand.vmem [shape: f32[3,1,128], index: 3, kind: input, shape index: {}]
  %s4 = inlined_call_operand.hbm [shape: f32[3,128,384], index: 4, kind: input, shape index: {}]
  %s5 = inlined_call_operand.hbm [shape: f32[3,128,128], index: 5, kind: input, shape index: {}]
  %s6 = inlined_call_operand.vmem [shape: f32[3,1,128], index: 6, kind: input, shape index: {}]
  %s7 = inlined_call_operand.vmem [shape: f32[3,1,128], index: 7, kind: input, shape index: {}]
  %s8 = inlined_call_operand.vmem [shape: f32[3,1,128], index: 8, kind: input, shape index: {}]
  %s9 = inlined_call_operand.hbm [shape: f32[3,128,256], index: 9, kind: input, shape index: {}]
  %s10 = inlined_call_operand.vmem [shape: f32[3,1,256], index: 10, kind: input, shape index: {}]
  %s11 = inlined_call_operand.hbm [shape: f32[3,256,128], index: 11, kind: input, shape index: {}]
  %s12 = inlined_call_operand.vmem [shape: f32[3,1,128], index: 12, kind: input, shape index: {}]
  %s13 = inlined_call_operand.vmem [shape: f32[1,128], index: 13, kind: input, shape index: {}]
  %s14 = inlined_call_operand.vmem [shape: f32[1,128], index: 14, kind: input, shape index: {}]
  %s15 = inlined_call_operand.vmem [shape: f32[128,128], index: 15, kind: input, shape index: {}]
  %s16 = inlined_call_operand.vmem [shape: f32[1,128], index: 16, kind: input, shape index: {}]
  %s17 = inlined_call_operand.hbm [shape: f32[16,128], index: 17, kind: output, shape index: {}]
  %s18 = sld [smem:[#allocation0]]
  $region94: #{ngram_forward.1} parent=0
    _
  %s20 = ssub.s32 1, %s18
  %s21 = scalar_select 0, %s20, %s18
  $region1: #{ngram_forward.1} parent=0
    #allocation2 [shape = 'u8[589824]{0}', space=vmem, size = 0x90000, scoped, tag = 'input window, operand 4, single buffered']
    #allocation3 [shape = 's32[1]{0}', space=sflag, size = 0x4, scoped, tag = 'scoped memory for ngram_forward.1']
    #allocation4 [shape = 's32[1]{0}', space=sflag, size = 0x4, scoped, tag = 'scoped memory for ngram_forward.1']
    #allocation5 [shape = 'u8[196608]{0}', space=vmem, size = 0x30000, scoped, tag = 'input window, operand 5, single buffered']
    #allocation6 [shape = 's32[1]{0}', space=sflag, size = 0x4, scoped, tag = 'scoped memory for ngram_forward.1']
    #allocation7 [shape = 'u8[393216]{0}', space=vmem, size = 0x60000, scoped, tag = 'input window, operand 9, single buffered']
    #allocation8 [shape = 'u8[393216]{0}', space=vmem, size = 0x60000, scoped, tag = 'input window, operand 11, single buffered']
    #allocation9 [shape = 's32[1]{0}', space=sflag, size = 0x4, scoped, tag = 'scoped memory for ngram_forward.1']
    #allocation10 [shape = 'u8[8192]{0}', space=vmem, size = 0x2000, scoped, tag = 'output window, operand 0, single buffered']
    %22 = vsyncpa [#allocation3], 0
    %23 = vsyncpa [#allocation6], 0
    %24 = vsyncpa [#allocation9], 0
    %25 = vsyncpa [#allocation4], 0
    // Predicated region
    $region2: #{ngram_forward.1} parent=1 // pred_check
      _
    $region3: #{ngram_forward.1} parent=1 // pred_check_branch
      %27 = sbr.rel (0) target = $region5
    $region4: #{ngram_forward.1} parent=1 // pred_region
      _
    $region5: #{ngram_forward.1} parent=1 // pred_fallthru
      _
    // Predicated region
    $region6: #{ngram_forward.1} parent=1 // pred_check
      _
    $region7: #{ngram_forward.1} parent=1 // pred_check_branch
      %29 = sbr.rel (0) target = $region9
    $region8: #{ngram_forward.1} parent=1 // pred_region
      _
    $region9: #{ngram_forward.1} parent=1 // pred_fallthru
      _
    // Predicated region
    $region10: #{ngram_forward.1} parent=1 // pred_check
      _
    $region11: #{ngram_forward.1} parent=1 // pred_check_branch
      %31 = sbr.rel (0) target = $region13
    $region12: #{ngram_forward.1} parent=1 // pred_region
      _
    $region13: #{ngram_forward.1} parent=1 // pred_fallthru
      _
    // Predicated region
    $region14: #{ngram_forward.1} parent=1 // pred_check
      _
    $region15: #{ngram_forward.1} parent=1 // pred_check_branch
      %33 = sbr.rel (0) target = $region17
    $region16: #{ngram_forward.1} parent=1 // pred_region
      _
    $region17: #{ngram_forward.1} parent=1 // pred_fallthru
      _
    // Predicated region
    $region18: #{ngram_forward.1} parent=1 // pred_check
      _
    $region19: #{ngram_forward.1} parent=1 // pred_check_branch
      %35 = sbr.rel (0) target = $region21
    $region20: #{ngram_forward.1} parent=1 // pred_region
      %s37 = ssub.s32 18432, 18432
      %38 = vsyncadd [#allocation3], %s37
      %s39 = sshll.u32 [#allocation2], 4
      %s40 = int_to_ptr.vmem [resolvable:$true] %s39
      %45 = dma.hbm_to_vmem [thread:$0]  %s4, 18432, %s40, [#allocation3], 384, 384, 24
    $region21: #{ngram_forward.1} parent=1 // pred_fallthru
      _
    // Predicated region
    $region22: #{ngram_forward.1} parent=1 // pred_check
      _
    $region23: #{ngram_forward.1} parent=1 // pred_check_branch
      %47 = sbr.rel (0) target = $region25
    $region24: #{ngram_forward.1} parent=1 // pred_region
      %s49 = ssub.s32 6144, 6144
      %50 = vsyncadd [#allocation6], %s49
      %s51 = sshll.u32 [#allocation5], 4
      %s52 = int_to_ptr.vmem [resolvable:$true] %s51
      %57 = dma.hbm_to_vmem [thread:$0]  %s5, 6144, %s52, [#allocation6], 128, 128, 8
    $region25: #{ngram_forward.1} parent=1 // pred_fallthru
      _
    // Predicated region
    $region26: #{ngram_forward.1} parent=1 // pred_check
      _
    $region27: #{ngram_forward.1} parent=1 // pred_check_branch
      %59 = sbr.rel (0) target = $region29
    $region28: #{ngram_forward.1} parent=1 // pred_region
      _
    $region29: #{ngram_forward.1} parent=1 // pred_fallthru
      _
    // Predicated region
    $region30: #{ngram_forward.1} parent=1 // pred_check
      _
    $region31: #{ngram_forward.1} parent=1 // pred_check_branch
      %61 = sbr.rel (0) target = $region33
    $region32: #{ngram_forward.1} parent=1 // pred_region
      _
    $region33: #{ngram_forward.1} parent=1 // pred_fallthru
      _
    // Predicated region
    $region34: #{ngram_forward.1} parent=1 // pred_check
      _
    $region35: #{ngram_forward.1} parent=1 // pred_check_branch
      %63 = sbr.rel (0) target = $region37
    $region36: #{ngram_forward.1} parent=1 // pred_region
      _
    $region37: #{ngram_forward.1} parent=1 // pred_fallthru
      _
    // Predicated region
    $region38: #{ngram_forward.1} parent=1 // pred_check
      _
    $region39: #{ngram_forward.1} parent=1 // pred_check_branch
      %65 = sbr.rel (0) target = $region41
    $region40: #{ngram_forward.1} parent=1 // pred_region
      %s67 = ssub.s32 12288, 12288
      %68 = vsyncadd [#allocation6], %s67
      %s69 = sshll.u32 [#allocation7], 4
      %s70 = int_to_ptr.vmem [resolvable:$true] %s69
      %75 = dma.hbm_to_vmem [thread:$0]  %s9, 12288, %s70, [#allocation6], 256, 256, 16
    $region41: #{ngram_forward.1} parent=1 // pred_fallthru
      _
    // Predicated region
    $region42: #{ngram_forward.1} parent=1 // pred_check
      _
    $region43: #{ngram_forward.1} parent=1 // pred_check_branch
      %77 = sbr.rel (0) target = $region45
    $region44: #{ngram_forward.1} parent=1 // pred_region
      _
    $region45: #{ngram_forward.1} parent=1 // pred_fallthru
      _
    // Predicated region
    $region46: #{ngram_forward.1} parent=1 // pred_check
      _
    $region47: #{ngram_forward.1} parent=1 // pred_check_branch
      %79 = sbr.rel (0) target = $region49
    $region48: #{ngram_forward.1} parent=1 // pred_region
      %s81 = ssub.s32 12288, 12288
      %82 = vsyncadd [#allocation9], %s81
      %s83 = sshll.u32 [#allocation8], 4
      %s84 = int_to_ptr.vmem [resolvable:$true] %s83
      %89 = dma.hbm_to_vmem [thread:$0]  %s11, 12288, %s84, [#allocation9], 128, 128, 8
    $region49: #{ngram_forward.1} parent=1 // pred_fallthru
      _
    // Predicated region
    $region50: #{ngram_forward.1} parent=1 // pred_check
      _
    $region51: #{ngram_forward.1} parent=1 // pred_check_branch
      %91 = sbr.rel (0) target = $region53
    $region52: #{ngram_forward.1} parent=1 // pred_region
      _
    $region53: #{ngram_forward.1} parent=1 // pred_fallthru
      _
    // Predicated region
    $region54: #{ngram_forward.1} parent=1 // pred_check
      _
    $region55: #{ngram_forward.1} parent=1 // pred_check_branch
      %93 = sbr.rel (0) target = $region57
    $region56: #{ngram_forward.1} parent=1 // pred_region
      _
    $region57: #{ngram_forward.1} parent=1 // pred_fallthru
      _
    // Predicated region
    $region58: #{ngram_forward.1} parent=1 // pred_check
      _
    $region59: #{ngram_forward.1} parent=1 // pred_check_branch
      %95 = sbr.rel (0) target = $region61
    $region60: #{ngram_forward.1} parent=1 // pred_region
      _
    $region61: #{ngram_forward.1} parent=1 // pred_fallthru
      _
    // Predicated region
    $region62: #{ngram_forward.1} parent=1 // pred_check
      _
    $region63: #{ngram_forward.1} parent=1 // pred_check_branch
      %97 = sbr.rel (0) target = $region65
    $region64: #{ngram_forward.1} parent=1 // pred_region
      _
    $region65: #{ngram_forward.1} parent=1 // pred_fallthru
      _
    // Predicated region
    $region66: #{ngram_forward.1} parent=1 // pred_check
      _
    $region67: #{ngram_forward.1} parent=1 // pred_check_branch
      %99 = sbr.rel (0) target = $region69
    $region68: #{ngram_forward.1} parent=1 // pred_region
      _
    $region69: #{ngram_forward.1} parent=1 // pred_fallthru
      _
    // Predicated region
    $region70: #{ngram_forward.1} parent=1 // pred_check
      _
    $region71: #{ngram_forward.1} parent=1 // pred_check_branch
      %101 = sbr.rel (0) target = $region73
    $region72: #{ngram_forward.1} parent=1 // pred_region
      %102 = dma.done [#allocation3], 18432
    $region73: #{ngram_forward.1} parent=1 // pred_fallthru
      _
    // Predicated region
    $region74: #{ngram_forward.1} parent=1 // pred_check
      _
    $region75: #{ngram_forward.1} parent=1 // pred_check_branch
      %104 = sbr.rel (0) target = $region77
    $region76: #{ngram_forward.1} parent=1 // pred_region
      %105 = dma.done [#allocation6], 6144
    $region77: #{ngram_forward.1} parent=1 // pred_fallthru
      _
    // Predicated region
    $region78: #{ngram_forward.1} parent=1 // pred_check
      _
    $region79: #{ngram_forward.1} parent=1 // pred_check_branch
      %107 = sbr.rel (0) target = $region81
    $region80: #{ngram_forward.1} parent=1 // pred_region
      %108 = dma.done [#allocation6], 12288
    $region81: #{ngram_forward.1} parent=1 // pred_fallthru
      _
    // Predicated region
    $region82: #{ngram_forward.1} parent=1 // pred_check
      _
    $region83: #{ngram_forward.1} parent=1 // pred_check_branch
      %110 = sbr.rel (0) target = $region85
    $region84: #{ngram_forward.1} parent=1 // pred_region
      %111 = dma.done [#allocation9], 12288
    $region85: #{ngram_forward.1} parent=1 // pred_fallthru
      _
    %v112 = vld [vmem:[%s0] sm:$0xff]
    %v113 = vld [vmem:[%s0 + $0x8] sm:$0xff]
    %v114 = vld [vmem:[%s1] sm:$0xff]
    %v115 = vlaneseq
    %v116 = vand.u32 %v115, 127
    %vm117 = vcmp.lt.s32.totalorder %v116, 60
    %vm118 = vcmp.ge.s32.totalorder %v116, 0
    %vm119 = vcmp.lt.s32.totalorder %v116, 20
    %vm120 = vmand %vm118, %vm119
    %v121 = vsel %vm120, 1, 0
    %v122 = vcvt.s32.f32 %v121
    %vm123 = vcmp.ge.s32.totalorder %v116, 20
    %vm124 = vcmp.lt.s32.totalorder %v116, 40
    %vm125 = vmand %vm123, %vm124
    %v126 = vsel %vm125, 1, 0
    %v127 = vcvt.s32.f32 %v126
    %vm128 = vcmp.ge.s32.totalorder %v116, 40
    %vm129 = vmand %vm128, %vm117
    %v130 = vsel %vm129, 1, 0
    %v131 = vcvt.s32.f32 %v130
    %v132 = vld [vmem:[%s2] sm:$0x1]
    %v133 = vld [vmem:[%s3] sm:$0x1]
    %134 = vadd.xlane.f32.xlu0 %v112
    %v135 = vpop.xlane.xlu0 %134
    %136 = vadd.xlane.f32.xlu0 %v113
    %v137 = vpop.xlane.xlu0 %136
    %v138 = vmul.f32 %v135, 0.016666668
    %v139 = vmul.f32 %v137, 0.016666668
    %v140 = vsub.f32 %v112, %v138
    %v141 = vsub.f32 %v113, %v139
    %v142 = vsel %vm117, 1, 0
    %vm143 = vcmp.eq.s32.totalorder %v142, 1
    %v144 = vsel %vm143, %v140, 0.0
    %v145 = vsel %vm143, %v141, 0.0
    %v146 = vmul.f32 %v144, %v144
    %v147 = vmul.f32 %v145, %v145
    %148 = vadd.xlane.f32.xlu0 %v146
    %v149 = vpop.xlane.xlu0 %148
    %150 = vadd.xlane.f32.xlu0 %v147
    %v151 = vpop.xlane.xlu0 %150
    %v152 = vmul.f32 %v149, 0.016666668
    %v153 = vmul.f32 %v151, 0.016666668
    %v154 = vadd.f32 %v152, 1e-05
    %v155 = vadd.f32 %v153, 1e-05
    %v156 = vrsqrt.pop %v154
    %v157 = vrsqrt.pop %v155
    %v158 = vmul.f32 %v144, %v156
    %v159 = vmul.f32 %v145, %v157
    %v161 = vlaneseq
    %v162 = vshrl.u32 %v161, 7
    %v163 = vsub.s32 0, %v162
    %v164 = vrot.slane %v132, %v163
    %v166 = vmul.f32 %v158, %v164
    %v167 = vmul.f32 %v159, %v164
    %v169 = vlaneseq
    %v170 = vshrl.u32 %v169, 7
    %v171 = vsub.s32 0, %v170
    %v172 = vrot.slane %v133, %v171
    %v174 = vadd.f32 %v166, %v172
    %v175 = vadd.f32 %v167, %v172
    %v176 = vld [vmem:[#allocation2] sm:$0xff]
    %v177 = vld [vmem:[#allocation2 + $0x8] sm:$0xff]
    %v178 = vld [vmem:[#allocation2 + $0x10] sm:$0xff]
    %v179 = vld [vmem:[#allocation2 + $0x18] sm:$0xff]
    %v180 = vld [vmem:[#allocation2 + $0x20] sm:$0xff]
    %v181 = vld [vmem:[#allocation2 + $0x28] sm:$0xff]
    %v182 = vld [vmem:[#allocation2 + $0x30] sm:$0xff]
    %v183 = vld [vmem:[#allocation2 + $0x38] sm:$0xff]
    %v184 = vld [vmem:[#allocation2 + $0x40] sm:$0xff]
    %v185 = vld [vmem:[#allocation2 + $0x48] sm:$0xff]
    %v186 = vld [vmem:[#allocation2 + $0x50] sm:$0xff]
    %v187 = vld [vmem:[#allocation2 + $0x58] sm:$0xff]
    %v188 = vld [vmem:[#allocation2 + $0x60] sm:$0xff]
    %v189 = vld [vmem:[#allocation2 + $0x68] sm:$0xff]
    %v190 = vld [vmem:[#allocation2 + $0x70] sm:$0xff]
    %v191 = vld [vmem:[#allocation2 + $0x78] sm:$0xff]
    %v192 = vld [vmem:[#allocation2 + $0x80] sm:$0xff]
    %v193 = vld [vmem:[#allocation2 + $0x88] sm:$0xff]
    %v194 = vld [vmem:[#allocation2 + $0x90] sm:$0xff]
    %v195 = vld [vmem:[#allocation2 + $0x98] sm:$0xff]
    %v196 = vld [vmem:[#allocation2 + $0xa0] sm:$0xff]
    %v197 = vld [vmem:[#allocation2 + $0xa8] sm:$0xff]
    %v198 = vld [vmem:[#allocation2 + $0xb0] sm:$0xff]
    %v199 = vld [vmem:[#allocation2 + $0xb8] sm:$0xff]
    %v200 = vld [vmem:[#allocation2 + $0xc0] sm:$0xff]
    %v201 = vld [vmem:[#allocation2 + $0xc8] sm:$0xff]
    %v202 = vld [vmem:[#allocation2 + $0xd0] sm:$0xff]
    %v203 = vld [vmem:[#allocation2 + $0xd8] sm:$0xff]
    %v204 = vld [vmem:[#allocation2 + $0xe0] sm:$0xff]
    %v205 = vld [vmem:[#allocation2 + $0xe8] sm:$0xff]
    %v206 = vld [vmem:[#allocation2 + $0xf0] sm:$0xff]
    %v207 = vld [vmem:[#allocation2 + $0xf8] sm:$0xff]
    %v208 = vld [vmem:[#allocation2 + $0x100] sm:$0xff]
    %v209 = vld [vmem:[#allocation2 + $0x108] sm:$0xff]
    %v210 = vld [vmem:[#allocation2 + $0x110] sm:$0xff]
    %v211 = vld [vmem:[#allocation2 + $0x118] sm:$0xff]
    %v212 = vld [vmem:[#allocation2 + $0x120] sm:$0xff]
    %v213 = vld [vmem:[#allocation2 + $0x128] sm:$0xff]
    %v214 = vld [vmem:[#allocation2 + $0x130] sm:$0xff]
    %v215 = vld [vmem:[#allocation2 + $0x138] sm:$0xff]
    %v216 = vld [vmem:[#allocation2 + $0x140] sm:$0xff]
    %v217 = vld [vmem:[#allocation2 + $0x148] sm:$0xff]
    %v218 = vld [vmem:[#allocation2 + $0x150] sm:$0xff]
    %v219 = vld [vmem:[#allocation2 + $0x158] sm:$0xff]
    %v220 = vld [vmem:[#allocation2 + $0x160] sm:$0xff]
    %v221 = vld [vmem:[#allocation2 + $0x168] sm:$0xff]
    %v222 = vld [vmem:[#allocation2 + $0x170] sm:$0xff]
    %v223 = vld [vmem:[#allocation2 + $0x178] sm:$0xff]
    %224 = vmatprep.subr.mxu0 %v222
    %225 = vmatpush1.msra.mxu0 %v221
    %226 = vmatprep.subr.mxu0 %v219
    %227 = vmatpush1.msra.mxu0 %v218
    %228 = vmatprep.subr.mxu0 %v216
    %229 = vmatpush1.msra.mxu0 %v215
    %230 = vmatprep.subr.mxu0 %v213
    %231 = vmatpush1.msra.mxu0 %v212
    %232 = vmatprep.subr.mxu0 %v210
    %233 = vmatpush1.msra.mxu0 %v209
    %234 = vmatprep.subr.mxu0 %v207
    %235 = vmatpush1.msra.mxu0 %v206
    %236 = vmatprep.subr.mxu0 %v204
    %237 = vmatpush1.msra.mxu0 %v203
    %238 = vmatprep.subr.mxu0 %v201
    %239 = vmatpush1.msra.mxu0 %v200
    %240 = vmatprep.subr.mxu0 %v198
    %241 = vmatpush1.msra.mxu0 %v197
    %242 = vmatprep.subr.mxu0 %v195
    %243 = vmatpush1.msra.mxu0 %v194
    %244 = vmatprep.subr.mxu0 %v192
    %245 = vmatpush1.msra.mxu0 %v191
    %246 = vmatprep.subr.mxu0 %v189
    %247 = vmatpush1.msra.mxu0 %v188
    %248 = vmatprep.subr.mxu0 %v186
    %249 = vmatpush1.msra.mxu0 %v185
    %250 = vmatprep.subr.mxu0 %v183
    %251 = vmatpush1.msra.mxu0 %v182
    %252 = vmatprep.subr.mxu0 %v180
    %253 = vmatpush1.msra.mxu0 %v179
    %254 = vmatprep.subr.mxu0 %v177
    %255 = vmatpush1.msra.mxu0 %v176
    %256 = vmatprep.subr.mxu0 0.0
    %257 = vmatpush2.msra.mxu0 0.0
    %258 = vmatprep.subr.mxu0 0.0
    %259 = vmatpush2.msra.mxu0 0.0
    %260 = vmatprep.subr.mxu0 0.0
    %261 = vmatpush2.msra.mxu0 0.0
    %262 = vmatprep.subr.mxu0 0.0
    %263 = vmatpush2.msra.mxu0 0.0
    %264 = vmatprep.subr.mxu0 0.0
    %265 = vmatpush2.msra.mxu0 0.0
    %266 = vmatprep.subr.mxu0 0.0
    %267 = vmatpush2.msra.mxu0 0.0
    %268 = vmatprep.subr.mxu0 0.0
    %269 = vmatpush2.msra.mxu0 0.0
    %270 = vmatprep.subr.mxu0 0.0
    %271 = vmatpush2.msra.mxu0 0.0
    %272 = vmatprep.subr.mxu0 0.0
    %273 = vmatpush2.msra.mxu0 0.0
    %274 = vmatprep.subr.mxu0 0.0
    %275 = vmatpush2.msra.mxu0 0.0
    %276 = vmatprep.subr.mxu0 0.0
    %277 = vmatpush2.msra.mxu0 0.0
    %278 = vmatprep.subr.mxu0 0.0
    %279 = vmatpush2.msra.mxu0 0.0
    %280 = vmatprep.subr.mxu0 0.0
    %281 = vmatpush2.msra.mxu0 0.0
    %282 = vmatprep.subr.mxu0 0.0
    %283 = vmatpush2.msra.mxu0 0.0
    %284 = vmatprep.subr.mxu0 0.0
    %285 = vmatpush2.msra.mxu0 0.0
    %286 = vmatprep.subr.mxu0 0.0
    %287 = vmatpush2.msra.mxu0 0.0
    %288 = vmatprep.mubr.f32.mxu0 0.0
    %289 = vmatmul.mubr.f32.gmra.mxu0 %v174
    %v290 = vpop.f32.mrf.mxu0
    %v291 = vadd.f32 0.0, %v290
    %v292 = vpop.f32.mrf.mxu0
    %v293 = vadd.f32 0.0, %v292
    %294 = vmatprep.mubr.f32.mxu0 0.0
    %295 = vmatmul.mubr.f32.gmra.mxu0 %v175
    %v296 = vpop.f32.mrf.mxu0
    %v297 = vadd.f32 0.0, %v296
    %v298 = vpop.f32.mrf.mxu0
    %v299 = vadd.f32 0.0, %v298
    %300 = vdwg.mxu0
    %301 = vmatprep.subr.mxu0 0.0
    %302 = vmatpush1.msra.mxu0 %v223
    %303 = vmatprep.subr.mxu0 0.0
    %304 = vmatpush1.msra.mxu0 %v220
    %305 = vmatprep.subr.mxu0 0.0
    %306 = vmatpush1.msra.mxu0 %v217
    %307 = vmatprep.subr.mxu0 0.0
    %308 = vmatpush1.msra.mxu0 %v214
    %309 = vmatprep.subr.mxu0 0.0
    %310 = vmatpush1.msra.mxu0 %v211
    %311 = vmatprep.subr.mxu0 0.0
    %312 = vmatpush1.msra.mxu0 %v208
    %313 = vmatprep.subr.mxu0 0.0
    %314 = vmatpush1.msra.mxu0 %v205
    %315 = vmatprep.subr.mxu0 0.0
    %316 = vmatpush1.msra.mxu0 %v202
    %317 = vmatprep.subr.mxu0 0.0
    %318 = vmatpush1.msra.mxu0 %v199
    %319 = vmatprep.subr.mxu0 0.0
    %320 = vmatpush1.msra.mxu0 %v196
    %321 = vmatprep.subr.mxu0 0.0
    %322 = vmatpush1.msra.mxu0 %v193
    %323 = vmatprep.subr.mxu0 0.0
    %324 = vmatpush1.msra.mxu0 %v190
    %325 = vmatprep.subr.mxu0 0.0
    %326 = vmatpush1.msra.mxu0 %v187
    %327 = vmatprep.subr.mxu0 0.0
    %328 = vmatpush1.msra.mxu0 %v184
    %329 = vmatprep.subr.mxu0 0.0
    %330 = vmatpush1.msra.mxu0 %v181
    %331 = vmatprep.subr.mxu0 0.0
    %332 = vmatpush1.msra.mxu0 %v178
    %333 = vmatprep.subr.mxu0 0.0
    %334 = vmatpush2.msra.mxu0 0.0
    %335 = vmatprep.subr.mxu0 0.0
    %336 = vmatpush2.msra.mxu0 0.0
    %337 = vmatprep.subr.mxu0 0.0
    %338 = vmatpush2.msra.mxu0 0.0
    %339 = vmatprep.subr.mxu0 0.0
    %340 = vmatpush2.msra.mxu0 0.0
    %341 = vmatprep.subr.mxu0 0.0
    %342 = vmatpush2.msra.mxu0 0.0
    %343 = vmatprep.subr.mxu0 0.0
    %344 = vmatpush2.msra.mxu0 0.0
    %345 = vmatprep.subr.mxu0 0.0
    %346 = vmatpush2.msra.mxu0 0.0
    %347 = vmatprep.subr.mxu0 0.0
    %348 = vmatpush2.msra.mxu0 0.0
    %349 = vmatprep.subr.mxu0 0.0
    %350 = vmatpush2.msra.mxu0 0.0
    %351 = vmatprep.subr.mxu0 0.0
    %352 = vmatpush2.msra.mxu0 0.0
    %353 = vmatprep.subr.mxu0 0.0
    %354 = vmatpush2.msra.mxu0 0.0
    %355 = vmatprep.subr.mxu0 0.0
    %356 = vmatpush2.msra.mxu0 0.0
    %357 = vmatprep.subr.mxu0 0.0
    %358 = vmatpush2.msra.mxu0 0.0
    %359 = vmatprep.subr.mxu0 0.0
    %360 = vmatpush2.msra.mxu0 0.0
    %361 = vmatprep.subr.mxu0 0.0
    %362 = vmatpush2.msra.mxu0 0.0
    %363 = vmatprep.subr.mxu0 0.0
    %364 = vmatpush2.msra.mxu0 0.0
    %365 = vmatprep.mubr.f32.mxu0 0.0
    %366 = vmatmul.mubr.f32.gmra.mxu0 %v174
    %v367 = vpop.f32.mrf.mxu0
    %v368 = vadd.f32 0.0, %v367
    %v369 = vpop.f32.mrf.mxu0
    %370 = vmatprep.mubr.f32.mxu0 0.0
    %371 = vmatmul.mubr.f32.gmra.mxu0 %v175
    %v372 = vpop.f32.mrf.mxu0
    %v373 = vadd.f32 0.0, %v372
    %v374 = vpop.f32.mrf.mxu0
    %375 = vdwg.mxu0
    %v376 = vmul.f32 %v291, %v122
    %v377 = vmul.f32 %v297, %v122
    %378 = vmatprep.subr.mxu0 0.0
    %379 = vmatpush1.xpose.msra.mxu0 0.0
    %380 = vmatprep.subr.mxu0 0.0
    %381 = vmatpush1.xpose.msra.mxu0 0.0
    %382 = vmatprep.subr.mxu0 0.0
    %383 = vmatpush1.xpose.msra.mxu0 0.0
    %384 = vmatprep.subr.mxu0 0.0
    %385 = vmatpush1.xpose.msra.mxu0 0.0
    %386 = vmatprep.subr.mxu0 0.0
    %387 = vmatpush1.xpose.msra.mxu0 0.0
    %388 = vmatprep.subr.mxu0 0.0
    %389 = vmatpush1.xpose.msra.mxu0 0.0
    %390 = vmatprep.subr.mxu0 0.0
    %391 = vmatpush1.xpose.msra.mxu0 0.0
    %392 = vmatprep.subr.mxu0 0.0
    %393 = vmatpush1.xpose.msra.mxu0 0.0
    %394 = vmatprep.subr.mxu0 0.0
    %395 = vmatpush1.xpose.msra.mxu0 0.0
    %396 = vmatprep.subr.mxu0 0.0
    %397 = vmatpush1.xpose.msra.mxu0 0.0
    %398 = vmatprep.subr.mxu0 0.0
    %399 = vmatpush1.xpose.msra.mxu0 0.0
    %400 = vmatprep.subr.mxu0 0.0
    %401 = vmatpush1.xpose.msra.mxu0 0.0
    %402 = vmatprep.subr.mxu0 0.0
    %403 = vmatpush1.xpose.msra.mxu0 0.0
    %404 = vmatprep.subr.mxu0 0.0
    %405 = vmatpush1.xpose.msra.mxu0 0.0
    %406 = vmatprep.subr.mxu0 0.0
    %407 = vmatpush1.xpose.msra.mxu0 0.0
    %408 = vmatprep.subr.mxu0 0.0
    %409 = vmatpush1.xpose.msra.mxu0 %v293
    %410 = vmatprep.subr.mxu0 0.0
    %411 = vmatpush2.xpose.msra.mxu0 0.0
    %412 = vmatprep.subr.mxu0 0.0
    %413 = vmatpush2.xpose.msra.mxu0 0.0
    %414 = vmatprep.subr.mxu0 0.0
    %415 = vmatpush2.xpose.msra.mxu0 0.0
    %416 = vmatprep.subr.mxu0 0.0
    %417 = vmatpush2.xpose.msra.mxu0 0.0
    %418 = vmatprep.subr.mxu0 0.0
    %419 = vmatpush2.xpose.msra.mxu0 0.0
    %420 = vmatprep.subr.mxu0 0.0
    %421 = vmatpush2.xpose.msra.mxu0 0.0
    %422 = vmatprep.subr.mxu0 0.0
    %423 = vmatpush2.xpose.msra.mxu0 0.0
    %424 = vmatprep.subr.mxu0 0.0
    %425 = vmatpush2.xpose.msra.mxu0 0.0
    %426 = vmatprep.subr.mxu0 0.0
    %427 = vmatpush2.xpose.msra.mxu0 0.0
    %428 = vmatprep.subr.mxu0 0.0
    %429 = vmatpush2.xpose.msra.mxu0 0.0
    %430 = vmatprep.subr.mxu0 0.0
    %431 = vmatpush2.xpose.msra.mxu0 0.0
    %432 = vmatprep.subr.mxu0 0.0
    %433 = vmatpush2.xpose.msra.mxu0 0.0
    %434 = vmatprep.subr.mxu0 0.0
    %435 = vmatpush2.xpose.msra.mxu0 0.0
    %436 = vmatprep.subr.mxu0 0.0
    %437 = vmatpush2.xpose.msra.mxu0 0.0
    %438 = vmatprep.subr.mxu0 0.0
    %439 = vmatpush2.xpose.msra.mxu0 0.0
    %440 = vmatprep.subr.mxu0 0.0
    %441 = vmatpush2.xpose.msra.mxu0 0.0
    %442 = vmatprep.mubr.f32.mxu0 0.0
    %443 = vmatmul.mubr.f32.gmra.mxu0 %v376
    %v444 = vpop.f32.mrf.mxu0
    %v445 = vadd.f32 0.0, %v444
    %v446 = vpop.f32.mrf.mxu0
    %447 = vdwg.mxu0
    %448 = vmatprep.subr.mxu0 0.0
    %449 = vmatpush1.xpose.msra.mxu0 0.0
    %450 = vmatprep.subr.mxu0 0.0
    %451 = vmatpush1.xpose.msra.mxu0 0.0
    %452 = vmatprep.subr.mxu0 0.0
    %453 = vmatpush1.xpose.msra.mxu0 0.0
    %454 = vmatprep.subr.mxu0 0.0
    %455 = vmatpush1.xpose.msra.mxu0 0.0
    %456 = vmatprep.subr.mxu0 0.0
    %457 = vmatpush1.xpose.msra.mxu0 0.0
    %458 = vmatprep.subr.mxu0 0.0
    %459 = vmatpush1.xpose.msra.mxu0 0.0
    %460 = vmatprep.subr.mxu0 0.0
    %461 = vmatpush1.xpose.msra.mxu0 0.0
    %462 = vmatprep.subr.mxu0 0.0
    %463 = vmatpush1.xpose.msra.mxu0 0.0
    %464 = vmatprep.subr.mxu0 0.0
    %465 = vmatpush1.xpose.msra.mxu0 0.0
    %466 = vmatprep.subr.mxu0 0.0
    %467 = vmatpush1.xpose.msra.mxu0 0.0
    %468 = vmatprep.subr.mxu0 0.0
    %469 = vmatpush1.xpose.msra.mxu0 0.0
    %470 = vmatprep.subr.mxu0 0.0
    %471 = vmatpush1.xpose.msra.mxu0 0.0
    %472 = vmatprep.subr.mxu0 0.0
    %473 = vmatpush1.xpose.msra.mxu0 0.0
    %474 = vmatprep.subr.mxu0 0.0
    %475 = vmatpush1.xpose.msra.mxu0 0.0
    %476 = vmatprep.subr.mxu0 0.0
    %477 = vmatpush1.xpose.msra.mxu0 0.0
    %478 = vmatprep.subr.mxu0 0.0
    %479 = vmatpush1.xpose.msra.mxu0 %v299
    %480 = vmatprep.subr.mxu0 0.0
    %481 = vmatpush2.xpose.msra.mxu0 0.0
    %482 = vmatprep.subr.mxu0 0.0
    %483 = vmatpush2.xpose.msra.mxu0 0.0
    %484 = vmatprep.subr.mxu0 0.0
    %485 = vmatpush2.xpose.msra.mxu0 0.0
    %486 = vmatprep.subr.mxu0 0.0
    %487 = vmatpush2.xpose.msra.mxu0 0.0
    %488 = vmatprep.subr.mxu0 0.0
    %489 = vmatpush2.xpose.msra.mxu0 0.0
    %490 = vmatprep.subr.mxu0 0.0
    %491 = vmatpush2.xpose.msra.mxu0 0.0
    %492 = vmatprep.subr.mxu0 0.0
    %493 = vmatpush2.xpose.msra.mxu0 0.0
    %494 = vmatprep.subr.mxu0 0.0
    %495 = vmatpush2.xpose.msra.mxu0 0.0
    %496 = vmatprep.subr.mxu0 0.0
    %497 = vmatpush2.xpose.msra.mxu0 0.0
    %498 = vmatprep.subr.mxu0 0.0
    %499 = vmatpush2.xpose.msra.mxu0 0.0
    %500 = vmatprep.subr.mxu0 0.0
    %501 = vmatpush2.xpose.msra.mxu0 0.0
    %502 = vmatprep.subr.mxu0 0.0
    %503 = vmatpush2.xpose.msra.mxu0 0.0
    %504 = vmatprep.subr.mxu0 0.0
    %505 = vmatpush2.xpose.msra.mxu0 0.0
    %506 = vmatprep.subr.mxu0 0.0
    %507 = vmatpush2.xpose.msra.mxu0 0.0
    %508 = vmatprep.subr.mxu0 0.0
    %509 = vmatpush2.xpose.msra.mxu0 0.0
    %510 = vmatprep.subr.mxu0 0.0
    %511 = vmatpush2.xpose.msra.mxu0 0.0
    %512 = vmatprep.mubr.f32.mxu0 0.0
    %513 = vmatmul.mubr.f32.gmra.mxu0 %v377
    %v514 = vpop.f32.mrf.mxu0
    %v515 = vadd.f32 0.0, %v514
    %v516 = vpop.f32.mrf.mxu0
    %517 = vdwg.mxu0
    %v518 = vmul.f32 %v445, 0.12909944
    %v519 = vmul.f32 %v515, 0.12909944
    %v520 = vadd.f32 %v518, %v114
    %v521 = vadd.f32 %v519, %v114
    %vm522 = vcmask 64512
    %v523 = vsel %vm522, %v520, -inf
    %524 = vmax.xlane.f32.xlu0 %v523
    %v525 = vpop.xlane.xlu0 %524
    %v526 = vsel %vm522, %v521, -inf
    %527 = vmax.xlane.f32.xlu0 %v526
    %v528 = vpop.xlane.xlu0 %527
    %v529 = vsub.f32 %v520, %v525
    %v530 = vsub.f32 %v521, %v528
    %v531 = vmul.f32 %v529, 1.442695
    %v532 = vpow.pop %v531
    %v533 = vmul.f32 %v530, 1.442695
    %v534 = vpow.pop %v533
    %v535 = vsel %vm522, %v532, 0.0
    %536 = vadd.xlane.f32.xlu0 %v535
    %v537 = vpop.xlane.xlu0 %536
    %v538 = vsel %vm522, %v534, 0.0
    %539 = vadd.xlane.f32.xlu0 %v538
    %v540 = vpop.xlane.xlu0 %539
    %v541 = vrcp.pop %v537
    %v542 = vrcp.pop %v540
    %v543 = vmul.f32 %v532, %v541
    %v544 = vmul.f32 %v534, %v542
    %v546 = vsel %vm522, %v543, 0
    %548 = vmatprep.subr.mxu0 0.0
    %549 = vmatpush1.msra.mxu0 0.0
    %550 = vmatprep.subr.mxu0 0.0
    %551 = vmatpush1.msra.mxu0 0.0
    %552 = vmatprep.subr.mxu0 0.0
    %553 = vmatpush1.msra.mxu0 0.0
    %554 = vmatprep.subr.mxu0 0.0
    %555 = vmatpush1.msra.mxu0 0.0
    %556 = vmatprep.subr.mxu0 0.0
    %557 = vmatpush1.msra.mxu0 0.0
    %558 = vmatprep.subr.mxu0 0.0
    %559 = vmatpush1.msra.mxu0 0.0
    %560 = vmatprep.subr.mxu0 0.0
    %561 = vmatpush1.msra.mxu0 0.0
    %562 = vmatprep.subr.mxu0 0.0
    %563 = vmatpush1.msra.mxu0 0.0
    %564 = vmatprep.subr.mxu0 0.0
    %565 = vmatpush1.msra.mxu0 0.0
    %566 = vmatprep.subr.mxu0 0.0
    %567 = vmatpush1.msra.mxu0 0.0
    %568 = vmatprep.subr.mxu0 0.0
    %569 = vmatpush1.msra.mxu0 0.0
    %570 = vmatprep.subr.mxu0 0.0
    %571 = vmatpush1.msra.mxu0 0.0
    %572 = vmatprep.subr.mxu0 0.0
    %573 = vmatpush1.msra.mxu0 0.0
    %574 = vmatprep.subr.mxu0 0.0
    %575 = vmatpush1.msra.mxu0 0.0
    %576 = vmatprep.subr.mxu0 0.0
    %577 = vmatpush1.msra.mxu0 0.0
    %578 = vmatprep.subr.mxu0 0.0
    %579 = vmatpush1.msra.mxu0 %v368
    %580 = vmatprep.subr.mxu0 0.0
    %581 = vmatpush2.msra.mxu0 0.0
    %582 = vmatprep.subr.mxu0 0.0
    %583 = vmatpush2.msra.mxu0 0.0
    %584 = vmatprep.subr.mxu0 0.0
    %585 = vmatpush2.msra.mxu0 0.0
    %586 = vmatprep.subr.mxu0 0.0
    %587 = vmatpush2.msra.mxu0 0.0
    %588 = vmatprep.subr.mxu0 0.0
    %589 = vmatpush2.msra.mxu0 0.0
    %590 = vmatprep.subr.mxu0 0.0
    %591 = vmatpush2.msra.mxu0 0.0
    %592 = vmatprep.subr.mxu0 0.0
    %593 = vmatpush2.msra.mxu0 0.0
    %594 = vmatprep.subr.mxu0 0.0
    %595 = vmatpush2.msra.mxu0 0.0
    %596 = vmatprep.subr.mxu0 0.0
    %597 = vmatpush2.msra.mxu0 0.0
    %598 = vmatprep.subr.mxu0 0.0
    %599 = vmatpush2.msra.mxu0 0.0
    %600 = vmatprep.subr.mxu0 0.0
    %601 = vmatpush2.msra.mxu0 0.0
    %602 = vmatprep.subr.mxu0 0.0
    %603 = vmatpush2.msra.mxu0 0.0
    %604 = vmatprep.subr.mxu0 0.0
    %605 = vmatpush2.msra.mxu0 0.0
    %606 = vmatprep.subr.mxu0 0.0
    %607 = vmatpush2.msra.mxu0 0.0
    %608 = vmatprep.subr.mxu0 0.0
    %609 = vmatpush2.msra.mxu0 0.0
    %610 = vmatprep.subr.mxu0 0.0
    %611 = vmatpush2.msra.mxu0 0.0
    %612 = vmatprep.mubr.f32.mxu0 0.0
    %613 = vmatmul.mubr.f32.gmra.mxu0 %v546
    %v614 = vpop.f32.mrf.mxu0
    %v615 = vadd.f32 0.0, %v614
    %v616 = vpop.f32.mrf.mxu0
    %617 = vdwg.mxu0
    %v619 = vsel %vm522, %v544, 0
    %621 = vmatprep.subr.mxu0 0.0
    %622 = vmatpush1.msra.mxu0 0.0
    %623 = vmatprep.subr.mxu0 0.0
    %624 = vmatpush1.msra.mxu0 0.0
    %625 = vmatprep.subr.mxu0 0.0
    %626 = vmatpush1.msra.mxu0 0.0
    %627 = vmatprep.subr.mxu0 0.0
    %628 = vmatpush1.msra.mxu0 0.0
    %629 = vmatprep.subr.mxu0 0.0
    %630 = vmatpush1.msra.mxu0 0.0
    %631 = vmatprep.subr.mxu0 0.0
    %632 = vmatpush1.msra.mxu0 0.0
    %633 = vmatprep.subr.mxu0 0.0
    %634 = vmatpush1.msra.mxu0 0.0
    %635 = vmatprep.subr.mxu0 0.0
    %636 = vmatpush1.msra.mxu0 0.0
    %637 = vmatprep.subr.mxu0 0.0
    %638 = vmatpush1.msra.mxu0 0.0
    %639 = vmatprep.subr.mxu0 0.0
    %640 = vmatpush1.msra.mxu0 0.0
    %641 = vmatprep.subr.mxu0 0.0
    %642 = vmatpush1.msra.mxu0 0.0
    %643 = vmatprep.subr.mxu0 0.0
    %644 = vmatpush1.msra.mxu0 0.0
    %645 = vmatprep.subr.mxu0 0.0
    %646 = vmatpush1.msra.mxu0 0.0
    %647 = vmatprep.subr.mxu0 0.0
    %648 = vmatpush1.msra.mxu0 0.0
    %649 = vmatprep.subr.mxu0 0.0
    %650 = vmatpush1.msra.mxu0 0.0
    %651 = vmatprep.subr.mxu0 0.0
    %652 = vmatpush1.msra.mxu0 %v373
    %653 = vmatprep.subr.mxu0 0.0
    %654 = vmatpush2.msra.mxu0 0.0
    %655 = vmatprep.subr.mxu0 0.0
    %656 = vmatpush2.msra.mxu0 0.0
    %657 = vmatprep.subr.mxu0 0.0
    %658 = vmatpush2.msra.mxu0 0.0
    %659 = vmatprep.subr.mxu0 0.0
    %660 = vmatpush2.msra.mxu0 0.0
    %661 = vmatprep.subr.mxu0 0.0
    %662 = vmatpush2.msra.mxu0 0.0
    %663 = vmatprep.subr.mxu0 0.0
    %664 = vmatpush2.msra.mxu0 0.0
    %665 = vmatprep.subr.mxu0 0.0
    %666 = vmatpush2.msra.mxu0 0.0
    %667 = vmatprep.subr.mxu0 0.0
    %668 = vmatpush2.msra.mxu0 0.0
    %669 = vmatprep.subr.mxu0 0.0
    %670 = vmatpush2.msra.mxu0 0.0
    %671 = vmatprep.subr.mxu0 0.0
    %672 = vmatpush2.msra.mxu0 0.0
    %673 = vmatprep.subr.mxu0 0.0
    %674 = vmatpush2.msra.mxu0 0.0
    %675 = vmatprep.subr.mxu0 0.0
    %676 = vmatpush2.msra.mxu0 0.0
    %677 = vmatprep.subr.mxu0 0.0
    %678 = vmatpush2.msra.mxu0 0.0
    %679 = vmatprep.subr.mxu0 0.0
    %680 = vmatpush2.msra.mxu0 0.0
    %681 = vmatprep.subr.mxu0 0.0
    %682 = vmatpush2.msra.mxu0 0.0
    %683 = vmatprep.subr.mxu0 0.0
    %684 = vmatpush2.msra.mxu0 0.0
    %685 = vmatprep.mubr.f32.mxu0 0.0
    %686 = vmatmul.mubr.f32.gmra.mxu0 %v619
    %v687 = vpop.f32.mrf.mxu0
    %v688 = vadd.f32 0.0, %v687
    %v689 = vpop.f32.mrf.mxu0
    %690 = vdwg.mxu0
    %v691 = vmul.f32 %v615, %v122
    %v692 = vmul.f32 %v688, %v122
    %v693 = vmul.f32 %v291, %v127
    %v694 = vmul.f32 %v297, %v127
    %695 = vmatprep.subr.mxu0 0.0
    %696 = vmatpush1.xpose.msra.mxu0 0.0
    %697 = vmatprep.subr.mxu0 0.0
    %698 = vmatpush1.xpose.msra.mxu0 0.0
    %699 = vmatprep.subr.mxu0 0.0
    %700 = vmatpush1.xpose.msra.mxu0 0.0
    %701 = vmatprep.subr.mxu0 0.0
    %702 = vmatpush1.xpose.msra.mxu0 0.0
    %703 = vmatprep.subr.mxu0 0.0
    %704 = vmatpush1.xpose.msra.mxu0 0.0
    %705 = vmatprep.subr.mxu0 0.0
    %706 = vmatpush1.xpose.msra.mxu0 0.0
    %707 = vmatprep.subr.mxu0 0.0
    %708 = vmatpush1.xpose.msra.mxu0 0.0
    %709 = vmatprep.subr.mxu0 0.0
    %710 = vmatpush1.xpose.msra.mxu0 0.0
    %711 = vmatprep.subr.mxu0 0.0
    %712 = vmatpush1.xpose.msra.mxu0 0.0
    %713 = vmatprep.subr.mxu0 0.0
    %714 = vmatpush1.xpose.msra.mxu0 0.0
    %715 = vmatprep.subr.mxu0 0.0
    %716 = vmatpush1.xpose.msra.mxu0 0.0
    %717 = vmatprep.subr.mxu0 0.0
    %718 = vmatpush1.xpose.msra.mxu0 0.0
    %719 = vmatprep.subr.mxu0 0.0
    %720 = vmatpush1.xpose.msra.mxu0 0.0
    %721 = vmatprep.subr.mxu0 0.0
    %722 = vmatpush1.xpose.msra.mxu0 0.0
    %723 = vmatprep.subr.mxu0 0.0
    %724 = vmatpush1.xpose.msra.mxu0 0.0
    %725 = vmatprep.subr.mxu0 0.0
    %726 = vmatpush1.xpose.msra.mxu0 %v293
    %727 = vmatprep.subr.mxu0 0.0
    %728 = vmatpush2.xpose.msra.mxu0 0.0
    %729 = vmatprep.subr.mxu0 0.0
    %730 = vmatpush2.xpose.msra.mxu0 0.0
    %731 = vmatprep.subr.mxu0 0.0
    %732 = vmatpush2.xpose.msra.mxu0 0.0
    %733 = vmatprep.subr.mxu0 0.0
    %734 = vmatpush2.xpose.msra.mxu0 0.0
    %735 = vmatprep.subr.mxu0 0.0
    %736 = vmatpush2.xpose.msra.mxu0 0.0
    %737 = vmatprep.subr.mxu0 0.0
    %738 = vmatpush2.xpose.msra.mxu0 0.0
    %739 = vmatprep.subr.mxu0 0.0
    %740 = vmatpush2.xpose.msra.mxu0 0.0
    %741 = vmatprep.subr.mxu0 0.0
    %742 = vmatpush2.xpose.msra.mxu0 0.0
    %743 = vmatprep.subr.mxu0 0.0
    %744 = vmatpush2.xpose.msra.mxu0 0.0
    %745 = vmatprep.subr.mxu0 0.0
    %746 = vmatpush2.xpose.msra.mxu0 0.0
    %747 = vmatprep.subr.mxu0 0.0
    %748 = vmatpush2.xpose.msra.mxu0 0.0
    %749 = vmatprep.subr.mxu0 0.0
    %750 = vmatpush2.xpose.msra.mxu0 0.0
    %751 = vmatprep.subr.mxu0 0.0
    %752 = vmatpush2.xpose.msra.mxu0 0.0
    %753 = vmatprep.subr.mxu0 0.0
    %754 = vmatpush2.xpose.msra.mxu0 0.0
    %755 = vmatprep.subr.mxu0 0.0
    %756 = vmatpush2.xpose.msra.mxu0 0.0
    %757 = vmatprep.subr.mxu0 0.0
    %758 = vmatpush2.xpose.msra.mxu0 0.0
    %759 = vmatprep.mubr.f32.mxu0 0.0
    %760 = vmatmul.mubr.f32.gmra.mxu0 %v693
    %v761 = vpop.f32.mrf.mxu0
    %v762 = vadd.f32 0.0, %v761
    %v763 = vpop.f32.mrf.mxu0
    %764 = vdwg.mxu0
    %765 = vmatprep.subr.mxu0 0.0
    %766 = vmatpush1.xpose.msra.mxu0 0.0
    %767 = vmatprep.subr.mxu0 0.0
    %768 = vmatpush1.xpose.msra.mxu0 0.0
    %769 = vmatprep.subr.mxu0 0.0
    %770 = vmatpush1.xpose.msra.mxu0 0.0
    %771 = vmatprep.subr.mxu0 0.0
    %772 = vmatpush1.xpose.msra.mxu0 0.0
    %773 = vmatprep.subr.mxu0 0.0
    %774 = vmatpush1.xpose.msra.mxu0 0.0
    %775 = vmatprep.subr.mxu0 0.0
    %776 = vmatpush1.xpose.msra.mxu0 0.0
    %777 = vmatprep.subr.mxu0 0.0
    %778 = vmatpush1.xpose.msra.mxu0 0.0
    %779 = vmatprep.subr.mxu0 0.0
    %780 = vmatpush1.xpose.msra.mxu0 0.0
    %781 = vmatprep.subr.mxu0 0.0
    %782 = vmatpush1.xpose.msra.mxu0 0.0
    %783 = vmatprep.subr.mxu0 0.0
    %784 = vmatpush1.xpose.msra.mxu0 0.0
    %785 = vmatprep.subr.mxu0 0.0
    %786 = vmatpush1.xpose.msra.mxu0 0.0
    %787 = vmatprep.subr.mxu0 0.0
    %788 = vmatpush1.xpose.msra.mxu0 0.0
    %789 = vmatprep.subr.mxu0 0.0
    %790 = vmatpush1.xpose.msra.mxu0 0.0
    %791 = vmatprep.subr.mxu0 0.0
    %792 = vmatpush1.xpose.msra.mxu0 0.0
    %793 = vmatprep.subr.mxu0 0.0
    %794 = vmatpush1.xpose.msra.mxu0 0.0
    %795 = vmatprep.subr.mxu0 0.0
    %796 = vmatpush1.xpose.msra.mxu0 %v299
    %797 = vmatprep.subr.mxu0 0.0
    %798 = vmatpush2.xpose.msra.mxu0 0.0
    %799 = vmatprep.subr.mxu0 0.0
    %800 = vmatpush2.xpose.msra.mxu0 0.0
    %801 = vmatprep.subr.mxu0 0.0
    %802 = vmatpush2.xpose.msra.mxu0 0.0
    %803 = vmatprep.subr.mxu0 0.0
    %804 = vmatpush2.xpose.msra.mxu0 0.0
    %805 = vmatprep.subr.mxu0 0.0
    %806 = vmatpush2.xpose.msra.mxu0 0.0
    %807 = vmatprep.subr.mxu0 0.0
    %808 = vmatpush2.xpose.msra.mxu0 0.0
    %809 = vmatprep.subr.mxu0 0.0
    %810 = vmatpush2.xpose.msra.mxu0 0.0
    %811 = vmatprep.subr.mxu0 0.0
    %812 = vmatpush2.xpose.msra.mxu0 0.0
    %813 = vmatprep.subr.mxu0 0.0
    %814 = vmatpush2.xpose.msra.mxu0 0.0
    %815 = vmatprep.subr.mxu0 0.0
    %816 = vmatpush2.xpose.msra.mxu0 0.0
    %817 = vmatprep.subr.mxu0 0.0
    %818 = vmatpush2.xpose.msra.mxu0 0.0
    %819 = vmatprep.subr.mxu0 0.0
    %820 = vmatpush2.xpose.msra.mxu0 0.0
    %821 = vmatprep.subr.mxu0 0.0
    %822 = vmatpush2.xpose.msra.mxu0 0.0
    %823 = vmatprep.subr.mxu0 0.0
    %824 = vmatpush2.xpose.msra.mxu0 0.0
    %825 = vmatprep.subr.mxu0 0.0
    %826 = vmatpush2.xpose.msra.mxu0 0.0
    %827 = vmatprep.subr.mxu0 0.0
    %828 = vmatpush2.xpose.msra.mxu0 0.0
    %829 = vmatprep.mubr.f32.mxu0 0.0
    %830 = vmatmul.mubr.f32.gmra.mxu0 %v694
    %v831 = vpop.f32.mrf.mxu0
    %v832 = vadd.f32 0.0, %v831
    %v833 = vpop.f32.mrf.mxu0
    %834 = vdwg.mxu0
    %v835 = vmul.f32 %v762, 0.12909944
    %v836 = vmul.f32 %v832, 0.12909944
    %v837 = vadd.f32 %v835, %v114
    %v838 = vadd.f32 %v836, %v114
    %v839 = vsel %vm522, %v837, -inf
    %840 = vmax.xlane.f32.xlu0 %v839
    %v841 = vpop.xlane.xlu0 %840
    %v842 = vsel %vm522, %v838, -inf
    %843 = vmax.xlane.f32.xlu0 %v842
    %v844 = vpop.xlane.xlu0 %843
    %v845 = vsub.f32 %v837, %v841
    %v846 = vsub.f32 %v838, %v844
    %v847 = vmul.f32 %v845, 1.442695
    %v848 = vpow.pop %v847
    %v849 = vmul.f32 %v846, 1.442695
    %v850 = vpow.pop %v849
    %v851 = vsel %vm522, %v848, 0.0
    %852 = vadd.xlane.f32.xlu0 %v851
    %v853 = vpop.xlane.xlu0 %852
    %v854 = vsel %vm522, %v850, 0.0
    %855 = vadd.xlane.f32.xlu0 %v854
    %v856 = vpop.xlane.xlu0 %855
    %v857 = vrcp.pop %v853
    %v858 = vrcp.pop %v856
    %v859 = vmul.f32 %v848, %v857
    %v860 = vmul.f32 %v850, %v858
    %v862 = vsel %vm522, %v859, 0
    %864 = vmatprep.subr.mxu0 0.0
    %865 = vmatpush1.msra.mxu0 0.0
    %866 = vmatprep.subr.mxu0 0.0
    %867 = vmatpush1.msra.mxu0 0.0
    %868 = vmatprep.subr.mxu0 0.0
    %869 = vmatpush1.msra.mxu0 0.0
    %870 = vmatprep.subr.mxu0 0.0
    %871 = vmatpush1.msra.mxu0 0.0
    %872 = vmatprep.subr.mxu0 0.0
    %873 = vmatpush1.msra.mxu0 0.0
    %874 = vmatprep.subr.mxu0 0.0
    %875 = vmatpush1.msra.mxu0 0.0
    %876 = vmatprep.subr.mxu0 0.0
    %877 = vmatpush1.msra.mxu0 0.0
    %878 = vmatprep.subr.mxu0 0.0
    %879 = vmatpush1.msra.mxu0 0.0
    %880 = vmatprep.subr.mxu0 0.0
    %881 = vmatpush1.msra.mxu0 0.0
    %882 = vmatprep.subr.mxu0 0.0
    %883 = vmatpush1.msra.mxu0 0.0
    %884 = vmatprep.subr.mxu0 0.0
    %885 = vmatpush1.msra.mxu0 0.0
    %886 = vmatprep.subr.mxu0 0.0
    %887 = vmatpush1.msra.mxu0 0.0
    %888 = vmatprep.subr.mxu0 0.0
    %889 = vmatpush1.msra.mxu0 0.0
    %890 = vmatprep.subr.mxu0 0.0
    %891 = vmatpush1.msra.mxu0 0.0
    %892 = vmatprep.subr.mxu0 0.0
    %893 = vmatpush1.msra.mxu0 0.0
    %894 = vmatprep.subr.mxu0 0.0
    %895 = vmatpush1.msra.mxu0 %v368
    %896 = vmatprep.subr.mxu0 0.0
    %897 = vmatpush2.msra.mxu0 0.0
    %898 = vmatprep.subr.mxu0 0.0
    %899 = vmatpush2.msra.mxu0 0.0
    %900 = vmatprep.subr.mxu0 0.0
    %901 = vmatpush2.msra.mxu0 0.0
    %902 = vmatprep.subr.mxu0 0.0
    %903 = vmatpush2.msra.mxu0 0.0
    %904 = vmatprep.subr.mxu0 0.0
    %905 = vmatpush2.msra.mxu0 0.0
    %906 = vmatprep.subr.mxu0 0.0
    %907 = vmatpush2.msra.mxu0 0.0
    %908 = vmatprep.subr.mxu0 0.0
    %909 = vmatpush2.msra.mxu0 0.0
    %910 = vmatprep.subr.mxu0 0.0
    %911 = vmatpush2.msra.mxu0 0.0
    %912 = vmatprep.subr.mxu0 0.0
    %913 = vmatpush2.msra.mxu0 0.0
    %914 = vmatprep.subr.mxu0 0.0
    %915 = vmatpush2.msra.mxu0 0.0
    %916 = vmatprep.subr.mxu0 0.0
    %917 = vmatpush2.msra.mxu0 0.0
    %918 = vmatprep.subr.mxu0 0.0
    %919 = vmatpush2.msra.mxu0 0.0
    %920 = vmatprep.subr.mxu0 0.0
    %921 = vmatpush2.msra.mxu0 0.0
    %922 = vmatprep.subr.mxu0 0.0
    %923 = vmatpush2.msra.mxu0 0.0
    %924 = vmatprep.subr.mxu0 0.0
    %925 = vmatpush2.msra.mxu0 0.0
    %926 = vmatprep.subr.mxu0 0.0
    %927 = vmatpush2.msra.mxu0 0.0
    %928 = vmatprep.mubr.f32.mxu0 0.0
    %929 = vmatmul.mubr.f32.gmra.mxu0 %v862
    %v930 = vpop.f32.mrf.mxu0
    %v931 = vadd.f32 0.0, %v930
    %v932 = vpop.f32.mrf.mxu0
    %933 = vdwg.mxu0
    %v935 = vsel %vm522, %v860, 0
    %937 = vmatprep.subr.mxu0 0.0
    %938 = vmatpush1.msra.mxu0 0.0
    %939 = vmatprep.subr.mxu0 0.0
    %940 = vmatpush1.msra.mxu0 0.0
    %941 = vmatprep.subr.mxu0 0.0
    %942 = vmatpush1.msra.mxu0 0.0
    %943 = vmatprep.subr.mxu0 0.0
    %944 = vmatpush1.msra.mxu0 0.0
    %945 = vmatprep.subr.mxu0 0.0
    %946 = vmatpush1.msra.mxu0 0.0
    %947 = vmatprep.subr.mxu0 0.0
    %948 = vmatpush1.msra.mxu0 0.0
    %949 = vmatprep.subr.mxu0 0.0
    %950 = vmatpush1.msra.mxu0 0.0
    %951 = vmatprep.subr.mxu0 0.0
    %952 = vmatpush1.msra.mxu0 0.0
    %953 = vmatprep.subr.mxu0 0.0
    %954 = vmatpush1.msra.mxu0 0.0
    %955 = vmatprep.subr.mxu0 0.0
    %956 = vmatpush1.msra.mxu0 0.0
    %957 = vmatprep.subr.mxu0 0.0
    %958 = vmatpush1.msra.mxu0 0.0
    %959 = vmatprep.subr.mxu0 0.0
    %960 = vmatpush1.msra.mxu0 0.0
    %961 = vmatprep.subr.mxu0 0.0
    %962 = vmatpush1.msra.mxu0 0.0
    %963 = vmatprep.subr.mxu0 0.0
    %964 = vmatpush1.msra.mxu0 0.0
    %965 = vmatprep.subr.mxu0 0.0
    %966 = vmatpush1.msra.mxu0 0.0
    %967 = vmatprep.subr.mxu0 0.0
    %968 = vmatpush1.msra.mxu0 %v373
    %969 = vmatprep.subr.mxu0 0.0
    %970 = vmatpush2.msra.mxu0 0.0
    %971 = vmatprep.subr.mxu0 0.0
    %972 = vmatpush2.msra.mxu0 0.0
    %973 = vmatprep.subr.mxu0 0.0
    %974 = vmatpush2.msra.mxu0 0.0
    %975 = vmatprep.subr.mxu0 0.0
    %976 = vmatpush2.msra.mxu0 0.0
    %977 = vmatprep.subr.mxu0 0.0
    %978 = vmatpush2.msra.mxu0 0.0
    %979 = vmatprep.subr.mxu0 0.0
    %980 = vmatpush2.msra.mxu0 0.0
    %981 = vmatprep.subr.mxu0 0.0
    %982 = vmatpush2.msra.mxu0 0.0
    %983 = vmatprep.subr.mxu0 0.0
    %984 = vmatpush2.msra.mxu0 0.0
    %985 = vmatprep.subr.mxu0 0.0
    %986 = vmatpush2.msra.mxu0 0.0
    %987 = vmatprep.subr.mxu0 0.0
    %988 = vmatpush2.msra.mxu0 0.0
    %989 = vmatprep.subr.mxu0 0.0
    %990 = vmatpush2.msra.mxu0 0.0
    %991 = vmatprep.subr.mxu0 0.0
    %992 = vmatpush2.msra.mxu0 0.0
    %993 = vmatprep.subr.mxu0 0.0
    %994 = vmatpush2.msra.mxu0 0.0
    %995 = vmatprep.subr.mxu0 0.0
    %996 = vmatpush2.msra.mxu0 0.0
    %997 = vmatprep.subr.mxu0 0.0
    %998 = vmatpush2.msra.mxu0 0.0
    %999 = vmatprep.subr.mxu0 0.0
    %1000 = vmatpush2.msra.mxu0 0.0
    %1001 = vmatprep.mubr.f32.mxu0 0.0
    %1002 = vmatmul.mubr.f32.gmra.mxu0 %v935
    %v1003 = vpop.f32.mrf.mxu0
    %v1004 = vadd.f32 0.0, %v1003
    %v1005 = vpop.f32.mrf.mxu0
    %1006 = vdwg.mxu0
    %v1007 = vmul.f32 %v931, %v127
    %v1008 = vmul.f32 %v1004, %v127
    %v1009 = vadd.f32 %v691, %v1007
    %v1010 = vadd.f32 %v692, %v1008
    %v1011 = vmul.f32 %v291, %v131
    %v1012 = vmul.f32 %v297, %v131
    %1013 = vmatprep.subr.mxu0 0.0
    %1014 = vmatpush1.xpose.msra.mxu0 0.0
    %1015 = vmatprep.subr.mxu0 0.0
    %1016 = vmatpush1.xpose.msra.mxu0 0.0
    %1017 = vmatprep.subr.mxu0 0.0
    %1018 = vmatpush1.xpose.msra.mxu0 0.0
    %1019 = vmatprep.subr.mxu0 0.0
    %1020 = vmatpush1.xpose.msra.mxu0 0.0
    %1021 = vmatprep.subr.mxu0 0.0
    %1022 = vmatpush1.xpose.msra.mxu0 0.0
    %1023 = vmatprep.subr.mxu0 0.0
    %1024 = vmatpush1.xpose.msra.mxu0 0.0
    %1025 = vmatprep.subr.mxu0 0.0
    %1026 = vmatpush1.xpose.msra.mxu0 0.0
    %1027 = vmatprep.subr.mxu0 0.0
    %1028 = vmatpush1.xpose.msra.mxu0 0.0
    %1029 = vmatprep.subr.mxu0 0.0
    %1030 = vmatpush1.xpose.msra.mxu0 0.0
    %1031 = vmatprep.subr.mxu0 0.0
    %1032 = vmatpush1.xpose.msra.mxu0 0.0
    %1033 = vmatprep.subr.mxu0 0.0
    %1034 = vmatpush1.xpose.msra.mxu0 0.0
    %1035 = vmatprep.subr.mxu0 0.0
    %1036 = vmatpush1.xpose.msra.mxu0 0.0
    %1037 = vmatprep.subr.mxu0 0.0
    %1038 = vmatpush1.xpose.msra.mxu0 0.0
    %1039 = vmatprep.subr.mxu0 0.0
    %1040 = vmatpush1.xpose.msra.mxu0 0.0
    %1041 = vmatprep.subr.mxu0 0.0
    %1042 = vmatpush1.xpose.msra.mxu0 0.0
    %1043 = vmatprep.subr.mxu0 0.0
    %1044 = vmatpush1.xpose.msra.mxu0 %v293
    %1045 = vmatprep.subr.mxu0 0.0
    %1046 = vmatpush2.xpose.msra.mxu0 0.0
    %1047 = vmatprep.subr.mxu0 0.0
    %1048 = vmatpush2.xpose.msra.mxu0 0.0
    %1049 = vmatprep.subr.mxu0 0.0
    %1050 = vmatpush2.xpose.msra.mxu0 0.0
    %1051 = vmatprep.subr.mxu0 0.0
    %1052 = vmatpush2.xpose.msra.mxu0 0.0
    %1053 = vmatprep.subr.mxu0 0.0
    %1054 = vmatpush2.xpose.msra.mxu0 0.0
    %1055 = vmatprep.subr.mxu0 0.0
    %1056 = vmatpush2.xpose.msra.mxu0 0.0
    %1057 = vmatprep.subr.mxu0 0.0
    %1058 = vmatpush2.xpose.msra.mxu0 0.0
    %1059 = vmatprep.subr.mxu0 0.0
    %1060 = vmatpush2.xpose.msra.mxu0 0.0
    %1061 = vmatprep.subr.mxu0 0.0
    %1062 = vmatpush2.xpose.msra.mxu0 0.0
    %1063 = vmatprep.subr.mxu0 0.0
    %1064 = vmatpush2.xpose.msra.mxu0 0.0
    %1065 = vmatprep.subr.mxu0 0.0
    %1066 = vmatpush2.xpose.msra.mxu0 0.0
    %1067 = vmatprep.subr.mxu0 0.0
    %1068 = vmatpush2.xpose.msra.mxu0 0.0
    %1069 = vmatprep.subr.mxu0 0.0
    %1070 = vmatpush2.xpose.msra.mxu0 0.0
    %1071 = vmatprep.subr.mxu0 0.0
    %1072 = vmatpush2.xpose.msra.mxu0 0.0
    %1073 = vmatprep.subr.mxu0 0.0
    %1074 = vmatpush2.xpose.msra.mxu0 0.0
    %1075 = vmatprep.subr.mxu0 0.0
    %1076 = vmatpush2.xpose.msra.mxu0 0.0
    %1077 = vmatprep.mubr.f32.mxu0 0.0
    %1078 = vmatmul.mubr.f32.gmra.mxu0 %v1011
    %v1079 = vpop.f32.mrf.mxu0
    %v1080 = vadd.f32 0.0, %v1079
    %v1081 = vpop.f32.mrf.mxu0
    %1082 = vdwg.mxu0
    %1083 = vmatprep.subr.mxu0 0.0
    %1084 = vmatpush1.xpose.msra.mxu0 0.0
    %1085 = vmatprep.subr.mxu0 0.0
    %1086 = vmatpush1.xpose.msra.mxu0 0.0
    %1087 = vmatprep.subr.mxu0 0.0
    %1088 = vmatpush1.xpose.msra.mxu0 0.0
    %1089 = vmatprep.subr.mxu0 0.0
    %1090 = vmatpush1.xpose.msra.mxu0 0.0
    %1091 = vmatprep.subr.mxu0 0.0
    %1092 = vmatpush1.xpose.msra.mxu0 0.0
    %1093 = vmatprep.subr.mxu0 0.0
    %1094 = vmatpush1.xpose.msra.mxu0 0.0
    %1095 = vmatprep.subr.mxu0 0.0
    %1096 = vmatpush1.xpose.msra.mxu0 0.0
    %1097 = vmatprep.subr.mxu0 0.0
    %1098 = vmatpush1.xpose.msra.mxu0 0.0
    %1099 = vmatprep.subr.mxu0 0.0
    %1100 = vmatpush1.xpose.msra.mxu0 0.0
    %1101 = vmatprep.subr.mxu0 0.0
    %1102 = vmatpush1.xpose.msra.mxu0 0.0
    %1103 = vmatprep.subr.mxu0 0.0
    %1104 = vmatpush1.xpose.msra.mxu0 0.0
    %1105 = vmatprep.subr.mxu0 0.0
    %1106 = vmatpush1.xpose.msra.mxu0 0.0
    %1107 = vmatprep.subr.mxu0 0.0
    %1108 = vmatpush1.xpose.msra.mxu0 0.0
    %1109 = vmatprep.subr.mxu0 0.0
    %1110 = vmatpush1.xpose.msra.mxu0 0.0
    %1111 = vmatprep.subr.mxu0 0.0
    %1112 = vmatpush1.xpose.msra.mxu0 0.0
    %1113 = vmatprep.subr.mxu0 0.0
    %1114 = vmatpush1.xpose.msra.mxu0 %v299
    %1115 = vmatprep.subr.mxu0 0.0
    %1116 = vmatpush2.xpose.msra.mxu0 0.0
    %1117 = vmatprep.subr.mxu0 0.0
    %1118 = vmatpush2.xpose.msra.mxu0 0.0
    %1119 = vmatprep.subr.mxu0 0.0
    %1120 = vmatpush2.xpose.msra.mxu0 0.0
    %1121 = vmatprep.subr.mxu0 0.0
    %1122 = vmatpush2.xpose.msra.mxu0 0.0
    %1123 = vmatprep.subr.mxu0 0.0
    %1124 = vmatpush2.xpose.msra.mxu0 0.0
    %1125 = vmatprep.subr.mxu0 0.0
    %1126 = vmatpush2.xpose.msra.mxu0 0.0
    %1127 = vmatprep.subr.mxu0 0.0
    %1128 = vmatpush2.xpose.msra.mxu0 0.0
    %1129 = vmatprep.subr.mxu0 0.0
    %1130 = vmatpush2.xpose.msra.mxu0 0.0
    %1131 = vmatprep.subr.mxu0 0.0
    %1132 = vmatpush2.xpose.msra.mxu0 0.0
    %1133 = vmatprep.subr.mxu0 0.0
    %1134 = vmatpush2.xpose.msra.mxu0 0.0
    %1135 = vmatprep.subr.mxu0 0.0
    %1136 = vmatpush2.xpose.msra.mxu0 0.0
    %1137 = vmatprep.subr.mxu0 0.0
    %1138 = vmatpush2.xpose.msra.mxu0 0.0
    %1139 = vmatprep.subr.mxu0 0.0
    %1140 = vmatpush2.xpose.msra.mxu0 0.0
    %1141 = vmatprep.subr.mxu0 0.0
    %1142 = vmatpush2.xpose.msra.mxu0 0.0
    %1143 = vmatprep.subr.mxu0 0.0
    %1144 = vmatpush2.xpose.msra.mxu0 0.0
    %1145 = vmatprep.subr.mxu0 0.0
    %1146 = vmatpush2.xpose.msra.mxu0 0.0
    %1147 = vmatprep.mubr.f32.mxu0 0.0
    %1148 = vmatmul.mubr.f32.gmra.mxu0 %v1012
    %v1149 = vpop.f32.mrf.mxu0
    %v1150 = vadd.f32 0.0, %v1149
    %v1151 = vpop.f32.mrf.mxu0
    %1152 = vdwg.mxu0
    %v1153 = vmul.f32 %v1080, 0.12909944
    %v1154 = vmul.f32 %v1150, 0.12909944
    %v1155 = vadd.f32 %v1153, %v114
    %v1156 = vadd.f32 %v1154, %v114
    %v1157 = vsel %vm522, %v1155, -inf
    %1158 = vmax.xlane.f32.xlu0 %v1157
    %v1159 = vpop.xlane.xlu0 %1158
    %v1160 = vsel %vm522, %v1156, -inf
    %1161 = vmax.xlane.f32.xlu0 %v1160
    %v1162 = vpop.xlane.xlu0 %1161
    %v1163 = vsub.f32 %v1155, %v1159
    %v1164 = vsub.f32 %v1156, %v1162
    %v1165 = vmul.f32 %v1163, 1.442695
    %v1166 = vpow.pop %v1165
    %v1167 = vmul.f32 %v1164, 1.442695
    %v1168 = vpow.pop %v1167
    %v1169 = vsel %vm522, %v1166, 0.0
    %1170 = vadd.xlane.f32.xlu0 %v1169
    %v1171 = vpop.xlane.xlu0 %1170
    %v1172 = vsel %vm522, %v1168, 0.0
    %1173 = vadd.xlane.f32.xlu0 %v1172
    %v1174 = vpop.xlane.xlu0 %1173
    %v1175 = vrcp.pop %v1171
    %v1176 = vrcp.pop %v1174
    %v1177 = vmul.f32 %v1166, %v1175
    %v1178 = vmul.f32 %v1168, %v1176
    %v1180 = vsel %vm522, %v1177, 0
    %1182 = vmatprep.subr.mxu0 0.0
    %1183 = vmatpush1.msra.mxu0 0.0
    %1184 = vmatprep.subr.mxu0 0.0
    %1185 = vmatpush1.msra.mxu0 0.0
    %1186 = vmatprep.subr.mxu0 0.0
    %1187 = vmatpush1.msra.mxu0 0.0
    %1188 = vmatprep.subr.mxu0 0.0
    %1189 = vmatpush1.msra.mxu0 0.0
    %1190 = vmatprep.subr.mxu0 0.0
    %1191 = vmatpush1.msra.mxu0 0.0
    %1192 = vmatprep.subr.mxu0 0.0
    %1193 = vmatpush1.msra.mxu0 0.0
    %1194 = vmatprep.subr.mxu0 0.0
    %1195 = vmatpush1.msra.mxu0 0.0
    %1196 = vmatprep.subr.mxu0 0.0
    %1197 = vmatpush1.msra.mxu0 0.0
    %1198 = vmatprep.subr.mxu0 0.0
    %1199 = vmatpush1.msra.mxu0 0.0
    %1200 = vmatprep.subr.mxu0 0.0
    %1201 = vmatpush1.msra.mxu0 0.0
    %1202 = vmatprep.subr.mxu0 0.0
    %1203 = vmatpush1.msra.mxu0 0.0
    %1204 = vmatprep.subr.mxu0 0.0
    %1205 = vmatpush1.msra.mxu0 0.0
    %1206 = vmatprep.subr.mxu0 0.0
    %1207 = vmatpush1.msra.mxu0 0.0
    %1208 = vmatprep.subr.mxu0 0.0
    %1209 = vmatpush1.msra.mxu0 0.0
    %1210 = vmatprep.subr.mxu0 0.0
    %1211 = vmatpush1.msra.mxu0 0.0
    %1212 = vmatprep.subr.mxu0 0.0
    %1213 = vmatpush1.msra.mxu0 %v368
    %1214 = vmatprep.subr.mxu0 0.0
    %1215 = vmatpush2.msra.mxu0 0.0
    %1216 = vmatprep.subr.mxu0 0.0
    %1217 = vmatpush2.msra.mxu0 0.0
    %1218 = vmatprep.subr.mxu0 0.0
    %1219 = vmatpush2.msra.mxu0 0.0
    %1220 = vmatprep.subr.mxu0 0.0
    %1221 = vmatpush2.msra.mxu0 0.0
    %1222 = vmatprep.subr.mxu0 0.0
    %1223 = vmatpush2.msra.mxu0 0.0
    %1224 = vmatprep.subr.mxu0 0.0
    %1225 = vmatpush2.msra.mxu0 0.0
    %1226 = vmatprep.subr.mxu0 0.0
    %1227 = vmatpush2.msra.mxu0 0.0
    %1228 = vmatprep.subr.mxu0 0.0
    %1229 = vmatpush2.msra.mxu0 0.0
    %1230 = vmatprep.subr.mxu0 0.0
    %1231 = vmatpush2.msra.mxu0 0.0
    %1232 = vmatprep.subr.mxu0 0.0
    %1233 = vmatpush2.msra.mxu0 0.0
    %1234 = vmatprep.subr.mxu0 0.0
    %1235 = vmatpush2.msra.mxu0 0.0
    %1236 = vmatprep.subr.mxu0 0.0
    %1237 = vmatpush2.msra.mxu0 0.0
    %1238 = vmatprep.subr.mxu0 0.0
    %1239 = vmatpush2.msra.mxu0 0.0
    %1240 = vmatprep.subr.mxu0 0.0
    %1241 = vmatpush2.msra.mxu0 0.0
    %1242 = vmatprep.subr.mxu0 0.0
    %1243 = vmatpush2.msra.mxu0 0.0
    %1244 = vmatprep.subr.mxu0 0.0
    %1245 = vmatpush2.msra.mxu0 0.0
    %1246 = vmatprep.mubr.f32.mxu0 0.0
    %1247 = vmatmul.mubr.f32.gmra.mxu0 %v1180
    %v1248 = vpop.f32.mrf.mxu0
    %v1249 = vadd.f32 0.0, %v1248
    %v1250 = vpop.f32.mrf.mxu0
    %1251 = vdwg.mxu0
    %v1253 = vsel %vm522, %v1178, 0
    %1255 = vmatprep.subr.mxu0 0.0
    %1256 = vmatpush1.msra.mxu0 0.0
    %1257 = vmatprep.subr.mxu0 0.0
    %1258 = vmatpush1.msra.mxu0 0.0
    %1259 = vmatprep.subr.mxu0 0.0
    %1260 = vmatpush1.msra.mxu0 0.0
    %1261 = vmatprep.subr.mxu0 0.0
    %1262 = vmatpush1.msra.mxu0 0.0
    %1263 = vmatprep.subr.mxu0 0.0
    %1264 = vmatpush1.msra.mxu0 0.0
    %1265 = vmatprep.subr.mxu0 0.0
    %1266 = vmatpush1.msra.mxu0 0.0
    %1267 = vmatprep.subr.mxu0 0.0
    %1268 = vmatpush1.msra.mxu0 0.0
    %1269 = vmatprep.subr.mxu0 0.0
    %1270 = vmatpush1.msra.mxu0 0.0
    %1271 = vmatprep.subr.mxu0 0.0
    %1272 = vmatpush1.msra.mxu0 0.0
    %1273 = vmatprep.subr.mxu0 0.0
    %1274 = vmatpush1.msra.mxu0 0.0
    %1275 = vmatprep.subr.mxu0 0.0
    %1276 = vmatpush1.msra.mxu0 0.0
    %1277 = vmatprep.subr.mxu0 0.0
    %1278 = vmatpush1.msra.mxu0 0.0
    %1279 = vmatprep.subr.mxu0 0.0
    %1280 = vmatpush1.msra.mxu0 0.0
    %1281 = vmatprep.subr.mxu0 0.0
    %1282 = vmatpush1.msra.mxu0 0.0
    %1283 = vmatprep.subr.mxu0 0.0
    %1284 = vmatpush1.msra.mxu0 0.0
    %1285 = vmatprep.subr.mxu0 0.0
    %1286 = vmatpush1.msra.mxu0 %v373
    %1287 = vmatprep.subr.mxu0 0.0
    %1288 = vmatpush2.msra.mxu0 0.0
    %1289 = vmatprep.subr.mxu0 0.0
    %1290 = vmatpush2.msra.mxu0 0.0
    %1291 = vmatprep.subr.mxu0 0.0
    %1292 = vmatpush2.msra.mxu0 0.0
    %1293 = vmatprep.subr.mxu0 0.0
    %1294 = vmatpush2.msra.mxu0 0.0
    %1295 = vmatprep.subr.mxu0 0.0
    %1296 = vmatpush2.msra.mxu0 0.0
    %1297 = vmatprep.subr.mxu0 0.0
    %1298 = vmatpush2.msra.mxu0 0.0
    %1299 = vmatprep.subr.mxu0 0.0
    %1300 = vmatpush2.msra.mxu0 0.0
    %1301 = vmatprep.subr.mxu0 0.0
    %1302 = vmatpush2.msra.mxu0 0.0
    %1303 = vmatprep.subr.mxu0 0.0
    %1304 = vmatpush2.msra.mxu0 0.0
    %1305 = vmatprep.subr.mxu0 0.0
    %1306 = vmatpush2.msra.mxu0 0.0
    %1307 = vmatprep.subr.mxu0 0.0
    %1308 = vmatpush2.msra.mxu0 0.0
    %1309 = vmatprep.subr.mxu0 0.0
    %1310 = vmatpush2.msra.mxu0 0.0
    %1311 = vmatprep.subr.mxu0 0.0
    %1312 = vmatpush2.msra.mxu0 0.0
    %1313 = vmatprep.subr.mxu0 0.0
    %1314 = vmatpush2.msra.mxu0 0.0
    %1315 = vmatprep.subr.mxu0 0.0
    %1316 = vmatpush2.msra.mxu0 0.0
    %1317 = vmatprep.subr.mxu0 0.0
    %1318 = vmatpush2.msra.mxu0 0.0
    %1319 = vmatprep.mubr.f32.mxu0 0.0
    %1320 = vmatmul.mubr.f32.gmra.mxu0 %v1253
    %v1321 = vpop.f32.mrf.mxu0
    %v1322 = vadd.f32 0.0, %v1321
    %v1323 = vpop.f32.mrf.mxu0
    %1324 = vdwg.mxu0
    %v1325 = vmul.f32 %v1249, %v131
    %v1326 = vmul.f32 %v1322, %v131
    %v1327 = vadd.f32 %v1009, %v1325
    %v1328 = vadd.f32 %v1010, %v1326
    %v1329 = vld [vmem:[#allocation5] sm:$0xff]
    %v1330 = vld [vmem:[#allocation5 + $0x8] sm:$0xff]
    %v1331 = vld [vmem:[#allocation5 + $0x10] sm:$0xff]
    %v1332 = vld [vmem:[#allocation5 + $0x18] sm:$0xff]
    %v1333 = vld [vmem:[#allocation5 + $0x20] sm:$0xff]
    %v1334 = vld [vmem:[#allocation5 + $0x28] sm:$0xff]
    %v1335 = vld [vmem:[#allocation5 + $0x30] sm:$0xff]
    %v1336 = vld [vmem:[#allocation5 + $0x38] sm:$0xff]
    %v1337 = vld [vmem:[#allocation5 + $0x40] sm:$0xff]
    %v1338 = vld [vmem:[#allocation5 + $0x48] sm:$0xff]
    %v1339 = vld [vmem:[#allocation5 + $0x50] sm:$0xff]
    %v1340 = vld [vmem:[#allocation5 + $0x58] sm:$0xff]
    %v1341 = vld [vmem:[#allocation5 + $0x60] sm:$0xff]
    %v1342 = vld [vmem:[#allocation5 + $0x68] sm:$0xff]
    %v1343 = vld [vmem:[#allocation5 + $0x70] sm:$0xff]
    %v1344 = vld [vmem:[#allocation5 + $0x78] sm:$0xff]
    %v1345 = vld [vmem:[%s6] sm:$0x1]
    %v1347 = vlaneseq
    %v1348 = vshrl.u32 %v1347, 7
    %v1349 = vsub.s32 0, %v1348
    %v1350 = vrot.slane %v1345, %v1349
    %1352 = vmatprep.subr.mxu0 0.0
    %1353 = vmatpush1.msra.mxu0 %v1344
    %1354 = vmatprep.subr.mxu0 0.0
    %1355 = vmatpush1.msra.mxu0 %v1343
    %1356 = vmatprep.subr.mxu0 0.0
    %1357 = vmatpush1.msra.mxu0 %v1342
    %1358 = vmatprep.subr.mxu0 0.0
    %1359 = vmatpush1.msra.mxu0 %v1341
    %1360 = vmatprep.subr.mxu0 0.0
    %1361 = vmatpush1.msra.mxu0 %v1340
    %1362 = vmatprep.subr.mxu0 0.0
    %1363 = vmatpush1.msra.mxu0 %v1339
    %1364 = vmatprep.subr.mxu0 0.0
    %1365 = vmatpush1.msra.mxu0 %v1338
    %1366 = vmatprep.subr.mxu0 0.0
    %1367 = vmatpush1.msra.mxu0 %v1337
    %1368 = vmatprep.subr.mxu0 0.0
    %1369 = vmatpush1.msra.mxu0 %v1336
    %1370 = vmatprep.subr.mxu0 0.0
    %1371 = vmatpush1.msra.mxu0 %v1335
    %1372 = vmatprep.subr.mxu0 0.0
    %1373 = vmatpush1.msra.mxu0 %v1334
    %1374 = vmatprep.subr.mxu0 0.0
    %1375 = vmatpush1.msra.mxu0 %v1333
    %1376 = vmatprep.subr.mxu0 0.0
    %1377 = vmatpush1.msra.mxu0 %v1332
    %1378 = vmatprep.subr.mxu0 0.0
    %1379 = vmatpush1.msra.mxu0 %v1331
    %1380 = vmatprep.subr.mxu0 0.0
    %1381 = vmatpush1.msra.mxu0 %v1330
    %1382 = vmatprep.subr.mxu0 0.0
    %1383 = vmatpush1.msra.mxu0 %v1329
    %1384 = vmatprep.subr.mxu0 0.0
    %1385 = vmatpush2.msra.mxu0 0.0
    %1386 = vmatprep.subr.mxu0 0.0
    %1387 = vmatpush2.msra.mxu0 0.0
    %1388 = vmatprep.subr.mxu0 0.0
    %1389 = vmatpush2.msra.mxu0 0.0
    %1390 = vmatprep.subr.mxu0 0.0
    %1391 = vmatpush2.msra.mxu0 0.0
    %1392 = vmatprep.subr.mxu0 0.0
    %1393 = vmatpush2.msra.mxu0 0.0
    %1394 = vmatprep.subr.mxu0 0.0
    %1395 = vmatpush2.msra.mxu0 0.0
    %1396 = vmatprep.subr.mxu0 0.0
    %1397 = vmatpush2.msra.mxu0 0.0
    %1398 = vmatprep.subr.mxu0 0.0
    %1399 = vmatpush2.msra.mxu0 0.0
    %1400 = vmatprep.subr.mxu0 0.0
    %1401 = vmatpush2.msra.mxu0 0.0
    %1402 = vmatprep.subr.mxu0 0.0
    %1403 = vmatpush2.msra.mxu0 0.0
    %1404 = vmatprep.subr.mxu0 0.0
    %1405 = vmatpush2.msra.mxu0 0.0
    %1406 = vmatprep.subr.mxu0 0.0
    %1407 = vmatpush2.msra.mxu0 0.0
    %1408 = vmatprep.subr.mxu0 0.0
    %1409 = vmatpush2.msra.mxu0 0.0
    %1410 = vmatprep.subr.mxu0 0.0
    %1411 = vmatpush2.msra.mxu0 0.0
    %1412 = vmatprep.subr.mxu0 0.0
    %1413 = vmatpush2.msra.mxu0 0.0
    %1414 = vmatprep.subr.mxu0 0.0
    %1415 = vmatpush2.msra.mxu0 0.0
    %1416 = vmatprep.mubr.f32.mxu0 0.0
    %1417 = vmatmul.mubr.f32.gmra.mxu0 %v1327
    %v1418 = vpop.f32.mrf.mxu0
    %v1419 = vadd.f32 %v1350, %v1418
    %v1420 = vpop.f32.mrf.mxu0
    %1421 = vmatprep.mubr.f32.mxu0 0.0
    %1422 = vmatmul.mubr.f32.gmra.mxu0 %v1328
    %v1423 = vpop.f32.mrf.mxu0
    %v1424 = vadd.f32 %v1350, %v1423
    %v1425 = vpop.f32.mrf.mxu0
    %1426 = vdwg.mxu0
    %v1427 = vadd.f32 %v112, %v1419
    %v1428 = vadd.f32 %v113, %v1424
    %v1429 = vld [vmem:[%s7] sm:$0x1]
    %v1430 = vld [vmem:[%s8] sm:$0x1]
    %1431 = vadd.xlane.f32.xlu0 %v1427
    %v1432 = vpop.xlane.xlu0 %1431
    %1433 = vadd.xlane.f32.xlu0 %v1428
    %v1434 = vpop.xlane.xlu0 %1433
    %v1435 = vmul.f32 %v1432, 0.016666668
    %v1436 = vmul.f32 %v1434, 0.016666668
    %v1437 = vsub.f32 %v1427, %v1435
    %v1438 = vsub.f32 %v1428, %v1436
    %v1439 = vsel %vm143, %v1437, 0.0
    %v1440 = vsel %vm143, %v1438, 0.0
    %v1441 = vmul.f32 %v1439, %v1439
    %v1442 = vmul.f32 %v1440, %v1440
    %1443 = vadd.xlane.f32.xlu0 %v1441
    %v1444 = vpop.xlane.xlu0 %1443
    %1445 = vadd.xlane.f32.xlu0 %v1442
    %v1446 = vpop.xlane.xlu0 %1445
    %v1447 = vmul.f32 %v1444, 0.016666668
    %v1448 = vmul.f32 %v1446, 0.016666668
    %v1449 = vadd.f32 %v1447, 1e-05
    %v1450 = vadd.f32 %v1448, 1e-05
    %v1451 = vrsqrt.pop %v1449
    %v1452 = vrsqrt.pop %v1450
    %v1453 = vmul.f32 %v1439, %v1451
    %v1454 = vmul.f32 %v1440, %v1452
    %v1456 = vlaneseq
    %v1457 = vshrl.u32 %v1456, 7
    %v1458 = vsub.s32 0, %v1457
    %v1459 = vrot.slane %v1429, %v1458
    %v1461 = vmul.f32 %v1453, %v1459
    %v1462 = vmul.f32 %v1454, %v1459
    %v1464 = vlaneseq
    %v1465 = vshrl.u32 %v1464, 7
    %v1466 = vsub.s32 0, %v1465
    %v1467 = vrot.slane %v1430, %v1466
    %v1469 = vadd.f32 %v1461, %v1467
    %v1470 = vadd.f32 %v1462, %v1467
    %v1471 = vld [vmem:[#allocation7] sm:$0xff]
    %v1472 = vld [vmem:[#allocation7 + $0x8] sm:$0xff]
    %v1473 = vld [vmem:[#allocation7 + $0x10] sm:$0xff]
    %v1474 = vld [vmem:[#allocation7 + $0x18] sm:$0xff]
    %v1475 = vld [vmem:[#allocation7 + $0x20] sm:$0xff]
    %v1476 = vld [vmem:[#allocation7 + $0x28] sm:$0xff]
    %v1477 = vld [vmem:[#allocation7 + $0x30] sm:$0xff]
    %v1478 = vld [vmem:[#allocation7 + $0x38] sm:$0xff]
    %v1479 = vld [vmem:[#allocation7 + $0x40] sm:$0xff]
    %v1480 = vld [vmem:[#allocation7 + $0x48] sm:$0xff]
    %v1481 = vld [vmem:[#allocation7 + $0x50] sm:$0xff]
    %v1482 = vld [vmem:[#allocation7 + $0x58] sm:$0xff]
    %v1483 = vld [vmem:[#allocation7 + $0x60] sm:$0xff]
    %v1484 = vld [vmem:[#allocation7 + $0x68] sm:$0xff]
    %v1485 = vld [vmem:[#allocation7 + $0x70] sm:$0xff]
    %v1486 = vld [vmem:[#allocation7 + $0x78] sm:$0xff]
    %v1487 = vld [vmem:[#allocation7 + $0x80] sm:$0xff]
    %v1488 = vld [vmem:[#allocation7 + $0x88] sm:$0xff]
    %v1489 = vld [vmem:[#allocation7 + $0x90] sm:$0xff]
    %v1490 = vld [vmem:[#allocation7 + $0x98] sm:$0xff]
    %v1491 = vld [vmem:[#allocation7 + $0xa0] sm:$0xff]
    %v1492 = vld [vmem:[#allocation7 + $0xa8] sm:$0xff]
    %v1493 = vld [vmem:[#allocation7 + $0xb0] sm:$0xff]
    %v1494 = vld [vmem:[#allocation7 + $0xb8] sm:$0xff]
    %v1495 = vld [vmem:[#allocation7 + $0xc0] sm:$0xff]
    %v1496 = vld [vmem:[#allocation7 + $0xc8] sm:$0xff]
    %v1497 = vld [vmem:[#allocation7 + $0xd0] sm:$0xff]
    %v1498 = vld [vmem:[#allocation7 + $0xd8] sm:$0xff]
    %v1499 = vld [vmem:[#allocation7 + $0xe0] sm:$0xff]
    %v1500 = vld [vmem:[#allocation7 + $0xe8] sm:$0xff]
    %v1501 = vld [vmem:[#allocation7 + $0xf0] sm:$0xff]
    %v1502 = vld [vmem:[#allocation7 + $0xf8] sm:$0xff]
    %v1503 = vld [vmem:[%s10] sm:$0x3]
    %v1505 = vlaneseq
    %v1506 = vshrl.u32 %v1505, 7
    %v1507 = vsub.s32 0, %v1506
    %v1508 = vrot.slane %v1503, %v1507
    %v1509 = vlaneseq
    %v1510 = vshrl.u32 %v1509, 7
    %v1511 = vsub.s32 1, %v1510
    %v1512 = vrot.slane %v1503, %v1511
    %1515 = vmatprep.subr.mxu0 %v1502
    %1516 = vmatpush1.msra.mxu0 %v1501
    %1517 = vmatprep.subr.mxu0 %v1500
    %1518 = vmatpush1.msra.mxu0 %v1499
    %1519 = vmatprep.subr.mxu0 %v1498
    %1520 = vmatpush1.msra.mxu0 %v1497
    %1521 = vmatprep.subr.mxu0 %v1496
    %1522 = vmatpush1.msra.mxu0 %v1495
    %1523 = vmatprep.subr.mxu0 %v1494
    %1524 = vmatpush1.msra.mxu0 %v1493
    %1525 = vmatprep.subr.mxu0 %v1492
    %1526 = vmatpush1.msra.mxu0 %v1491
    %1527 = vmatprep.subr.mxu0 %v1490
    %1528 = vmatpush1.msra.mxu0 %v1489
    %1529 = vmatprep.subr.mxu0 %v1488
    %1530 = vmatpush1.msra.mxu0 %v1487
    %1531 = vmatprep.subr.mxu0 %v1486
    %1532 = vmatpush1.msra.mxu0 %v1485
    %1533 = vmatprep.subr.mxu0 %v1484
    %1534 = vmatpush1.msra.mxu0 %v1483
    %1535 = vmatprep.subr.mxu0 %v1482
    %1536 = vmatpush1.msra.mxu0 %v1481
    %1537 = vmatprep.subr.mxu0 %v1480
    %1538 = vmatpush1.msra.mxu0 %v1479
    %1539 = vmatprep.subr.mxu0 %v1478
    %1540 = vmatpush1.msra.mxu0 %v1477
    %1541 = vmatprep.subr.mxu0 %v1476
    %1542 = vmatpush1.msra.mxu0 %v1475
    %1543 = vmatprep.subr.mxu0 %v1474
    %1544 = vmatpush1.msra.mxu0 %v1473
    %1545 = vmatprep.subr.mxu0 %v1472
    %1546 = vmatpush1.msra.mxu0 %v1471
    %1547 = vmatprep.subr.mxu0 0.0
    %1548 = vmatpush2.msra.mxu0 0.0
    %1549 = vmatprep.subr.mxu0 0.0
    %1550 = vmatpush2.msra.mxu0 0.0
    %1551 = vmatprep.subr.mxu0 0.0
    %1552 = vmatpush2.msra.mxu0 0.0
    %1553 = vmatprep.subr.mxu0 0.0
    %1554 = vmatpush2.msra.mxu0 0.0
    %1555 = vmatprep.subr.mxu0 0.0
    %1556 = vmatpush2.msra.mxu0 0.0
    %1557 = vmatprep.subr.mxu0 0.0
    %1558 = vmatpush2.msra.mxu0 0.0
    %1559 = vmatprep.subr.mxu0 0.0
    %1560 = vmatpush2.msra.mxu0 0.0
    %1561 = vmatprep.subr.mxu0 0.0
    %1562 = vmatpush2.msra.mxu0 0.0
    %1563 = vmatprep.subr.mxu0 0.0
    %1564 = vmatpush2.msra.mxu0 0.0
    %1565 = vmatprep.subr.mxu0 0.0
    %1566 = vmatpush2.msra.mxu0 0.0
    %1567 = vmatprep.subr.mxu0 0.0
    %1568 = vmatpush2.msra.mxu0 0.0
    %1569 = vmatprep.subr.mxu0 0.0
    %1570 = vmatpush2.msra.mxu0 0.0
    %1571 = vmatprep.subr.mxu0 0.0
    %1572 = vmatpush2.msra.mxu0 0.0
    %1573 = vmatprep.subr.mxu0 0.0
    %1574 = vmatpush2.msra.mxu0 0.0
    %1575 = vmatprep.subr.mxu0 0.0
    %1576 = vmatpush2.msra.mxu0 0.0
    %1577 = vmatprep.subr.mxu0 0.0
    %1578 = vmatpush2.msra.mxu0 0.0
    %1579 = vmatprep.mubr.f32.mxu0 0.0
    %1580 = vmatmul.mubr.f32.gmra.mxu0 %v1469
    %v1581 = vpop.f32.mrf.mxu0
    %v1582 = vadd.f32 %v1508, %v1581
    %v1583 = vpop.f32.mrf.mxu0
    %v1584 = vadd.f32 %v1512, %v1583
    %1585 = vmatprep.mubr.f32.mxu0 0.0
    %1586 = vmatmul.mubr.f32.gmra.mxu0 %v1470
    %v1587 = vpop.f32.mrf.mxu0
    %v1588 = vadd.f32 %v1508, %v1587
    %v1589 = vpop.f32.mrf.mxu0
    %v1590 = vadd.f32 %v1512, %v1589
    %1591 = vdwg.mxu0
    %v1592 = vmax.f32 %v1582, 0.0
    %v1593 = vmax.f32 %v1584, 0.0
    %v1594 = vmax.f32 %v1588, 0.0
    %v1595 = vmax.f32 %v1590, 0.0
    %v1596 = vld [vmem:[#allocation8] sm:$0xff]
    %v1597 = vld [vmem:[#allocation8 + $0x8] sm:$0xff]
    %v1598 = vld [vmem:[#allocation8 + $0x10] sm:$0xff]
    %v1599 = vld [vmem:[#allocation8 + $0x18] sm:$0xff]
    %v1600 = vld [vmem:[#allocation8 + $0x20] sm:$0xff]
    %v1601 = vld [vmem:[#allocation8 + $0x28] sm:$0xff]
    %v1602 = vld [vmem:[#allocation8 + $0x30] sm:$0xff]
    %v1603 = vld [vmem:[#allocation8 + $0x38] sm:$0xff]
    %v1604 = vld [vmem:[#allocation8 + $0x40] sm:$0xff]
    %v1605 = vld [vmem:[#allocation8 + $0x48] sm:$0xff]
    %v1606 = vld [vmem:[#allocation8 + $0x50] sm:$0xff]
    %v1607 = vld [vmem:[#allocation8 + $0x58] sm:$0xff]
    %v1608 = vld [vmem:[#allocation8 + $0x60] sm:$0xff]
    %v1609 = vld [vmem:[#allocation8 + $0x68] sm:$0xff]
    %v1610 = vld [vmem:[#allocation8 + $0x70] sm:$0xff]
    %v1611 = vld [vmem:[#allocation8 + $0x78] sm:$0xff]
    %v1612 = vld [vmem:[#allocation8 + $0x80] sm:$0xff]
    %v1613 = vld [vmem:[#allocation8 + $0x88] sm:$0xff]
    %v1614 = vld [vmem:[#allocation8 + $0x90] sm:$0xff]
    %v1615 = vld [vmem:[#allocation8 + $0x98] sm:$0xff]
    %v1616 = vld [vmem:[#allocation8 + $0xa0] sm:$0xff]
    %v1617 = vld [vmem:[#allocation8 + $0xa8] sm:$0xff]
    %v1618 = vld [vmem:[#allocation8 + $0xb0] sm:$0xff]
    %v1619 = vld [vmem:[#allocation8 + $0xb8] sm:$0xff]
    %v1620 = vld [vmem:[#allocation8 + $0xc0] sm:$0xff]
    %v1621 = vld [vmem:[#allocation8 + $0xc8] sm:$0xff]
    %v1622 = vld [vmem:[#allocation8 + $0xd0] sm:$0xff]
    %v1623 = vld [vmem:[#allocation8 + $0xd8] sm:$0xff]
    %v1624 = vld [vmem:[#allocation8 + $0xe0] sm:$0xff]
    %v1625 = vld [vmem:[#allocation8 + $0xe8] sm:$0xff]
    %v1626 = vld [vmem:[#allocation8 + $0xf0] sm:$0xff]
    %v1627 = vld [vmem:[#allocation8 + $0xf8] sm:$0xff]
    %1628 = vmatprep.subr.mxu0 0.0
    %1629 = vmatpush1.msra.mxu0 %v1611
    %1630 = vmatprep.subr.mxu0 0.0
    %1631 = vmatpush1.msra.mxu0 %v1610
    %1632 = vmatprep.subr.mxu0 0.0
    %1633 = vmatpush1.msra.mxu0 %v1609
    %1634 = vmatprep.subr.mxu0 0.0
    %1635 = vmatpush1.msra.mxu0 %v1608
    %1636 = vmatprep.subr.mxu0 0.0
    %1637 = vmatpush1.msra.mxu0 %v1607
    %1638 = vmatprep.subr.mxu0 0.0
    %1639 = vmatpush1.msra.mxu0 %v1606
    %1640 = vmatprep.subr.mxu0 0.0
    %1641 = vmatpush1.msra.mxu0 %v1605
    %1642 = vmatprep.subr.mxu0 0.0
    %1643 = vmatpush1.msra.mxu0 %v1604
    %1644 = vmatprep.subr.mxu0 0.0
    %1645 = vmatpush1.msra.mxu0 %v1603
    %1646 = vmatprep.subr.mxu0 0.0
    %1647 = vmatpush1.msra.mxu0 %v1602
    %1648 = vmatprep.subr.mxu0 0.0
    %1649 = vmatpush1.msra.mxu0 %v1601
    %1650 = vmatprep.subr.mxu0 0.0
    %1651 = vmatpush1.msra.mxu0 %v1600
    %1652 = vmatprep.subr.mxu0 0.0
    %1653 = vmatpush1.msra.mxu0 %v1599
    %1654 = vmatprep.subr.mxu0 0.0
    %1655 = vmatpush1.msra.mxu0 %v1598
    %1656 = vmatprep.subr.mxu0 0.0
    %1657 = vmatpush1.msra.mxu0 %v1597
    %1658 = vmatprep.subr.mxu0 0.0
    %1659 = vmatpush1.msra.mxu0 %v1596
    %1660 = vmatprep.subr.mxu0 0.0
    %1661 = vmatpush2.msra.mxu0 %v1627
    %1662 = vmatprep.subr.mxu0 0.0
    %1663 = vmatpush2.msra.mxu0 %v1626
    %1664 = vmatprep.subr.mxu0 0.0
    %1665 = vmatpush2.msra.mxu0 %v1625
    %1666 = vmatprep.subr.mxu0 0.0
    %1667 = vmatpush2.msra.mxu0 %v1624
    %1668 = vmatprep.subr.mxu0 0.0
    %1669 = vmatpush2.msra.mxu0 %v1623
    %1670 = vmatprep.subr.mxu0 0.0
    %1671 = vmatpush2.msra.mxu0 %v1622
    %1672 = vmatprep.subr.mxu0 0.0
    %1673 = vmatpush2.msra.mxu0 %v1621
    %1674 = vmatprep.subr.mxu0 0.0
    %1675 = vmatpush2.msra.mxu0 %v1620
    %1676 = vmatprep.subr.mxu0 0.0
    %1677 = vmatpush2.msra.mxu0 %v1619
    %1678 = vmatprep.subr.mxu0 0.0
    %1679 = vmatpush2.msra.mxu0 %v1618
    %1680 = vmatprep.subr.mxu0 0.0
    %1681 = vmatpush2.msra.mxu0 %v1617
    %1682 = vmatprep.subr.mxu0 0.0
    %1683 = vmatpush2.msra.mxu0 %v1616
    %1684 = vmatprep.subr.mxu0 0.0
    %1685 = vmatpush2.msra.mxu0 %v1615
    %1686 = vmatprep.subr.mxu0 0.0
    %1687 = vmatpush2.msra.mxu0 %v1614
    %1688 = vmatprep.subr.mxu0 0.0
    %1689 = vmatpush2.msra.mxu0 %v1613
    %1690 = vmatprep.subr.mxu0 0.0
    %1691 = vmatpush2.msra.mxu0 %v1612
    %1692 = vmatprep.mubr.f32.mxu0 %v1593
    %1693 = vmatmul.mubr.f32.gmra.mxu0 %v1592
    %v1694 = vpop.f32.mrf.mxu0
    %v1695 = vadd.f32 0.0, %v1694
    %v1696 = vpop.f32.mrf.mxu0
    %1697 = vmatprep.mubr.f32.mxu0 %v1595
    %1698 = vmatmul.mubr.f32.gmra.mxu0 %v1594
    %v1699 = vpop.f32.mrf.mxu0
    %v1700 = vadd.f32 0.0, %v1699
    %v1701 = vpop.f32.mrf.mxu0
    %1702 = vdwg.mxu0
    %v1703 = vadd.f32 %v1427, %v1695
    %v1704 = vadd.f32 %v1428, %v1700
    %v1705 = vld [vmem:[%s12] sm:$0x1]
    %v1707 = vlaneseq
    %v1708 = vshrl.u32 %v1707, 7
    %v1709 = vsub.s32 0, %v1708
    %v1710 = vrot.slane %v1705, %v1709
    %v1712 = vadd.f32 %v1703, %v1710
    %v1713 = vadd.f32 %v1704, %v1710
    %s1714 = scalar_lea.vmem %s2, 1
    %v1715 = vld [vmem:[%s1714] sm:$0x1]
    %s1716 = scalar_lea.vmem %s3, 1
    %v1717 = vld [vmem:[%s1716] sm:$0x1]
    %1718 = vadd.xlane.f32.xlu0 %v1712
    %v1719 = vpop.xlane.xlu0 %1718
    %1720 = vadd.xlane.f32.xlu0 %v1713
    %v1721 = vpop.xlane.xlu0 %1720
    %v1722 = vmul.f32 %v1719, 0.016666668
    %v1723 = vmul.f32 %v1721, 0.016666668
    %v1724 = vsub.f32 %v1712, %v1722
    %v1725 = vsub.f32 %v1713, %v1723
    %v1726 = vsel %vm143, %v1724, 0.0
    %v1727 = vsel %vm143, %v1725, 0.0
    %v1728 = vmul.f32 %v1726, %v1726
    %v1729 = vmul.f32 %v1727, %v1727
    %1730 = vadd.xlane.f32.xlu0 %v1728
    %v1731 = vpop.xlane.xlu0 %1730
    %1732 = vadd.xlane.f32.xlu0 %v1729
    %v1733 = vpop.xlane.xlu0 %1732
    %v1734 = vmul.f32 %v1731, 0.016666668
    %v1735 = vmul.f32 %v1733, 0.016666668
    %v1736 = vadd.f32 %v1734, 1e-05
    %v1737 = vadd.f32 %v1735, 1e-05
    %v1738 = vrsqrt.pop %v1736
    %v1739 = vrsqrt.pop %v1737
    %v1740 = vmul.f32 %v1726, %v1738
    %v1741 = vmul.f32 %v1727, %v1739
    %v1743 = vlaneseq
    %v1744 = vshrl.u32 %v1743, 7
    %v1745 = vsub.s32 0, %v1744
    %v1746 = vrot.slane %v1715, %v1745
    %v1748 = vmul.f32 %v1740, %v1746
    %v1749 = vmul.f32 %v1741, %v1746
    %v1751 = vlaneseq
    %v1752 = vshrl.u32 %v1751, 7
    %v1753 = vsub.s32 0, %v1752
    %v1754 = vrot.slane %v1717, %v1753
    %v1756 = vadd.f32 %v1748, %v1754
    %v1757 = vadd.f32 %v1749, %v1754
    %s1758 = scalar_lea.vmem [#allocation2], 384
    %v1759 = vld [vmem:[%s1758] sm:$0xff]
    %v1760 = vld [vmem:[%s1758 + $0x8] sm:$0xff]
    %v1761 = vld [vmem:[%s1758 + $0x10] sm:$0xff]
    %v1762 = vld [vmem:[%s1758 + $0x18] sm:$0xff]
    %v1763 = vld [vmem:[%s1758 + $0x20] sm:$0xff]
    %v1764 = vld [vmem:[%s1758 + $0x28] sm:$0xff]
    %v1765 = vld [vmem:[%s1758 + $0x30] sm:$0xff]
    %v1766 = vld [vmem:[%s1758 + $0x38] sm:$0xff]
    %v1767 = vld [vmem:[%s1758 + $0x40] sm:$0xff]
    %v1768 = vld [vmem:[%s1758 + $0x48] sm:$0xff]
    %v1769 = vld [vmem:[%s1758 + $0x50] sm:$0xff]
    %v1770 = vld [vmem:[%s1758 + $0x58] sm:$0xff]
    %v1771 = vld [vmem:[%s1758 + $0x60] sm:$0xff]
    %v1772 = vld [vmem:[%s1758 + $0x68] sm:$0xff]
    %v1773 = vld [vmem:[%s1758 + $0x70] sm:$0xff]
    %v1774 = vld [vmem:[%s1758 + $0x78] sm:$0xff]
    %v1775 = vld [vmem:[%s1758 + $0x80] sm:$0xff]
    %v1776 = vld [vmem:[%s1758 + $0x88] sm:$0xff]
    %v1777 = vld [vmem:[%s1758 + $0x90] sm:$0xff]
    %v1778 = vld [vmem:[%s1758 + $0x98] sm:$0xff]
    %v1779 = vld [vmem:[%s1758 + $0xa0] sm:$0xff]
    %v1780 = vld [vmem:[%s1758 + $0xa8] sm:$0xff]
    %v1781 = vld [vmem:[%s1758 + $0xb0] sm:$0xff]
    %v1782 = vld [vmem:[%s1758 + $0xb8] sm:$0xff]
    %v1783 = vld [vmem:[%s1758 + $0xc0] sm:$0xff]
    %v1784 = vld [vmem:[%s1758 + $0xc8] sm:$0xff]
    %v1785 = vld [vmem:[%s1758 + $0xd0] sm:$0xff]
    %v1786 = vld [vmem:[%s1758 + $0xd8] sm:$0xff]
    %v1787 = vld [vmem:[%s1758 + $0xe0] sm:$0xff]
    %v1788 = vld [vmem:[%s1758 + $0xe8] sm:$0xff]
    %v1789 = vld [vmem:[%s1758 + $0xf0] sm:$0xff]
    %v1790 = vld [vmem:[%s1758 + $0xf8] sm:$0xff]
    %v1791 = vld [vmem:[%s1758 + $0x100] sm:$0xff]
    %v1792 = vld [vmem:[%s1758 + $0x108] sm:$0xff]
    %v1793 = vld [vmem:[%s1758 + $0x110] sm:$0xff]
    %v1794 = vld [vmem:[%s1758 + $0x118] sm:$0xff]
    %v1795 = vld [vmem:[%s1758 + $0x120] sm:$0xff]
    %v1796 = vld [vmem:[%s1758 + $0x128] sm:$0xff]
    %v1797 = vld [vmem:[%s1758 + $0x130] sm:$0xff]
    %v1798 = vld [vmem:[%s1758 + $0x138] sm:$0xff]
    %v1799 = vld [vmem:[%s1758 + $0x140] sm:$0xff]
    %v1800 = vld [vmem:[%s1758 + $0x148] sm:$0xff]
    %v1801 = vld [vmem:[%s1758 + $0x150] sm:$0xff]
    %v1802 = vld [vmem:[%s1758 + $0x158] sm:$0xff]
    %v1803 = vld [vmem:[%s1758 + $0x160] sm:$0xff]
    %v1804 = vld [vmem:[%s1758 + $0x168] sm:$0xff]
    %v1805 = vld [vmem:[%s1758 + $0x170] sm:$0xff]
    %v1806 = vld [vmem:[%s1758 + $0x178] sm:$0xff]
    %1807 = vmatprep.subr.mxu0 %v1805
    %1808 = vmatpush1.msra.mxu0 %v1804
    %1809 = vmatprep.subr.mxu0 %v1802
    %1810 = vmatpush1.msra.mxu0 %v1801
    %1811 = vmatprep.subr.mxu0 %v1799
    %1812 = vmatpush1.msra.mxu0 %v1798
    %1813 = vmatprep.subr.mxu0 %v1796
    %1814 = vmatpush1.msra.mxu0 %v1795
    %1815 = vmatprep.subr.mxu0 %v1793
    %1816 = vmatpush1.msra.mxu0 %v1792
    %1817 = vmatprep.subr.mxu0 %v1790
    %1818 = vmatpush1.msra.mxu0 %v1789
    %1819 = vmatprep.subr.mxu0 %v1787
    %1820 = vmatpush1.msra.mxu0 %v1786
    %1821 = vmatprep.subr.mxu0 %v1784
    %1822 = vmatpush1.msra.mxu0 %v1783
    %1823 = vmatprep.subr.mxu0 %v1781
    %1824 = vmatpush1.msra.mxu0 %v1780
    %1825 = vmatprep.subr.mxu0 %v1778
    %1826 = vmatpush1.msra.mxu0 %v1777
    %1827 = vmatprep.subr.mxu0 %v1775
    %1828 = vmatpush1.msra.mxu0 %v1774
    %1829 = vmatprep.subr.mxu0 %v1772
    %1830 = vmatpush1.msra.mxu0 %v1771
    %1831 = vmatprep.subr.mxu0 %v1769
    %1832 = vmatpush1.msra.mxu0 %v1768
    %1833 = vmatprep.subr.mxu0 %v1766
    %1834 = vmatpush1.msra.mxu0 %v1765
    %1835 = vmatprep.subr.mxu0 %v1763
    %1836 = vmatpush1.msra.mxu0 %v1762
    %1837 = vmatprep.subr.mxu0 %v1760
    %1838 = vmatpush1.msra.mxu0 %v1759
    %1839 = vmatprep.subr.mxu0 0.0
    %1840 = vmatpush2.msra.mxu0 0.0
    %1841 = vmatprep.subr.mxu0 0.0
    %1842 = vmatpush2.msra.mxu0 0.0
    %1843 = vmatprep.subr.mxu0 0.0
    %1844 = vmatpush2.msra.mxu0 0.0
    %1845 = vmatprep.subr.mxu0 0.0
    %1846 = vmatpush2.msra.mxu0 0.0
    %1847 = vmatprep.subr.mxu0 0.0
    %1848 = vmatpush2.msra.mxu0 0.0
    %1849 = vmatprep.subr.mxu0 0.0
    %1850 = vmatpush2.msra.mxu0 0.0
    %1851 = vmatprep.subr.mxu0 0.0
    %1852 = vmatpush2.msra.mxu0 0.0
    %1853 = vmatprep.subr.mxu0 0.0
    %1854 = vmatpush2.msra.mxu0 0.0
    %1855 = vmatprep.subr.mxu0 0.0
    %1856 = vmatpush2.msra.mxu0 0.0
    %1857 = vmatprep.subr.mxu0 0.0
    %1858 = vmatpush2.msra.mxu0 0.0
    %1859 = vmatprep.subr.mxu0 0.0
    %1860 = vmatpush2.msra.mxu0 0.0
    %1861 = vmatprep.subr.mxu0 0.0
    %1862 = vmatpush2.msra.mxu0 0.0
    %1863 = vmatprep.subr.mxu0 0.0
    %1864 = vmatpush2.msra.mxu0 0.0
    %1865 = vmatprep.subr.mxu0 0.0
    %1866 = vmatpush2.msra.mxu0 0.0
    %1867 = vmatprep.subr.mxu0 0.0
    %1868 = vmatpush2.msra.mxu0 0.0
    %1869 = vmatprep.subr.mxu0 0.0
    %1870 = vmatpush2.msra.mxu0 0.0
    %1871 = vmatprep.mubr.f32.mxu0 0.0
    %1872 = vmatmul.mubr.f32.gmra.mxu0 %v1756
    %v1873 = vpop.f32.mrf.mxu0
    %v1874 = vadd.f32 0.0, %v1873
    %v1875 = vpop.f32.mrf.mxu0
    %v1876 = vadd.f32 0.0, %v1875
    %1877 = vmatprep.mubr.f32.mxu0 0.0
    %1878 = vmatmul.mubr.f32.gmra.mxu0 %v1757
    %v1879 = vpop.f32.mrf.mxu0
    %v1880 = vadd.f32 0.0, %v1879
    %v1881 = vpop.f32.mrf.mxu0
    %v1882 = vadd.f32 0.0, %v1881
    %1883 = vdwg.mxu0
    %1884 = vmatprep.subr.mxu0 0.0
    %1885 = vmatpush1.msra.mxu0 %v1806
    %1886 = vmatprep.subr.mxu0 0.0
    %1887 = vmatpush1.msra.mxu0 %v1803
    %1888 = vmatprep.subr.mxu0 0.0
    %1889 = vmatpush1.msra.mxu0 %v1800
    %1890 = vmatprep.subr.mxu0 0.0
    %1891 = vmatpush1.msra.mxu0 %v1797
    %1892 = vmatprep.subr.mxu0 0.0
    %1893 = vmatpush1.msra.mxu0 %v1794
    %1894 = vmatprep.subr.mxu0 0.0
    %1895 = vmatpush1.msra.mxu0 %v1791
    %1896 = vmatprep.subr.mxu0 0.0
    %1897 = vmatpush1.msra.mxu0 %v1788
    %1898 = vmatprep.subr.mxu0 0.0
    %1899 = vmatpush1.msra.mxu0 %v1785
    %1900 = vmatprep.subr.mxu0 0.0
    %1901 = vmatpush1.msra.mxu0 %v1782
    %1902 = vmatprep.subr.mxu0 0.0
    %1903 = vmatpush1.msra.mxu0 %v1779
    %1904 = vmatprep.subr.mxu0 0.0
    %1905 = vmatpush1.msra.mxu0 %v1776
    %1906 = vmatprep.subr.mxu0 0.0
    %1907 = vmatpush1.msra.mxu0 %v1773
    %1908 = vmatprep.subr.mxu0 0.0
    %1909 = vmatpush1.msra.mxu0 %v1770
    %1910 = vmatprep.subr.mxu0 0.0
    %1911 = vmatpush1.msra.mxu0 %v1767
    %1912 = vmatprep.subr.mxu0 0.0
    %1913 = vmatpush1.msra.mxu0 %v1764
    %1914 = vmatprep.subr.mxu0 0.0
    %1915 = vmatpush1.msra.mxu0 %v1761
    %1916 = vmatprep.subr.mxu0 0.0
    %1917 = vmatpush2.msra.mxu0 0.0
    %1918 = vmatprep.subr.mxu0 0.0
    %1919 = vmatpush2.msra.mxu0 0.0
    %1920 = vmatprep.subr.mxu0 0.0
    %1921 = vmatpush2.msra.mxu0 0.0
    %1922 = vmatprep.subr.mxu0 0.0
    %1923 = vmatpush2.msra.mxu0 0.0
    %1924 = vmatprep.subr.mxu0 0.0
    %1925 = vmatpush2.msra.mxu0 0.0
    %1926 = vmatprep.subr.mxu0 0.0
    %1927 = vmatpush2.msra.mxu0 0.0
    %1928 = vmatprep.subr.mxu0 0.0
    %1929 = vmatpush2.msra.mxu0 0.0
    %1930 = vmatprep.subr.mxu0 0.0
    %1931 = vmatpush2.msra.mxu0 0.0
    %1932 = vmatprep.subr.mxu0 0.0
    %1933 = vmatpush2.msra.mxu0 0.0
    %1934 = vmatprep.subr.mxu0 0.0
    %1935 = vmatpush2.msra.mxu0 0.0
    %1936 = vmatprep.subr.mxu0 0.0
    %1937 = vmatpush2.msra.mxu0 0.0
    %1938 = vmatprep.subr.mxu0 0.0
    %1939 = vmatpush2.msra.mxu0 0.0
    %1940 = vmatprep.subr.mxu0 0.0
    %1941 = vmatpush2.msra.mxu0 0.0
    %1942 = vmatprep.subr.mxu0 0.0
    %1943 = vmatpush2.msra.mxu0 0.0
    %1944 = vmatprep.subr.mxu0 0.0
    %1945 = vmatpush2.msra.mxu0 0.0
    %1946 = vmatprep.subr.mxu0 0.0
    %1947 = vmatpush2.msra.mxu0 0.0
    %1948 = vmatprep.mubr.f32.mxu0 0.0
    %1949 = vmatmul.mubr.f32.gmra.mxu0 %v1756
    %v1950 = vpop.f32.mrf.mxu0
    %v1951 = vadd.f32 0.0, %v1950
    %v1952 = vpop.f32.mrf.mxu0
    %1953 = vmatprep.mubr.f32.mxu0 0.0
    %1954 = vmatmul.mubr.f32.gmra.mxu0 %v1757
    %v1955 = vpop.f32.mrf.mxu0
    %v1956 = vadd.f32 0.0, %v1955
    %v1957 = vpop.f32.mrf.mxu0
    %1958 = vdwg.mxu0
    %v1959 = vmul.f32 %v1874, %v122
    %v1960 = vmul.f32 %v1880, %v122
    %1961 = vmatprep.subr.mxu0 0.0
    %1962 = vmatpush1.xpose.msra.mxu0 0.0
    %1963 = vmatprep.subr.mxu0 0.0
    %1964 = vmatpush1.xpose.msra.mxu0 0.0
    %1965 = vmatprep.subr.mxu0 0.0
    %1966 = vmatpush1.xpose.msra.mxu0 0.0
    %1967 = vmatprep.subr.mxu0 0.0
    %1968 = vmatpush1.xpose.msra.mxu0 0.0
    %1969 = vmatprep.subr.mxu0 0.0
    %1970 = vmatpush1.xpose.msra.mxu0 0.0
    %1971 = vmatprep.subr.mxu0 0.0
    %1972 = vmatpush1.xpose.msra.mxu0 0.0
    %1973 = vmatprep.subr.mxu0 0.0
    %1974 = vmatpush1.xpose.msra.mxu0 0.0
    %1975 = vmatprep.subr.mxu0 0.0
    %1976 = vmatpush1.xpose.msra.mxu0 0.0
    %1977 = vmatprep.subr.mxu0 0.0
    %1978 = vmatpush1.xpose.msra.mxu0 0.0
    %1979 = vmatprep.subr.mxu0 0.0
    %1980 = vmatpush1.xpose.msra.mxu0 0.0
    %1981 = vmatprep.subr.mxu0 0.0
    %1982 = vmatpush1.xpose.msra.mxu0 0.0
    %1983 = vmatprep.subr.mxu0 0.0
    %1984 = vmatpush1.xpose.msra.mxu0 0.0
    %1985 = vmatprep.subr.mxu0 0.0
    %1986 = vmatpush1.xpose.msra.mxu0 0.0
    %1987 = vmatprep.subr.mxu0 0.0
    %1988 = vmatpush1.xpose.msra.mxu0 0.0
    %1989 = vmatprep.subr.mxu0 0.0
    %1990 = vmatpush1.xpose.msra.mxu0 0.0
    %1991 = vmatprep.subr.mxu0 0.0
    %1992 = vmatpush1.xpose.msra.mxu0 %v1876
    %1993 = vmatprep.subr.mxu0 0.0
    %1994 = vmatpush2.xpose.msra.mxu0 0.0
    %1995 = vmatprep.subr.mxu0 0.0
    %1996 = vmatpush2.xpose.msra.mxu0 0.0
    %1997 = vmatprep.subr.mxu0 0.0
    %1998 = vmatpush2.xpose.msra.mxu0 0.0
    %1999 = vmatprep.subr.mxu0 0.0
    %2000 = vmatpush2.xpose.msra.mxu0 0.0
    %2001 = vmatprep.subr.mxu0 0.0
    %2002 = vmatpush2.xpose.msra.mxu0 0.0
    %2003 = vmatprep.subr.mxu0 0.0
    %2004 = vmatpush2.xpose.msra.mxu0 0.0
    %2005 = vmatprep.subr.mxu0 0.0
    %2006 = vmatpush2.xpose.msra.mxu0 0.0
    %2007 = vmatprep.subr.mxu0 0.0
    %2008 = vmatpush2.xpose.msra.mxu0 0.0
    %2009 = vmatprep.subr.mxu0 0.0
    %2010 = vmatpush2.xpose.msra.mxu0 0.0
    %2011 = vmatprep.subr.mxu0 0.0
    %2012 = vmatpush2.xpose.msra.mxu0 0.0
    %2013 = vmatprep.subr.mxu0 0.0
    %2014 = vmatpush2.xpose.msra.mxu0 0.0
    %2015 = vmatprep.subr.mxu0 0.0
    %2016 = vmatpush2.xpose.msra.mxu0 0.0
    %2017 = vmatprep.subr.mxu0 0.0
    %2018 = vmatpush2.xpose.msra.mxu0 0.0
    %2019 = vmatprep.subr.mxu0 0.0
    %2020 = vmatpush2.xpose.msra.mxu0 0.0
    %2021 = vmatprep.subr.mxu0 0.0
    %2022 = vmatpush2.xpose.msra.mxu0 0.0
    %2023 = vmatprep.subr.mxu0 0.0
    %2024 = vmatpush2.xpose.msra.mxu0 0.0
    %2025 = vmatprep.mubr.f32.mxu0 0.0
    %2026 = vmatmul.mubr.f32.gmra.mxu0 %v1959
    %v2027 = vpop.f32.mrf.mxu0
    %v2028 = vadd.f32 0.0, %v2027
    %v2029 = vpop.f32.mrf.mxu0
    %2030 = vdwg.mxu0
    %2031 = vmatprep.subr.mxu0 0.0
    %2032 = vmatpush1.xpose.msra.mxu0 0.0
    %2033 = vmatprep.subr.mxu0 0.0
    %2034 = vmatpush1.xpose.msra.mxu0 0.0
    %2035 = vmatprep.subr.mxu0 0.0
    %2036 = vmatpush1.xpose.msra.mxu0 0.0
    %2037 = vmatprep.subr.mxu0 0.0
    %2038 = vmatpush1.xpose.msra.mxu0 0.0
    %2039 = vmatprep.subr.mxu0 0.0
    %2040 = vmatpush1.xpose.msra.mxu0 0.0
    %2041 = vmatprep.subr.mxu0 0.0
    %2042 = vmatpush1.xpose.msra.mxu0 0.0
    %2043 = vmatprep.subr.mxu0 0.0
    %2044 = vmatpush1.xpose.msra.mxu0 0.0
    %2045 = vmatprep.subr.mxu0 0.0
    %2046 = vmatpush1.xpose.msra.mxu0 0.0
    %2047 = vmatprep.subr.mxu0 0.0
    %2048 = vmatpush1.xpose.msra.mxu0 0.0
    %2049 = vmatprep.subr.mxu0 0.0
    %2050 = vmatpush1.xpose.msra.mxu0 0.0
    %2051 = vmatprep.subr.mxu0 0.0
    %2052 = vmatpush1.xpose.msra.mxu0 0.0
    %2053 = vmatprep.subr.mxu0 0.0
    %2054 = vmatpush1.xpose.msra.mxu0 0.0
    %2055 = vmatprep.subr.mxu0 0.0
    %2056 = vmatpush1.xpose.msra.mxu0 0.0
    %2057 = vmatprep.subr.mxu0 0.0
    %2058 = vmatpush1.xpose.msra.mxu0 0.0
    %2059 = vmatprep.subr.mxu0 0.0
    %2060 = vmatpush1.xpose.msra.mxu0 0.0
    %2061 = vmatprep.subr.mxu0 0.0
    %2062 = vmatpush1.xpose.msra.mxu0 %v1882
    %2063 = vmatprep.subr.mxu0 0.0
    %2064 = vmatpush2.xpose.msra.mxu0 0.0
    %2065 = vmatprep.subr.mxu0 0.0
    %2066 = vmatpush2.xpose.msra.mxu0 0.0
    %2067 = vmatprep.subr.mxu0 0.0
    %2068 = vmatpush2.xpose.msra.mxu0 0.0
    %2069 = vmatprep.subr.mxu0 0.0
    %2070 = vmatpush2.xpose.msra.mxu0 0.0
    %2071 = vmatprep.subr.mxu0 0.0
    %2072 = vmatpush2.xpose.msra.mxu0 0.0
    %2073 = vmatprep.subr.mxu0 0.0
    %2074 = vmatpush2.xpose.msra.mxu0 0.0
    %2075 = vmatprep.subr.mxu0 0.0
    %2076 = vmatpush2.xpose.msra.mxu0 0.0
    %2077 = vmatprep.subr.mxu0 0.0
    %2078 = vmatpush2.xpose.msra.mxu0 0.0
    %2079 = vmatprep.subr.mxu0 0.0
    %2080 = vmatpush2.xpose.msra.mxu0 0.0
    %2081 = vmatprep.subr.mxu0 0.0
    %2082 = vmatpush2.xpose.msra.mxu0 0.0
    %2083 = vmatprep.subr.mxu0 0.0
    %2084 = vmatpush2.xpose.msra.mxu0 0.0
    %2085 = vmatprep.subr.mxu0 0.0
    %2086 = vmatpush2.xpose.msra.mxu0 0.0
    %2087 = vmatprep.subr.mxu0 0.0
    %2088 = vmatpush2.xpose.msra.mxu0 0.0
    %2089 = vmatprep.subr.mxu0 0.0
    %2090 = vmatpush2.xpose.msra.mxu0 0.0
    %2091 = vmatprep.subr.mxu0 0.0
    %2092 = vmatpush2.xpose.msra.mxu0 0.0
    %2093 = vmatprep.subr.mxu0 0.0
    %2094 = vmatpush2.xpose.msra.mxu0 0.0
    %2095 = vmatprep.mubr.f32.mxu0 0.0
    %2096 = vmatmul.mubr.f32.gmra.mxu0 %v1960
    %v2097 = vpop.f32.mrf.mxu0
    %v2098 = vadd.f32 0.0, %v2097
    %v2099 = vpop.f32.mrf.mxu0
    %2100 = vdwg.mxu0
    %v2101 = vmul.f32 %v2028, 0.12909944
    %v2102 = vmul.f32 %v2098, 0.12909944
    %v2103 = vadd.f32 %v2101, %v114
    %v2104 = vadd.f32 %v2102, %v114
    %v2105 = vsel %vm522, %v2103, -inf
    %2106 = vmax.xlane.f32.xlu0 %v2105
    %v2107 = vpop.xlane.xlu0 %2106
    %v2108 = vsel %vm522, %v2104, -inf
    %2109 = vmax.xlane.f32.xlu0 %v2108
    %v2110 = vpop.xlane.xlu0 %2109
    %v2111 = vsub.f32 %v2103, %v2107
    %v2112 = vsub.f32 %v2104, %v2110
    %v2113 = vmul.f32 %v2111, 1.442695
    %v2114 = vpow.pop %v2113
    %v2115 = vmul.f32 %v2112, 1.442695
    %v2116 = vpow.pop %v2115
    %v2117 = vsel %vm522, %v2114, 0.0
    %2118 = vadd.xlane.f32.xlu0 %v2117
    %v2119 = vpop.xlane.xlu0 %2118
    %v2120 = vsel %vm522, %v2116, 0.0
    %2121 = vadd.xlane.f32.xlu0 %v2120
    %v2122 = vpop.xlane.xlu0 %2121
    %v2123 = vrcp.pop %v2119
    %v2124 = vrcp.pop %v2122
    %v2125 = vmul.f32 %v2114, %v2123
    %v2126 = vmul.f32 %v2116, %v2124
    %v2128 = vsel %vm522, %v2125, 0
    %2130 = vmatprep.subr.mxu0 0.0
    %2131 = vmatpush1.msra.mxu0 0.0
    %2132 = vmatprep.subr.mxu0 0.0
    %2133 = vmatpush1.msra.mxu0 0.0
    %2134 = vmatprep.subr.mxu0 0.0
    %2135 = vmatpush1.msra.mxu0 0.0
    %2136 = vmatprep.subr.mxu0 0.0
    %2137 = vmatpush1.msra.mxu0 0.0
    %2138 = vmatprep.subr.mxu0 0.0
    %2139 = vmatpush1.msra.mxu0 0.0
    %2140 = vmatprep.subr.mxu0 0.0
    %2141 = vmatpush1.msra.mxu0 0.0
    %2142 = vmatprep.subr.mxu0 0.0
    %2143 = vmatpush1.msra.mxu0 0.0
    %2144 = vmatprep.subr.mxu0 0.0
    %2145 = vmatpush1.msra.mxu0 0.0
    %2146 = vmatprep.subr.mxu0 0.0
    %2147 = vmatpush1.msra.mxu0 0.0
    %2148 = vmatprep.subr.mxu0 0.0
    %2149 = vmatpush1.msra.mxu0 0.0
    %2150 = vmatprep.subr.mxu0 0.0
    %2151 = vmatpush1.msra.mxu0 0.0
    %2152 = vmatprep.subr.mxu0 0.0
    %2153 = vmatpush1.msra.mxu0 0.0
    %2154 = vmatprep.subr.mxu0 0.0
    %2155 = vmatpush1.msra.mxu0 0.0
    %2156 = vmatprep.subr.mxu0 0.0
    %2157 = vmatpush1.msra.mxu0 0.0
    %2158 = vmatprep.subr.mxu0 0.0
    %2159 = vmatpush1.msra.mxu0 0.0
    %2160 = vmatprep.subr.mxu0 0.0
    %2161 = vmatpush1.msra.mxu0 %v1951
    %2162 = vmatprep.subr.mxu0 0.0
    %2163 = vmatpush2.msra.mxu0 0.0
    %2164 = vmatprep.subr.mxu0 0.0
    %2165 = vmatpush2.msra.mxu0 0.0
    %2166 = vmatprep.subr.mxu0 0.0
    %2167 = vmatpush2.msra.mxu0 0.0
    %2168 = vmatprep.subr.mxu0 0.0
    %2169 = vmatpush2.msra.mxu0 0.0
    %2170 = vmatprep.subr.mxu0 0.0
    %2171 = vmatpush2.msra.mxu0 0.0
    %2172 = vmatprep.subr.mxu0 0.0
    %2173 = vmatpush2.msra.mxu0 0.0
    %2174 = vmatprep.subr.mxu0 0.0
    %2175 = vmatpush2.msra.mxu0 0.0
    %2176 = vmatprep.subr.mxu0 0.0
    %2177 = vmatpush2.msra.mxu0 0.0
    %2178 = vmatprep.subr.mxu0 0.0
    %2179 = vmatpush2.msra.mxu0 0.0
    %2180 = vmatprep.subr.mxu0 0.0
    %2181 = vmatpush2.msra.mxu0 0.0
    %2182 = vmatprep.subr.mxu0 0.0
    %2183 = vmatpush2.msra.mxu0 0.0
    %2184 = vmatprep.subr.mxu0 0.0
    %2185 = vmatpush2.msra.mxu0 0.0
    %2186 = vmatprep.subr.mxu0 0.0
    %2187 = vmatpush2.msra.mxu0 0.0
    %2188 = vmatprep.subr.mxu0 0.0
    %2189 = vmatpush2.msra.mxu0 0.0
    %2190 = vmatprep.subr.mxu0 0.0
    %2191 = vmatpush2.msra.mxu0 0.0
    %2192 = vmatprep.subr.mxu0 0.0
    %2193 = vmatpush2.msra.mxu0 0.0
    %2194 = vmatprep.mubr.f32.mxu0 0.0
    %2195 = vmatmul.mubr.f32.gmra.mxu0 %v2128
    %v2196 = vpop.f32.mrf.mxu0
    %v2197 = vadd.f32 0.0, %v2196
    %v2198 = vpop.f32.mrf.mxu0
    %2199 = vdwg.mxu0
    %v2201 = vsel %vm522, %v2126, 0
    %2203 = vmatprep.subr.mxu0 0.0
    %2204 = vmatpush1.msra.mxu0 0.0
    %2205 = vmatprep.subr.mxu0 0.0
    %2206 = vmatpush1.msra.mxu0 0.0
    %2207 = vmatprep.subr.mxu0 0.0
    %2208 = vmatpush1.msra.mxu0 0.0
    %2209 = vmatprep.subr.mxu0 0.0
    %2210 = vmatpush1.msra.mxu0 0.0
    %2211 = vmatprep.subr.mxu0 0.0
    %2212 = vmatpush1.msra.mxu0 0.0
    %2213 = vmatprep.subr.mxu0 0.0
    %2214 = vmatpush1.msra.mxu0 0.0
    %2215 = vmatprep.subr.mxu0 0.0
    %2216 = vmatpush1.msra.mxu0 0.0
    %2217 = vmatprep.subr.mxu0 0.0
    %2218 = vmatpush1.msra.mxu0 0.0
    %2219 = vmatprep.subr.mxu0 0.0
    %2220 = vmatpush1.msra.mxu0 0.0
    %2221 = vmatprep.subr.mxu0 0.0
    %2222 = vmatpush1.msra.mxu0 0.0
    %2223 = vmatprep.subr.mxu0 0.0
    %2224 = vmatpush1.msra.mxu0 0.0
    %2225 = vmatprep.subr.mxu0 0.0
    %2226 = vmatpush1.msra.mxu0 0.0
    %2227 = vmatprep.subr.mxu0 0.0
    %2228 = vmatpush1.msra.mxu0 0.0
    %2229 = vmatprep.subr.mxu0 0.0
    %2230 = vmatpush1.msra.mxu0 0.0
    %2231 = vmatprep.subr.mxu0 0.0
    %2232 = vmatpush1.msra.mxu0 0.0
    %2233 = vmatprep.subr.mxu0 0.0
    %2234 = vmatpush1.msra.mxu0 %v1956
    %2235 = vmatprep.subr.mxu0 0.0
    %2236 = vmatpush2.msra.mxu0 0.0
    %2237 = vmatprep.subr.mxu0 0.0
    %2238 = vmatpush2.msra.mxu0 0.0
    %2239 = vmatprep.subr.mxu0 0.0
    %2240 = vmatpush2.msra.mxu0 0.0
    %2241 = vmatprep.subr.mxu0 0.0
    %2242 = vmatpush2.msra.mxu0 0.0
    %2243 = vmatprep.subr.mxu0 0.0
    %2244 = vmatpush2.msra.mxu0 0.0
    %2245 = vmatprep.subr.mxu0 0.0
    %2246 = vmatpush2.msra.mxu0 0.0
    %2247 = vmatprep.subr.mxu0 0.0
    %2248 = vmatpush2.msra.mxu0 0.0
    %2249 = vmatprep.subr.mxu0 0.0
    %2250 = vmatpush2.msra.mxu0 0.0
    %2251 = vmatprep.subr.mxu0 0.0
    %2252 = vmatpush2.msra.mxu0 0.0
    %2253 = vmatprep.subr.mxu0 0.0
    %2254 = vmatpush2.msra.mxu0 0.0
    %2255 = vmatprep.subr.mxu0 0.0
    %2256 = vmatpush2.msra.mxu0 0.0
    %2257 = vmatprep.subr.mxu0 0.0
    %2258 = vmatpush2.msra.mxu0 0.0
    %2259 = vmatprep.subr.mxu0 0.0
    %2260 = vmatpush2.msra.mxu0 0.0
    %2261 = vmatprep.subr.mxu0 0.0
    %2262 = vmatpush2.msra.mxu0 0.0
    %2263 = vmatprep.subr.mxu0 0.0
    %2264 = vmatpush2.msra.mxu0 0.0
    %2265 = vmatprep.subr.mxu0 0.0
    %2266 = vmatpush2.msra.mxu0 0.0
    %2267 = vmatprep.mubr.f32.mxu0 0.0
    %2268 = vmatmul.mubr.f32.gmra.mxu0 %v2201
    %v2269 = vpop.f32.mrf.mxu0
    %v2270 = vadd.f32 0.0, %v2269
    %v2271 = vpop.f32.mrf.mxu0
    %2272 = vdwg.mxu0
    %v2273 = vmul.f32 %v2197, %v122
    %v2274 = vmul.f32 %v2270, %v122
    %v2275 = vmul.f32 %v1874, %v127
    %v2276 = vmul.f32 %v1880, %v127
    %2277 = vmatprep.subr.mxu0 0.0
    %2278 = vmatpush1.xpose.msra.mxu0 0.0
    %2279 = vmatprep.subr.mxu0 0.0
    %2280 = vmatpush1.xpose.msra.mxu0 0.0
    %2281 = vmatprep.subr.mxu0 0.0
    %2282 = vmatpush1.xpose.msra.mxu0 0.0
    %2283 = vmatprep.subr.mxu0 0.0
    %2284 = vmatpush1.xpose.msra.mxu0 0.0
    %2285 = vmatprep.subr.mxu0 0.0
    %2286 = vmatpush1.xpose.msra.mxu0 0.0
    %2287 = vmatprep.subr.mxu0 0.0
    %2288 = vmatpush1.xpose.msra.mxu0 0.0
    %2289 = vmatprep.subr.mxu0 0.0
    %2290 = vmatpush1.xpose.msra.mxu0 0.0
    %2291 = vmatprep.subr.mxu0 0.0
    %2292 = vmatpush1.xpose.msra.mxu0 0.0
    %2293 = vmatprep.subr.mxu0 0.0
    %2294 = vmatpush1.xpose.msra.mxu0 0.0
    %2295 = vmatprep.subr.mxu0 0.0
    %2296 = vmatpush1.xpose.msra.mxu0 0.0
    %2297 = vmatprep.subr.mxu0 0.0
    %2298 = vmatpush1.xpose.msra.mxu0 0.0
    %2299 = vmatprep.subr.mxu0 0.0
    %2300 = vmatpush1.xpose.msra.mxu0 0.0
    %2301 = vmatprep.subr.mxu0 0.0
    %2302 = vmatpush1.xpose.msra.mxu0 0.0
    %2303 = vmatprep.subr.mxu0 0.0
    %2304 = vmatpush1.xpose.msra.mxu0 0.0
    %2305 = vmatprep.subr.mxu0 0.0
    %2306 = vmatpush1.xpose.msra.mxu0 0.0
    %2307 = vmatprep.subr.mxu0 0.0
    %2308 = vmatpush1.xpose.msra.mxu0 %v1876
    %2309 = vmatprep.subr.mxu0 0.0
    %2310 = vmatpush2.xpose.msra.mxu0 0.0
    %2311 = vmatprep.subr.mxu0 0.0
    %2312 = vmatpush2.xpose.msra.mxu0 0.0
    %2313 = vmatprep.subr.mxu0 0.0
    %2314 = vmatpush2.xpose.msra.mxu0 0.0
    %2315 = vmatprep.subr.mxu0 0.0
    %2316 = vmatpush2.xpose.msra.mxu0 0.0
    %2317 = vmatprep.subr.mxu0 0.0
    %2318 = vmatpush2.xpose.msra.mxu0 0.0
    %2319 = vmatprep.subr.mxu0 0.0
    %2320 = vmatpush2.xpose.msra.mxu0 0.0
    %2321 = vmatprep.subr.mxu0 0.0
    %2322 = vmatpush2.xpose.msra.mxu0 0.0
    %2323 = vmatprep.subr.mxu0 0.0
    %2324 = vmatpush2.xpose.msra.mxu0 0.0
    %2325 = vmatprep.subr.mxu0 0.0
    %2326 = vmatpush2.xpose.msra.mxu0 0.0
    %2327 = vmatprep.subr.mxu0 0.0
    %2328 = vmatpush2.xpose.msra.mxu0 0.0
    %2329 = vmatprep.subr.mxu0 0.0
    %2330 = vmatpush2.xpose.msra.mxu0 0.0
    %2331 = vmatprep.subr.mxu0 0.0
    %2332 = vmatpush2.xpose.msra.mxu0 0.0
    %2333 = vmatprep.subr.mxu0 0.0
    %2334 = vmatpush2.xpose.msra.mxu0 0.0
    %2335 = vmatprep.subr.mxu0 0.0
    %2336 = vmatpush2.xpose.msra.mxu0 0.0
    %2337 = vmatprep.subr.mxu0 0.0
    %2338 = vmatpush2.xpose.msra.mxu0 0.0
    %2339 = vmatprep.subr.mxu0 0.0
    %2340 = vmatpush2.xpose.msra.mxu0 0.0
    %2341 = vmatprep.mubr.f32.mxu0 0.0
    %2342 = vmatmul.mubr.f32.gmra.mxu0 %v2275
    %v2343 = vpop.f32.mrf.mxu0
    %v2344 = vadd.f32 0.0, %v2343
    %v2345 = vpop.f32.mrf.mxu0
    %2346 = vdwg.mxu0
    %2347 = vmatprep.subr.mxu0 0.0
    %2348 = vmatpush1.xpose.msra.mxu0 0.0
    %2349 = vmatprep.subr.mxu0 0.0
    %2350 = vmatpush1.xpose.msra.mxu0 0.0
    %2351 = vmatprep.subr.mxu0 0.0
    %2352 = vmatpush1.xpose.msra.mxu0 0.0
    %2353 = vmatprep.subr.mxu0 0.0
    %2354 = vmatpush1.xpose.msra.mxu0 0.0
    %2355 = vmatprep.subr.mxu0 0.0
    %2356 = vmatpush1.xpose.msra.mxu0 0.0
    %2357 = vmatprep.subr.mxu0 0.0
    %2358 = vmatpush1.xpose.msra.mxu0 0.0
    %2359 = vmatprep.subr.mxu0 0.0
    %2360 = vmatpush1.xpose.msra.mxu0 0.0
    %2361 = vmatprep.subr.mxu0 0.0
    %2362 = vmatpush1.xpose.msra.mxu0 0.0
    %2363 = vmatprep.subr.mxu0 0.0
    %2364 = vmatpush1.xpose.msra.mxu0 0.0
    %2365 = vmatprep.subr.mxu0 0.0
    %2366 = vmatpush1.xpose.msra.mxu0 0.0
    %2367 = vmatprep.subr.mxu0 0.0
    %2368 = vmatpush1.xpose.msra.mxu0 0.0
    %2369 = vmatprep.subr.mxu0 0.0
    %2370 = vmatpush1.xpose.msra.mxu0 0.0
    %2371 = vmatprep.subr.mxu0 0.0
    %2372 = vmatpush1.xpose.msra.mxu0 0.0
    %2373 = vmatprep.subr.mxu0 0.0
    %2374 = vmatpush1.xpose.msra.mxu0 0.0
    %2375 = vmatprep.subr.mxu0 0.0
    %2376 = vmatpush1.xpose.msra.mxu0 0.0
    %2377 = vmatprep.subr.mxu0 0.0
    %2378 = vmatpush1.xpose.msra.mxu0 %v1882
    %2379 = vmatprep.subr.mxu0 0.0
    %2380 = vmatpush2.xpose.msra.mxu0 0.0
    %2381 = vmatprep.subr.mxu0 0.0
    %2382 = vmatpush2.xpose.msra.mxu0 0.0
    %2383 = vmatprep.subr.mxu0 0.0
    %2384 = vmatpush2.xpose.msra.mxu0 0.0
    %2385 = vmatprep.subr.mxu0 0.0
    %2386 = vmatpush2.xpose.msra.mxu0 0.0
    %2387 = vmatprep.subr.mxu0 0.0
    %2388 = vmatpush2.xpose.msra.mxu0 0.0
    %2389 = vmatprep.subr.mxu0 0.0
    %2390 = vmatpush2.xpose.msra.mxu0 0.0
    %2391 = vmatprep.subr.mxu0 0.0
    %2392 = vmatpush2.xpose.msra.mxu0 0.0
    %2393 = vmatprep.subr.mxu0 0.0
    %2394 = vmatpush2.xpose.msra.mxu0 0.0
    %2395 = vmatprep.subr.mxu0 0.0
    %2396 = vmatpush2.xpose.msra.mxu0 0.0
    %2397 = vmatprep.subr.mxu0 0.0
    %2398 = vmatpush2.xpose.msra.mxu0 0.0
    %2399 = vmatprep.subr.mxu0 0.0
    %2400 = vmatpush2.xpose.msra.mxu0 0.0
    %2401 = vmatprep.subr.mxu0 0.0
    %2402 = vmatpush2.xpose.msra.mxu0 0.0
    %2403 = vmatprep.subr.mxu0 0.0
    %2404 = vmatpush2.xpose.msra.mxu0 0.0
    %2405 = vmatprep.subr.mxu0 0.0
    %2406 = vmatpush2.xpose.msra.mxu0 0.0
    %2407 = vmatprep.subr.mxu0 0.0
    %2408 = vmatpush2.xpose.msra.mxu0 0.0
    %2409 = vmatprep.subr.mxu0 0.0
    %2410 = vmatpush2.xpose.msra.mxu0 0.0
    %2411 = vmatprep.mubr.f32.mxu0 0.0
    %2412 = vmatmul.mubr.f32.gmra.mxu0 %v2276
    %v2413 = vpop.f32.mrf.mxu0
    %v2414 = vadd.f32 0.0, %v2413
    %v2415 = vpop.f32.mrf.mxu0
    %2416 = vdwg.mxu0
    %v2417 = vmul.f32 %v2344, 0.12909944
    %v2418 = vmul.f32 %v2414, 0.12909944
    %v2419 = vadd.f32 %v2417, %v114
    %v2420 = vadd.f32 %v2418, %v114
    %v2421 = vsel %vm522, %v2419, -inf
    %2422 = vmax.xlane.f32.xlu0 %v2421
    %v2423 = vpop.xlane.xlu0 %2422
    %v2424 = vsel %vm522, %v2420, -inf
    %2425 = vmax.xlane.f32.xlu0 %v2424
    %v2426 = vpop.xlane.xlu0 %2425
    %v2427 = vsub.f32 %v2419, %v2423
    %v2428 = vsub.f32 %v2420, %v2426
    %v2429 = vmul.f32 %v2427, 1.442695
    %v2430 = vpow.pop %v2429
    %v2431 = vmul.f32 %v2428, 1.442695
    %v2432 = vpow.pop %v2431
    %v2433 = vsel %vm522, %v2430, 0.0
    %2434 = vadd.xlane.f32.xlu0 %v2433
    %v2435 = vpop.xlane.xlu0 %2434
    %v2436 = vsel %vm522, %v2432, 0.0
    %2437 = vadd.xlane.f32.xlu0 %v2436
    %v2438 = vpop.xlane.xlu0 %2437
    %v2439 = vrcp.pop %v2435
    %v2440 = vrcp.pop %v2438
    %v2441 = vmul.f32 %v2430, %v2439
    %v2442 = vmul.f32 %v2432, %v2440
    %v2444 = vsel %vm522, %v2441, 0
    %2446 = vmatprep.subr.mxu0 0.0
    %2447 = vmatpush1.msra.mxu0 0.0
    %2448 = vmatprep.subr.mxu0 0.0
    %2449 = vmatpush1.msra.mxu0 0.0
    %2450 = vmatprep.subr.mxu0 0.0
    %2451 = vmatpush1.msra.mxu0 0.0
    %2452 = vmatprep.subr.mxu0 0.0
    %2453 = vmatpush1.msra.mxu0 0.0
    %2454 = vmatprep.subr.mxu0 0.0
    %2455 = vmatpush1.msra.mxu0 0.0
    %2456 = vmatprep.subr.mxu0 0.0
    %2457 = vmatpush1.msra.mxu0 0.0
    %2458 = vmatprep.subr.mxu0 0.0
    %2459 = vmatpush1.msra.mxu0 0.0
    %2460 = vmatprep.subr.mxu0 0.0
    %2461 = vmatpush1.msra.mxu0 0.0
    %2462 = vmatprep.subr.mxu0 0.0
    %2463 = vmatpush1.msra.mxu0 0.0
    %2464 = vmatprep.subr.mxu0 0.0
    %2465 = vmatpush1.msra.mxu0 0.0
    %2466 = vmatprep.subr.mxu0 0.0
    %2467 = vmatpush1.msra.mxu0 0.0
    %2468 = vmatprep.subr.mxu0 0.0
    %2469 = vmatpush1.msra.mxu0 0.0
    %2470 = vmatprep.subr.mxu0 0.0
    %2471 = vmatpush1.msra.mxu0 0.0
    %2472 = vmatprep.subr.mxu0 0.0
    %2473 = vmatpush1.msra.mxu0 0.0
    %2474 = vmatprep.subr.mxu0 0.0
    %2475 = vmatpush1.msra.mxu0 0.0
    %2476 = vmatprep.subr.mxu0 0.0
    %2477 = vmatpush1.msra.mxu0 %v1951
    %2478 = vmatprep.subr.mxu0 0.0
    %2479 = vmatpush2.msra.mxu0 0.0
    %2480 = vmatprep.subr.mxu0 0.0
    %2481 = vmatpush2.msra.mxu0 0.0
    %2482 = vmatprep.subr.mxu0 0.0
    %2483 = vmatpush2.msra.mxu0 0.0
    %2484 = vmatprep.subr.mxu0 0.0
    %2485 = vmatpush2.msra.mxu0 0.0
    %2486 = vmatprep.subr.mxu0 0.0
    %2487 = vmatpush2.msra.mxu0 0.0
    %2488 = vmatprep.subr.mxu0 0.0
    %2489 = vmatpush2.msra.mxu0 0.0
    %2490 = vmatprep.subr.mxu0 0.0
    %2491 = vmatpush2.msra.mxu0 0.0
    %2492 = vmatprep.subr.mxu0 0.0
    %2493 = vmatpush2.msra.mxu0 0.0
    %2494 = vmatprep.subr.mxu0 0.0
    %2495 = vmatpush2.msra.mxu0 0.0
    %2496 = vmatprep.subr.mxu0 0.0
    %2497 = vmatpush2.msra.mxu0 0.0
    %2498 = vmatprep.subr.mxu0 0.0
    %2499 = vmatpush2.msra.mxu0 0.0
    %2500 = vmatprep.subr.mxu0 0.0
    %2501 = vmatpush2.msra.mxu0 0.0
    %2502 = vmatprep.subr.mxu0 0.0
    %2503 = vmatpush2.msra.mxu0 0.0
    %2504 = vmatprep.subr.mxu0 0.0
    %2505 = vmatpush2.msra.mxu0 0.0
    %2506 = vmatprep.subr.mxu0 0.0
    %2507 = vmatpush2.msra.mxu0 0.0
    %2508 = vmatprep.subr.mxu0 0.0
    %2509 = vmatpush2.msra.mxu0 0.0
    %2510 = vmatprep.mubr.f32.mxu0 0.0
    %2511 = vmatmul.mubr.f32.gmra.mxu0 %v2444
    %v2512 = vpop.f32.mrf.mxu0
    %v2513 = vadd.f32 0.0, %v2512
    %v2514 = vpop.f32.mrf.mxu0
    %2515 = vdwg.mxu0
    %v2517 = vsel %vm522, %v2442, 0
    %2519 = vmatprep.subr.mxu0 0.0
    %2520 = vmatpush1.msra.mxu0 0.0
    %2521 = vmatprep.subr.mxu0 0.0
    %2522 = vmatpush1.msra.mxu0 0.0
    %2523 = vmatprep.subr.mxu0 0.0
    %2524 = vmatpush1.msra.mxu0 0.0
    %2525 = vmatprep.subr.mxu0 0.0
    %2526 = vmatpush1.msra.mxu0 0.0
    %2527 = vmatprep.subr.mxu0 0.0
    %2528 = vmatpush1.msra.mxu0 0.0
    %2529 = vmatprep.subr.mxu0 0.0
    %2530 = vmatpush1.msra.mxu0 0.0
    %2531 = vmatprep.subr.mxu0 0.0
    %2532 = vmatpush1.msra.mxu0 0.0
    %2533 = vmatprep.subr.mxu0 0.0
    %2534 = vmatpush1.msra.mxu0 0.0
    %2535 = vmatprep.subr.mxu0 0.0
    %2536 = vmatpush1.msra.mxu0 0.0
    %2537 = vmatprep.subr.mxu0 0.0
    %2538 = vmatpush1.msra.mxu0 0.0
    %2539 = vmatprep.subr.mxu0 0.0
    %2540 = vmatpush1.msra.mxu0 0.0
    %2541 = vmatprep.subr.mxu0 0.0
    %2542 = vmatpush1.msra.mxu0 0.0
    %2543 = vmatprep.subr.mxu0 0.0
    %2544 = vmatpush1.msra.mxu0 0.0
    %2545 = vmatprep.subr.mxu0 0.0
    %2546 = vmatpush1.msra.mxu0 0.0
    %2547 = vmatprep.subr.mxu0 0.0
    %2548 = vmatpush1.msra.mxu0 0.0
    %2549 = vmatprep.subr.mxu0 0.0
    %2550 = vmatpush1.msra.mxu0 %v1956
    %2551 = vmatprep.subr.mxu0 0.0
    %2552 = vmatpush2.msra.mxu0 0.0
    %2553 = vmatprep.subr.mxu0 0.0
    %2554 = vmatpush2.msra.mxu0 0.0
    %2555 = vmatprep.subr.mxu0 0.0
    %2556 = vmatpush2.msra.mxu0 0.0
    %2557 = vmatprep.subr.mxu0 0.0
    %2558 = vmatpush2.msra.mxu0 0.0
    %2559 = vmatprep.subr.mxu0 0.0
    %2560 = vmatpush2.msra.mxu0 0.0
    %2561 = vmatprep.subr.mxu0 0.0
    %2562 = vmatpush2.msra.mxu0 0.0
    %2563 = vmatprep.subr.mxu0 0.0
    %2564 = vmatpush2.msra.mxu0 0.0
    %2565 = vmatprep.subr.mxu0 0.0
    %2566 = vmatpush2.msra.mxu0 0.0
    %2567 = vmatprep.subr.mxu0 0.0
    %2568 = vmatpush2.msra.mxu0 0.0
    %2569 = vmatprep.subr.mxu0 0.0
    %2570 = vmatpush2.msra.mxu0 0.0
    %2571 = vmatprep.subr.mxu0 0.0
    %2572 = vmatpush2.msra.mxu0 0.0
    %2573 = vmatprep.subr.mxu0 0.0
    %2574 = vmatpush2.msra.mxu0 0.0
    %2575 = vmatprep.subr.mxu0 0.0
    %2576 = vmatpush2.msra.mxu0 0.0
    %2577 = vmatprep.subr.mxu0 0.0
    %2578 = vmatpush2.msra.mxu0 0.0
    %2579 = vmatprep.subr.mxu0 0.0
    %2580 = vmatpush2.msra.mxu0 0.0
    %2581 = vmatprep.subr.mxu0 0.0
    %2582 = vmatpush2.msra.mxu0 0.0
    %2583 = vmatprep.mubr.f32.mxu0 0.0
    %2584 = vmatmul.mubr.f32.gmra.mxu0 %v2517
    %v2585 = vpop.f32.mrf.mxu0
    %v2586 = vadd.f32 0.0, %v2585
    %v2587 = vpop.f32.mrf.mxu0
    %2588 = vdwg.mxu0
    %v2589 = vmul.f32 %v2513, %v127
    %v2590 = vmul.f32 %v2586, %v127
    %v2591 = vadd.f32 %v2273, %v2589
    %v2592 = vadd.f32 %v2274, %v2590
    %v2593 = vmul.f32 %v1874, %v131
    %v2594 = vmul.f32 %v1880, %v131
    %2595 = vmatprep.subr.mxu0 0.0
    %2596 = vmatpush1.xpose.msra.mxu0 0.0
    %2597 = vmatprep.subr.mxu0 0.0
    %2598 = vmatpush1.xpose.msra.mxu0 0.0
    %2599 = vmatprep.subr.mxu0 0.0
    %2600 = vmatpush1.xpose.msra.mxu0 0.0
    %2601 = vmatprep.subr.mxu0 0.0
    %2602 = vmatpush1.xpose.msra.mxu0 0.0
    %2603 = vmatprep.subr.mxu0 0.0
    %2604 = vmatpush1.xpose.msra.mxu0 0.0
    %2605 = vmatprep.subr.mxu0 0.0
    %2606 = vmatpush1.xpose.msra.mxu0 0.0
    %2607 = vmatprep.subr.mxu0 0.0
    %2608 = vmatpush1.xpose.msra.mxu0 0.0
    %2609 = vmatprep.subr.mxu0 0.0
    %2610 = vmatpush1.xpose.msra.mxu0 0.0
    %2611 = vmatprep.subr.mxu0 0.0
    %2612 = vmatpush1.xpose.msra.mxu0 0.0
    %2613 = vmatprep.subr.mxu0 0.0
    %2614 = vmatpush1.xpose.msra.mxu0 0.0
    %2615 = vmatprep.subr.mxu0 0.0
    %2616 = vmatpush1.xpose.msra.mxu0 0.0
    %2617 = vmatprep.subr.mxu0 0.0
    %2618 = vmatpush1.xpose.msra.mxu0 0.0
    %2619 = vmatprep.subr.mxu0 0.0
    %2620 = vmatpush1.xpose.msra.mxu0 0.0
    %2621 = vmatprep.subr.mxu0 0.0
    %2622 = vmatpush1.xpose.msra.mxu0 0.0
    %2623 = vmatprep.subr.mxu0 0.0
    %2624 = vmatpush1.xpose.msra.mxu0 0.0
    %2625 = vmatprep.subr.mxu0 0.0
    %2626 = vmatpush1.xpose.msra.mxu0 %v1876
    %2627 = vmatprep.subr.mxu0 0.0
    %2628 = vmatpush2.xpose.msra.mxu0 0.0
    %2629 = vmatprep.subr.mxu0 0.0
    %2630 = vmatpush2.xpose.msra.mxu0 0.0
    %2631 = vmatprep.subr.mxu0 0.0
    %2632 = vmatpush2.xpose.msra.mxu0 0.0
    %2633 = vmatprep.subr.mxu0 0.0
    %2634 = vmatpush2.xpose.msra.mxu0 0.0
    %2635 = vmatprep.subr.mxu0 0.0
    %2636 = vmatpush2.xpose.msra.mxu0 0.0
    %2637 = vmatprep.subr.mxu0 0.0
    %2638 = vmatpush2.xpose.msra.mxu0 0.0
    %2639 = vmatprep.subr.mxu0 0.0
    %2640 = vmatpush2.xpose.msra.mxu0 0.0
    %2641 = vmatprep.subr.mxu0 0.0
    %2642 = vmatpush2.xpose.msra.mxu0 0.0
    %2643 = vmatprep.subr.mxu0 0.0
    %2644 = vmatpush2.xpose.msra.mxu0 0.0
    %2645 = vmatprep.subr.mxu0 0.0
    %2646 = vmatpush2.xpose.msra.mxu0 0.0
    %2647 = vmatprep.subr.mxu0 0.0
    %2648 = vmatpush2.xpose.msra.mxu0 0.0
    %2649 = vmatprep.subr.mxu0 0.0
    %2650 = vmatpush2.xpose.msra.mxu0 0.0
    %2651 = vmatprep.subr.mxu0 0.0
    %2652 = vmatpush2.xpose.msra.mxu0 0.0
    %2653 = vmatprep.subr.mxu0 0.0
    %2654 = vmatpush2.xpose.msra.mxu0 0.0
    %2655 = vmatprep.subr.mxu0 0.0
    %2656 = vmatpush2.xpose.msra.mxu0 0.0
    %2657 = vmatprep.subr.mxu0 0.0
    %2658 = vmatpush2.xpose.msra.mxu0 0.0
    %2659 = vmatprep.mubr.f32.mxu0 0.0
    %2660 = vmatmul.mubr.f32.gmra.mxu0 %v2593
    %v2661 = vpop.f32.mrf.mxu0
    %v2662 = vadd.f32 0.0, %v2661
    %v2663 = vpop.f32.mrf.mxu0
    %2664 = vdwg.mxu0
    %2665 = vmatprep.subr.mxu0 0.0
    %2666 = vmatpush1.xpose.msra.mxu0 0.0
    %2667 = vmatprep.subr.mxu0 0.0
    %2668 = vmatpush1.xpose.msra.mxu0 0.0
    %2669 = vmatprep.subr.mxu0 0.0
    %2670 = vmatpush1.xpose.msra.mxu0 0.0
    %2671 = vmatprep.subr.mxu0 0.0
    %2672 = vmatpush1.xpose.msra.mxu0 0.0
    %2673 = vmatprep.subr.mxu0 0.0
    %2674 = vmatpush1.xpose.msra.mxu0 0.0
    %2675 = vmatprep.subr.mxu0 0.0
    %2676 = vmatpush1.xpose.msra.mxu0 0.0
    %2677 = vmatprep.subr.mxu0 0.0
    %2678 = vmatpush1.xpose.msra.mxu0 0.0
    %2679 = vmatprep.subr.mxu0 0.0
    %2680 = vmatpush1.xpose.msra.mxu0 0.0
    %2681 = vmatprep.subr.mxu0 0.0
    %2682 = vmatpush1.xpose.msra.mxu0 0.0
    %2683 = vmatprep.subr.mxu0 0.0
    %2684 = vmatpush1.xpose.msra.mxu0 0.0
    %2685 = vmatprep.subr.mxu0 0.0
    %2686 = vmatpush1.xpose.msra.mxu0 0.0
    %2687 = vmatprep.subr.mxu0 0.0
    %2688 = vmatpush1.xpose.msra.mxu0 0.0
    %2689 = vmatprep.subr.mxu0 0.0
    %2690 = vmatpush1.xpose.msra.mxu0 0.0
    %2691 = vmatprep.subr.mxu0 0.0
    %2692 = vmatpush1.xpose.msra.mxu0 0.0
    %2693 = vmatprep.subr.mxu0 0.0
    %2694 = vmatpush1.xpose.msra.mxu0 0.0
    %2695 = vmatprep.subr.mxu0 0.0
    %2696 = vmatpush1.xpose.msra.mxu0 %v1882
    %2697 = vmatprep.subr.mxu0 0.0
    %2698 = vmatpush2.xpose.msra.mxu0 0.0
    %2699 = vmatprep.subr.mxu0 0.0
    %2700 = vmatpush2.xpose.msra.mxu0 0.0
    %2701 = vmatprep.subr.mxu0 0.0
    %2702 = vmatpush2.xpose.msra.mxu0 0.0
    %2703 = vmatprep.subr.mxu0 0.0
    %2704 = vmatpush2.xpose.msra.mxu0 0.0
    %2705 = vmatprep.subr.mxu0 0.0
    %2706 = vmatpush2.xpose.msra.mxu0 0.0
    %2707 = vmatprep.subr.mxu0 0.0
    %2708 = vmatpush2.xpose.msra.mxu0 0.0
    %2709 = vmatprep.subr.mxu0 0.0
    %2710 = vmatpush2.xpose.msra.mxu0 0.0
    %2711 = vmatprep.subr.mxu0 0.0
    %2712 = vmatpush2.xpose.msra.mxu0 0.0
    %2713 = vmatprep.subr.mxu0 0.0
    %2714 = vmatpush2.xpose.msra.mxu0 0.0
    %2715 = vmatprep.subr.mxu0 0.0
    %2716 = vmatpush2.xpose.msra.mxu0 0.0
    %2717 = vmatprep.subr.mxu0 0.0
    %2718 = vmatpush2.xpose.msra.mxu0 0.0
    %2719 = vmatprep.subr.mxu0 0.0
    %2720 = vmatpush2.xpose.msra.mxu0 0.0
    %2721 = vmatprep.subr.mxu0 0.0
    %2722 = vmatpush2.xpose.msra.mxu0 0.0
    %2723 = vmatprep.subr.mxu0 0.0
    %2724 = vmatpush2.xpose.msra.mxu0 0.0
    %2725 = vmatprep.subr.mxu0 0.0
    %2726 = vmatpush2.xpose.msra.mxu0 0.0
    %2727 = vmatprep.subr.mxu0 0.0
    %2728 = vmatpush2.xpose.msra.mxu0 0.0
    %2729 = vmatprep.mubr.f32.mxu0 0.0
    %2730 = vmatmul.mubr.f32.gmra.mxu0 %v2594
    %v2731 = vpop.f32.mrf.mxu0
    %v2732 = vadd.f32 0.0, %v2731
    %v2733 = vpop.f32.mrf.mxu0
    %2734 = vdwg.mxu0
    %v2735 = vmul.f32 %v2662, 0.12909944
    %v2736 = vmul.f32 %v2732, 0.12909944
    %v2737 = vadd.f32 %v2735, %v114
    %v2738 = vadd.f32 %v2736, %v114
    %v2739 = vsel %vm522, %v2737, -inf
    %2740 = vmax.xlane.f32.xlu0 %v2739
    %v2741 = vpop.xlane.xlu0 %2740
    %v2742 = vsel %vm522, %v2738, -inf
    %2743 = vmax.xlane.f32.xlu0 %v2742
    %v2744 = vpop.xlane.xlu0 %2743
    %v2745 = vsub.f32 %v2737, %v2741
    %v2746 = vsub.f32 %v2738, %v2744
    %v2747 = vmul.f32 %v2745, 1.442695
    %v2748 = vpow.pop %v2747
    %v2749 = vmul.f32 %v2746, 1.442695
    %v2750 = vpow.pop %v2749
    %v2751 = vsel %vm522, %v2748, 0.0
    %2752 = vadd.xlane.f32.xlu0 %v2751
    %v2753 = vpop.xlane.xlu0 %2752
    %v2754 = vsel %vm522, %v2750, 0.0
    %2755 = vadd.xlane.f32.xlu0 %v2754
    %v2756 = vpop.xlane.xlu0 %2755
    %v2757 = vrcp.pop %v2753
    %v2758 = vrcp.pop %v2756
    %v2759 = vmul.f32 %v2748, %v2757
    %v2760 = vmul.f32 %v2750, %v2758
    %v2762 = vsel %vm522, %v2759, 0
    %2764 = vmatprep.subr.mxu0 0.0
    %2765 = vmatpush1.msra.mxu0 0.0
    %2766 = vmatprep.subr.mxu0 0.0
    %2767 = vmatpush1.msra.mxu0 0.0
    %2768 = vmatprep.subr.mxu0 0.0
    %2769 = vmatpush1.msra.mxu0 0.0
    %2770 = vmatprep.subr.mxu0 0.0
    %2771 = vmatpush1.msra.mxu0 0.0
    %2772 = vmatprep.subr.mxu0 0.0
    %2773 = vmatpush1.msra.mxu0 0.0
    %2774 = vmatprep.subr.mxu0 0.0
    %2775 = vmatpush1.msra.mxu0 0.0
    %2776 = vmatprep.subr.mxu0 0.0
    %2777 = vmatpush1.msra.mxu0 0.0
    %2778 = vmatprep.subr.mxu0 0.0
    %2779 = vmatpush1.msra.mxu0 0.0
    %2780 = vmatprep.subr.mxu0 0.0
    %2781 = vmatpush1.msra.mxu0 0.0
    %2782 = vmatprep.subr.mxu0 0.0
    %2783 = vmatpush1.msra.mxu0 0.0
    %2784 = vmatprep.subr.mxu0 0.0
    %2785 = vmatpush1.msra.mxu0 0.0
    %2786 = vmatprep.subr.mxu0 0.0
    %2787 = vmatpush1.msra.mxu0 0.0
    %2788 = vmatprep.subr.mxu0 0.0
    %2789 = vmatpush1.msra.mxu0 0.0
    %2790 = vmatprep.subr.mxu0 0.0
    %2791 = vmatpush1.msra.mxu0 0.0
    %2792 = vmatprep.subr.mxu0 0.0
    %2793 = vmatpush1.msra.mxu0 0.0
    %2794 = vmatprep.subr.mxu0 0.0
    %2795 = vmatpush1.msra.mxu0 %v1951
    %2796 = vmatprep.subr.mxu0 0.0
    %2797 = vmatpush2.msra.mxu0 0.0
    %2798 = vmatprep.subr.mxu0 0.0
    %2799 = vmatpush2.msra.mxu0 0.0
    %2800 = vmatprep.subr.mxu0 0.0
    %2801 = vmatpush2.msra.mxu0 0.0
    %2802 = vmatprep.subr.mxu0 0.0
    %2803 = vmatpush2.msra.mxu0 0.0
    %2804 = vmatprep.subr.mxu0 0.0
    %2805 = vmatpush2.msra.mxu0 0.0
    %2806 = vmatprep.subr.mxu0 0.0
    %2807 = vmatpush2.msra.mxu0 0.0
    %2808 = vmatprep.subr.mxu0 0.0
    %2809 = vmatpush2.msra.mxu0 0.0
    %2810 = vmatprep.subr.mxu0 0.0
    %2811 = vmatpush2.msra.mxu0 0.0
    %2812 = vmatprep.subr.mxu0 0.0
    %2813 = vmatpush2.msra.mxu0 0.0
    %2814 = vmatprep.subr.mxu0 0.0
    %2815 = vmatpush2.msra.mxu0 0.0
    %2816 = vmatprep.subr.mxu0 0.0
    %2817 = vmatpush2.msra.mxu0 0.0
    %2818 = vmatprep.subr.mxu0 0.0
    %2819 = vmatpush2.msra.mxu0 0.0
    %2820 = vmatprep.subr.mxu0 0.0
    %2821 = vmatpush2.msra.mxu0 0.0
    %2822 = vmatprep.subr.mxu0 0.0
    %2823 = vmatpush2.msra.mxu0 0.0
    %2824 = vmatprep.subr.mxu0 0.0
    %2825 = vmatpush2.msra.mxu0 0.0
    %2826 = vmatprep.subr.mxu0 0.0
    %2827 = vmatpush2.msra.mxu0 0.0
    %2828 = vmatprep.mubr.f32.mxu0 0.0
    %2829 = vmatmul.mubr.f32.gmra.mxu0 %v2762
    %v2830 = vpop.f32.mrf.mxu0
    %v2831 = vadd.f32 0.0, %v2830
    %v2832 = vpop.f32.mrf.mxu0
    %2833 = vdwg.mxu0
    %v2835 = vsel %vm522, %v2760, 0
    %2837 = vmatprep.subr.mxu0 0.0
    %2838 = vmatpush1.msra.mxu0 0.0
    %2839 = vmatprep.subr.mxu0 0.0
    %2840 = vmatpush1.msra.mxu0 0.0
    %2841 = vmatprep.subr.mxu0 0.0
    %2842 = vmatpush1.msra.mxu0 0.0
    %2843 = vmatprep.subr.mxu0 0.0
    %2844 = vmatpush1.msra.mxu0 0.0
    %2845 = vmatprep.subr.mxu0 0.0
    %2846 = vmatpush1.msra.mxu0 0.0
    %2847 = vmatprep.subr.mxu0 0.0
    %2848 = vmatpush1.msra.mxu0 0.0
    %2849 = vmatprep.subr.mxu0 0.0
    %2850 = vmatpush1.msra.mxu0 0.0
    %2851 = vmatprep.subr.mxu0 0.0
    %2852 = vmatpush1.msra.mxu0 0.0
    %2853 = vmatprep.subr.mxu0 0.0
    %2854 = vmatpush1.msra.mxu0 0.0
    %2855 = vmatprep.subr.mxu0 0.0
    %2856 = vmatpush1.msra.mxu0 0.0
    %2857 = vmatprep.subr.mxu0 0.0
    %2858 = vmatpush1.msra.mxu0 0.0
    %2859 = vmatprep.subr.mxu0 0.0
    %2860 = vmatpush1.msra.mxu0 0.0
    %2861 = vmatprep.subr.mxu0 0.0
    %2862 = vmatpush1.msra.mxu0 0.0
    %2863 = vmatprep.subr.mxu0 0.0
    %2864 = vmatpush1.msra.mxu0 0.0
    %2865 = vmatprep.subr.mxu0 0.0
    %2866 = vmatpush1.msra.mxu0 0.0
    %2867 = vmatprep.subr.mxu0 0.0
    %2868 = vmatpush1.msra.mxu0 %v1956
    %2869 = vmatprep.subr.mxu0 0.0
    %2870 = vmatpush2.msra.mxu0 0.0
    %2871 = vmatprep.subr.mxu0 0.0
    %2872 = vmatpush2.msra.mxu0 0.0
    %2873 = vmatprep.subr.mxu0 0.0
    %2874 = vmatpush2.msra.mxu0 0.0
    %2875 = vmatprep.subr.mxu0 0.0
    %2876 = vmatpush2.msra.mxu0 0.0
    %2877 = vmatprep.subr.mxu0 0.0
    %2878 = vmatpush2.msra.mxu0 0.0
    %2879 = vmatprep.subr.mxu0 0.0
    %2880 = vmatpush2.msra.mxu0 0.0
    %2881 = vmatprep.subr.mxu0 0.0
    %2882 = vmatpush2.msra.mxu0 0.0
    %2883 = vmatprep.subr.mxu0 0.0
    %2884 = vmatpush2.msra.mxu0 0.0
    %2885 = vmatprep.subr.mxu0 0.0
    %2886 = vmatpush2.msra.mxu0 0.0
    %2887 = vmatprep.subr.mxu0 0.0
    %2888 = vmatpush2.msra.mxu0 0.0
    %2889 = vmatprep.subr.mxu0 0.0
    %2890 = vmatpush2.msra.mxu0 0.0
    %2891 = vmatprep.subr.mxu0 0.0
    %2892 = vmatpush2.msra.mxu0 0.0
    %2893 = vmatprep.subr.mxu0 0.0
    %2894 = vmatpush2.msra.mxu0 0.0
    %2895 = vmatprep.subr.mxu0 0.0
    %2896 = vmatpush2.msra.mxu0 0.0
    %2897 = vmatprep.subr.mxu0 0.0
    %2898 = vmatpush2.msra.mxu0 0.0
    %2899 = vmatprep.subr.mxu0 0.0
    %2900 = vmatpush2.msra.mxu0 0.0
    %2901 = vmatprep.mubr.f32.mxu0 0.0
    %2902 = vmatmul.mubr.f32.gmra.mxu0 %v2835
    %v2903 = vpop.f32.mrf.mxu0
    %v2904 = vadd.f32 0.0, %v2903
    %v2905 = vpop.f32.mrf.mxu0
    %2906 = vdwg.mxu0
    %v2907 = vmul.f32 %v2831, %v131
    %v2908 = vmul.f32 %v2904, %v131
    %v2909 = vadd.f32 %v2591, %v2907
    %v2910 = vadd.f32 %v2592, %v2908
    %s2911 = scalar_lea.vmem [#allocation5], 128
    %v2912 = vld [vmem:[%s2911] sm:$0xff]
    %v2913 = vld [vmem:[%s2911 + $0x8] sm:$0xff]
    %v2914 = vld [vmem:[%s2911 + $0x10] sm:$0xff]
    %v2915 = vld [vmem:[%s2911 + $0x18] sm:$0xff]
    %v2916 = vld [vmem:[%s2911 + $0x20] sm:$0xff]
    %v2917 = vld [vmem:[%s2911 + $0x28] sm:$0xff]
    %v2918 = vld [vmem:[%s2911 + $0x30] sm:$0xff]
    %v2919 = vld [vmem:[%s2911 + $0x38] sm:$0xff]
    %v2920 = vld [vmem:[%s2911 + $0x40] sm:$0xff]
    %v2921 = vld [vmem:[%s2911 + $0x48] sm:$0xff]
    %v2922 = vld [vmem:[%s2911 + $0x50] sm:$0xff]
    %v2923 = vld [vmem:[%s2911 + $0x58] sm:$0xff]
    %v2924 = vld [vmem:[%s2911 + $0x60] sm:$0xff]
    %v2925 = vld [vmem:[%s2911 + $0x68] sm:$0xff]
    %v2926 = vld [vmem:[%s2911 + $0x70] sm:$0xff]
    %v2927 = vld [vmem:[%s2911 + $0x78] sm:$0xff]
    %s2928 = scalar_lea.vmem %s6, 1
    %v2929 = vld [vmem:[%s2928] sm:$0x1]
    %v2931 = vlaneseq
    %v2932 = vshrl.u32 %v2931, 7
    %v2933 = vsub.s32 0, %v2932
    %v2934 = vrot.slane %v2929, %v2933
    %2936 = vmatprep.subr.mxu0 0.0
    %2937 = vmatpush1.msra.mxu0 %v2927
    %2938 = vmatprep.subr.mxu0 0.0
    %2939 = vmatpush1.msra.mxu0 %v2926
    %2940 = vmatprep.subr.mxu0 0.0
    %2941 = vmatpush1.msra.mxu0 %v2925
    %2942 = vmatprep.subr.mxu0 0.0
    %2943 = vmatpush1.msra.mxu0 %v2924
    %2944 = vmatprep.subr.mxu0 0.0
    %2945 = vmatpush1.msra.mxu0 %v2923
    %2946 = vmatprep.subr.mxu0 0.0
    %2947 = vmatpush1.msra.mxu0 %v2922
    %2948 = vmatprep.subr.mxu0 0.0
    %2949 = vmatpush1.msra.mxu0 %v2921
    %2950 = vmatprep.subr.mxu0 0.0
    %2951 = vmatpush1.msra.mxu0 %v2920
    %2952 = vmatprep.subr.mxu0 0.0
    %2953 = vmatpush1.msra.mxu0 %v2919
    %2954 = vmatprep.subr.mxu0 0.0
    %2955 = vmatpush1.msra.mxu0 %v2918
    %2956 = vmatprep.subr.mxu0 0.0
    %2957 = vmatpush1.msra.mxu0 %v2917
    %2958 = vmatprep.subr.mxu0 0.0
    %2959 = vmatpush1.msra.mxu0 %v2916
    %2960 = vmatprep.subr.mxu0 0.0
    %2961 = vmatpush1.msra.mxu0 %v2915
    %2962 = vmatprep.subr.mxu0 0.0
    %2963 = vmatpush1.msra.mxu0 %v2914
    %2964 = vmatprep.subr.mxu0 0.0
    %2965 = vmatpush1.msra.mxu0 %v2913
    %2966 = vmatprep.subr.mxu0 0.0
    %2967 = vmatpush1.msra.mxu0 %v2912
    %2968 = vmatprep.subr.mxu0 0.0
    %2969 = vmatpush2.msra.mxu0 0.0
    %2970 = vmatprep.subr.mxu0 0.0
    %2971 = vmatpush2.msra.mxu0 0.0
    %2972 = vmatprep.subr.mxu0 0.0
    %2973 = vmatpush2.msra.mxu0 0.0
    %2974 = vmatprep.subr.mxu0 0.0
    %2975 = vmatpush2.msra.mxu0 0.0
    %2976 = vmatprep.subr.mxu0 0.0
    %2977 = vmatpush2.msra.mxu0 0.0
    %2978 = vmatprep.subr.mxu0 0.0
    %2979 = vmatpush2.msra.mxu0 0.0
    %2980 = vmatprep.subr.mxu0 0.0
    %2981 = vmatpush2.msra.mxu0 0.0
    %2982 = vmatprep.subr.mxu0 0.0
    %2983 = vmatpush2.msra.mxu0 0.0
    %2984 = vmatprep.subr.mxu0 0.0
    %2985 = vmatpush2.msra.mxu0 0.0
    %2986 = vmatprep.subr.mxu0 0.0
    %2987 = vmatpush2.msra.mxu0 0.0
    %2988 = vmatprep.subr.mxu0 0.0
    %2989 = vmatpush2.msra.mxu0 0.0
    %2990 = vmatprep.subr.mxu0 0.0
    %2991 = vmatpush2.msra.mxu0 0.0
    %2992 = vmatprep.subr.mxu0 0.0
    %2993 = vmatpush2.msra.mxu0 0.0
    %2994 = vmatprep.subr.mxu0 0.0
    %2995 = vmatpush2.msra.mxu0 0.0
    %2996 = vmatprep.subr.mxu0 0.0
    %2997 = vmatpush2.msra.mxu0 0.0
    %2998 = vmatprep.subr.mxu0 0.0
    %2999 = vmatpush2.msra.mxu0 0.0
    %3000 = vmatprep.mubr.f32.mxu0 0.0
    %3001 = vmatmul.mubr.f32.gmra.mxu0 %v2909
    %v3002 = vpop.f32.mrf.mxu0
    %v3003 = vadd.f32 %v2934, %v3002
    %v3004 = vpop.f32.mrf.mxu0
    %3005 = vmatprep.mubr.f32.mxu0 0.0
    %3006 = vmatmul.mubr.f32.gmra.mxu0 %v2910
    %v3007 = vpop.f32.mrf.mxu0
    %v3008 = vadd.f32 %v2934, %v3007
    %v3009 = vpop.f32.mrf.mxu0
    %3010 = vdwg.mxu0
    %v3011 = vadd.f32 %v1712, %v3003
    %v3012 = vadd.f32 %v1713, %v3008
    %s3013 = scalar_lea.vmem %s7, 1
    %v3014 = vld [vmem:[%s3013] sm:$0x1]
    %s3015 = scalar_lea.vmem %s8, 1
    %v3016 = vld [vmem:[%s3015] sm:$0x1]
    %3017 = vadd.xlane.f32.xlu0 %v3011
    %v3018 = vpop.xlane.xlu0 %3017
    %3019 = vadd.xlane.f32.xlu0 %v3012
    %v3020 = vpop.xlane.xlu0 %3019
    %v3021 = vmul.f32 %v3018, 0.016666668
    %v3022 = vmul.f32 %v3020, 0.016666668
    %v3023 = vsub.f32 %v3011, %v3021
    %v3024 = vsub.f32 %v3012, %v3022
    %v3025 = vsel %vm143, %v3023, 0.0
    %v3026 = vsel %vm143, %v3024, 0.0
    %v3027 = vmul.f32 %v3025, %v3025
    %v3028 = vmul.f32 %v3026, %v3026
    %3029 = vadd.xlane.f32.xlu0 %v3027
    %v3030 = vpop.xlane.xlu0 %3029
    %3031 = vadd.xlane.f32.xlu0 %v3028
    %v3032 = vpop.xlane.xlu0 %3031
    %v3033 = vmul.f32 %v3030, 0.016666668
    %v3034 = vmul.f32 %v3032, 0.016666668
    %v3035 = vadd.f32 %v3033, 1e-05
    %v3036 = vadd.f32 %v3034, 1e-05
    %v3037 = vrsqrt.pop %v3035
    %v3038 = vrsqrt.pop %v3036
    %v3039 = vmul.f32 %v3025, %v3037
    %v3040 = vmul.f32 %v3026, %v3038
    %v3042 = vlaneseq
    %v3043 = vshrl.u32 %v3042, 7
    %v3044 = vsub.s32 0, %v3043
    %v3045 = vrot.slane %v3014, %v3044
    %v3047 = vmul.f32 %v3039, %v3045
    %v3048 = vmul.f32 %v3040, %v3045
    %v3050 = vlaneseq
    %v3051 = vshrl.u32 %v3050, 7
    %v3052 = vsub.s32 0, %v3051
    %v3053 = vrot.slane %v3016, %v3052
    %v3055 = vadd.f32 %v3047, %v3053
    %v3056 = vadd.f32 %v3048, %v3053
    %s3057 = scalar_lea.vmem [#allocation7], 256
    %v3058 = vld [vmem:[%s3057] sm:$0xff]
    %v3059 = vld [vmem:[%s3057 + $0x8] sm:$0xff]
    %v3060 = vld [vmem:[%s3057 + $0x10] sm:$0xff]
    %v3061 = vld [vmem:[%s3057 + $0x18] sm:$0xff]
    %v3062 = vld [vmem:[%s3057 + $0x20] sm:$0xff]
    %v3063 = vld [vmem:[%s3057 + $0x28] sm:$0xff]
    %v3064 = vld [vmem:[%s3057 + $0x30] sm:$0xff]
    %v3065 = vld [vmem:[%s3057 + $0x38] sm:$0xff]
    %v3066 = vld [vmem:[%s3057 + $0x40] sm:$0xff]
    %v3067 = vld [vmem:[%s3057 + $0x48] sm:$0xff]
    %v3068 = vld [vmem:[%s3057 + $0x50] sm:$0xff]
    %v3069 = vld [vmem:[%s3057 + $0x58] sm:$0xff]
    %v3070 = vld [vmem:[%s3057 + $0x60] sm:$0xff]
    %v3071 = vld [vmem:[%s3057 + $0x68] sm:$0xff]
    %v3072 = vld [vmem:[%s3057 + $0x70] sm:$0xff]
    %v3073 = vld [vmem:[%s3057 + $0x78] sm:$0xff]
    %v3074 = vld [vmem:[%s3057 + $0x80] sm:$0xff]
    %v3075 = vld [vmem:[%s3057 + $0x88] sm:$0xff]
    %v3076 = vld [vmem:[%s3057 + $0x90] sm:$0xff]
    %v3077 = vld [vmem:[%s3057 + $0x98] sm:$0xff]
    %v3078 = vld [vmem:[%s3057 + $0xa0] sm:$0xff]
    %v3079 = vld [vmem:[%s3057 + $0xa8] sm:$0xff]
    %v3080 = vld [vmem:[%s3057 + $0xb0] sm:$0xff]
    %v3081 = vld [vmem:[%s3057 + $0xb8] sm:$0xff]
    %v3082 = vld [vmem:[%s3057 + $0xc0] sm:$0xff]
    %v3083 = vld [vmem:[%s3057 + $0xc8] sm:$0xff]
    %v3084 = vld [vmem:[%s3057 + $0xd0] sm:$0xff]
    %v3085 = vld [vmem:[%s3057 + $0xd8] sm:$0xff]
    %v3086 = vld [vmem:[%s3057 + $0xe0] sm:$0xff]
    %v3087 = vld [vmem:[%s3057 + $0xe8] sm:$0xff]
    %v3088 = vld [vmem:[%s3057 + $0xf0] sm:$0xff]
    %v3089 = vld [vmem:[%s3057 + $0xf8] sm:$0xff]
    %s3090 = scalar_lea.vmem %s10, 2
    %v3091 = vld [vmem:[%s3090] sm:$0x3]
    %v3093 = vlaneseq
    %v3094 = vshrl.u32 %v3093, 7
    %v3095 = vsub.s32 0, %v3094
    %v3096 = vrot.slane %v3091, %v3095
    %v3097 = vlaneseq
    %v3098 = vshrl.u32 %v3097, 7
    %v3099 = vsub.s32 1, %v3098
    %v3100 = vrot.slane %v3091, %v3099
    %3103 = vmatprep.subr.mxu0 %v3089
    %3104 = vmatpush1.msra.mxu0 %v3088
    %3105 = vmatprep.subr.mxu0 %v3087
    %3106 = vmatpush1.msra.mxu0 %v3086
    %3107 = vmatprep.subr.mxu0 %v3085
    %3108 = vmatpush1.msra.mxu0 %v3084
    %3109 = vmatprep.subr.mxu0 %v3083
    %3110 = vmatpush1.msra.mxu0 %v3082
    %3111 = vmatprep.subr.mxu0 %v3081
    %3112 = vmatpush1.msra.mxu0 %v3080
    %3113 = vmatprep.subr.mxu0 %v3079
    %3114 = vmatpush1.msra.mxu0 %v3078
    %3115 = vmatprep.subr.mxu0 %v3077
    %3116 = vmatpush1.msra.mxu0 %v3076
    %3117 = vmatprep.subr.mxu0 %v3075
    %3118 = vmatpush1.msra.mxu0 %v3074
    %3119 = vmatprep.subr.mxu0 %v3073
    %3120 = vmatpush1.msra.mxu0 %v3072
    %3121 = vmatprep.subr.mxu0 %v3071
    %3122 = vmatpush1.msra.mxu0 %v3070
    %3123 = vmatprep.subr.mxu0 %v3069
    %3124 = vmatpush1.msra.mxu0 %v3068
    %3125 = vmatprep.subr.mxu0 %v3067
    %3126 = vmatpush1.msra.mxu0 %v3066
    %3127 = vmatprep.subr.mxu0 %v3065
    %3128 = vmatpush1.msra.mxu0 %v3064
    %3129 = vmatprep.subr.mxu0 %v3063
    %3130 = vmatpush1.msra.mxu0 %v3062
    %3131 = vmatprep.subr.mxu0 %v3061
    %3132 = vmatpush1.msra.mxu0 %v3060
    %3133 = vmatprep.subr.mxu0 %v3059
    %3134 = vmatpush1.msra.mxu0 %v3058
    %3135 = vmatprep.subr.mxu0 0.0
    %3136 = vmatpush2.msra.mxu0 0.0
    %3137 = vmatprep.subr.mxu0 0.0
    %3138 = vmatpush2.msra.mxu0 0.0
    %3139 = vmatprep.subr.mxu0 0.0
    %3140 = vmatpush2.msra.mxu0 0.0
    %3141 = vmatprep.subr.mxu0 0.0
    %3142 = vmatpush2.msra.mxu0 0.0
    %3143 = vmatprep.subr.mxu0 0.0
    %3144 = vmatpush2.msra.mxu0 0.0
    %3145 = vmatprep.subr.mxu0 0.0
    %3146 = vmatpush2.msra.mxu0 0.0
    %3147 = vmatprep.subr.mxu0 0.0
    %3148 = vmatpush2.msra.mxu0 0.0
    %3149 = vmatprep.subr.mxu0 0.0
    %3150 = vmatpush2.msra.mxu0 0.0
    %3151 = vmatprep.subr.mxu0 0.0
    %3152 = vmatpush2.msra.mxu0 0.0
    %3153 = vmatprep.subr.mxu0 0.0
    %3154 = vmatpush2.msra.mxu0 0.0
    %3155 = vmatprep.subr.mxu0 0.0
    %3156 = vmatpush2.msra.mxu0 0.0
    %3157 = vmatprep.subr.mxu0 0.0
    %3158 = vmatpush2.msra.mxu0 0.0
    %3159 = vmatprep.subr.mxu0 0.0
    %3160 = vmatpush2.msra.mxu0 0.0
    %3161 = vmatprep.subr.mxu0 0.0
    %3162 = vmatpush2.msra.mxu0 0.0
    %3163 = vmatprep.subr.mxu0 0.0
    %3164 = vmatpush2.msra.mxu0 0.0
    %3165 = vmatprep.subr.mxu0 0.0
    %3166 = vmatpush2.msra.mxu0 0.0
    %3167 = vmatprep.mubr.f32.mxu0 0.0
    %3168 = vmatmul.mubr.f32.gmra.mxu0 %v3055
    %v3169 = vpop.f32.mrf.mxu0
    %v3170 = vadd.f32 %v3096, %v3169
    %v3171 = vpop.f32.mrf.mxu0
    %v3172 = vadd.f32 %v3100, %v3171
    %3173 = vmatprep.mubr.f32.mxu0 0.0
    %3174 = vmatmul.mubr.f32.gmra.mxu0 %v3056
    %v3175 = vpop.f32.mrf.mxu0
    %v3176 = vadd.f32 %v3096, %v3175
    %v3177 = vpop.f32.mrf.mxu0
    %v3178 = vadd.f32 %v3100, %v3177
    %3179 = vdwg.mxu0
    %v3180 = vmax.f32 %v3170, 0.0
    %v3181 = vmax.f32 %v3172, 0.0
    %v3182 = vmax.f32 %v3176, 0.0
    %v3183 = vmax.f32 %v3178, 0.0
    %s3184 = scalar_lea.vmem [#allocation8], 256
    %v3185 = vld [vmem:[%s3184] sm:$0xff]
    %v3186 = vld [vmem:[%s3184 + $0x8] sm:$0xff]
    %v3187 = vld [vmem:[%s3184 + $0x10] sm:$0xff]
    %v3188 = vld [vmem:[%s3184 + $0x18] sm:$0xff]
    %v3189 = vld [vmem:[%s3184 + $0x20] sm:$0xff]
    %v3190 = vld [vmem:[%s3184 + $0x28] sm:$0xff]
    %v3191 = vld [vmem:[%s3184 + $0x30] sm:$0xff]
    %v3192 = vld [vmem:[%s3184 + $0x38] sm:$0xff]
    %v3193 = vld [vmem:[%s3184 + $0x40] sm:$0xff]
    %v3194 = vld [vmem:[%s3184 + $0x48] sm:$0xff]
    %v3195 = vld [vmem:[%s3184 + $0x50] sm:$0xff]
    %v3196 = vld [vmem:[%s3184 + $0x58] sm:$0xff]
    %v3197 = vld [vmem:[%s3184 + $0x60] sm:$0xff]
    %v3198 = vld [vmem:[%s3184 + $0x68] sm:$0xff]
    %v3199 = vld [vmem:[%s3184 + $0x70] sm:$0xff]
    %v3200 = vld [vmem:[%s3184 + $0x78] sm:$0xff]
    %v3201 = vld [vmem:[%s3184 + $0x80] sm:$0xff]
    %v3202 = vld [vmem:[%s3184 + $0x88] sm:$0xff]
    %v3203 = vld [vmem:[%s3184 + $0x90] sm:$0xff]
    %v3204 = vld [vmem:[%s3184 + $0x98] sm:$0xff]
    %v3205 = vld [vmem:[%s3184 + $0xa0] sm:$0xff]
    %v3206 = vld [vmem:[%s3184 + $0xa8] sm:$0xff]
    %v3207 = vld [vmem:[%s3184 + $0xb0] sm:$0xff]
    %v3208 = vld [vmem:[%s3184 + $0xb8] sm:$0xff]
    %v3209 = vld [vmem:[%s3184 + $0xc0] sm:$0xff]
    %v3210 = vld [vmem:[%s3184 + $0xc8] sm:$0xff]
    %v3211 = vld [vmem:[%s3184 + $0xd0] sm:$0xff]
    %v3212 = vld [vmem:[%s3184 + $0xd8] sm:$0xff]
    %v3213 = vld [vmem:[%s3184 + $0xe0] sm:$0xff]
    %v3214 = vld [vmem:[%s3184 + $0xe8] sm:$0xff]
    %v3215 = vld [vmem:[%s3184 + $0xf0] sm:$0xff]
    %v3216 = vld [vmem:[%s3184 + $0xf8] sm:$0xff]
    %3217 = vmatprep.subr.mxu0 0.0
    %3218 = vmatpush1.msra.mxu0 %v3200
    %3219 = vmatprep.subr.mxu0 0.0
    %3220 = vmatpush1.msra.mxu0 %v3199
    %3221 = vmatprep.subr.mxu0 0.0
    %3222 = vmatpush1.msra.mxu0 %v3198
    %3223 = vmatprep.subr.mxu0 0.0
    %3224 = vmatpush1.msra.mxu0 %v3197
    %3225 = vmatprep.subr.mxu0 0.0
    %3226 = vmatpush1.msra.mxu0 %v3196
    %3227 = vmatprep.subr.mxu0 0.0
    %3228 = vmatpush1.msra.mxu0 %v3195
    %3229 = vmatprep.subr.mxu0 0.0
    %3230 = vmatpush1.msra.mxu0 %v3194
    %3231 = vmatprep.subr.mxu0 0.0
    %3232 = vmatpush1.msra.mxu0 %v3193
    %3233 = vmatprep.subr.mxu0 0.0
    %3234 = vmatpush1.msra.mxu0 %v3192
    %3235 = vmatprep.subr.mxu0 0.0
    %3236 = vmatpush1.msra.mxu0 %v3191
    %3237 = vmatprep.subr.mxu0 0.0
    %3238 = vmatpush1.msra.mxu0 %v3190
    %3239 = vmatprep.subr.mxu0 0.0
    %3240 = vmatpush1.msra.mxu0 %v3189
    %3241 = vmatprep.subr.mxu0 0.0
    %3242 = vmatpush1.msra.mxu0 %v3188
    %3243 = vmatprep.subr.mxu0 0.0
    %3244 = vmatpush1.msra.mxu0 %v3187
    %3245 = vmatprep.subr.mxu0 0.0
    %3246 = vmatpush1.msra.mxu0 %v3186
    %3247 = vmatprep.subr.mxu0 0.0
    %3248 = vmatpush1.msra.mxu0 %v3185
    %3249 = vmatprep.subr.mxu0 0.0
    %3250 = vmatpush2.msra.mxu0 %v3216
    %3251 = vmatprep.subr.mxu0 0.0
    %3252 = vmatpush2.msra.mxu0 %v3215
    %3253 = vmatprep.subr.mxu0 0.0
    %3254 = vmatpush2.msra.mxu0 %v3214
    %3255 = vmatprep.subr.mxu0 0.0
    %3256 = vmatpush2.msra.mxu0 %v3213
    %3257 = vmatprep.subr.mxu0 0.0
    %3258 = vmatpush2.msra.mxu0 %v3212
    %3259 = vmatprep.subr.mxu0 0.0
    %3260 = vmatpush2.msra.mxu0 %v3211
    %3261 = vmatprep.subr.mxu0 0.0
    %3262 = vmatpush2.msra.mxu0 %v3210
    %3263 = vmatprep.subr.mxu0 0.0
    %3264 = vmatpush2.msra.mxu0 %v3209
    %3265 = vmatprep.subr.mxu0 0.0
    %3266 = vmatpush2.msra.mxu0 %v3208
    %3267 = vmatprep.subr.mxu0 0.0
    %3268 = vmatpush2.msra.mxu0 %v3207
    %3269 = vmatprep.subr.mxu0 0.0
    %3270 = vmatpush2.msra.mxu0 %v3206
    %3271 = vmatprep.subr.mxu0 0.0
    %3272 = vmatpush2.msra.mxu0 %v3205
    %3273 = vmatprep.subr.mxu0 0.0
    %3274 = vmatpush2.msra.mxu0 %v3204
    %3275 = vmatprep.subr.mxu0 0.0
    %3276 = vmatpush2.msra.mxu0 %v3203
    %3277 = vmatprep.subr.mxu0 0.0
    %3278 = vmatpush2.msra.mxu0 %v3202
    %3279 = vmatprep.subr.mxu0 0.0
    %3280 = vmatpush2.msra.mxu0 %v3201
    %3281 = vmatprep.mubr.f32.mxu0 %v3181
    %3282 = vmatmul.mubr.f32.gmra.mxu0 %v3180
    %v3283 = vpop.f32.mrf.mxu0
    %v3284 = vadd.f32 0.0, %v3283
    %v3285 = vpop.f32.mrf.mxu0
    %3286 = vmatprep.mubr.f32.mxu0 %v3183
    %3287 = vmatmul.mubr.f32.gmra.mxu0 %v3182
    %v3288 = vpop.f32.mrf.mxu0
    %v3289 = vadd.f32 0.0, %v3288
    %v3290 = vpop.f32.mrf.mxu0
    %3291 = vdwg.mxu0
    %v3292 = vadd.f32 %v3011, %v3284
    %v3293 = vadd.f32 %v3012, %v3289
    %s3294 = scalar_lea.vmem %s12, 1
    %v3295 = vld [vmem:[%s3294] sm:$0x1]
    %v3297 = vlaneseq
    %v3298 = vshrl.u32 %v3297, 7
    %v3299 = vsub.s32 0, %v3298
    %v3300 = vrot.slane %v3295, %v3299
    %v3302 = vadd.f32 %v3292, %v3300
    %v3303 = vadd.f32 %v3293, %v3300
    %s3304 = scalar_lea.vmem %s2, 2
    %v3305 = vld [vmem:[%s3304] sm:$0x1]
    %s3306 = scalar_lea.vmem %s3, 2
    %v3307 = vld [vmem:[%s3306] sm:$0x1]
    %3308 = vadd.xlane.f32.xlu0 %v3302
    %v3309 = vpop.xlane.xlu0 %3308
    %3310 = vadd.xlane.f32.xlu0 %v3303
    %v3311 = vpop.xlane.xlu0 %3310
    %v3312 = vmul.f32 %v3309, 0.016666668
    %v3313 = vmul.f32 %v3311, 0.016666668
    %v3314 = vsub.f32 %v3302, %v3312
    %v3315 = vsub.f32 %v3303, %v3313
    %v3316 = vsel %vm143, %v3314, 0.0
    %v3317 = vsel %vm143, %v3315, 0.0
    %v3318 = vmul.f32 %v3316, %v3316
    %v3319 = vmul.f32 %v3317, %v3317
    %3320 = vadd.xlane.f32.xlu0 %v3318
    %v3321 = vpop.xlane.xlu0 %3320
    %3322 = vadd.xlane.f32.xlu0 %v3319
    %v3323 = vpop.xlane.xlu0 %3322
    %v3324 = vmul.f32 %v3321, 0.016666668
    %v3325 = vmul.f32 %v3323, 0.016666668
    %v3326 = vadd.f32 %v3324, 1e-05
    %v3327 = vadd.f32 %v3325, 1e-05
    %v3328 = vrsqrt.pop %v3326
    %v3329 = vrsqrt.pop %v3327
    %v3330 = vmul.f32 %v3316, %v3328
    %v3331 = vmul.f32 %v3317, %v3329
    %v3333 = vlaneseq
    %v3334 = vshrl.u32 %v3333, 7
    %v3335 = vsub.s32 0, %v3334
    %v3336 = vrot.slane %v3305, %v3335
    %v3338 = vmul.f32 %v3330, %v3336
    %v3339 = vmul.f32 %v3331, %v3336
    %v3341 = vlaneseq
    %v3342 = vshrl.u32 %v3341, 7
    %v3343 = vsub.s32 0, %v3342
    %v3344 = vrot.slane %v3307, %v3343
    %v3346 = vadd.f32 %v3338, %v3344
    %v3347 = vadd.f32 %v3339, %v3344
    %s3348 = scalar_lea.vmem [#allocation2], 768
    %v3349 = vld [vmem:[%s3348] sm:$0xff]
    %v3350 = vld [vmem:[%s3348 + $0x8] sm:$0xff]
    %v3351 = vld [vmem:[%s3348 + $0x10] sm:$0xff]
    %v3352 = vld [vmem:[%s3348 + $0x18] sm:$0xff]
    %v3353 = vld [vmem:[%s3348 + $0x20] sm:$0xff]
    %v3354 = vld [vmem:[%s3348 + $0x28] sm:$0xff]
    %v3355 = vld [vmem:[%s3348 + $0x30] sm:$0xff]
    %v3356 = vld [vmem:[%s3348 + $0x38] sm:$0xff]
    %v3357 = vld [vmem:[%s3348 + $0x40] sm:$0xff]
    %v3358 = vld [vmem:[%s3348 + $0x48] sm:$0xff]
    %v3359 = vld [vmem:[%s3348 + $0x50] sm:$0xff]
    %v3360 = vld [vmem:[%s3348 + $0x58] sm:$0xff]
    %v3361 = vld [vmem:[%s3348 + $0x60] sm:$0xff]
    %v3362 = vld [vmem:[%s3348 + $0x68] sm:$0xff]
    %v3363 = vld [vmem:[%s3348 + $0x70] sm:$0xff]
    %v3364 = vld [vmem:[%s3348 + $0x78] sm:$0xff]
    %v3365 = vld [vmem:[%s3348 + $0x80] sm:$0xff]
    %v3366 = vld [vmem:[%s3348 + $0x88] sm:$0xff]
    %v3367 = vld [vmem:[%s3348 + $0x90] sm:$0xff]
    %v3368 = vld [vmem:[%s3348 + $0x98] sm:$0xff]
    %v3369 = vld [vmem:[%s3348 + $0xa0] sm:$0xff]
    %v3370 = vld [vmem:[%s3348 + $0xa8] sm:$0xff]
    %v3371 = vld [vmem:[%s3348 + $0xb0] sm:$0xff]
    %v3372 = vld [vmem:[%s3348 + $0xb8] sm:$0xff]
    %v3373 = vld [vmem:[%s3348 + $0xc0] sm:$0xff]
    %v3374 = vld [vmem:[%s3348 + $0xc8] sm:$0xff]
    %v3375 = vld [vmem:[%s3348 + $0xd0] sm:$0xff]
    %v3376 = vld [vmem:[%s3348 + $0xd8] sm:$0xff]
    %v3377 = vld [vmem:[%s3348 + $0xe0] sm:$0xff]
    %v3378 = vld [vmem:[%s3348 + $0xe8] sm:$0xff]
    %v3379 = vld [vmem:[%s3348 + $0xf0] sm:$0xff]
    %v3380 = vld [vmem:[%s3348 + $0xf8] sm:$0xff]
    %v3381 = vld [vmem:[%s3348 + $0x100] sm:$0xff]
    %v3382 = vld [vmem:[%s3348 + $0x108] sm:$0xff]
    %v3383 = vld [vmem:[%s3348 + $0x110] sm:$0xff]
    %v3384 = vld [vmem:[%s3348 + $0x118] sm:$0xff]
    %v3385 = vld [vmem:[%s3348 + $0x120] sm:$0xff]
    %v3386 = vld [vmem:[%s3348 + $0x128] sm:$0xff]
    %v3387 = vld [vmem:[%s3348 + $0x130] sm:$0xff]
    %v3388 = vld [vmem:[%s3348 + $0x138] sm:$0xff]
    %v3389 = vld [vmem:[%s3348 + $0x140] sm:$0xff]
    %v3390 = vld [vmem:[%s3348 + $0x148] sm:$0xff]
    %v3391 = vld [vmem:[%s3348 + $0x150] sm:$0xff]
    %v3392 = vld [vmem:[%s3348 + $0x158] sm:$0xff]
    %v3393 = vld [vmem:[%s3348 + $0x160] sm:$0xff]
    %v3394 = vld [vmem:[%s3348 + $0x168] sm:$0xff]
    %v3395 = vld [vmem:[%s3348 + $0x170] sm:$0xff]
    %v3396 = vld [vmem:[%s3348 + $0x178] sm:$0xff]
    %3397 = vmatprep.subr.mxu0 %v3395
    %3398 = vmatpush1.msra.mxu0 %v3394
    %3399 = vmatprep.subr.mxu0 %v3392
    %3400 = vmatpush1.msra.mxu0 %v3391
    %3401 = vmatprep.subr.mxu0 %v3389
    %3402 = vmatpush1.msra.mxu0 %v3388
    %3403 = vmatprep.subr.mxu0 %v3386
    %3404 = vmatpush1.msra.mxu0 %v3385
    %3405 = vmatprep.subr.mxu0 %v3383
    %3406 = vmatpush1.msra.mxu0 %v3382
    %3407 = vmatprep.subr.mxu0 %v3380
    %3408 = vmatpush1.msra.mxu0 %v3379
    %3409 = vmatprep.subr.mxu0 %v3377
    %3410 = vmatpush1.msra.mxu0 %v3376
    %3411 = vmatprep.subr.mxu0 %v3374
    %3412 = vmatpush1.msra.mxu0 %v3373
    %3413 = vmatprep.subr.mxu0 %v3371
    %3414 = vmatpush1.msra.mxu0 %v3370
    %3415 = vmatprep.subr.mxu0 %v3368
    %3416 = vmatpush1.msra.mxu0 %v3367
    %3417 = vmatprep.subr.mxu0 %v3365
    %3418 = vmatpush1.msra.mxu0 %v3364
    %3419 = vmatprep.subr.mxu0 %v3362
    %3420 = vmatpush1.msra.mxu0 %v3361
    %3421 = vmatprep.subr.mxu0 %v3359
    %3422 = vmatpush1.msra.mxu0 %v3358
    %3423 = vmatprep.subr.mxu0 %v3356
    %3424 = vmatpush1.msra.mxu0 %v3355
    %3425 = vmatprep.subr.mxu0 %v3353
    %3426 = vmatpush1.msra.mxu0 %v3352
    %3427 = vmatprep.subr.mxu0 %v3350
    %3428 = vmatpush1.msra.mxu0 %v3349
    %3429 = vmatprep.subr.mxu0 0.0
    %3430 = vmatpush2.msra.mxu0 0.0
    %3431 = vmatprep.subr.mxu0 0.0
    %3432 = vmatpush2.msra.mxu0 0.0
    %3433 = vmatprep.subr.mxu0 0.0
    %3434 = vmatpush2.msra.mxu0 0.0
    %3435 = vmatprep.subr.mxu0 0.0
    %3436 = vmatpush2.msra.mxu0 0.0
    %3437 = vmatprep.subr.mxu0 0.0
    %3438 = vmatpush2.msra.mxu0 0.0
    %3439 = vmatprep.subr.mxu0 0.0
    %3440 = vmatpush2.msra.mxu0 0.0
    %3441 = vmatprep.subr.mxu0 0.0
    %3442 = vmatpush2.msra.mxu0 0.0
    %3443 = vmatprep.subr.mxu0 0.0
    %3444 = vmatpush2.msra.mxu0 0.0
    %3445 = vmatprep.subr.mxu0 0.0
    %3446 = vmatpush2.msra.mxu0 0.0
    %3447 = vmatprep.subr.mxu0 0.0
    %3448 = vmatpush2.msra.mxu0 0.0
    %3449 = vmatprep.subr.mxu0 0.0
    %3450 = vmatpush2.msra.mxu0 0.0
    %3451 = vmatprep.subr.mxu0 0.0
    %3452 = vmatpush2.msra.mxu0 0.0
    %3453 = vmatprep.subr.mxu0 0.0
    %3454 = vmatpush2.msra.mxu0 0.0
    %3455 = vmatprep.subr.mxu0 0.0
    %3456 = vmatpush2.msra.mxu0 0.0
    %3457 = vmatprep.subr.mxu0 0.0
    %3458 = vmatpush2.msra.mxu0 0.0
    %3459 = vmatprep.subr.mxu0 0.0
    %3460 = vmatpush2.msra.mxu0 0.0
    %3461 = vmatprep.mubr.f32.mxu0 0.0
    %3462 = vmatmul.mubr.f32.gmra.mxu0 %v3346
    %v3463 = vpop.f32.mrf.mxu0
    %v3464 = vadd.f32 0.0, %v3463
    %v3465 = vpop.f32.mrf.mxu0
    %v3466 = vadd.f32 0.0, %v3465
    %3467 = vmatprep.mubr.f32.mxu0 0.0
    %3468 = vmatmul.mubr.f32.gmra.mxu0 %v3347
    %v3469 = vpop.f32.mrf.mxu0
    %v3470 = vadd.f32 0.0, %v3469
    %v3471 = vpop.f32.mrf.mxu0
    %v3472 = vadd.f32 0.0, %v3471
    %3473 = vdwg.mxu0
    %3474 = vmatprep.subr.mxu0 0.0
    %3475 = vmatpush1.msra.mxu0 %v3396
    %3476 = vmatprep.subr.mxu0 0.0
    %3477 = vmatpush1.msra.mxu0 %v3393
    %3478 = vmatprep.subr.mxu0 0.0
    %3479 = vmatpush1.msra.mxu0 %v3390
    %3480 = vmatprep.subr.mxu0 0.0
    %3481 = vmatpush1.msra.mxu0 %v3387
    %3482 = vmatprep.subr.mxu0 0.0
    %3483 = vmatpush1.msra.mxu0 %v3384
    %3484 = vmatprep.subr.mxu0 0.0
    %3485 = vmatpush1.msra.mxu0 %v3381
    %3486 = vmatprep.subr.mxu0 0.0
    %3487 = vmatpush1.msra.mxu0 %v3378
    %3488 = vmatprep.subr.mxu0 0.0
    %3489 = vmatpush1.msra.mxu0 %v3375
    %3490 = vmatprep.subr.mxu0 0.0
    %3491 = vmatpush1.msra.mxu0 %v3372
    %3492 = vmatprep.subr.mxu0 0.0
    %3493 = vmatpush1.msra.mxu0 %v3369
    %3494 = vmatprep.subr.mxu0 0.0
    %3495 = vmatpush1.msra.mxu0 %v3366
    %3496 = vmatprep.subr.mxu0 0.0
    %3497 = vmatpush1.msra.mxu0 %v3363
    %3498 = vmatprep.subr.mxu0 0.0
    %3499 = vmatpush1.msra.mxu0 %v3360
    %3500 = vmatprep.subr.mxu0 0.0
    %3501 = vmatpush1.msra.mxu0 %v3357
    %3502 = vmatprep.subr.mxu0 0.0
    %3503 = vmatpush1.msra.mxu0 %v3354
    %3504 = vmatprep.subr.mxu0 0.0
    %3505 = vmatpush1.msra.mxu0 %v3351
    %3506 = vmatprep.subr.mxu0 0.0
    %3507 = vmatpush2.msra.mxu0 0.0
    %3508 = vmatprep.subr.mxu0 0.0
    %3509 = vmatpush2.msra.mxu0 0.0
    %3510 = vmatprep.subr.mxu0 0.0
    %3511 = vmatpush2.msra.mxu0 0.0
    %3512 = vmatprep.subr.mxu0 0.0
    %3513 = vmatpush2.msra.mxu0 0.0
    %3514 = vmatprep.subr.mxu0 0.0
    %3515 = vmatpush2.msra.mxu0 0.0
    %3516 = vmatprep.subr.mxu0 0.0
    %3517 = vmatpush2.msra.mxu0 0.0
    %3518 = vmatprep.subr.mxu0 0.0
    %3519 = vmatpush2.msra.mxu0 0.0
    %3520 = vmatprep.subr.mxu0 0.0
    %3521 = vmatpush2.msra.mxu0 0.0
    %3522 = vmatprep.subr.mxu0 0.0
    %3523 = vmatpush2.msra.mxu0 0.0
    %3524 = vmatprep.subr.mxu0 0.0
    %3525 = vmatpush2.msra.mxu0 0.0
    %3526 = vmatprep.subr.mxu0 0.0
    %3527 = vmatpush2.msra.mxu0 0.0
    %3528 = vmatprep.subr.mxu0 0.0
    %3529 = vmatpush2.msra.mxu0 0.0
    %3530 = vmatprep.subr.mxu0 0.0
    %3531 = vmatpush2.msra.mxu0 0.0
    %3532 = vmatprep.subr.mxu0 0.0
    %3533 = vmatpush2.msra.mxu0 0.0
    %3534 = vmatprep.subr.mxu0 0.0
    %3535 = vmatpush2.msra.mxu0 0.0
    %3536 = vmatprep.subr.mxu0 0.0
    %3537 = vmatpush2.msra.mxu0 0.0
    %3538 = vmatprep.mubr.f32.mxu0 0.0
    %3539 = vmatmul.mubr.f32.gmra.mxu0 %v3346
    %v3540 = vpop.f32.mrf.mxu0
    %v3541 = vadd.f32 0.0, %v3540
    %v3542 = vpop.f32.mrf.mxu0
    %3543 = vmatprep.mubr.f32.mxu0 0.0
    %3544 = vmatmul.mubr.f32.gmra.mxu0 %v3347
    %v3545 = vpop.f32.mrf.mxu0
    %v3546 = vadd.f32 0.0, %v3545
    %v3547 = vpop.f32.mrf.mxu0
    %3548 = vdwg.mxu0
    %v3549 = vmul.f32 %v3464, %v122
    %v3550 = vmul.f32 %v3470, %v122
    %3551 = vmatprep.subr.mxu0 0.0
    %3552 = vmatpush1.xpose.msra.mxu0 0.0
    %3553 = vmatprep.subr.mxu0 0.0
    %3554 = vmatpush1.xpose.msra.mxu0 0.0
    %3555 = vmatprep.subr.mxu0 0.0
    %3556 = vmatpush1.xpose.msra.mxu0 0.0
    %3557 = vmatprep.subr.mxu0 0.0
    %3558 = vmatpush1.xpose.msra.mxu0 0.0
    %3559 = vmatprep.subr.mxu0 0.0
    %3560 = vmatpush1.xpose.msra.mxu0 0.0
    %3561 = vmatprep.subr.mxu0 0.0
    %3562 = vmatpush1.xpose.msra.mxu0 0.0
    %3563 = vmatprep.subr.mxu0 0.0
    %3564 = vmatpush1.xpose.msra.mxu0 0.0
    %3565 = vmatprep.subr.mxu0 0.0
    %3566 = vmatpush1.xpose.msra.mxu0 0.0
    %3567 = vmatprep.subr.mxu0 0.0
    %3568 = vmatpush1.xpose.msra.mxu0 0.0
    %3569 = vmatprep.subr.mxu0 0.0
    %3570 = vmatpush1.xpose.msra.mxu0 0.0
    %3571 = vmatprep.subr.mxu0 0.0
    %3572 = vmatpush1.xpose.msra.mxu0 0.0
    %3573 = vmatprep.subr.mxu0 0.0
    %3574 = vmatpush1.xpose.msra.mxu0 0.0
    %3575 = vmatprep.subr.mxu0 0.0
    %3576 = vmatpush1.xpose.msra.mxu0 0.0
    %3577 = vmatprep.subr.mxu0 0.0
    %3578 = vmatpush1.xpose.msra.mxu0 0.0
    %3579 = vmatprep.subr.mxu0 0.0
    %3580 = vmatpush1.xpose.msra.mxu0 0.0
    %3581 = vmatprep.subr.mxu0 0.0
    %3582 = vmatpush1.xpose.msra.mxu0 %v3466
    %3583 = vmatprep.subr.mxu0 0.0
    %3584 = vmatpush2.xpose.msra.mxu0 0.0
    %3585 = vmatprep.subr.mxu0 0.0
    %3586 = vmatpush2.xpose.msra.mxu0 0.0
    %3587 = vmatprep.subr.mxu0 0.0
    %3588 = vmatpush2.xpose.msra.mxu0 0.0
    %3589 = vmatprep.subr.mxu0 0.0
    %3590 = vmatpush2.xpose.msra.mxu0 0.0
    %3591 = vmatprep.subr.mxu0 0.0
    %3592 = vmatpush2.xpose.msra.mxu0 0.0
    %3593 = vmatprep.subr.mxu0 0.0
    %3594 = vmatpush2.xpose.msra.mxu0 0.0
    %3595 = vmatprep.subr.mxu0 0.0
    %3596 = vmatpush2.xpose.msra.mxu0 0.0
    %3597 = vmatprep.subr.mxu0 0.0
    %3598 = vmatpush2.xpose.msra.mxu0 0.0
    %3599 = vmatprep.subr.mxu0 0.0
    %3600 = vmatpush2.xpose.msra.mxu0 0.0
    %3601 = vmatprep.subr.mxu0 0.0
    %3602 = vmatpush2.xpose.msra.mxu0 0.0
    %3603 = vmatprep.subr.mxu0 0.0
    %3604 = vmatpush2.xpose.msra.mxu0 0.0
    %3605 = vmatprep.subr.mxu0 0.0
    %3606 = vmatpush2.xpose.msra.mxu0 0.0
    %3607 = vmatprep.subr.mxu0 0.0
    %3608 = vmatpush2.xpose.msra.mxu0 0.0
    %3609 = vmatprep.subr.mxu0 0.0
    %3610 = vmatpush2.xpose.msra.mxu0 0.0
    %3611 = vmatprep.subr.mxu0 0.0
    %3612 = vmatpush2.xpose.msra.mxu0 0.0
    %3613 = vmatprep.subr.mxu0 0.0
    %3614 = vmatpush2.xpose.msra.mxu0 0.0
    %3615 = vmatprep.mubr.f32.mxu0 0.0
    %3616 = vmatmul.mubr.f32.gmra.mxu0 %v3549
    %v3617 = vpop.f32.mrf.mxu0
    %v3618 = vadd.f32 0.0, %v3617
    %v3619 = vpop.f32.mrf.mxu0
    %3620 = vdwg.mxu0
    %3621 = vmatprep.subr.mxu0 0.0
    %3622 = vmatpush1.xpose.msra.mxu0 0.0
    %3623 = vmatprep.subr.mxu0 0.0
    %3624 = vmatpush1.xpose.msra.mxu0 0.0
    %3625 = vmatprep.subr.mxu0 0.0
    %3626 = vmatpush1.xpose.msra.mxu0 0.0
    %3627 = vmatprep.subr.mxu0 0.0
    %3628 = vmatpush1.xpose.msra.mxu0 0.0
    %3629 = vmatprep.subr.mxu0 0.0
    %3630 = vmatpush1.xpose.msra.mxu0 0.0
    %3631 = vmatprep.subr.mxu0 0.0
    %3632 = vmatpush1.xpose.msra.mxu0 0.0
    %3633 = vmatprep.subr.mxu0 0.0
    %3634 = vmatpush1.xpose.msra.mxu0 0.0
    %3635 = vmatprep.subr.mxu0 0.0
    %3636 = vmatpush1.xpose.msra.mxu0 0.0
    %3637 = vmatprep.subr.mxu0 0.0
    %3638 = vmatpush1.xpose.msra.mxu0 0.0
    %3639 = vmatprep.subr.mxu0 0.0
    %3640 = vmatpush1.xpose.msra.mxu0 0.0
    %3641 = vmatprep.subr.mxu0 0.0
    %3642 = vmatpush1.xpose.msra.mxu0 0.0
    %3643 = vmatprep.subr.mxu0 0.0
    %3644 = vmatpush1.xpose.msra.mxu0 0.0
    %3645 = vmatprep.subr.mxu0 0.0
    %3646 = vmatpush1.xpose.msra.mxu0 0.0
    %3647 = vmatprep.subr.mxu0 0.0
    %3648 = vmatpush1.xpose.msra.mxu0 0.0
    %3649 = vmatprep.subr.mxu0 0.0
    %3650 = vmatpush1.xpose.msra.mxu0 0.0
    %3651 = vmatprep.subr.mxu0 0.0
    %3652 = vmatpush1.xpose.msra.mxu0 %v3472
    %3653 = vmatprep.subr.mxu0 0.0
    %3654 = vmatpush2.xpose.msra.mxu0 0.0
    %3655 = vmatprep.subr.mxu0 0.0
    %3656 = vmatpush2.xpose.msra.mxu0 0.0
    %3657 = vmatprep.subr.mxu0 0.0
    %3658 = vmatpush2.xpose.msra.mxu0 0.0
    %3659 = vmatprep.subr.mxu0 0.0
    %3660 = vmatpush2.xpose.msra.mxu0 0.0
    %3661 = vmatprep.subr.mxu0 0.0
    %3662 = vmatpush2.xpose.msra.mxu0 0.0
    %3663 = vmatprep.subr.mxu0 0.0
    %3664 = vmatpush2.xpose.msra.mxu0 0.0
    %3665 = vmatprep.subr.mxu0 0.0
    %3666 = vmatpush2.xpose.msra.mxu0 0.0
    %3667 = vmatprep.subr.mxu0 0.0
    %3668 = vmatpush2.xpose.msra.mxu0 0.0
    %3669 = vmatprep.subr.mxu0 0.0
    %3670 = vmatpush2.xpose.msra.mxu0 0.0
    %3671 = vmatprep.subr.mxu0 0.0
    %3672 = vmatpush2.xpose.msra.mxu0 0.0
    %3673 = vmatprep.subr.mxu0 0.0
    %3674 = vmatpush2.xpose.msra.mxu0 0.0
    %3675 = vmatprep.subr.mxu0 0.0
    %3676 = vmatpush2.xpose.msra.mxu0 0.0
    %3677 = vmatprep.subr.mxu0 0.0
    %3678 = vmatpush2.xpose.msra.mxu0 0.0
    %3679 = vmatprep.subr.mxu0 0.0
    %3680 = vmatpush2.xpose.msra.mxu0 0.0
    %3681 = vmatprep.subr.mxu0 0.0
    %3682 = vmatpush2.xpose.msra.mxu0 0.0
    %3683 = vmatprep.subr.mxu0 0.0
    %3684 = vmatpush2.xpose.msra.mxu0 0.0
    %3685 = vmatprep.mubr.f32.mxu0 0.0
    %3686 = vmatmul.mubr.f32.gmra.mxu0 %v3550
    %v3687 = vpop.f32.mrf.mxu0
    %v3688 = vadd.f32 0.0, %v3687
    %v3689 = vpop.f32.mrf.mxu0
    %3690 = vdwg.mxu0
    %v3691 = vmul.f32 %v3618, 0.12909944
    %v3692 = vmul.f32 %v3688, 0.12909944
    %v3693 = vadd.f32 %v3691, %v114
    %v3694 = vadd.f32 %v3692, %v114
    %v3695 = vsel %vm522, %v3693, -inf
    %3696 = vmax.xlane.f32.xlu0 %v3695
    %v3697 = vpop.xlane.xlu0 %3696
    %v3698 = vsel %vm522, %v3694, -inf
    %3699 = vmax.xlane.f32.xlu0 %v3698
    %v3700 = vpop.xlane.xlu0 %3699
    %v3701 = vsub.f32 %v3693, %v3697
    %v3702 = vsub.f32 %v3694, %v3700
    %v3703 = vmul.f32 %v3701, 1.442695
    %v3704 = vpow.pop %v3703
    %v3705 = vmul.f32 %v3702, 1.442695
    %v3706 = vpow.pop %v3705
    %v3707 = vsel %vm522, %v3704, 0.0
    %3708 = vadd.xlane.f32.xlu0 %v3707
    %v3709 = vpop.xlane.xlu0 %3708
    %v3710 = vsel %vm522, %v3706, 0.0
    %3711 = vadd.xlane.f32.xlu0 %v3710
    %v3712 = vpop.xlane.xlu0 %3711
    %v3713 = vrcp.pop %v3709
    %v3714 = vrcp.pop %v3712
    %v3715 = vmul.f32 %v3704, %v3713
    %v3716 = vmul.f32 %v3706, %v3714
    %v3718 = vsel %vm522, %v3715, 0
    %3720 = vmatprep.subr.mxu0 0.0
    %3721 = vmatpush1.msra.mxu0 0.0
    %3722 = vmatprep.subr.mxu0 0.0
    %3723 = vmatpush1.msra.mxu0 0.0
    %3724 = vmatprep.subr.mxu0 0.0
    %3725 = vmatpush1.msra.mxu0 0.0
    %3726 = vmatprep.subr.mxu0 0.0
    %3727 = vmatpush1.msra.mxu0 0.0
    %3728 = vmatprep.subr.mxu0 0.0
    %3729 = vmatpush1.msra.mxu0 0.0
    %3730 = vmatprep.subr.mxu0 0.0
    %3731 = vmatpush1.msra.mxu0 0.0
    %3732 = vmatprep.subr.mxu0 0.0
    %3733 = vmatpush1.msra.mxu0 0.0
    %3734 = vmatprep.subr.mxu0 0.0
    %3735 = vmatpush1.msra.mxu0 0.0
    %3736 = vmatprep.subr.mxu0 0.0
    %3737 = vmatpush1.msra.mxu0 0.0
    %3738 = vmatprep.subr.mxu0 0.0
    %3739 = vmatpush1.msra.mxu0 0.0
    %3740 = vmatprep.subr.mxu0 0.0
    %3741 = vmatpush1.msra.mxu0 0.0
    %3742 = vmatprep.subr.mxu0 0.0
    %3743 = vmatpush1.msra.mxu0 0.0
    %3744 = vmatprep.subr.mxu0 0.0
    %3745 = vmatpush1.msra.mxu0 0.0
    %3746 = vmatprep.subr.mxu0 0.0
    %3747 = vmatpush1.msra.mxu0 0.0
    %3748 = vmatprep.subr.mxu0 0.0
    %3749 = vmatpush1.msra.mxu0 0.0
    %3750 = vmatprep.subr.mxu0 0.0
    %3751 = vmatpush1.msra.mxu0 %v3541
    %3752 = vmatprep.subr.mxu0 0.0
    %3753 = vmatpush2.msra.mxu0 0.0
    %3754 = vmatprep.subr.mxu0 0.0
    %3755 = vmatpush2.msra.mxu0 0.0
    %3756 = vmatprep.subr.mxu0 0.0
    %3757 = vmatpush2.msra.mxu0 0.0
    %3758 = vmatprep.subr.mxu0 0.0
    %3759 = vmatpush2.msra.mxu0 0.0
    %3760 = vmatprep.subr.mxu0 0.0
    %3761 = vmatpush2.msra.mxu0 0.0
    %3762 = vmatprep.subr.mxu0 0.0
    %3763 = vmatpush2.msra.mxu0 0.0
    %3764 = vmatprep.subr.mxu0 0.0
    %3765 = vmatpush2.msra.mxu0 0.0
    %3766 = vmatprep.subr.mxu0 0.0
    %3767 = vmatpush2.msra.mxu0 0.0
    %3768 = vmatprep.subr.mxu0 0.0
    %3769 = vmatpush2.msra.mxu0 0.0
    %3770 = vmatprep.subr.mxu0 0.0
    %3771 = vmatpush2.msra.mxu0 0.0
    %3772 = vmatprep.subr.mxu0 0.0
    %3773 = vmatpush2.msra.mxu0 0.0
    %3774 = vmatprep.subr.mxu0 0.0
    %3775 = vmatpush2.msra.mxu0 0.0
    %3776 = vmatprep.subr.mxu0 0.0
    %3777 = vmatpush2.msra.mxu0 0.0
    %3778 = vmatprep.subr.mxu0 0.0
    %3779 = vmatpush2.msra.mxu0 0.0
    %3780 = vmatprep.subr.mxu0 0.0
    %3781 = vmatpush2.msra.mxu0 0.0
    %3782 = vmatprep.subr.mxu0 0.0
    %3783 = vmatpush2.msra.mxu0 0.0
    %3784 = vmatprep.mubr.f32.mxu0 0.0
    %3785 = vmatmul.mubr.f32.gmra.mxu0 %v3718
    %v3786 = vpop.f32.mrf.mxu0
    %v3787 = vadd.f32 0.0, %v3786
    %v3788 = vpop.f32.mrf.mxu0
    %3789 = vdwg.mxu0
    %v3791 = vsel %vm522, %v3716, 0
    %3793 = vmatprep.subr.mxu0 0.0
    %3794 = vmatpush1.msra.mxu0 0.0
    %3795 = vmatprep.subr.mxu0 0.0
    %3796 = vmatpush1.msra.mxu0 0.0
    %3797 = vmatprep.subr.mxu0 0.0
    %3798 = vmatpush1.msra.mxu0 0.0
    %3799 = vmatprep.subr.mxu0 0.0
    %3800 = vmatpush1.msra.mxu0 0.0
    %3801 = vmatprep.subr.mxu0 0.0
    %3802 = vmatpush1.msra.mxu0 0.0
    %3803 = vmatprep.subr.mxu0 0.0
    %3804 = vmatpush1.msra.mxu0 0.0
    %3805 = vmatprep.subr.mxu0 0.0
    %3806 = vmatpush1.msra.mxu0 0.0
    %3807 = vmatprep.subr.mxu0 0.0
    %3808 = vmatpush1.msra.mxu0 0.0
    %3809 = vmatprep.subr.mxu0 0.0
    %3810 = vmatpush1.msra.mxu0 0.0
    %3811 = vmatprep.subr.mxu0 0.0
    %3812 = vmatpush1.msra.mxu0 0.0
    %3813 = vmatprep.subr.mxu0 0.0
    %3814 = vmatpush1.msra.mxu0 0.0
    %3815 = vmatprep.subr.mxu0 0.0
    %3816 = vmatpush1.msra.mxu0 0.0
    %3817 = vmatprep.subr.mxu0 0.0
    %3818 = vmatpush1.msra.mxu0 0.0
    %3819 = vmatprep.subr.mxu0 0.0
    %3820 = vmatpush1.msra.mxu0 0.0
    %3821 = vmatprep.subr.mxu0 0.0
    %3822 = vmatpush1.msra.mxu0 0.0
    %3823 = vmatprep.subr.mxu0 0.0
    %3824 = vmatpush1.msra.mxu0 %v3546
    %3825 = vmatprep.subr.mxu0 0.0
    %3826 = vmatpush2.msra.mxu0 0.0
    %3827 = vmatprep.subr.mxu0 0.0
    %3828 = vmatpush2.msra.mxu0 0.0
    %3829 = vmatprep.subr.mxu0 0.0
    %3830 = vmatpush2.msra.mxu0 0.0
    %3831 = vmatprep.subr.mxu0 0.0
    %3832 = vmatpush2.msra.mxu0 0.0
    %3833 = vmatprep.subr.mxu0 0.0
    %3834 = vmatpush2.msra.mxu0 0.0
    %3835 = vmatprep.subr.mxu0 0.0
    %3836 = vmatpush2.msra.mxu0 0.0
    %3837 = vmatprep.subr.mxu0 0.0
    %3838 = vmatpush2.msra.mxu0 0.0
    %3839 = vmatprep.subr.mxu0 0.0
    %3840 = vmatpush2.msra.mxu0 0.0
    %3841 = vmatprep.subr.mxu0 0.0
    %3842 = vmatpush2.msra.mxu0 0.0
    %3843 = vmatprep.subr.mxu0 0.0
    %3844 = vmatpush2.msra.mxu0 0.0
    %3845 = vmatprep.subr.mxu0 0.0
    %3846 = vmatpush2.msra.mxu0 0.0
    %3847 = vmatprep.subr.mxu0 0.0
    %3848 = vmatpush2.msra.mxu0 0.0
    %3849 = vmatprep.subr.mxu0 0.0
    %3850 = vmatpush2.msra.mxu0 0.0
    %3851 = vmatprep.subr.mxu0 0.0
    %3852 = vmatpush2.msra.mxu0 0.0
    %3853 = vmatprep.subr.mxu0 0.0
    %3854 = vmatpush2.msra.mxu0 0.0
    %3855 = vmatprep.subr.mxu0 0.0
    %3856 = vmatpush2.msra.mxu0 0.0
    %3857 = vmatprep.mubr.f32.mxu0 0.0
    %3858 = vmatmul.mubr.f32.gmra.mxu0 %v3791
    %v3859 = vpop.f32.mrf.mxu0
    %v3860 = vadd.f32 0.0, %v3859
    %v3861 = vpop.f32.mrf.mxu0
    %3862 = vdwg.mxu0
    %v3863 = vmul.f32 %v3787, %v122
    %v3864 = vmul.f32 %v3860, %v122
    %v3865 = vmul.f32 %v3464, %v127
    %v3866 = vmul.f32 %v3470, %v127
    %3867 = vmatprep.subr.mxu0 0.0
    %3868 = vmatpush1.xpose.msra.mxu0 0.0
    %3869 = vmatprep.subr.mxu0 0.0
    %3870 = vmatpush1.xpose.msra.mxu0 0.0
    %3871 = vmatprep.subr.mxu0 0.0
    %3872 = vmatpush1.xpose.msra.mxu0 0.0
    %3873 = vmatprep.subr.mxu0 0.0
    %3874 = vmatpush1.xpose.msra.mxu0 0.0
    %3875 = vmatprep.subr.mxu0 0.0
    %3876 = vmatpush1.xpose.msra.mxu0 0.0
    %3877 = vmatprep.subr.mxu0 0.0
    %3878 = vmatpush1.xpose.msra.mxu0 0.0
    %3879 = vmatprep.subr.mxu0 0.0
    %3880 = vmatpush1.xpose.msra.mxu0 0.0
    %3881 = vmatprep.subr.mxu0 0.0
    %3882 = vmatpush1.xpose.msra.mxu0 0.0
    %3883 = vmatprep.subr.mxu0 0.0
    %3884 = vmatpush1.xpose.msra.mxu0 0.0
    %3885 = vmatprep.subr.mxu0 0.0
    %3886 = vmatpush1.xpose.msra.mxu0 0.0
    %3887 = vmatprep.subr.mxu0 0.0
    %3888 = vmatpush1.xpose.msra.mxu0 0.0
    %3889 = vmatprep.subr.mxu0 0.0
    %3890 = vmatpush1.xpose.msra.mxu0 0.0
    %3891 = vmatprep.subr.mxu0 0.0
    %3892 = vmatpush1.xpose.msra.mxu0 0.0
    %3893 = vmatprep.subr.mxu0 0.0
    %3894 = vmatpush1.xpose.msra.mxu0 0.0
    %3895 = vmatprep.subr.mxu0 0.0
    %3896 = vmatpush1.xpose.msra.mxu0 0.0
    %3897 = vmatprep.subr.mxu0 0.0
    %3898 = vmatpush1.xpose.msra.mxu0 %v3466
    %3899 = vmatprep.subr.mxu0 0.0
    %3900 = vmatpush2.xpose.msra.mxu0 0.0
    %3901 = vmatprep.subr.mxu0 0.0
    %3902 = vmatpush2.xpose.msra.mxu0 0.0
    %3903 = vmatprep.subr.mxu0 0.0
    %3904 = vmatpush2.xpose.msra.mxu0 0.0
    %3905 = vmatprep.subr.mxu0 0.0
    %3906 = vmatpush2.xpose.msra.mxu0 0.0
    %3907 = vmatprep.subr.mxu0 0.0
    %3908 = vmatpush2.xpose.msra.mxu0 0.0
    %3909 = vmatprep.subr.mxu0 0.0
    %3910 = vmatpush2.xpose.msra.mxu0 0.0
    %3911 = vmatprep.subr.mxu0 0.0
    %3912 = vmatpush2.xpose.msra.mxu0 0.0
    %3913 = vmatprep.subr.mxu0 0.0
    %3914 = vmatpush2.xpose.msra.mxu0 0.0
    %3915 = vmatprep.subr.mxu0 0.0
    %3916 = vmatpush2.xpose.msra.mxu0 0.0
    %3917 = vmatprep.subr.mxu0 0.0
    %3918 = vmatpush2.xpose.msra.mxu0 0.0
    %3919 = vmatprep.subr.mxu0 0.0
    %3920 = vmatpush2.xpose.msra.mxu0 0.0
    %3921 = vmatprep.subr.mxu0 0.0
    %3922 = vmatpush2.xpose.msra.mxu0 0.0
    %3923 = vmatprep.subr.mxu0 0.0
    %3924 = vmatpush2.xpose.msra.mxu0 0.0
    %3925 = vmatprep.subr.mxu0 0.0
    %3926 = vmatpush2.xpose.msra.mxu0 0.0
    %3927 = vmatprep.subr.mxu0 0.0
    %3928 = vmatpush2.xpose.msra.mxu0 0.0
    %3929 = vmatprep.subr.mxu0 0.0
    %3930 = vmatpush2.xpose.msra.mxu0 0.0
    %3931 = vmatprep.mubr.f32.mxu0 0.0
    %3932 = vmatmul.mubr.f32.gmra.mxu0 %v3865
    %v3933 = vpop.f32.mrf.mxu0
    %v3934 = vadd.f32 0.0, %v3933
    %v3935 = vpop.f32.mrf.mxu0
    %3936 = vdwg.mxu0
    %3937 = vmatprep.subr.mxu0 0.0
    %3938 = vmatpush1.xpose.msra.mxu0 0.0
    %3939 = vmatprep.subr.mxu0 0.0
    %3940 = vmatpush1.xpose.msra.mxu0 0.0
    %3941 = vmatprep.subr.mxu0 0.0
    %3942 = vmatpush1.xpose.msra.mxu0 0.0
    %3943 = vmatprep.subr.mxu0 0.0
    %3944 = vmatpush1.xpose.msra.mxu0 0.0
    %3945 = vmatprep.subr.mxu0 0.0
    %3946 = vmatpush1.xpose.msra.mxu0 0.0
    %3947 = vmatprep.subr.mxu0 0.0
    %3948 = vmatpush1.xpose.msra.mxu0 0.0
    %3949 = vmatprep.subr.mxu0 0.0
    %3950 = vmatpush1.xpose.msra.mxu0 0.0
    %3951 = vmatprep.subr.mxu0 0.0
    %3952 = vmatpush1.xpose.msra.mxu0 0.0
    %3953 = vmatprep.subr.mxu0 0.0
    %3954 = vmatpush1.xpose.msra.mxu0 0.0
    %3955 = vmatprep.subr.mxu0 0.0
    %3956 = vmatpush1.xpose.msra.mxu0 0.0
    %3957 = vmatprep.subr.mxu0 0.0
    %3958 = vmatpush1.xpose.msra.mxu0 0.0
    %3959 = vmatprep.subr.mxu0 0.0
    %3960 = vmatpush1.xpose.msra.mxu0 0.0
    %3961 = vmatprep.subr.mxu0 0.0
    %3962 = vmatpush1.xpose.msra.mxu0 0.0
    %3963 = vmatprep.subr.mxu0 0.0
    %3964 = vmatpush1.xpose.msra.mxu0 0.0
    %3965 = vmatprep.subr.mxu0 0.0
    %3966 = vmatpush1.xpose.msra.mxu0 0.0
    %3967 = vmatprep.subr.mxu0 0.0
    %3968 = vmatpush1.xpose.msra.mxu0 %v3472
    %3969 = vmatprep.subr.mxu0 0.0
    %3970 = vmatpush2.xpose.msra.mxu0 0.0
    %3971 = vmatprep.subr.mxu0 0.0
    %3972 = vmatpush2.xpose.msra.mxu0 0.0
    %3973 = vmatprep.subr.mxu0 0.0
    %3974 = vmatpush2.xpose.msra.mxu0 0.0
    %3975 = vmatprep.subr.mxu0 0.0
    %3976 = vmatpush2.xpose.msra.mxu0 0.0
    %3977 = vmatprep.subr.mxu0 0.0
    %3978 = vmatpush2.xpose.msra.mxu0 0.0
    %3979 = vmatprep.subr.mxu0 0.0
    %3980 = vmatpush2.xpose.msra.mxu0 0.0
    %3981 = vmatprep.subr.mxu0 0.0
    %3982 = vmatpush2.xpose.msra.mxu0 0.0
    %3983 = vmatprep.subr.mxu0 0.0
    %3984 = vmatpush2.xpose.msra.mxu0 0.0
    %3985 = vmatprep.subr.mxu0 0.0
    %3986 = vmatpush2.xpose.msra.mxu0 0.0
    %3987 = vmatprep.subr.mxu0 0.0
    %3988 = vmatpush2.xpose.msra.mxu0 0.0
    %3989 = vmatprep.subr.mxu0 0.0
    %3990 = vmatpush2.xpose.msra.mxu0 0.0
    %3991 = vmatprep.subr.mxu0 0.0
    %3992 = vmatpush2.xpose.msra.mxu0 0.0
    %3993 = vmatprep.subr.mxu0 0.0
    %3994 = vmatpush2.xpose.msra.mxu0 0.0
    %3995 = vmatprep.subr.mxu0 0.0
    %3996 = vmatpush2.xpose.msra.mxu0 0.0
    %3997 = vmatprep.subr.mxu0 0.0
    %3998 = vmatpush2.xpose.msra.mxu0 0.0
    %3999 = vmatprep.subr.mxu0 0.0
    %4000 = vmatpush2.xpose.msra.mxu0 0.0
    %4001 = vmatprep.mubr.f32.mxu0 0.0
    %4002 = vmatmul.mubr.f32.gmra.mxu0 %v3866
    %v4003 = vpop.f32.mrf.mxu0
    %v4004 = vadd.f32 0.0, %v4003
    %v4005 = vpop.f32.mrf.mxu0
    %4006 = vdwg.mxu0
    %v4007 = vmul.f32 %v3934, 0.12909944
    %v4008 = vmul.f32 %v4004, 0.12909944
    %v4009 = vadd.f32 %v4007, %v114
    %v4010 = vadd.f32 %v4008, %v114
    %v4011 = vsel %vm522, %v4009, -inf
    %4012 = vmax.xlane.f32.xlu0 %v4011
    %v4013 = vpop.xlane.xlu0 %4012
    %v4014 = vsel %vm522, %v4010, -inf
    %4015 = vmax.xlane.f32.xlu0 %v4014
    %v4016 = vpop.xlane.xlu0 %4015
    %v4017 = vsub.f32 %v4009, %v4013
    %v4018 = vsub.f32 %v4010, %v4016
    %v4019 = vmul.f32 %v4017, 1.442695
    %v4020 = vpow.pop %v4019
    %v4021 = vmul.f32 %v4018, 1.442695
    %v4022 = vpow.pop %v4021
    %v4023 = vsel %vm522, %v4020, 0.0
    %4024 = vadd.xlane.f32.xlu0 %v4023
    %v4025 = vpop.xlane.xlu0 %4024
    %v4026 = vsel %vm522, %v4022, 0.0
    %4027 = vadd.xlane.f32.xlu0 %v4026
    %v4028 = vpop.xlane.xlu0 %4027
    %v4029 = vrcp.pop %v4025
    %v4030 = vrcp.pop %v4028
    %v4031 = vmul.f32 %v4020, %v4029
    %v4032 = vmul.f32 %v4022, %v4030
    %v4034 = vsel %vm522, %v4031, 0
    %4036 = vmatprep.subr.mxu0 0.0
    %4037 = vmatpush1.msra.mxu0 0.0
    %4038 = vmatprep.subr.mxu0 0.0
    %4039 = vmatpush1.msra.mxu0 0.0
    %4040 = vmatprep.subr.mxu0 0.0
    %4041 = vmatpush1.msra.mxu0 0.0
    %4042 = vmatprep.subr.mxu0 0.0
    %4043 = vmatpush1.msra.mxu0 0.0
    %4044 = vmatprep.subr.mxu0 0.0
    %4045 = vmatpush1.msra.mxu0 0.0
    %4046 = vmatprep.subr.mxu0 0.0
    %4047 = vmatpush1.msra.mxu0 0.0
    %4048 = vmatprep.subr.mxu0 0.0
    %4049 = vmatpush1.msra.mxu0 0.0
    %4050 = vmatprep.subr.mxu0 0.0
    %4051 = vmatpush1.msra.mxu0 0.0
    %4052 = vmatprep.subr.mxu0 0.0
    %4053 = vmatpush1.msra.mxu0 0.0
    %4054 = vmatprep.subr.mxu0 0.0
    %4055 = vmatpush1.msra.mxu0 0.0
    %4056 = vmatprep.subr.mxu0 0.0
    %4057 = vmatpush1.msra.mxu0 0.0
    %4058 = vmatprep.subr.mxu0 0.0
    %4059 = vmatpush1.msra.mxu0 0.0
    %4060 = vmatprep.subr.mxu0 0.0
    %4061 = vmatpush1.msra.mxu0 0.0
    %4062 = vmatprep.subr.mxu0 0.0
    %4063 = vmatpush1.msra.mxu0 0.0
    %4064 = vmatprep.subr.mxu0 0.0
    %4065 = vmatpush1.msra.mxu0 0.0
    %4066 = vmatprep.subr.mxu0 0.0
    %4067 = vmatpush1.msra.mxu0 %v3541
    %4068 = vmatprep.subr.mxu0 0.0
    %4069 = vmatpush2.msra.mxu0 0.0
    %4070 = vmatprep.subr.mxu0 0.0
    %4071 = vmatpush2.msra.mxu0 0.0
    %4072 = vmatprep.subr.mxu0 0.0
    %4073 = vmatpush2.msra.mxu0 0.0
    %4074 = vmatprep.subr.mxu0 0.0
    %4075 = vmatpush2.msra.mxu0 0.0
    %4076 = vmatprep.subr.mxu0 0.0
    %4077 = vmatpush2.msra.mxu0 0.0
    %4078 = vmatprep.subr.mxu0 0.0
    %4079 = vmatpush2.msra.mxu0 0.0
    %4080 = vmatprep.subr.mxu0 0.0
    %4081 = vmatpush2.msra.mxu0 0.0
    %4082 = vmatprep.subr.mxu0 0.0
    %4083 = vmatpush2.msra.mxu0 0.0
    %4084 = vmatprep.subr.mxu0 0.0
    %4085 = vmatpush2.msra.mxu0 0.0
    %4086 = vmatprep.subr.mxu0 0.0
    %4087 = vmatpush2.msra.mxu0 0.0
    %4088 = vmatprep.subr.mxu0 0.0
    %4089 = vmatpush2.msra.mxu0 0.0
    %4090 = vmatprep.subr.mxu0 0.0
    %4091 = vmatpush2.msra.mxu0 0.0
    %4092 = vmatprep.subr.mxu0 0.0
    %4093 = vmatpush2.msra.mxu0 0.0
    %4094 = vmatprep.subr.mxu0 0.0
    %4095 = vmatpush2.msra.mxu0 0.0
    %4096 = vmatprep.subr.mxu0 0.0
    %4097 = vmatpush2.msra.mxu0 0.0
    %4098 = vmatprep.subr.mxu0 0.0
    %4099 = vmatpush2.msra.mxu0 0.0
    %4100 = vmatprep.mubr.f32.mxu0 0.0
    %4101 = vmatmul.mubr.f32.gmra.mxu0 %v4034
    %v4102 = vpop.f32.mrf.mxu0
    %v4103 = vadd.f32 0.0, %v4102
    %v4104 = vpop.f32.mrf.mxu0
    %4105 = vdwg.mxu0
    %v4107 = vsel %vm522, %v4032, 0
    %4109 = vmatprep.subr.mxu0 0.0
    %4110 = vmatpush1.msra.mxu0 0.0
    %4111 = vmatprep.subr.mxu0 0.0
    %4112 = vmatpush1.msra.mxu0 0.0
    %4113 = vmatprep.subr.mxu0 0.0
    %4114 = vmatpush1.msra.mxu0 0.0
    %4115 = vmatprep.subr.mxu0 0.0
    %4116 = vmatpush1.msra.mxu0 0.0
    %4117 = vmatprep.subr.mxu0 0.0
    %4118 = vmatpush1.msra.mxu0 0.0
    %4119 = vmatprep.subr.mxu0 0.0
    %4120 = vmatpush1.msra.mxu0 0.0
    %4121 = vmatprep.subr.mxu0 0.0
    %4122 = vmatpush1.msra.mxu0 0.0
    %4123 = vmatprep.subr.mxu0 0.0
    %4124 = vmatpush1.msra.mxu0 0.0
    %4125 = vmatprep.subr.mxu0 0.0
    %4126 = vmatpush1.msra.mxu0 0.0
    %4127 = vmatprep.subr.mxu0 0.0
    %4128 = vmatpush1.msra.mxu0 0.0
    %4129 = vmatprep.subr.mxu0 0.0
    %4130 = vmatpush1.msra.mxu0 0.0
    %4131 = vmatprep.subr.mxu0 0.0
    %4132 = vmatpush1.msra.mxu0 0.0
    %4133 = vmatprep.subr.mxu0 0.0
    %4134 = vmatpush1.msra.mxu0 0.0
    %4135 = vmatprep.subr.mxu0 0.0
    %4136 = vmatpush1.msra.mxu0 0.0
    %4137 = vmatprep.subr.mxu0 0.0
    %4138 = vmatpush1.msra.mxu0 0.0
    %4139 = vmatprep.subr.mxu0 0.0
    %4140 = vmatpush1.msra.mxu0 %v3546
    %4141 = vmatprep.subr.mxu0 0.0
    %4142 = vmatpush2.msra.mxu0 0.0
    %4143 = vmatprep.subr.mxu0 0.0
    %4144 = vmatpush2.msra.mxu0 0.0
    %4145 = vmatprep.subr.mxu0 0.0
    %4146 = vmatpush2.msra.mxu0 0.0
    %4147 = vmatprep.subr.mxu0 0.0
    %4148 = vmatpush2.msra.mxu0 0.0
    %4149 = vmatprep.subr.mxu0 0.0
    %4150 = vmatpush2.msra.mxu0 0.0
    %4151 = vmatprep.subr.mxu0 0.0
    %4152 = vmatpush2.msra.mxu0 0.0
    %4153 = vmatprep.subr.mxu0 0.0
    %4154 = vmatpush2.msra.mxu0 0.0
    %4155 = vmatprep.subr.mxu0 0.0
    %4156 = vmatpush2.msra.mxu0 0.0
    %4157 = vmatprep.subr.mxu0 0.0
    %4158 = vmatpush2.msra.mxu0 0.0
    %4159 = vmatprep.subr.mxu0 0.0
    %4160 = vmatpush2.msra.mxu0 0.0
    %4161 = vmatprep.subr.mxu0 0.0
    %4162 = vmatpush2.msra.mxu0 0.0
    %4163 = vmatprep.subr.mxu0 0.0
    %4164 = vmatpush2.msra.mxu0 0.0
    %4165 = vmatprep.subr.mxu0 0.0
    %4166 = vmatpush2.msra.mxu0 0.0
    %4167 = vmatprep.subr.mxu0 0.0
    %4168 = vmatpush2.msra.mxu0 0.0
    %4169 = vmatprep.subr.mxu0 0.0
    %4170 = vmatpush2.msra.mxu0 0.0
    %4171 = vmatprep.subr.mxu0 0.0
    %4172 = vmatpush2.msra.mxu0 0.0
    %4173 = vmatprep.mubr.f32.mxu0 0.0
    %4174 = vmatmul.mubr.f32.gmra.mxu0 %v4107
    %v4175 = vpop.f32.mrf.mxu0
    %v4176 = vadd.f32 0.0, %v4175
    %v4177 = vpop.f32.mrf.mxu0
    %4178 = vdwg.mxu0
    %v4179 = vmul.f32 %v4103, %v127
    %v4180 = vmul.f32 %v4176, %v127
    %v4181 = vadd.f32 %v3863, %v4179
    %v4182 = vadd.f32 %v3864, %v4180
    %v4183 = vmul.f32 %v3464, %v131
    %v4184 = vmul.f32 %v3470, %v131
    %4185 = vmatprep.subr.mxu0 0.0
    %4186 = vmatpush1.xpose.msra.mxu0 0.0
    %4187 = vmatprep.subr.mxu0 0.0
    %4188 = vmatpush1.xpose.msra.mxu0 0.0
    %4189 = vmatprep.subr.mxu0 0.0
    %4190 = vmatpush1.xpose.msra.mxu0 0.0
    %4191 = vmatprep.subr.mxu0 0.0
    %4192 = vmatpush1.xpose.msra.mxu0 0.0
    %4193 = vmatprep.subr.mxu0 0.0
    %4194 = vmatpush1.xpose.msra.mxu0 0.0
    %4195 = vmatprep.subr.mxu0 0.0
    %4196 = vmatpush1.xpose.msra.mxu0 0.0
    %4197 = vmatprep.subr.mxu0 0.0
    %4198 = vmatpush1.xpose.msra.mxu0 0.0
    %4199 = vmatprep.subr.mxu0 0.0
    %4200 = vmatpush1.xpose.msra.mxu0 0.0
    %4201 = vmatprep.subr.mxu0 0.0
    %4202 = vmatpush1.xpose.msra.mxu0 0.0
    %4203 = vmatprep.subr.mxu0 0.0
    %4204 = vmatpush1.xpose.msra.mxu0 0.0
    %4205 = vmatprep.subr.mxu0 0.0
    %4206 = vmatpush1.xpose.msra.mxu0 0.0
    %4207 = vmatprep.subr.mxu0 0.0
    %4208 = vmatpush1.xpose.msra.mxu0 0.0
    %4209 = vmatprep.subr.mxu0 0.0
    %4210 = vmatpush1.xpose.msra.mxu0 0.0
    %4211 = vmatprep.subr.mxu0 0.0
    %4212 = vmatpush1.xpose.msra.mxu0 0.0
    %4213 = vmatprep.subr.mxu0 0.0
    %4214 = vmatpush1.xpose.msra.mxu0 0.0
    %4215 = vmatprep.subr.mxu0 0.0
    %4216 = vmatpush1.xpose.msra.mxu0 %v3466
    %4217 = vmatprep.subr.mxu0 0.0
    %4218 = vmatpush2.xpose.msra.mxu0 0.0
    %4219 = vmatprep.subr.mxu0 0.0
    %4220 = vmatpush2.xpose.msra.mxu0 0.0
    %4221 = vmatprep.subr.mxu0 0.0
    %4222 = vmatpush2.xpose.msra.mxu0 0.0
    %4223 = vmatprep.subr.mxu0 0.0
    %4224 = vmatpush2.xpose.msra.mxu0 0.0
    %4225 = vmatprep.subr.mxu0 0.0
    %4226 = vmatpush2.xpose.msra.mxu0 0.0
    %4227 = vmatprep.subr.mxu0 0.0
    %4228 = vmatpush2.xpose.msra.mxu0 0.0
    %4229 = vmatprep.subr.mxu0 0.0
    %4230 = vmatpush2.xpose.msra.mxu0 0.0
    %4231 = vmatprep.subr.mxu0 0.0
    %4232 = vmatpush2.xpose.msra.mxu0 0.0
    %4233 = vmatprep.subr.mxu0 0.0
    %4234 = vmatpush2.xpose.msra.mxu0 0.0
    %4235 = vmatprep.subr.mxu0 0.0
    %4236 = vmatpush2.xpose.msra.mxu0 0.0
    %4237 = vmatprep.subr.mxu0 0.0
    %4238 = vmatpush2.xpose.msra.mxu0 0.0
    %4239 = vmatprep.subr.mxu0 0.0
    %4240 = vmatpush2.xpose.msra.mxu0 0.0
    %4241 = vmatprep.subr.mxu0 0.0
    %4242 = vmatpush2.xpose.msra.mxu0 0.0
    %4243 = vmatprep.subr.mxu0 0.0
    %4244 = vmatpush2.xpose.msra.mxu0 0.0
    %4245 = vmatprep.subr.mxu0 0.0
    %4246 = vmatpush2.xpose.msra.mxu0 0.0
    %4247 = vmatprep.subr.mxu0 0.0
    %4248 = vmatpush2.xpose.msra.mxu0 0.0
    %4249 = vmatprep.mubr.f32.mxu0 0.0
    %4250 = vmatmul.mubr.f32.gmra.mxu0 %v4183
    %v4251 = vpop.f32.mrf.mxu0
    %v4252 = vadd.f32 0.0, %v4251
    %v4253 = vpop.f32.mrf.mxu0
    %4254 = vdwg.mxu0
    %4255 = vmatprep.subr.mxu0 0.0
    %4256 = vmatpush1.xpose.msra.mxu0 0.0
    %4257 = vmatprep.subr.mxu0 0.0
    %4258 = vmatpush1.xpose.msra.mxu0 0.0
    %4259 = vmatprep.subr.mxu0 0.0
    %4260 = vmatpush1.xpose.msra.mxu0 0.0
    %4261 = vmatprep.subr.mxu0 0.0
    %4262 = vmatpush1.xpose.msra.mxu0 0.0
    %4263 = vmatprep.subr.mxu0 0.0
    %4264 = vmatpush1.xpose.msra.mxu0 0.0
    %4265 = vmatprep.subr.mxu0 0.0
    %4266 = vmatpush1.xpose.msra.mxu0 0.0
    %4267 = vmatprep.subr.mxu0 0.0
    %4268 = vmatpush1.xpose.msra.mxu0 0.0
    %4269 = vmatprep.subr.mxu0 0.0
    %4270 = vmatpush1.xpose.msra.mxu0 0.0
    %4271 = vmatprep.subr.mxu0 0.0
    %4272 = vmatpush1.xpose.msra.mxu0 0.0
    %4273 = vmatprep.subr.mxu0 0.0
    %4274 = vmatpush1.xpose.msra.mxu0 0.0
    %4275 = vmatprep.subr.mxu0 0.0
    %4276 = vmatpush1.xpose.msra.mxu0 0.0
    %4277 = vmatprep.subr.mxu0 0.0
    %4278 = vmatpush1.xpose.msra.mxu0 0.0
    %4279 = vmatprep.subr.mxu0 0.0
    %4280 = vmatpush1.xpose.msra.mxu0 0.0
    %4281 = vmatprep.subr.mxu0 0.0
    %4282 = vmatpush1.xpose.msra.mxu0 0.0
    %4283 = vmatprep.subr.mxu0 0.0
    %4284 = vmatpush1.xpose.msra.mxu0 0.0
    %4285 = vmatprep.subr.mxu0 0.0
    %4286 = vmatpush1.xpose.msra.mxu0 %v3472
    %4287 = vmatprep.subr.mxu0 0.0
    %4288 = vmatpush2.xpose.msra.mxu0 0.0
    %4289 = vmatprep.subr.mxu0 0.0
    %4290 = vmatpush2.xpose.msra.mxu0 0.0
    %4291 = vmatprep.subr.mxu0 0.0
    %4292 = vmatpush2.xpose.msra.mxu0 0.0
    %4293 = vmatprep.subr.mxu0 0.0
    %4294 = vmatpush2.xpose.msra.mxu0 0.0
    %4295 = vmatprep.subr.mxu0 0.0
    %4296 = vmatpush2.xpose.msra.mxu0 0.0
    %4297 = vmatprep.subr.mxu0 0.0
    %4298 = vmatpush2.xpose.msra.mxu0 0.0
    %4299 = vmatprep.subr.mxu0 0.0
    %4300 = vmatpush2.xpose.msra.mxu0 0.0
    %4301 = vmatprep.subr.mxu0 0.0
    %4302 = vmatpush2.xpose.msra.mxu0 0.0
    %4303 = vmatprep.subr.mxu0 0.0
    %4304 = vmatpush2.xpose.msra.mxu0 0.0
    %4305 = vmatprep.subr.mxu0 0.0
    %4306 = vmatpush2.xpose.msra.mxu0 0.0
    %4307 = vmatprep.subr.mxu0 0.0
    %4308 = vmatpush2.xpose.msra.mxu0 0.0
    %4309 = vmatprep.subr.mxu0 0.0
    %4310 = vmatpush2.xpose.msra.mxu0 0.0
    %4311 = vmatprep.subr.mxu0 0.0
    %4312 = vmatpush2.xpose.msra.mxu0 0.0
    %4313 = vmatprep.subr.mxu0 0.0
    %4314 = vmatpush2.xpose.msra.mxu0 0.0
    %4315 = vmatprep.subr.mxu0 0.0
    %4316 = vmatpush2.xpose.msra.mxu0 0.0
    %4317 = vmatprep.subr.mxu0 0.0
    %4318 = vmatpush2.xpose.msra.mxu0 0.0
    %4319 = vmatprep.mubr.f32.mxu0 0.0
    %4320 = vmatmul.mubr.f32.gmra.mxu0 %v4184
    %v4321 = vpop.f32.mrf.mxu0
    %v4322 = vadd.f32 0.0, %v4321
    %v4323 = vpop.f32.mrf.mxu0
    %4324 = vdwg.mxu0
    %v4325 = vmul.f32 %v4252, 0.12909944
    %v4326 = vmul.f32 %v4322, 0.12909944
    %v4327 = vadd.f32 %v4325, %v114
    %v4328 = vadd.f32 %v4326, %v114
    %v4329 = vsel %vm522, %v4327, -inf
    %4330 = vmax.xlane.f32.xlu0 %v4329
    %v4331 = vpop.xlane.xlu0 %4330
    %v4332 = vsel %vm522, %v4328, -inf
    %4333 = vmax.xlane.f32.xlu0 %v4332
    %v4334 = vpop.xlane.xlu0 %4333
    %v4335 = vsub.f32 %v4327, %v4331
    %v4336 = vsub.f32 %v4328, %v4334
    %v4337 = vmul.f32 %v4335, 1.442695
    %v4338 = vpow.pop %v4337
    %v4339 = vmul.f32 %v4336, 1.442695
    %v4340 = vpow.pop %v4339
    %v4341 = vsel %vm522, %v4338, 0.0
    %4342 = vadd.xlane.f32.xlu0 %v4341
    %v4343 = vpop.xlane.xlu0 %4342
    %v4344 = vsel %vm522, %v4340, 0.0
    %4345 = vadd.xlane.f32.xlu0 %v4344
    %v4346 = vpop.xlane.xlu0 %4345
    %v4347 = vrcp.pop %v4343
    %v4348 = vrcp.pop %v4346
    %v4349 = vmul.f32 %v4338, %v4347
    %v4350 = vmul.f32 %v4340, %v4348
    %v4352 = vsel %vm522, %v4349, 0
    %4354 = vmatprep.subr.mxu0 0.0
    %4355 = vmatpush1.msra.mxu0 0.0
    %4356 = vmatprep.subr.mxu0 0.0
    %4357 = vmatpush1.msra.mxu0 0.0
    %4358 = vmatprep.subr.mxu0 0.0
    %4359 = vmatpush1.msra.mxu0 0.0
    %4360 = vmatprep.subr.mxu0 0.0
    %4361 = vmatpush1.msra.mxu0 0.0
    %4362 = vmatprep.subr.mxu0 0.0
    %4363 = vmatpush1.msra.mxu0 0.0
    %4364 = vmatprep.subr.mxu0 0.0
    %4365 = vmatpush1.msra.mxu0 0.0
    %4366 = vmatprep.subr.mxu0 0.0
    %4367 = vmatpush1.msra.mxu0 0.0
    %4368 = vmatprep.subr.mxu0 0.0
    %4369 = vmatpush1.msra.mxu0 0.0
    %4370 = vmatprep.subr.mxu0 0.0
    %4371 = vmatpush1.msra.mxu0 0.0
    %4372 = vmatprep.subr.mxu0 0.0
    %4373 = vmatpush1.msra.mxu0 0.0
    %4374 = vmatprep.subr.mxu0 0.0
    %4375 = vmatpush1.msra.mxu0 0.0
    %4376 = vmatprep.subr.mxu0 0.0
    %4377 = vmatpush1.msra.mxu0 0.0
    %4378 = vmatprep.subr.mxu0 0.0
    %4379 = vmatpush1.msra.mxu0 0.0
    %4380 = vmatprep.subr.mxu0 0.0
    %4381 = vmatpush1.msra.mxu0 0.0
    %4382 = vmatprep.subr.mxu0 0.0
    %4383 = vmatpush1.msra.mxu0 0.0
    %4384 = vmatprep.subr.mxu0 0.0
    %4385 = vmatpush1.msra.mxu0 %v3541
    %4386 = vmatprep.subr.mxu0 0.0
    %4387 = vmatpush2.msra.mxu0 0.0
    %4388 = vmatprep.subr.mxu0 0.0
    %4389 = vmatpush2.msra.mxu0 0.0
    %4390 = vmatprep.subr.mxu0 0.0
    %4391 = vmatpush2.msra.mxu0 0.0
    %4392 = vmatprep.subr.mxu0 0.0
    %4393 = vmatpush2.msra.mxu0 0.0
    %4394 = vmatprep.subr.mxu0 0.0
    %4395 = vmatpush2.msra.mxu0 0.0
    %4396 = vmatprep.subr.mxu0 0.0
    %4397 = vmatpush2.msra.mxu0 0.0
    %4398 = vmatprep.subr.mxu0 0.0
    %4399 = vmatpush2.msra.mxu0 0.0
    %4400 = vmatprep.subr.mxu0 0.0
    %4401 = vmatpush2.msra.mxu0 0.0
    %4402 = vmatprep.subr.mxu0 0.0
    %4403 = vmatpush2.msra.mxu0 0.0
    %4404 = vmatprep.subr.mxu0 0.0
    %4405 = vmatpush2.msra.mxu0 0.0
    %4406 = vmatprep.subr.mxu0 0.0
    %4407 = vmatpush2.msra.mxu0 0.0
    %4408 = vmatprep.subr.mxu0 0.0
    %4409 = vmatpush2.msra.mxu0 0.0
    %4410 = vmatprep.subr.mxu0 0.0
    %4411 = vmatpush2.msra.mxu0 0.0
    %4412 = vmatprep.subr.mxu0 0.0
    %4413 = vmatpush2.msra.mxu0 0.0
    %4414 = vmatprep.subr.mxu0 0.0
    %4415 = vmatpush2.msra.mxu0 0.0
    %4416 = vmatprep.subr.mxu0 0.0
    %4417 = vmatpush2.msra.mxu0 0.0
    %4418 = vmatprep.mubr.f32.mxu0 0.0
    %4419 = vmatmul.mubr.f32.gmra.mxu0 %v4352
    %v4420 = vpop.f32.mrf.mxu0
    %v4421 = vadd.f32 0.0, %v4420
    %v4422 = vpop.f32.mrf.mxu0
    %4423 = vdwg.mxu0
    %v4425 = vsel %vm522, %v4350, 0
    %4427 = vmatprep.subr.mxu0 0.0
    %4428 = vmatpush1.msra.mxu0 0.0
    %4429 = vmatprep.subr.mxu0 0.0
    %4430 = vmatpush1.msra.mxu0 0.0
    %4431 = vmatprep.subr.mxu0 0.0
    %4432 = vmatpush1.msra.mxu0 0.0
    %4433 = vmatprep.subr.mxu0 0.0
    %4434 = vmatpush1.msra.mxu0 0.0
    %4435 = vmatprep.subr.mxu0 0.0
    %4436 = vmatpush1.msra.mxu0 0.0
    %4437 = vmatprep.subr.mxu0 0.0
    %4438 = vmatpush1.msra.mxu0 0.0
    %4439 = vmatprep.subr.mxu0 0.0
    %4440 = vmatpush1.msra.mxu0 0.0
    %4441 = vmatprep.subr.mxu0 0.0
    %4442 = vmatpush1.msra.mxu0 0.0
    %4443 = vmatprep.subr.mxu0 0.0
    %4444 = vmatpush1.msra.mxu0 0.0
    %4445 = vmatprep.subr.mxu0 0.0
    %4446 = vmatpush1.msra.mxu0 0.0
    %4447 = vmatprep.subr.mxu0 0.0
    %4448 = vmatpush1.msra.mxu0 0.0
    %4449 = vmatprep.subr.mxu0 0.0
    %4450 = vmatpush1.msra.mxu0 0.0
    %4451 = vmatprep.subr.mxu0 0.0
    %4452 = vmatpush1.msra.mxu0 0.0
    %4453 = vmatprep.subr.mxu0 0.0
    %4454 = vmatpush1.msra.mxu0 0.0
    %4455 = vmatprep.subr.mxu0 0.0
    %4456 = vmatpush1.msra.mxu0 0.0
    %4457 = vmatprep.subr.mxu0 0.0
    %4458 = vmatpush1.msra.mxu0 %v3546
    %4459 = vmatprep.subr.mxu0 0.0
    %4460 = vmatpush2.msra.mxu0 0.0
    %4461 = vmatprep.subr.mxu0 0.0
    %4462 = vmatpush2.msra.mxu0 0.0
    %4463 = vmatprep.subr.mxu0 0.0
    %4464 = vmatpush2.msra.mxu0 0.0
    %4465 = vmatprep.subr.mxu0 0.0
    %4466 = vmatpush2.msra.mxu0 0.0
    %4467 = vmatprep.subr.mxu0 0.0
    %4468 = vmatpush2.msra.mxu0 0.0
    %4469 = vmatprep.subr.mxu0 0.0
    %4470 = vmatpush2.msra.mxu0 0.0
    %4471 = vmatprep.subr.mxu0 0.0
    %4472 = vmatpush2.msra.mxu0 0.0
    %4473 = vmatprep.subr.mxu0 0.0
    %4474 = vmatpush2.msra.mxu0 0.0
    %4475 = vmatprep.subr.mxu0 0.0
    %4476 = vmatpush2.msra.mxu0 0.0
    %4477 = vmatprep.subr.mxu0 0.0
    %4478 = vmatpush2.msra.mxu0 0.0
    %4479 = vmatprep.subr.mxu0 0.0
    %4480 = vmatpush2.msra.mxu0 0.0
    %4481 = vmatprep.subr.mxu0 0.0
    %4482 = vmatpush2.msra.mxu0 0.0
    %4483 = vmatprep.subr.mxu0 0.0
    %4484 = vmatpush2.msra.mxu0 0.0
    %4485 = vmatprep.subr.mxu0 0.0
    %4486 = vmatpush2.msra.mxu0 0.0
    %4487 = vmatprep.subr.mxu0 0.0
    %4488 = vmatpush2.msra.mxu0 0.0
    %4489 = vmatprep.subr.mxu0 0.0
    %4490 = vmatpush2.msra.mxu0 0.0
    %4491 = vmatprep.mubr.f32.mxu0 0.0
    %4492 = vmatmul.mubr.f32.gmra.mxu0 %v4425
    %v4493 = vpop.f32.mrf.mxu0
    %v4494 = vadd.f32 0.0, %v4493
    %v4495 = vpop.f32.mrf.mxu0
    %4496 = vdwg.mxu0
    %v4497 = vmul.f32 %v4421, %v131
    %v4498 = vmul.f32 %v4494, %v131
    %v4499 = vadd.f32 %v4181, %v4497
    %v4500 = vadd.f32 %v4182, %v4498
    %s4501 = scalar_lea.vmem [#allocation5], 256
    %v4502 = vld [vmem:[%s4501] sm:$0xff]
    %v4503 = vld [vmem:[%s4501 + $0x8] sm:$0xff]
    %v4504 = vld [vmem:[%s4501 + $0x10] sm:$0xff]
    %v4505 = vld [vmem:[%s4501 + $0x18] sm:$0xff]
    %v4506 = vld [vmem:[%s4501 + $0x20] sm:$0xff]
    %v4507 = vld [vmem:[%s4501 + $0x28] sm:$0xff]
    %v4508 = vld [vmem:[%s4501 + $0x30] sm:$0xff]
    %v4509 = vld [vmem:[%s4501 + $0x38] sm:$0xff]
    %v4510 = vld [vmem:[%s4501 + $0x40] sm:$0xff]
    %v4511 = vld [vmem:[%s4501 + $0x48] sm:$0xff]
    %v4512 = vld [vmem:[%s4501 + $0x50] sm:$0xff]
    %v4513 = vld [vmem:[%s4501 + $0x58] sm:$0xff]
    %v4514 = vld [vmem:[%s4501 + $0x60] sm:$0xff]
    %v4515 = vld [vmem:[%s4501 + $0x68] sm:$0xff]
    %v4516 = vld [vmem:[%s4501 + $0x70] sm:$0xff]
    %v4517 = vld [vmem:[%s4501 + $0x78] sm:$0xff]
    %s4518 = scalar_lea.vmem %s6, 2
    %v4519 = vld [vmem:[%s4518] sm:$0x1]
    %v4521 = vlaneseq
    %v4522 = vshrl.u32 %v4521, 7
    %v4523 = vsub.s32 0, %v4522
    %v4524 = vrot.slane %v4519, %v4523
    %4526 = vmatprep.subr.mxu0 0.0
    %4527 = vmatpush1.msra.mxu0 %v4517
    %4528 = vmatprep.subr.mxu0 0.0
    %4529 = vmatpush1.msra.mxu0 %v4516
    %4530 = vmatprep.subr.mxu0 0.0
    %4531 = vmatpush1.msra.mxu0 %v4515
    %4532 = vmatprep.subr.mxu0 0.0
    %4533 = vmatpush1.msra.mxu0 %v4514
    %4534 = vmatprep.subr.mxu0 0.0
    %4535 = vmatpush1.msra.mxu0 %v4513
    %4536 = vmatprep.subr.mxu0 0.0
    %4537 = vmatpush1.msra.mxu0 %v4512
    %4538 = vmatprep.subr.mxu0 0.0
    %4539 = vmatpush1.msra.mxu0 %v4511
    %4540 = vmatprep.subr.mxu0 0.0
    %4541 = vmatpush1.msra.mxu0 %v4510
    %4542 = vmatprep.subr.mxu0 0.0
    %4543 = vmatpush1.msra.mxu0 %v4509
    %4544 = vmatprep.subr.mxu0 0.0
    %4545 = vmatpush1.msra.mxu0 %v4508
    %4546 = vmatprep.subr.mxu0 0.0
    %4547 = vmatpush1.msra.mxu0 %v4507
    %4548 = vmatprep.subr.mxu0 0.0
    %4549 = vmatpush1.msra.mxu0 %v4506
    %4550 = vmatprep.subr.mxu0 0.0
    %4551 = vmatpush1.msra.mxu0 %v4505
    %4552 = vmatprep.subr.mxu0 0.0
    %4553 = vmatpush1.msra.mxu0 %v4504
    %4554 = vmatprep.subr.mxu0 0.0
    %4555 = vmatpush1.msra.mxu0 %v4503
    %4556 = vmatprep.subr.mxu0 0.0
    %4557 = vmatpush1.msra.mxu0 %v4502
    %4558 = vmatprep.subr.mxu0 0.0
    %4559 = vmatpush2.msra.mxu0 0.0
    %4560 = vmatprep.subr.mxu0 0.0
    %4561 = vmatpush2.msra.mxu0 0.0
    %4562 = vmatprep.subr.mxu0 0.0
    %4563 = vmatpush2.msra.mxu0 0.0
    %4564 = vmatprep.subr.mxu0 0.0
    %4565 = vmatpush2.msra.mxu0 0.0
    %4566 = vmatprep.subr.mxu0 0.0
    %4567 = vmatpush2.msra.mxu0 0.0
    %4568 = vmatprep.subr.mxu0 0.0
    %4569 = vmatpush2.msra.mxu0 0.0
    %4570 = vmatprep.subr.mxu0 0.0
    %4571 = vmatpush2.msra.mxu0 0.0
    %4572 = vmatprep.subr.mxu0 0.0
    %4573 = vmatpush2.msra.mxu0 0.0
    %4574 = vmatprep.subr.mxu0 0.0
    %4575 = vmatpush2.msra.mxu0 0.0
    %4576 = vmatprep.subr.mxu0 0.0
    %4577 = vmatpush2.msra.mxu0 0.0
    %4578 = vmatprep.subr.mxu0 0.0
    %4579 = vmatpush2.msra.mxu0 0.0
    %4580 = vmatprep.subr.mxu0 0.0
    %4581 = vmatpush2.msra.mxu0 0.0
    %4582 = vmatprep.subr.mxu0 0.0
    %4583 = vmatpush2.msra.mxu0 0.0
    %4584 = vmatprep.subr.mxu0 0.0
    %4585 = vmatpush2.msra.mxu0 0.0
    %4586 = vmatprep.subr.mxu0 0.0
    %4587 = vmatpush2.msra.mxu0 0.0
    %4588 = vmatprep.subr.mxu0 0.0
    %4589 = vmatpush2.msra.mxu0 0.0
    %4590 = vmatprep.mubr.f32.mxu0 0.0
    %4591 = vmatmul.mubr.f32.gmra.mxu0 %v4499
    %v4592 = vpop.f32.mrf.mxu0
    %v4593 = vadd.f32 %v4524, %v4592
    %v4594 = vpop.f32.mrf.mxu0
    %4595 = vmatprep.mubr.f32.mxu0 0.0
    %4596 = vmatmul.mubr.f32.gmra.mxu0 %v4500
    %v4597 = vpop.f32.mrf.mxu0
    %v4598 = vadd.f32 %v4524, %v4597
    %v4599 = vpop.f32.mrf.mxu0
    %4600 = vdwg.mxu0
    %v4601 = vadd.f32 %v3302, %v4593
    %v4602 = vadd.f32 %v3303, %v4598
    %s4603 = scalar_lea.vmem %s7, 2
    %v4604 = vld [vmem:[%s4603] sm:$0x1]
    %s4605 = scalar_lea.vmem %s8, 2
    %v4606 = vld [vmem:[%s4605] sm:$0x1]
    %4607 = vadd.xlane.f32.xlu0 %v4601
    %v4608 = vpop.xlane.xlu0 %4607
    %4609 = vadd.xlane.f32.xlu0 %v4602
    %v4610 = vpop.xlane.xlu0 %4609
    %v4611 = vmul.f32 %v4608, 0.016666668
    %v4612 = vmul.f32 %v4610, 0.016666668
    %v4613 = vsub.f32 %v4601, %v4611
    %v4614 = vsub.f32 %v4602, %v4612
    %v4615 = vsel %vm143, %v4613, 0.0
    %v4616 = vsel %vm143, %v4614, 0.0
    %v4617 = vmul.f32 %v4615, %v4615
    %v4618 = vmul.f32 %v4616, %v4616
    %4619 = vadd.xlane.f32.xlu0 %v4617
    %v4620 = vpop.xlane.xlu0 %4619
    %4621 = vadd.xlane.f32.xlu0 %v4618
    %v4622 = vpop.xlane.xlu0 %4621
    %v4623 = vmul.f32 %v4620, 0.016666668
    %v4624 = vmul.f32 %v4622, 0.016666668
    %v4625 = vadd.f32 %v4623, 1e-05
    %v4626 = vadd.f32 %v4624, 1e-05
    %v4627 = vrsqrt.pop %v4625
    %v4628 = vrsqrt.pop %v4626
    %v4629 = vmul.f32 %v4615, %v4627
    %v4630 = vmul.f32 %v4616, %v4628
    %v4632 = vlaneseq
    %v4633 = vshrl.u32 %v4632, 7
    %v4634 = vsub.s32 0, %v4633
    %v4635 = vrot.slane %v4604, %v4634
    %v4637 = vmul.f32 %v4629, %v4635
    %v4638 = vmul.f32 %v4630, %v4635
    %v4640 = vlaneseq
    %v4641 = vshrl.u32 %v4640, 7
    %v4642 = vsub.s32 0, %v4641
    %v4643 = vrot.slane %v4606, %v4642
    %v4645 = vadd.f32 %v4637, %v4643
    %v4646 = vadd.f32 %v4638, %v4643
    %s4647 = scalar_lea.vmem [#allocation7], 512
    %v4648 = vld [vmem:[%s4647] sm:$0xff]
    %v4649 = vld [vmem:[%s4647 + $0x8] sm:$0xff]
    %v4650 = vld [vmem:[%s4647 + $0x10] sm:$0xff]
    %v4651 = vld [vmem:[%s4647 + $0x18] sm:$0xff]
    %v4652 = vld [vmem:[%s4647 + $0x20] sm:$0xff]
    %v4653 = vld [vmem:[%s4647 + $0x28] sm:$0xff]
    %v4654 = vld [vmem:[%s4647 + $0x30] sm:$0xff]
    %v4655 = vld [vmem:[%s4647 + $0x38] sm:$0xff]
    %v4656 = vld [vmem:[%s4647 + $0x40] sm:$0xff]
    %v4657 = vld [vmem:[%s4647 + $0x48] sm:$0xff]
    %v4658 = vld [vmem:[%s4647 + $0x50] sm:$0xff]
    %v4659 = vld [vmem:[%s4647 + $0x58] sm:$0xff]
    %v4660 = vld [vmem:[%s4647 + $0x60] sm:$0xff]
    %v4661 = vld [vmem:[%s4647 + $0x68] sm:$0xff]
    %v4662 = vld [vmem:[%s4647 + $0x70] sm:$0xff]
    %v4663 = vld [vmem:[%s4647 + $0x78] sm:$0xff]
    %v4664 = vld [vmem:[%s4647 + $0x80] sm:$0xff]
    %v4665 = vld [vmem:[%s4647 + $0x88] sm:$0xff]
    %v4666 = vld [vmem:[%s4647 + $0x90] sm:$0xff]
    %v4667 = vld [vmem:[%s4647 + $0x98] sm:$0xff]
    %v4668 = vld [vmem:[%s4647 + $0xa0] sm:$0xff]
    %v4669 = vld [vmem:[%s4647 + $0xa8] sm:$0xff]
    %v4670 = vld [vmem:[%s4647 + $0xb0] sm:$0xff]
    %v4671 = vld [vmem:[%s4647 + $0xb8] sm:$0xff]
    %v4672 = vld [vmem:[%s4647 + $0xc0] sm:$0xff]
    %v4673 = vld [vmem:[%s4647 + $0xc8] sm:$0xff]
    %v4674 = vld [vmem:[%s4647 + $0xd0] sm:$0xff]
    %v4675 = vld [vmem:[%s4647 + $0xd8] sm:$0xff]
    %v4676 = vld [vmem:[%s4647 + $0xe0] sm:$0xff]
    %v4677 = vld [vmem:[%s4647 + $0xe8] sm:$0xff]
    %v4678 = vld [vmem:[%s4647 + $0xf0] sm:$0xff]
    %v4679 = vld [vmem:[%s4647 + $0xf8] sm:$0xff]
    %s4680 = scalar_lea.vmem %s10, 4
    %v4681 = vld [vmem:[%s4680] sm:$0x3]
    %v4683 = vlaneseq
    %v4684 = vshrl.u32 %v4683, 7
    %v4685 = vsub.s32 0, %v4684
    %v4686 = vrot.slane %v4681, %v4685
    %v4687 = vlaneseq
    %v4688 = vshrl.u32 %v4687, 7
    %v4689 = vsub.s32 1, %v4688
    %v4690 = vrot.slane %v4681, %v4689
    %4693 = vmatprep.subr.mxu0 %v4679
    %4694 = vmatpush1.msra.mxu0 %v4678
    %4695 = vmatprep.subr.mxu0 %v4677
    %4696 = vmatpush1.msra.mxu0 %v4676
    %4697 = vmatprep.subr.mxu0 %v4675
    %4698 = vmatpush1.msra.mxu0 %v4674
    %4699 = vmatprep.subr.mxu0 %v4673
    %4700 = vmatpush1.msra.mxu0 %v4672
    %4701 = vmatprep.subr.mxu0 %v4671
    %4702 = vmatpush1.msra.mxu0 %v4670
    %4703 = vmatprep.subr.mxu0 %v4669
    %4704 = vmatpush1.msra.mxu0 %v4668
    %4705 = vmatprep.subr.mxu0 %v4667
    %4706 = vmatpush1.msra.mxu0 %v4666
    %4707 = vmatprep.subr.mxu0 %v4665
    %4708 = vmatpush1.msra.mxu0 %v4664
    %4709 = vmatprep.subr.mxu0 %v4663
    %4710 = vmatpush1.msra.mxu0 %v4662
    %4711 = vmatprep.subr.mxu0 %v4661
    %4712 = vmatpush1.msra.mxu0 %v4660
    %4713 = vmatprep.subr.mxu0 %v4659
    %4714 = vmatpush1.msra.mxu0 %v4658
    %4715 = vmatprep.subr.mxu0 %v4657
    %4716 = vmatpush1.msra.mxu0 %v4656
    %4717 = vmatprep.subr.mxu0 %v4655
    %4718 = vmatpush1.msra.mxu0 %v4654
    %4719 = vmatprep.subr.mxu0 %v4653
    %4720 = vmatpush1.msra.mxu0 %v4652
    %4721 = vmatprep.subr.mxu0 %v4651
    %4722 = vmatpush1.msra.mxu0 %v4650
    %4723 = vmatprep.subr.mxu0 %v4649
    %4724 = vmatpush1.msra.mxu0 %v4648
    %4725 = vmatprep.subr.mxu0 0.0
    %4726 = vmatpush2.msra.mxu0 0.0
    %4727 = vmatprep.subr.mxu0 0.0
    %4728 = vmatpush2.msra.mxu0 0.0
    %4729 = vmatprep.subr.mxu0 0.0
    %4730 = vmatpush2.msra.mxu0 0.0
    %4731 = vmatprep.subr.mxu0 0.0
    %4732 = vmatpush2.msra.mxu0 0.0
    %4733 = vmatprep.subr.mxu0 0.0
    %4734 = vmatpush2.msra.mxu0 0.0
    %4735 = vmatprep.subr.mxu0 0.0
    %4736 = vmatpush2.msra.mxu0 0.0
    %4737 = vmatprep.subr.mxu0 0.0
    %4738 = vmatpush2.msra.mxu0 0.0
    %4739 = vmatprep.subr.mxu0 0.0
    %4740 = vmatpush2.msra.mxu0 0.0
    %4741 = vmatprep.subr.mxu0 0.0
    %4742 = vmatpush2.msra.mxu0 0.0
    %4743 = vmatprep.subr.mxu0 0.0
    %4744 = vmatpush2.msra.mxu0 0.0
    %4745 = vmatprep.subr.mxu0 0.0
    %4746 = vmatpush2.msra.mxu0 0.0
    %4747 = vmatprep.subr.mxu0 0.0
    %4748 = vmatpush2.msra.mxu0 0.0
    %4749 = vmatprep.subr.mxu0 0.0
    %4750 = vmatpush2.msra.mxu0 0.0
    %4751 = vmatprep.subr.mxu0 0.0
    %4752 = vmatpush2.msra.mxu0 0.0
    %4753 = vmatprep.subr.mxu0 0.0
    %4754 = vmatpush2.msra.mxu0 0.0
    %4755 = vmatprep.subr.mxu0 0.0
    %4756 = vmatpush2.msra.mxu0 0.0
    %4757 = vmatprep.mubr.f32.mxu0 0.0
    %4758 = vmatmul.mubr.f32.gmra.mxu0 %v4645
    %v4759 = vpop.f32.mrf.mxu0
    %v4760 = vadd.f32 %v4686, %v4759
    %v4761 = vpop.f32.mrf.mxu0
    %v4762 = vadd.f32 %v4690, %v4761
    %4763 = vmatprep.mubr.f32.mxu0 0.0
    %4764 = vmatmul.mubr.f32.gmra.mxu0 %v4646
    %v4765 = vpop.f32.mrf.mxu0
    %v4766 = vadd.f32 %v4686, %v4765
    %v4767 = vpop.f32.mrf.mxu0
    %v4768 = vadd.f32 %v4690, %v4767
    %4769 = vdwg.mxu0
    %v4770 = vmax.f32 %v4760, 0.0
    %v4771 = vmax.f32 %v4762, 0.0
    %v4772 = vmax.f32 %v4766, 0.0
    %v4773 = vmax.f32 %v4768, 0.0
    %s4774 = scalar_lea.vmem [#allocation8], 512
    %v4775 = vld [vmem:[%s4774] sm:$0xff]
    %v4776 = vld [vmem:[%s4774 + $0x8] sm:$0xff]
    %v4777 = vld [vmem:[%s4774 + $0x10] sm:$0xff]
    %v4778 = vld [vmem:[%s4774 + $0x18] sm:$0xff]
    %v4779 = vld [vmem:[%s4774 + $0x20] sm:$0xff]
    %v4780 = vld [vmem:[%s4774 + $0x28] sm:$0xff]
    %v4781 = vld [vmem:[%s4774 + $0x30] sm:$0xff]
    %v4782 = vld [vmem:[%s4774 + $0x38] sm:$0xff]
    %v4783 = vld [vmem:[%s4774 + $0x40] sm:$0xff]
    %v4784 = vld [vmem:[%s4774 + $0x48] sm:$0xff]
    %v4785 = vld [vmem:[%s4774 + $0x50] sm:$0xff]
    %v4786 = vld [vmem:[%s4774 + $0x58] sm:$0xff]
    %v4787 = vld [vmem:[%s4774 + $0x60] sm:$0xff]
    %v4788 = vld [vmem:[%s4774 + $0x68] sm:$0xff]
    %v4789 = vld [vmem:[%s4774 + $0x70] sm:$0xff]
    %v4790 = vld [vmem:[%s4774 + $0x78] sm:$0xff]
    %v4791 = vld [vmem:[%s4774 + $0x80] sm:$0xff]
    %v4792 = vld [vmem:[%s4774 + $0x88] sm:$0xff]
    %v4793 = vld [vmem:[%s4774 + $0x90] sm:$0xff]
    %v4794 = vld [vmem:[%s4774 + $0x98] sm:$0xff]
    %v4795 = vld [vmem:[%s4774 + $0xa0] sm:$0xff]
    %v4796 = vld [vmem:[%s4774 + $0xa8] sm:$0xff]
    %v4797 = vld [vmem:[%s4774 + $0xb0] sm:$0xff]
    %v4798 = vld [vmem:[%s4774 + $0xb8] sm:$0xff]
    %v4799 = vld [vmem:[%s4774 + $0xc0] sm:$0xff]
    %v4800 = vld [vmem:[%s4774 + $0xc8] sm:$0xff]
    %v4801 = vld [vmem:[%s4774 + $0xd0] sm:$0xff]
    %v4802 = vld [vmem:[%s4774 + $0xd8] sm:$0xff]
    %v4803 = vld [vmem:[%s4774 + $0xe0] sm:$0xff]
    %v4804 = vld [vmem:[%s4774 + $0xe8] sm:$0xff]
    %v4805 = vld [vmem:[%s4774 + $0xf0] sm:$0xff]
    %v4806 = vld [vmem:[%s4774 + $0xf8] sm:$0xff]
    %4807 = vmatprep.subr.mxu0 0.0
    %4808 = vmatpush1.msra.mxu0 %v4790
    %4809 = vmatprep.subr.mxu0 0.0
    %4810 = vmatpush1.msra.mxu0 %v4789
    %4811 = vmatprep.subr.mxu0 0.0
    %4812 = vmatpush1.msra.mxu0 %v4788
    %4813 = vmatprep.subr.mxu0 0.0
    %4814 = vmatpush1.msra.mxu0 %v4787
    %4815 = vmatprep.subr.mxu0 0.0
    %4816 = vmatpush1.msra.mxu0 %v4786
    %4817 = vmatprep.subr.mxu0 0.0
    %4818 = vmatpush1.msra.mxu0 %v4785
    %4819 = vmatprep.subr.mxu0 0.0
    %4820 = vmatpush1.msra.mxu0 %v4784
    %4821 = vmatprep.subr.mxu0 0.0
    %4822 = vmatpush1.msra.mxu0 %v4783
    %4823 = vmatprep.subr.mxu0 0.0
    %4824 = vmatpush1.msra.mxu0 %v4782
    %4825 = vmatprep.subr.mxu0 0.0
    %4826 = vmatpush1.msra.mxu0 %v4781
    %4827 = vmatprep.subr.mxu0 0.0
    %4828 = vmatpush1.msra.mxu0 %v4780
    %4829 = vmatprep.subr.mxu0 0.0
    %4830 = vmatpush1.msra.mxu0 %v4779
    %4831 = vmatprep.subr.mxu0 0.0
    %4832 = vmatpush1.msra.mxu0 %v4778
    %4833 = vmatprep.subr.mxu0 0.0
    %4834 = vmatpush1.msra.mxu0 %v4777
    %4835 = vmatprep.subr.mxu0 0.0
    %4836 = vmatpush1.msra.mxu0 %v4776
    %4837 = vmatprep.subr.mxu0 0.0
    %4838 = vmatpush1.msra.mxu0 %v4775
    %4839 = vmatprep.subr.mxu0 0.0
    %4840 = vmatpush2.msra.mxu0 %v4806
    %4841 = vmatprep.subr.mxu0 0.0
    %4842 = vmatpush2.msra.mxu0 %v4805
    %4843 = vmatprep.subr.mxu0 0.0
    %4844 = vmatpush2.msra.mxu0 %v4804
    %4845 = vmatprep.subr.mxu0 0.0
    %4846 = vmatpush2.msra.mxu0 %v4803
    %4847 = vmatprep.subr.mxu0 0.0
    %4848 = vmatpush2.msra.mxu0 %v4802
    %4849 = vmatprep.subr.mxu0 0.0
    %4850 = vmatpush2.msra.mxu0 %v4801
    %4851 = vmatprep.subr.mxu0 0.0
    %4852 = vmatpush2.msra.mxu0 %v4800
    %4853 = vmatprep.subr.mxu0 0.0
    %4854 = vmatpush2.msra.mxu0 %v4799
    %4855 = vmatprep.subr.mxu0 0.0
    %4856 = vmatpush2.msra.mxu0 %v4798
    %4857 = vmatprep.subr.mxu0 0.0
    %4858 = vmatpush2.msra.mxu0 %v4797
    %4859 = vmatprep.subr.mxu0 0.0
    %4860 = vmatpush2.msra.mxu0 %v4796
    %4861 = vmatprep.subr.mxu0 0.0
    %4862 = vmatpush2.msra.mxu0 %v4795
    %4863 = vmatprep.subr.mxu0 0.0
    %4864 = vmatpush2.msra.mxu0 %v4794
    %4865 = vmatprep.subr.mxu0 0.0
    %4866 = vmatpush2.msra.mxu0 %v4793
    %4867 = vmatprep.subr.mxu0 0.0
    %4868 = vmatpush2.msra.mxu0 %v4792
    %4869 = vmatprep.subr.mxu0 0.0
    %4870 = vmatpush2.msra.mxu0 %v4791
    %4871 = vmatprep.mubr.f32.mxu0 %v4771
    %4872 = vmatmul.mubr.f32.gmra.mxu0 %v4770
    %v4873 = vpop.f32.mrf.mxu0
    %v4874 = vadd.f32 0.0, %v4873
    %v4875 = vpop.f32.mrf.mxu0
    %4876 = vmatprep.mubr.f32.mxu0 %v4773
    %4877 = vmatmul.mubr.f32.gmra.mxu0 %v4772
    %v4878 = vpop.f32.mrf.mxu0
    %v4879 = vadd.f32 0.0, %v4878
    %v4880 = vpop.f32.mrf.mxu0
    %4881 = vdwg.mxu0
    %v4882 = vadd.f32 %v4601, %v4874
    %v4883 = vadd.f32 %v4602, %v4879
    %s4884 = scalar_lea.vmem %s12, 2
    %v4885 = vld [vmem:[%s4884] sm:$0x1]
    %v4887 = vlaneseq
    %v4888 = vshrl.u32 %v4887, 7
    %v4889 = vsub.s32 0, %v4888
    %v4890 = vrot.slane %v4885, %v4889
    %v4892 = vadd.f32 %v4882, %v4890
    %v4893 = vadd.f32 %v4883, %v4890
    %v4894 = vld [vmem:[%s13] sm:$0x1]
    %v4895 = vld [vmem:[%s14] sm:$0x1]
    %4896 = vadd.xlane.f32.xlu0 %v4892
    %v4897 = vpop.xlane.xlu0 %4896
    %4898 = vadd.xlane.f32.xlu0 %v4893
    %v4899 = vpop.xlane.xlu0 %4898
    %v4900 = vmul.f32 %v4897, 0.016666668
    %v4901 = vmul.f32 %v4899, 0.016666668
    %v4902 = vsub.f32 %v4892, %v4900
    %v4903 = vsub.f32 %v4893, %v4901
    %v4904 = vsel %vm143, %v4902, 0.0
    %v4905 = vsel %vm143, %v4903, 0.0
    %v4906 = vmul.f32 %v4904, %v4904
    %v4907 = vmul.f32 %v4905, %v4905
    %4908 = vadd.xlane.f32.xlu0 %v4906
    %v4909 = vpop.xlane.xlu0 %4908
    %4910 = vadd.xlane.f32.xlu0 %v4907
    %v4911 = vpop.xlane.xlu0 %4910
    %v4912 = vmul.f32 %v4909, 0.016666668
    %v4913 = vmul.f32 %v4911, 0.016666668
    %v4914 = vadd.f32 %v4912, 1e-05
    %v4915 = vadd.f32 %v4913, 1e-05
    %v4916 = vrsqrt.pop %v4914
    %v4917 = vrsqrt.pop %v4915
    %v4918 = vmul.f32 %v4904, %v4916
    %v4919 = vmul.f32 %v4905, %v4917
    %v4921 = vlaneseq
    %v4922 = vshrl.u32 %v4921, 7
    %v4923 = vsub.s32 0, %v4922
    %v4924 = vrot.slane %v4894, %v4923
    %v4926 = vmul.f32 %v4918, %v4924
    %v4927 = vmul.f32 %v4919, %v4924
    %v4929 = vlaneseq
    %v4930 = vshrl.u32 %v4929, 7
    %v4931 = vsub.s32 0, %v4930
    %v4932 = vrot.slane %v4895, %v4931
    %v4934 = vadd.f32 %v4926, %v4932
    %v4935 = vadd.f32 %v4927, %v4932
    %v4936 = vld [vmem:[%s15] sm:$0xff]
    %v4937 = vld [vmem:[%s15 + $0x8] sm:$0xff]
    %v4938 = vld [vmem:[%s15 + $0x10] sm:$0xff]
    %v4939 = vld [vmem:[%s15 + $0x18] sm:$0xff]
    %v4940 = vld [vmem:[%s15 + $0x20] sm:$0xff]
    %v4941 = vld [vmem:[%s15 + $0x28] sm:$0xff]
    %v4942 = vld [vmem:[%s15 + $0x30] sm:$0xff]
    %v4943 = vld [vmem:[%s15 + $0x38] sm:$0xff]
    %v4944 = vld [vmem:[%s15 + $0x40] sm:$0xff]
    %v4945 = vld [vmem:[%s15 + $0x48] sm:$0xff]
    %v4946 = vld [vmem:[%s15 + $0x50] sm:$0xff]
    %v4947 = vld [vmem:[%s15 + $0x58] sm:$0xff]
    %v4948 = vld [vmem:[%s15 + $0x60] sm:$0xff]
    %v4949 = vld [vmem:[%s15 + $0x68] sm:$0xff]
    %v4950 = vld [vmem:[%s15 + $0x70] sm:$0xff]
    %v4951 = vld [vmem:[%s15 + $0x78] sm:$0xff]
    %v4952 = vld [vmem:[%s16] sm:$0x1]
    %v4954 = vlaneseq
    %v4955 = vshrl.u32 %v4954, 7
    %v4956 = vsub.s32 0, %v4955
    %v4957 = vrot.slane %v4952, %v4956
    %4959 = vmatprep.subr.mxu0 0.0
    %4960 = vmatpush1.msra.mxu0 %v4951
    %4961 = vmatprep.subr.mxu0 0.0
    %4962 = vmatpush1.msra.mxu0 %v4950
    %4963 = vmatprep.subr.mxu0 0.0
    %4964 = vmatpush1.msra.mxu0 %v4949
    %4965 = vmatprep.subr.mxu0 0.0
    %4966 = vmatpush1.msra.mxu0 %v4948
    %4967 = vmatprep.subr.mxu0 0.0
    %4968 = vmatpush1.msra.mxu0 %v4947
    %4969 = vmatprep.subr.mxu0 0.0
    %4970 = vmatpush1.msra.mxu0 %v4946
    %4971 = vmatprep.subr.mxu0 0.0
    %4972 = vmatpush1.msra.mxu0 %v4945
    %4973 = vmatprep.subr.mxu0 0.0
    %4974 = vmatpush1.msra.mxu0 %v4944
    %4975 = vmatprep.subr.mxu0 0.0
    %4976 = vmatpush1.msra.mxu0 %v4943
    %4977 = vmatprep.subr.mxu0 0.0
    %4978 = vmatpush1.msra.mxu0 %v4942
    %4979 = vmatprep.subr.mxu0 0.0
    %4980 = vmatpush1.msra.mxu0 %v4941
    %4981 = vmatprep.subr.mxu0 0.0
    %4982 = vmatpush1.msra.mxu0 %v4940
    %4983 = vmatprep.subr.mxu0 0.0
    %4984 = vmatpush1.msra.mxu0 %v4939
    %4985 = vmatprep.subr.mxu0 0.0
    %4986 = vmatpush1.msra.mxu0 %v4938
    %4987 = vmatprep.subr.mxu0 0.0
    %4988 = vmatpush1.msra.mxu0 %v4937
    %4989 = vmatprep.subr.mxu0 0.0
    %4990 = vmatpush1.msra.mxu0 %v4936
    %4991 = vmatprep.subr.mxu0 0.0
    %4992 = vmatpush2.msra.mxu0 0.0
    %4993 = vmatprep.subr.mxu0 0.0
    %4994 = vmatpush2.msra.mxu0 0.0
    %4995 = vmatprep.subr.mxu0 0.0
    %4996 = vmatpush2.msra.mxu0 0.0
    %4997 = vmatprep.subr.mxu0 0.0
    %4998 = vmatpush2.msra.mxu0 0.0
    %4999 = vmatprep.subr.mxu0 0.0
    %5000 = vmatpush2.msra.mxu0 0.0
    %5001 = vmatprep.subr.mxu0 0.0
    %5002 = vmatpush2.msra.mxu0 0.0
    %5003 = vmatprep.subr.mxu0 0.0
    %5004 = vmatpush2.msra.mxu0 0.0
    %5005 = vmatprep.subr.mxu0 0.0
    %5006 = vmatpush2.msra.mxu0 0.0
    %5007 = vmatprep.subr.mxu0 0.0
    %5008 = vmatpush2.msra.mxu0 0.0
    %5009 = vmatprep.subr.mxu0 0.0
    %5010 = vmatpush2.msra.mxu0 0.0
    %5011 = vmatprep.subr.mxu0 0.0
    %5012 = vmatpush2.msra.mxu0 0.0
    %5013 = vmatprep.subr.mxu0 0.0
    %5014 = vmatpush2.msra.mxu0 0.0
    %5015 = vmatprep.subr.mxu0 0.0
    %5016 = vmatpush2.msra.mxu0 0.0
    %5017 = vmatprep.subr.mxu0 0.0
    %5018 = vmatpush2.msra.mxu0 0.0
    %5019 = vmatprep.subr.mxu0 0.0
    %5020 = vmatpush2.msra.mxu0 0.0
    %5021 = vmatprep.subr.mxu0 0.0
    %5022 = vmatpush2.msra.mxu0 0.0
    %5023 = vmatprep.mubr.f32.mxu0 0.0
    %5024 = vmatmul.mubr.f32.gmra.mxu0 %v4934
    %v5025 = vpop.f32.mrf.mxu0
    %v5026 = vadd.f32 %v4957, %v5025
    %v5027 = vpop.f32.mrf.mxu0
    %5028 = vmatprep.mubr.f32.mxu0 0.0
    %5029 = vmatmul.mubr.f32.gmra.mxu0 %v4935
    %v5030 = vpop.f32.mrf.mxu0
    %v5031 = vadd.f32 %v4957, %v5030
    %v5032 = vpop.f32.mrf.mxu0
    %5033 = vdwg.mxu0
    %5034 = vst [vmem:[#allocation10] sm:$0xff] %v5026
    %5035 = vst [vmem:[#allocation10 + $0x8] sm:$0xff] %v5031
    // Predicated region
    $region86: #{ngram_forward.1} parent=1 // pred_check
      _
    $region87: #{ngram_forward.1} parent=1 // pred_check_branch
      %5037 = sbr.rel (0) target = $region89
    $region88: #{ngram_forward.1} parent=1 // pred_region
      %s5039 = ssub.s32 256, 256
      %5040 = vsyncadd [#allocation4], %s5039
      %s5041 = sshll.u32 [#allocation10], 4
      %s5042 = int_to_ptr.vmem [resolvable:$true] %s5041
      %5047 = dma.vmem_to_hbm [thread:$0]  %s5042, 256, %s17, [#allocation4], 128, 128, 8
    $region89: #{ngram_forward.1} parent=1 // pred_fallthru
      _
    // Predicated region
    $region90: #{ngram_forward.1} parent=1 // pred_check
      _
    $region91: #{ngram_forward.1} parent=1 // pred_check_branch
      %5049 = sbr.rel (0) target = $region93
    $region92: #{ngram_forward.1} parent=1 // pred_region
      %5050 = dma.done [#allocation4], 256
    $region93: #{ngram_forward.1} parent=1 // pred_fallthru
      _
    %5051 = vsyncpa [#allocation3], 1
    %5052 = vsyncpa [#allocation6], 1
    %5053 = vsyncpa [#allocation9], 1
    %5054 = vsyncpa [#allocation4], 1

</llo_original>
